<compile_context>
chip_gen: v6e
topology: v6e:2x2x1
jax: 0.10.0
libtpu: 0.0.40
codegen_flags: <defaults>
</compile_context>

<pallas_src>
import numpy as np
import jax
import jax.numpy as jnp
from jax.experimental import pallas as pl
from jax.experimental.pallas import tpu as pltpu

BN_EPS = 1e-5


def down_block_kernel(x_ref, w_ref, g_ref, beta_ref, o_ref, xpad_ref, col_ref):
    """One DownBlock2d: conv3x3(pad=1) + BatchNorm(train) + ReLU + AvgPool2x2.

    x_ref    : (N, H, W, Cin)        unpadded NHWC input (f32)
    w_ref    : (9*Cin, Cout)         conv taps (bf16), row = (ky*3+kx)*Cin + cin
    g_ref    : (1, Cout)             BN gamma (f32)
    beta_ref : (1, Cout)             BN beta  (f32)
    o_ref    : (N*Ho, Wo*Cout)       pooled output, lane-dense layout (f32)
    xpad_ref : (N, H+2, W+2, Cin)    VMEM scratch: in-kernel zero-padded input
    col_ref  : (N*H*W, 9*Cin)        VMEM scratch: bf16 im2col slab
    """
    N, H, W, Cin = x_ref.shape
    Ho, Wo = H // 2, W // 2
    Cout = w_ref.shape[-1]
    M = N * H * W

    # --- 1-pixel halo built in VMEM (no wrapper-side jnp.pad / HBM round trip) ---
    xpad_ref[...] = jnp.zeros_like(xpad_ref)
    xpad_ref[:, 1:H + 1, 1:W + 1, :] = x_ref[...]

    # --- im2col: 9 shifted windows stacked along the lane axis (bf16 slab) ---
    for t in range(9):
        dy, dx = divmod(t, 3)
        col_ref[:, t * Cin:(t + 1) * Cin] = (
            xpad_ref[:, dy:dy + H, dx:dx + W, :]
            .reshape(M, Cin).astype(jnp.bfloat16))

    # --- Conv3x3(pad=1) as ONE bf16 MXU matmul, f32 accumulate (K = 9*Cin). ---
    # Conv bias intentionally omitted: train-mode BN cancels it exactly.
    acc = jnp.dot(col_ref[...], w_ref[...], preferred_element_type=jnp.float32)

    # --- BatchNorm2d, training-mode biased batch stats (one-pass sum/sumsq). ---
    # TODO(synk): switch to two-pass / Welford stats if activations ever reach
    # |mean| >> std (cancellation risk of E[x^2] - mean^2 in f32).
    inv_m = 1.0 / M
    mean = jnp.sum(acc, axis=0, keepdims=True) * inv_m
    ex2 = jnp.sum(acc * acc, axis=0, keepdims=True) * inv_m
    var = jnp.maximum(ex2 - mean * mean, 0.0)
    y = (acc - mean) * jax.lax.rsqrt(var + BN_EPS) * g_ref[...] + beta_ref[...]

    # --- ReLU ---
    y = jnp.maximum(y, 0.0)

    # --- AvgPool2d(2x2): two adjacent-pair adds (W pairs, then H pairs). ---
    y4 = y.reshape(N, H, Wo, 2, Cout)
    yw = y4[:, :, :, 0, :] + y4[:, :, :, 1, :]              # (N, H, Wo, Cout)
    yh = yw.reshape(N, Ho, 2, Wo, Cout)
    pooled = 0.25 * (yh[:, :, 0, :, :] + yh[:, :, 1, :, :])  # (N, Ho, Wo, Cout)

    # --- Lane-dense store: last dim Wo*Cout (128-wide for the first blocks). ---
    o_ref[...] = pooled.reshape(N * Ho, Wo * Cout).astype(o_ref.dtype)


def _vmem_limit_bytes(N, H, W, Cin, Cout):
    """Scoped-VMEM budget sized to the actual kernel buffers, with headroom."""
    Ho, Wo = H // 2, W // 2
    in_bytes = N * H * W * Cin * 4
    out_bytes = N * Ho * Wo * Cout * 4
    xpad_bytes = N * (H + 2) * (W + 2) * Cin * 4
    col_bytes = N * H * W * 9 * Cin * 2
    w_bytes = 9 * Cin * Cout * 2
    small = 4 * Cout * 4
    total = 2 * (in_bytes + out_bytes + w_bytes + small) + xpad_bytes + col_bytes
    return int(min(max(2 * total + (8 << 20), 16 << 20), 128 << 20))


def down_block_nhwc(x_nhwc, w, gamma, beta):
    """x_nhwc: (N, H, W, Cin); w: (Cout, Cin, 3, 3) (PyTorch OIHW). NHWC out."""
    N, H, W, Cin = x_nhwc.shape
    Cout = w.shape[0]
    assert H % 2 == 0 and W % 2 == 0, "AvgPool2d(2) path assumes even H, W"
    Ho, Wo = H // 2, W // 2

    # (Cout, Cin, 3, 3) -> (ky, kx, Cin, Cout) -> (9*Cin, Cout); bf16 for MXU.
    # Row order matches the im2col lane order built inside the kernel.
    w2 = jnp.transpose(w, (2, 3, 1, 0)).reshape(9 * Cin, Cout).astype(jnp.bfloat16)

    out2d = pl.pallas_call(
        down_block_kernel,
        out_shape=jax.ShapeDtypeStruct((N * Ho, Wo * Cout), jnp.float32),
        in_specs=[pl.BlockSpec(memory_space=pltpu.MemorySpace.VMEM)] * 4,
        out_specs=pl.BlockSpec(memory_space=pltpu.MemorySpace.VMEM),
        scratch_shapes=[
            pltpu.VMEM((N, H + 2, W + 2, Cin), jnp.float32),   # padded input
            pltpu.VMEM((N * H * W, 9 * Cin), jnp.bfloat16),    # im2col slab
        ],
        compiler_params=pltpu.CompilerParams(
            vmem_limit_bytes=_vmem_limit_bytes(N, H, W, Cin, Cout)),
    )(x_nhwc,
      w2,
      gamma.reshape(1, Cout).astype(jnp.float32),
      beta.reshape(1, Cout).astype(jnp.float32))

    # Free contiguous reshape back to NHWC for the next block / output.
    return out2d.reshape(N, Ho, Wo, Cout)


def init_encoder_params(key, block_expansion, in_features,
                        num_blocks=3, max_features=256):
    params = []
    for i in range(num_blocks):
        cin = in_features if i == 0 else min(max_features,
                                             block_expansion * 2 ** i)
        cout = min(max_features, block_expansion * 2 ** (i + 1))
        key, k1, k2 = jax.random.split(key, 3)
        w = jax.random.normal(k1, (cout, cin, 3, 3), jnp.float32) \
            * (1.0 / np.sqrt(cin * 9))
        b = jax.random.normal(k2, (cout,), jnp.float32) * 0.05
        gamma = jnp.ones((cout,), jnp.float32)   # BatchNorm affine init
        beta = jnp.zeros((cout,), jnp.float32)
        params.append((w, b, gamma, beta))
    return params


def encoder_forward(x_nchw, params):
    """Matches Encoder.forward: returns [x, out1, out2, out3] (NCHW).

    Internal activation chain stays NHWC; only returned tensors are NCHW.
    The conv bias `b` is not passed to the kernel (cancelled by train-mode BN).
    """
    outs = [x_nchw]
    h = jnp.transpose(x_nchw, (0, 2, 3, 1))          # NCHW -> NHWC, once
    for (w, b, g, be) in params:
        h = down_block_nhwc(h, w, g, be)             # stays NHWC
        outs.append(jnp.transpose(h, (0, 3, 1, 2)))  # NHWC -> NCHW for output
    return outs


# ---------------- pure-JAX reference for a correctness check ----------------
def _ref_down_block(x, w, b, g, be):
    y = jax.lax.conv_general_dilated(
        x, w, window_strides=(1, 1), padding=((1, 1), (1, 1)),
        dimension_numbers=('NCHW', 'OIHW', 'NCHW'))
    y = y + b[None, :, None, None]        # bias kept here; BN cancels it
    mean = jnp.mean(y, axis=(0, 2, 3), keepdims=True)
    var = jnp.mean((y - mean) ** 2, axis=(0, 2, 3), keepdims=True)
    y = (y - mean) / jnp.sqrt(var + BN_EPS) * g[None, :, None, None] \
        + be[None, :, None, None]
    y = jnp.maximum(y, 0.0)
    N, C, H, W = y.shape
    return y.reshape(N, C, H // 2, 2, W // 2, 2).mean(axis=(3, 5))


def _ref_encoder(x, params):
    outs = [x]
    for (w, b, g, be) in params:
        outs.append(_ref_down_block(outs[-1], w, b, g, be))
    return outs


if __name__ == "__main__":
    # Small shapes consistent with the module:
    # batch=2, in_features=4, spatial=16, block_expansion=8, num_blocks=3,
    # max_features=32  ->  channels 4 -> 16 -> 32 -> 32, spatial 16->8->4->2.
    key = jax.random.PRNGKey(0)
    kx, kp = jax.random.split(key)
    N, Cin, S = 2, 4, 16
    x = jax.random.normal(kx, (N, Cin, S, S), jnp.float32)

    params = init_encoder_params(kp, block_expansion=8, in_features=Cin,
                                 num_blocks=3, max_features=32)

    encoder_jit = jax.jit(encoder_forward)
    outs = encoder_jit(x, params)
    outs = [jax.block_until_ready(o) for o in outs]

    refs = _ref_encoder(x, params)
    assert len(outs) == len(refs) == 4
    # Tolerance slightly relaxed vs. the pure-f32 version to account for the
    # intentional bf16 im2col/weight path (f32 accumulation, f32 BN/pool).
    for o, r in zip(outs, refs):
        assert o.shape == r.shape, (o.shape, r.shape)
        np.testing.assert_allclose(np.asarray(o), np.asarray(r),
                                   rtol=3e-2, atol=3e-2)

    print("KERNEL_OK")
</pallas_src>

<mosaic_0001>
module attributes {stable_mosaic.version = 11 : i64} {
  func.func @down_block_kernel(%arg0: memref<2x16x16x4xf32, #tpu.memory_space<vmem>>, %arg1: memref<36x16xbf16, #tpu.memory_space<vmem>>, %arg2: memref<1x16xf32, #tpu.memory_space<vmem>>, %arg3: memref<1x16xf32, #tpu.memory_space<vmem>>, %arg4: memref<16x128xf32, #tpu.memory_space<vmem>>, %arg5: memref<2x18x18x4xf32, #tpu.memory_space<vmem>>, %arg6: memref<512x36xbf16, #tpu.memory_space<vmem>>) attributes {dimension_semantics = [], scalar_prefetch = 0 : i64, scratch_operands = 2 : i64, tpu.core_type = #tpu.core_type<tc>} {
    %cst = arith.constant 0.000000e+00 : f32
    %0 = vector.broadcast %cst : f32 to vector<2x18x18x4xf32>
    %c0 = arith.constant 0 : index
    %c0_0 = arith.constant 0 : index
    %c0_1 = arith.constant 0 : index
    %c0_2 = arith.constant 0 : index
    %1 = vector.load %arg5[%c0, %c0_0, %c0_1, %c0_2] : memref<2x18x18x4xf32, #tpu.memory_space<vmem>>, vector<2x18x18x4xf32>
    tpu.vector_store %arg5[%c0, %c0_0, %c0_1, %c0_2], %0 {strides = array<i32>} : memref<2x18x18x4xf32, #tpu.memory_space<vmem>>, vector<2x18x18x4xf32>,
    %c0_3 = arith.constant 0 : index
    %c0_4 = arith.constant 0 : index
    %c0_5 = arith.constant 0 : index
    %c0_6 = arith.constant 0 : index
    %2 = vector.load %arg0[%c0_3, %c0_4, %c0_5, %c0_6] : memref<2x16x16x4xf32, #tpu.memory_space<vmem>>, vector<2x16x16x4xf32>
    %c0_7 = arith.constant 0 : index
    %c1 = arith.constant 1 : index
    %c1_8 = arith.constant 1 : index
    %c0_9 = arith.constant 0 : index
    %3 = vector.load %arg5[%c0_7, %c1, %c1_8, %c0_9] : memref<2x18x18x4xf32, #tpu.memory_space<vmem>>, vector<2x16x16x4xf32>
    tpu.vector_store %arg5[%c0_7, %c1, %c1_8, %c0_9], %2 {strides = array<i32>} : memref<2x18x18x4xf32, #tpu.memory_space<vmem>>, vector<2x16x16x4xf32>,
    %c0_10 = arith.constant 0 : index
    %c0_11 = arith.constant 0 : index
    %c0_12 = arith.constant 0 : index
    %c0_13 = arith.constant 0 : index
    %4 = vector.load %arg5[%c0_10, %c0_11, %c0_12, %c0_13] : memref<2x18x18x4xf32, #tpu.memory_space<vmem>>, vector<2x16x16x4xf32>
    %5 = vector.shape_cast %4 : vector<2x16x16x4xf32> to vector<512x4xf32>
    %6 = arith.truncf %5 : vector<512x4xf32> to vector<512x4xbf16>
    %c0_14 = arith.constant 0 : index
    %c0_15 = arith.constant 0 : index
    %7 = vector.load %arg6[%c0_14, %c0_15] : memref<512x36xbf16, #tpu.memory_space<vmem>>, vector<512x4xbf16>
    tpu.vector_store %arg6[%c0_14, %c0_15], %6 {strides = array<i32>} : memref<512x36xbf16, #tpu.memory_space<vmem>>, vector<512x4xbf16>,
    %c0_16 = arith.constant 0 : index
    %c0_17 = arith.constant 0 : index
    %c1_18 = arith.constant 1 : index
    %c0_19 = arith.constant 0 : index
    %8 = vector.load %arg5[%c0_16, %c0_17, %c1_18, %c0_19] : memref<2x18x18x4xf32, #tpu.memory_space<vmem>>, vector<2x16x16x4xf32>
    %9 = vector.shape_cast %8 : vector<2x16x16x4xf32> to vector<512x4xf32>
    %10 = arith.truncf %9 : vector<512x4xf32> to vector<512x4xbf16>
    %c0_20 = arith.constant 0 : index
    %c4 = arith.constant 4 : index
    %11 = vector.load %arg6[%c0_20, %c4] : memref<512x36xbf16, #tpu.memory_space<vmem>>, vector<512x4xbf16>
    tpu.vector_store %arg6[%c0_20, %c4], %10 {strides = array<i32>} : memref<512x36xbf16, #tpu.memory_space<vmem>>, vector<512x4xbf16>,
    %c0_21 = arith.constant 0 : index
    %c0_22 = arith.constant 0 : index
    %c2 = arith.constant 2 : index
    %c0_23 = arith.constant 0 : index
    %12 = vector.load %arg5[%c0_21, %c0_22, %c2, %c0_23] : memref<2x18x18x4xf32, #tpu.memory_space<vmem>>, vector<2x16x16x4xf32>
    %13 = vector.shape_cast %12 : vector<2x16x16x4xf32> to vector<512x4xf32>
    %14 = arith.truncf %13 : vector<512x4xf32> to vector<512x4xbf16>
    %c0_24 = arith.constant 0 : index
    %c8 = arith.constant 8 : index
    %15 = vector.load %arg6[%c0_24, %c8] : memref<512x36xbf16, #tpu.memory_space<vmem>>, vector<512x4xbf16>
    tpu.vector_store %arg6[%c0_24, %c8], %14 {strides = array<i32>} : memref<512x36xbf16, #tpu.memory_space<vmem>>, vector<512x4xbf16>,
    %c0_25 = arith.constant 0 : index
    %c1_26 = arith.constant 1 : index
    %c0_27 = arith.constant 0 : index
    %c0_28 = arith.constant 0 : index
    %16 = vector.load %arg5[%c0_25, %c1_26, %c0_27, %c0_28] : memref<2x18x18x4xf32, #tpu.memory_space<vmem>>, vector<2x16x16x4xf32>
    %17 = vector.shape_cast %16 : vector<2x16x16x4xf32> to vector<512x4xf32>
    %18 = arith.truncf %17 : vector<512x4xf32> to vector<512x4xbf16>
    %c0_29 = arith.constant 0 : index
    %c12 = arith.constant 12 : index
    %19 = vector.load %arg6[%c0_29, %c12] : memref<512x36xbf16, #tpu.memory_space<vmem>>, vector<512x4xbf16>
    tpu.vector_store %arg6[%c0_29, %c12], %18 {strides = array<i32>} : memref<512x36xbf16, #tpu.memory_space<vmem>>, vector<512x4xbf16>,
    %c0_30 = arith.constant 0 : index
    %c1_31 = arith.constant 1 : index
    %c1_32 = arith.constant 1 : index
    %c0_33 = arith.constant 0 : index
    %20 = vector.load %arg5[%c0_30, %c1_31, %c1_32, %c0_33] : memref<2x18x18x4xf32, #tpu.memory_space<vmem>>, vector<2x16x16x4xf32>
    %21 = vector.shape_cast %20 : vector<2x16x16x4xf32> to vector<512x4xf32>
    %22 = arith.truncf %21 : vector<512x4xf32> to vector<512x4xbf16>
    %c0_34 = arith.constant 0 : index
    %c16 = arith.constant 16 : index
    %23 = vector.load %arg6[%c0_34, %c16] : memref<512x36xbf16, #tpu.memory_space<vmem>>, vector<512x4xbf16>
    tpu.vector_store %arg6[%c0_34, %c16], %22 {strides = array<i32>} : memref<512x36xbf16, #tpu.memory_space<vmem>>, vector<512x4xbf16>,
    %c0_35 = arith.constant 0 : index
    %c1_36 = arith.constant 1 : index
    %c2_37 = arith.constant 2 : index
    %c0_38 = arith.constant 0 : index
    %24 = vector.load %arg5[%c0_35, %c1_36, %c2_37, %c0_38] : memref<2x18x18x4xf32, #tpu.memory_space<vmem>>, vector<2x16x16x4xf32>
    %25 = vector.shape_cast %24 : vector<2x16x16x4xf32> to vector<512x4xf32>
    %26 = arith.truncf %25 : vector<512x4xf32> to vector<512x4xbf16>
    %c0_39 = arith.constant 0 : index
    %c20 = arith.constant 20 : index
    %27 = vector.load %arg6[%c0_39, %c20] : memref<512x36xbf16, #tpu.memory_space<vmem>>, vector<512x4xbf16>
    tpu.vector_store %arg6[%c0_39, %c20], %26 {strides = array<i32>} : memref<512x36xbf16, #tpu.memory_space<vmem>>, vector<512x4xbf16>,
    %c0_40 = arith.constant 0 : index
    %c2_41 = arith.constant 2 : index
    %c0_42 = arith.constant 0 : index
    %c0_43 = arith.constant 0 : index
    %28 = vector.load %arg5[%c0_40, %c2_41, %c0_42, %c0_43] : memref<2x18x18x4xf32, #tpu.memory_space<vmem>>, vector<2x16x16x4xf32>
    %29 = vector.shape_cast %28 : vector<2x16x16x4xf32> to vector<512x4xf32>
    %30 = arith.truncf %29 : vector<512x4xf32> to vector<512x4xbf16>
    %c0_44 = arith.constant 0 : index
    %c24 = arith.constant 24 : index
    %31 = vector.load %arg6[%c0_44, %c24] : memref<512x36xbf16, #tpu.memory_space<vmem>>, vector<512x4xbf16>
    tpu.vector_store %arg6[%c0_44, %c24], %30 {strides = array<i32>} : memref<512x36xbf16, #tpu.memory_space<vmem>>, vector<512x4xbf16>,
    %c0_45 = arith.constant 0 : index
    %c2_46 = arith.constant 2 : index
    %c1_47 = arith.constant 1 : index
    %c0_48 = arith.constant 0 : index
    %32 = vector.load %arg5[%c0_45, %c2_46, %c1_47, %c0_48] : memref<2x18x18x4xf32, #tpu.memory_space<vmem>>, vector<2x16x16x4xf32>
    %33 = vector.shape_cast %32 : vector<2x16x16x4xf32> to vector<512x4xf32>
    %34 = arith.truncf %33 : vector<512x4xf32> to vector<512x4xbf16>
    %c0_49 = arith.constant 0 : index
    %c28 = arith.constant 28 : index
    %35 = vector.load %arg6[%c0_49, %c28] : memref<512x36xbf16, #tpu.memory_space<vmem>>, vector<512x4xbf16>
    tpu.vector_store %arg6[%c0_49, %c28], %34 {strides = array<i32>} : memref<512x36xbf16, #tpu.memory_space<vmem>>, vector<512x4xbf16>,
    %c0_50 = arith.constant 0 : index
    %c2_51 = arith.constant 2 : index
    %c2_52 = arith.constant 2 : index
    %c0_53 = arith.constant 0 : index
    %36 = vector.load %arg5[%c0_50, %c2_51, %c2_52, %c0_53] : memref<2x18x18x4xf32, #tpu.memory_space<vmem>>, vector<2x16x16x4xf32>
    %37 = vector.shape_cast %36 : vector<2x16x16x4xf32> to vector<512x4xf32>
    %38 = arith.truncf %37 : vector<512x4xf32> to vector<512x4xbf16>
    %c0_54 = arith.constant 0 : index
    %c32 = arith.constant 32 : index
    %39 = vector.load %arg6[%c0_54, %c32] : memref<512x36xbf16, #tpu.memory_space<vmem>>, vector<512x4xbf16>
    tpu.vector_store %arg6[%c0_54, %c32], %38 {strides = array<i32>} : memref<512x36xbf16, #tpu.memory_space<vmem>>, vector<512x4xbf16>,
    %c0_55 = arith.constant 0 : index
    %c0_56 = arith.constant 0 : index
    %40 = vector.load %arg6[%c0_55, %c0_56] : memref<512x36xbf16, #tpu.memory_space<vmem>>, vector<512x36xbf16>
    %c0_57 = arith.constant 0 : index
    %c0_58 = arith.constant 0 : index
    %41 = vector.load %arg1[%c0_57, %c0_58] : memref<36x16xbf16, #tpu.memory_space<vmem>>, vector<36x16xbf16>
    %cst_59 = arith.constant dense<0.000000e+00> : vector<512x16xf32>
    %42 = tpu.matmul %40, %41, %cst_59 {dimension_numbers = #tpu.dot_dimension_numbers<[1], [0], [0], [1], [0, 0, 1, 1], [], []>} : vector<512x36xbf16>, vector<36x16xbf16>, vector<512x16xf32> -> vector<512x16xf32>
    %cst_60 = arith.constant dense<0.000000e+00> : vector<16xf32>
    %43 = vector.multi_reduction <add>, %42, %cst_60 [0] : vector<512x16xf32> to vector<16xf32>
    %44 = vector.shape_cast %43 : vector<16xf32> to vector<1x16xf32>
    %cst_61 = arith.constant 0.001953125 : f32
    %45 = vector.broadcast %cst_61 : f32 to vector<1x16xf32>
    %46 = arith.mulf %44, %45 : vector<1x16xf32>
    %47 = arith.mulf %42, %42 : vector<512x16xf32>
    %cst_62 = arith.constant dense<0.000000e+00> : vector<16xf32>
    %48 = vector.multi_reduction <add>, %47, %cst_62 [0] : vector<512x16xf32> to vector<16xf32>
    %49 = vector.shape_cast %48 : vector<16xf32> to vector<1x16xf32>
    %cst_63 = arith.constant 0.001953125 : f32
    %50 = vector.broadcast %cst_63 : f32 to vector<1x16xf32>
    %51 = arith.mulf %49, %50 : vector<1x16xf32>
    %52 = arith.mulf %46, %46 : vector<1x16xf32>
    %53 = arith.subf %51, %52 : vector<1x16xf32>
    %cst_64 = arith.constant 0.000000e+00 : f32
    %54 = vector.broadcast %cst_64 : f32 to vector<1x16xf32>
    %55 = arith.maximumf %53, %54 : vector<1x16xf32>
    %56 = vector.broadcast %46 : vector<1x16xf32> to vector<512x16xf32>
    %57 = arith.subf %42, %56 : vector<512x16xf32>
    %cst_65 = arith.constant 9.99999974E-6 : f32
    %58 = vector.broadcast %cst_65 : f32 to vector<1x16xf32>
    %59 = arith.addf %55, %58 : vector<1x16xf32>
    %60 = math.rsqrt %59 : vector<1x16xf32>
    %61 = vector.broadcast %60 : vector<1x16xf32> to vector<512x16xf32>
    %62 = arith.mulf %57, %61 : vector<512x16xf32>
    %c0_66 = arith.constant 0 : index
    %c0_67 = arith.constant 0 : index
    %63 = vector.load %arg2[%c0_66, %c0_67] : memref<1x16xf32, #tpu.memory_space<vmem>>, vector<1x16xf32>
    %64 = vector.broadcast %63 : vector<1x16xf32> to vector<512x16xf32>
    %65 = arith.mulf %62, %64 : vector<512x16xf32>
    %c0_68 = arith.constant 0 : index
    %c0_69 = arith.constant 0 : index
    %66 = vector.load %arg3[%c0_68, %c0_69] : memref<1x16xf32, #tpu.memory_space<vmem>>, vector<1x16xf32>
    %67 = vector.broadcast %66 : vector<1x16xf32> to vector<512x16xf32>
    %68 = arith.addf %65, %67 : vector<512x16xf32>
    %cst_70 = arith.constant 0.000000e+00 : f32
    %69 = vector.broadcast %cst_70 : f32 to vector<512x16xf32>
    %70 = arith.maximumf %68, %69 : vector<512x16xf32>
    %71 = vector.shape_cast %70 : vector<512x16xf32> to vector<2x16x8x2x16xf32>
    %72 = vector.extract_strided_slice %71 {offsets = [0, 0, 0, 0, 0], sizes = [2, 16, 8, 1, 16], strides = [1, 1, 1, 1, 1]} : vector<2x16x8x2x16xf32> to vector<2x16x8x1x16xf32>
    %73 = vector.shape_cast %72 : vector<2x16x8x1x16xf32> to vector<2x16x8x16xf32>
    %74 = vector.extract_strided_slice %71 {offsets = [0, 0, 0, 1, 0], sizes = [2, 16, 8, 1, 16], strides = [1, 1, 1, 1, 1]} : vector<2x16x8x2x16xf32> to vector<2x16x8x1x16xf32>
    %75 = vector.shape_cast %74 : vector<2x16x8x1x16xf32> to vector<2x16x8x16xf32>
    %76 = arith.addf %73, %75 : vector<2x16x8x16xf32>
    %77 = vector.shape_cast %76 : vector<2x16x8x16xf32> to vector<2x8x2x8x16xf32>
    %78 = vector.extract_strided_slice %77 {offsets = [0, 0, 0, 0, 0], sizes = [2, 8, 1, 8, 16], strides = [1, 1, 1, 1, 1]} : vector<2x8x2x8x16xf32> to vector<2x8x1x8x16xf32>
    %79 = vector.shape_cast %78 : vector<2x8x1x8x16xf32> to vector<2x8x8x16xf32>
    %80 = vector.extract_strided_slice %77 {offsets = [0, 0, 1, 0, 0], sizes = [2, 8, 1, 8, 16], strides = [1, 1, 1, 1, 1]} : vector<2x8x2x8x16xf32> to vector<2x8x1x8x16xf32>
    %81 = vector.shape_cast %80 : vector<2x8x1x8x16xf32> to vector<2x8x8x16xf32>
    %82 = arith.addf %79, %81 : vector<2x8x8x16xf32>
    %cst_71 = arith.constant 2.500000e-01 : f32
    %83 = vector.broadcast %cst_71 : f32 to vector<2x8x8x16xf32>
    %84 = arith.mulf %83, %82 : vector<2x8x8x16xf32>
    %85 = vector.shape_cast %84 : vector<2x8x8x16xf32> to vector<16x128xf32>
    %c0_72 = arith.constant 0 : index
    %c0_73 = arith.constant 0 : index
    %86 = vector.load %arg4[%c0_72, %c0_73] : memref<16x128xf32, #tpu.memory_space<vmem>>, vector<16x128xf32>
    tpu.vector_store %arg4[%c0_72, %c0_73], %85 {strides = array<i32>} : memref<16x128xf32, #tpu.memory_space<vmem>>, vector<16x128xf32>,
    return
  }
}

module attributes {stable_mosaic.version = 11 : i64} {
  func.func @down_block_kernel(%arg0: memref<2x8x8x16xf32, #tpu.memory_space<vmem>>, %arg1: memref<144x32xbf16, #tpu.memory_space<vmem>>, %arg2: memref<1x32xf32, #tpu.memory_space<vmem>>, %arg3: memref<1x32xf32, #tpu.memory_space<vmem>>, %arg4: memref<8x128xf32, #tpu.memory_space<vmem>>, %arg5: memref<2x10x10x16xf32, #tpu.memory_space<vmem>>, %arg6: memref<128x144xbf16, #tpu.memory_space<vmem>>) attributes {dimension_semantics = [], scalar_prefetch = 0 : i64, scratch_operands = 2 : i64, tpu.core_type = #tpu.core_type<tc>} {
    %cst = arith.constant 0.000000e+00 : f32
    %0 = vector.broadcast %cst : f32 to vector<2x10x10x16xf32>
    %c0 = arith.constant 0 : index
    %c0_0 = arith.constant 0 : index
    %c0_1 = arith.constant 0 : index
    %c0_2 = arith.constant 0 : index
    %1 = vector.load %arg5[%c0, %c0_0, %c0_1, %c0_2] : memref<2x10x10x16xf32, #tpu.memory_space<vmem>>, vector<2x10x10x16xf32>
    tpu.vector_store %arg5[%c0, %c0_0, %c0_1, %c0_2], %0 {strides = array<i32>} : memref<2x10x10x16xf32, #tpu.memory_space<vmem>>, vector<2x10x10x16xf32>,
    %c0_3 = arith.constant 0 : index
    %c0_4 = arith.constant 0 : index
    %c0_5 = arith.constant 0 : index
    %c0_6 = arith.constant 0 : index
    %2 = vector.load %arg0[%c0_3, %c0_4, %c0_5, %c0_6] : memref<2x8x8x16xf32, #tpu.memory_space<vmem>>, vector<2x8x8x16xf32>
    %c0_7 = arith.constant 0 : index
    %c1 = arith.constant 1 : index
    %c1_8 = arith.constant 1 : index
    %c0_9 = arith.constant 0 : index
    %3 = vector.load %arg5[%c0_7, %c1, %c1_8, %c0_9] : memref<2x10x10x16xf32, #tpu.memory_space<vmem>>, vector<2x8x8x16xf32>
    tpu.vector_store %arg5[%c0_7, %c1, %c1_8, %c0_9], %2 {strides = array<i32>} : memref<2x10x10x16xf32, #tpu.memory_space<vmem>>, vector<2x8x8x16xf32>,
    %c0_10 = arith.constant 0 : index
    %c0_11 = arith.constant 0 : index
    %c0_12 = arith.constant 0 : index
    %c0_13 = arith.constant 0 : index
    %4 = vector.load %arg5[%c0_10, %c0_11, %c0_12, %c0_13] : memref<2x10x10x16xf32, #tpu.memory_space<vmem>>, vector<2x8x8x16xf32>
    %5 = vector.shape_cast %4 : vector<2x8x8x16xf32> to vector<128x16xf32>
    %6 = arith.truncf %5 : vector<128x16xf32> to vector<128x16xbf16>
    %c0_14 = arith.constant 0 : index
    %c0_15 = arith.constant 0 : index
    %7 = vector.load %arg6[%c0_14, %c0_15] : memref<128x144xbf16, #tpu.memory_space<vmem>>, vector<128x16xbf16>
    tpu.vector_store %arg6[%c0_14, %c0_15], %6 {strides = array<i32>} : memref<128x144xbf16, #tpu.memory_space<vmem>>, vector<128x16xbf16>,
    %c0_16 = arith.constant 0 : index
    %c0_17 = arith.constant 0 : index
    %c1_18 = arith.constant 1 : index
    %c0_19 = arith.constant 0 : index
    %8 = vector.load %arg5[%c0_16, %c0_17, %c1_18, %c0_19] : memref<2x10x10x16xf32, #tpu.memory_space<vmem>>, vector<2x8x8x16xf32>
    %9 = vector.shape_cast %8 : vector<2x8x8x16xf32> to vector<128x16xf32>
    %10 = arith.truncf %9 : vector<128x16xf32> to vector<128x16xbf16>
    %c0_20 = arith.constant 0 : index
    %c16 = arith.constant 16 : index
    %11 = vector.load %arg6[%c0_20, %c16] : memref<128x144xbf16, #tpu.memory_space<vmem>>, vector<128x16xbf16>
    tpu.vector_store %arg6[%c0_20, %c16], %10 {strides = array<i32>} : memref<128x144xbf16, #tpu.memory_space<vmem>>, vector<128x16xbf16>,
    %c0_21 = arith.constant 0 : index
    %c0_22 = arith.constant 0 : index
    %c2 = arith.constant 2 : index
    %c0_23 = arith.constant 0 : index
    %12 = vector.load %arg5[%c0_21, %c0_22, %c2, %c0_23] : memref<2x10x10x16xf32, #tpu.memory_space<vmem>>, vector<2x8x8x16xf32>
    %13 = vector.shape_cast %12 : vector<2x8x8x16xf32> to vector<128x16xf32>
    %14 = arith.truncf %13 : vector<128x16xf32> to vector<128x16xbf16>
    %c0_24 = arith.constant 0 : index
    %c32 = arith.constant 32 : index
    %15 = vector.load %arg6[%c0_24, %c32] : memref<128x144xbf16, #tpu.memory_space<vmem>>, vector<128x16xbf16>
    tpu.vector_store %arg6[%c0_24, %c32], %14 {strides = array<i32>} : memref<128x144xbf16, #tpu.memory_space<vmem>>, vector<128x16xbf16>,
    %c0_25 = arith.constant 0 : index
    %c1_26 = arith.constant 1 : index
    %c0_27 = arith.constant 0 : index
    %c0_28 = arith.constant 0 : index
    %16 = vector.load %arg5[%c0_25, %c1_26, %c0_27, %c0_28] : memref<2x10x10x16xf32, #tpu.memory_space<vmem>>, vector<2x8x8x16xf32>
    %17 = vector.shape_cast %16 : vector<2x8x8x16xf32> to vector<128x16xf32>
    %18 = arith.truncf %17 : vector<128x16xf32> to vector<128x16xbf16>
    %c0_29 = arith.constant 0 : index
    %c48 = arith.constant 48 : index
    %19 = vector.load %arg6[%c0_29, %c48] : memref<128x144xbf16, #tpu.memory_space<vmem>>, vector<128x16xbf16>
    tpu.vector_store %arg6[%c0_29, %c48], %18 {strides = array<i32>} : memref<128x144xbf16, #tpu.memory_space<vmem>>, vector<128x16xbf16>,
    %c0_30 = arith.constant 0 : index
    %c1_31 = arith.constant 1 : index
    %c1_32 = arith.constant 1 : index
    %c0_33 = arith.constant 0 : index
    %20 = vector.load %arg5[%c0_30, %c1_31, %c1_32, %c0_33] : memref<2x10x10x16xf32, #tpu.memory_space<vmem>>, vector<2x8x8x16xf32>
    %21 = vector.shape_cast %20 : vector<2x8x8x16xf32> to vector<128x16xf32>
    %22 = arith.truncf %21 : vector<128x16xf32> to vector<128x16xbf16>
    %c0_34 = arith.constant 0 : index
    %c64 = arith.constant 64 : index
    %23 = vector.load %arg6[%c0_34, %c64] : memref<128x144xbf16, #tpu.memory_space<vmem>>, vector<128x16xbf16>
    tpu.vector_store %arg6[%c0_34, %c64], %22 {strides = array<i32>} : memref<128x144xbf16, #tpu.memory_space<vmem>>, vector<128x16xbf16>,
    %c0_35 = arith.constant 0 : index
    %c1_36 = arith.constant 1 : index
    %c2_37 = arith.constant 2 : index
    %c0_38 = arith.constant 0 : index
    %24 = vector.load %arg5[%c0_35, %c1_36, %c2_37, %c0_38] : memref<2x10x10x16xf32, #tpu.memory_space<vmem>>, vector<2x8x8x16xf32>
    %25 = vector.shape_cast %24 : vector<2x8x8x16xf32> to vector<128x16xf32>
    %26 = arith.truncf %25 : vector<128x16xf32> to vector<128x16xbf16>
    %c0_39 = arith.constant 0 : index
    %c80 = arith.constant 80 : index
    %27 = vector.load %arg6[%c0_39, %c80] : memref<128x144xbf16, #tpu.memory_space<vmem>>, vector<128x16xbf16>
    tpu.vector_store %arg6[%c0_39, %c80], %26 {strides = array<i32>} : memref<128x144xbf16, #tpu.memory_space<vmem>>, vector<128x16xbf16>,
    %c0_40 = arith.constant 0 : index
    %c2_41 = arith.constant 2 : index
    %c0_42 = arith.constant 0 : index
    %c0_43 = arith.constant 0 : index
    %28 = vector.load %arg5[%c0_40, %c2_41, %c0_42, %c0_43] : memref<2x10x10x16xf32, #tpu.memory_space<vmem>>, vector<2x8x8x16xf32>
    %29 = vector.shape_cast %28 : vector<2x8x8x16xf32> to vector<128x16xf32>
    %30 = arith.truncf %29 : vector<128x16xf32> to vector<128x16xbf16>
    %c0_44 = arith.constant 0 : index
    %c96 = arith.constant 96 : index
    %31 = vector.load %arg6[%c0_44, %c96] : memref<128x144xbf16, #tpu.memory_space<vmem>>, vector<128x16xbf16>
    tpu.vector_store %arg6[%c0_44, %c96], %30 {strides = array<i32>} : memref<128x144xbf16, #tpu.memory_space<vmem>>, vector<128x16xbf16>,
    %c0_45 = arith.constant 0 : index
    %c2_46 = arith.constant 2 : index
    %c1_47 = arith.constant 1 : index
    %c0_48 = arith.constant 0 : index
    %32 = vector.load %arg5[%c0_45, %c2_46, %c1_47, %c0_48] : memref<2x10x10x16xf32, #tpu.memory_space<vmem>>, vector<2x8x8x16xf32>
    %33 = vector.shape_cast %32 : vector<2x8x8x16xf32> to vector<128x16xf32>
    %34 = arith.truncf %33 : vector<128x16xf32> to vector<128x16xbf16>
    %c0_49 = arith.constant 0 : index
    %c112 = arith.constant 112 : index
    %35 = vector.load %arg6[%c0_49, %c112] : memref<128x144xbf16, #tpu.memory_space<vmem>>, vector<128x16xbf16>
    tpu.vector_store %arg6[%c0_49, %c112], %34 {strides = array<i32>} : memref<128x144xbf16, #tpu.memory_space<vmem>>, vector<128x16xbf16>,
    %c0_50 = arith.constant 0 : index
    %c2_51 = arith.constant 2 : index
    %c2_52 = arith.constant 2 : index
    %c0_53 = arith.constant 0 : index
    %36 = vector.load %arg5[%c0_50, %c2_51, %c2_52, %c0_53] : memref<2x10x10x16xf32, #tpu.memory_space<vmem>>, vector<2x8x8x16xf32>
    %37 = vector.shape_cast %36 : vector<2x8x8x16xf32> to vector<128x16xf32>
    %38 = arith.truncf %37 : vector<128x16xf32> to vector<128x16xbf16>
    %c0_54 = arith.constant 0 : index
    %c128 = arith.constant 128 : index
    %39 = vector.load %arg6[%c0_54, %c128] : memref<128x144xbf16, #tpu.memory_space<vmem>>, vector<128x16xbf16>
    tpu.vector_store %arg6[%c0_54, %c128], %38 {strides = array<i32>} : memref<128x144xbf16, #tpu.memory_space<vmem>>, vector<128x16xbf16>,
    %c0_55 = arith.constant 0 : index
    %c0_56 = arith.constant 0 : index
    %40 = vector.load %arg6[%c0_55, %c0_56] : memref<128x144xbf16, #tpu.memory_space<vmem>>, vector<128x144xbf16>
    %c0_57 = arith.constant 0 : index
    %c0_58 = arith.constant 0 : index
    %41 = vector.load %arg1[%c0_57, %c0_58] : memref<144x32xbf16, #tpu.memory_space<vmem>>, vector<144x32xbf16>
    %cst_59 = arith.constant dense<0.000000e+00> : vector<128x32xf32>
    %42 = tpu.matmul %40, %41, %cst_59 {dimension_numbers = #tpu.dot_dimension_numbers<[1], [0], [0], [1], [0, 0, 1, 1], [], []>} : vector<128x144xbf16>, vector<144x32xbf16>, vector<128x32xf32> -> vector<128x32xf32>
    %cst_60 = arith.constant dense<0.000000e+00> : vector<32xf32>
    %43 = vector.multi_reduction <add>, %42, %cst_60 [0] : vector<128x32xf32> to vector<32xf32>
    %44 = vector.shape_cast %43 : vector<32xf32> to vector<1x32xf32>
    %cst_61 = arith.constant 7.812500e-03 : f32
    %45 = vector.broadcast %cst_61 : f32 to vector<1x32xf32>
    %46 = arith.mulf %44, %45 : vector<1x32xf32>
    %47 = arith.mulf %42, %42 : vector<128x32xf32>
    %cst_62 = arith.constant dense<0.000000e+00> : vector<32xf32>
    %48 = vector.multi_reduction <add>, %47, %cst_62 [0] : vector<128x32xf32> to vector<32xf32>
    %49 = vector.shape_cast %48 : vector<32xf32> to vector<1x32xf32>
    %cst_63 = arith.constant 7.812500e-03 : f32
    %50 = vector.broadcast %cst_63 : f32 to vector<1x32xf32>
    %51 = arith.mulf %49, %50 : vector<1x32xf32>
    %52 = arith.mulf %46, %46 : vector<1x32xf32>
    %53 = arith.subf %51, %52 : vector<1x32xf32>
    %cst_64 = arith.constant 0.000000e+00 : f32
    %54 = vector.broadcast %cst_64 : f32 to vector<1x32xf32>
    %55 = arith.maximumf %53, %54 : vector<1x32xf32>
    %56 = vector.broadcast %46 : vector<1x32xf32> to vector<128x32xf32>
    %57 = arith.subf %42, %56 : vector<128x32xf32>
    %cst_65 = arith.constant 9.99999974E-6 : f32
    %58 = vector.broadcast %cst_65 : f32 to vector<1x32xf32>
    %59 = arith.addf %55, %58 : vector<1x32xf32>
    %60 = math.rsqrt %59 : vector<1x32xf32>
    %61 = vector.broadcast %60 : vector<1x32xf32> to vector<128x32xf32>
    %62 = arith.mulf %57, %61 : vector<128x32xf32>
    %c0_66 = arith.constant 0 : index
    %c0_67 = arith.constant 0 : index
    %63 = vector.load %arg2[%c0_66, %c0_67] : memref<1x32xf32, #tpu.memory_space<vmem>>, vector<1x32xf32>
    %64 = vector.broadcast %63 : vector<1x32xf32> to vector<128x32xf32>
    %65 = arith.mulf %62, %64 : vector<128x32xf32>
    %c0_68 = arith.constant 0 : index
    %c0_69 = arith.constant 0 : index
    %66 = vector.load %arg3[%c0_68, %c0_69] : memref<1x32xf32, #tpu.memory_space<vmem>>, vector<1x32xf32>
    %67 = vector.broadcast %66 : vector<1x32xf32> to vector<128x32xf32>
    %68 = arith.addf %65, %67 : vector<128x32xf32>
    %cst_70 = arith.constant 0.000000e+00 : f32
    %69 = vector.broadcast %cst_70 : f32 to vector<128x32xf32>
    %70 = arith.maximumf %68, %69 : vector<128x32xf32>
    %71 = vector.shape_cast %70 : vector<128x32xf32> to vector<2x8x4x2x32xf32>
    %72 = vector.extract_strided_slice %71 {offsets = [0, 0, 0, 0, 0], sizes = [2, 8, 4, 1, 32], strides = [1, 1, 1, 1, 1]} : vector<2x8x4x2x32xf32> to vector<2x8x4x1x32xf32>
    %73 = vector.shape_cast %72 : vector<2x8x4x1x32xf32> to vector<2x8x4x32xf32>
    %74 = vector.extract_strided_slice %71 {offsets = [0, 0, 0, 1, 0], sizes = [2, 8, 4, 1, 32], strides = [1, 1, 1, 1, 1]} : vector<2x8x4x2x32xf32> to vector<2x8x4x1x32xf32>
    %75 = vector.shape_cast %74 : vector<2x8x4x1x32xf32> to vector<2x8x4x32xf32>
    %76 = arith.addf %73, %75 : vector<2x8x4x32xf32>
    %77 = vector.shape_cast %76 : vector<2x8x4x32xf32> to vector<2x4x2x4x32xf32>
    %78 = vector.extract_strided_slice %77 {offsets = [0, 0, 0, 0, 0], sizes = [2, 4, 1, 4, 32], strides = [1, 1, 1, 1, 1]} : vector<2x4x2x4x32xf32> to vector<2x4x1x4x32xf32>
    %79 = vector.shape_cast %78 : vector<2x4x1x4x32xf32> to vector<2x4x4x32xf32>
    %80 = vector.extract_strided_slice %77 {offsets = [0, 0, 1, 0, 0], sizes = [2, 4, 1, 4, 32], strides = [1, 1, 1, 1, 1]} : vector<2x4x2x4x32xf32> to vector<2x4x1x4x32xf32>
    %81 = vector.shape_cast %80 : vector<2x4x1x4x32xf32> to vector<2x4x4x32xf32>
    %82 = arith.addf %79, %81 : vector<2x4x4x32xf32>
    %cst_71 = arith.constant 2.500000e-01 : f32
    %83 = vector.broadcast %cst_71 : f32 to vector<2x4x4x32xf32>
    %84 = arith.mulf %83, %82 : vector<2x4x4x32xf32>
    %85 = vector.shape_cast %84 : vector<2x4x4x32xf32> to vector<8x128xf32>
    %c0_72 = arith.constant 0 : index
    %c0_73 = arith.constant 0 : index
    %86 = vector.load %arg4[%c0_72, %c0_73] : memref<8x128xf32, #tpu.memory_space<vmem>>, vector<8x128xf32>
    tpu.vector_store %arg4[%c0_72, %c0_73], %85 {strides = array<i32>} : memref<8x128xf32, #tpu.memory_space<vmem>>, vector<8x128xf32>,
    return
  }
}

module attributes {stable_mosaic.version = 11 : i64} {
  func.func @down_block_kernel(%arg0: memref<2x4x4x32xf32, #tpu.memory_space<vmem>>, %arg1: memref<288x32xbf16, #tpu.memory_space<vmem>>, %arg2: memref<1x32xf32, #tpu.memory_space<vmem>>, %arg3: memref<1x32xf32, #tpu.memory_space<vmem>>, %arg4: memref<4x64xf32, #tpu.memory_space<vmem>>, %arg5: memref<2x6x6x32xf32, #tpu.memory_space<vmem>>, %arg6: memref<32x288xbf16, #tpu.memory_space<vmem>>) attributes {dimension_semantics = [], scalar_prefetch = 0 : i64, scratch_operands = 2 : i64, tpu.core_type = #tpu.core_type<tc>} {
    %cst = arith.constant 0.000000e+00 : f32
    %0 = vector.broadcast %cst : f32 to vector<2x6x6x32xf32>
    %c0 = arith.constant 0 : index
    %c0_0 = arith.constant 0 : index
    %c0_1 = arith.constant 0 : index
    %c0_2 = arith.constant 0 : index
    %1 = vector.load %arg5[%c0, %c0_0, %c0_1, %c0_2] : memref<2x6x6x32xf32, #tpu.memory_space<vmem>>, vector<2x6x6x32xf32>
    tpu.vector_store %arg5[%c0, %c0_0, %c0_1, %c0_2], %0 {strides = array<i32>} : memref<2x6x6x32xf32, #tpu.memory_space<vmem>>, vector<2x6x6x32xf32>,
    %c0_3 = arith.constant 0 : index
    %c0_4 = arith.constant 0 : index
    %c0_5 = arith.constant 0 : index
    %c0_6 = arith.constant 0 : index
    %2 = vector.load %arg0[%c0_3, %c0_4, %c0_5, %c0_6] : memref<2x4x4x32xf32, #tpu.memory_space<vmem>>, vector<2x4x4x32xf32>
    %c0_7 = arith.constant 0 : index
    %c1 = arith.constant 1 : index
    %c1_8 = arith.constant 1 : index
    %c0_9 = arith.constant 0 : index
    %3 = vector.load %arg5[%c0_7, %c1, %c1_8, %c0_9] : memref<2x6x6x32xf32, #tpu.memory_space<vmem>>, vector<2x4x4x32xf32>
    tpu.vector_store %arg5[%c0_7, %c1, %c1_8, %c0_9], %2 {strides = array<i32>} : memref<2x6x6x32xf32, #tpu.memory_space<vmem>>, vector<2x4x4x32xf32>,
    %c0_10 = arith.constant 0 : index
    %c0_11 = arith.constant 0 : index
    %c0_12 = arith.constant 0 : index
    %c0_13 = arith.constant 0 : index
    %4 = vector.load %arg5[%c0_10, %c0_11, %c0_12, %c0_13] : memref<2x6x6x32xf32, #tpu.memory_space<vmem>>, vector<2x4x4x32xf32>
    %5 = vector.shape_cast %4 : vector<2x4x4x32xf32> to vector<32x32xf32>
    %6 = arith.truncf %5 : vector<32x32xf32> to vector<32x32xbf16>
    %c0_14 = arith.constant 0 : index
    %c0_15 = arith.constant 0 : index
    %7 = vector.load %arg6[%c0_14, %c0_15] : memref<32x288xbf16, #tpu.memory_space<vmem>>, vector<32x32xbf16>
    tpu.vector_store %arg6[%c0_14, %c0_15], %6 {strides = array<i32>} : memref<32x288xbf16, #tpu.memory_space<vmem>>, vector<32x32xbf16>,
    %c0_16 = arith.constant 0 : index
    %c0_17 = arith.constant 0 : index
    %c1_18 = arith.constant 1 : index
    %c0_19 = arith.constant 0 : index
    %8 = vector.load %arg5[%c0_16, %c0_17, %c1_18, %c0_19] : memref<2x6x6x32xf32, #tpu.memory_space<vmem>>, vector<2x4x4x32xf32>
    %9 = vector.shape_cast %8 : vector<2x4x4x32xf32> to vector<32x32xf32>
    %10 = arith.truncf %9 : vector<32x32xf32> to vector<32x32xbf16>
    %c0_20 = arith.constant 0 : index
    %c32 = arith.constant 32 : index
    %11 = vector.load %arg6[%c0_20, %c32] : memref<32x288xbf16, #tpu.memory_space<vmem>>, vector<32x32xbf16>
    tpu.vector_store %arg6[%c0_20, %c32], %10 {strides = array<i32>} : memref<32x288xbf16, #tpu.memory_space<vmem>>, vector<32x32xbf16>,
    %c0_21 = arith.constant 0 : index
    %c0_22 = arith.constant 0 : index
    %c2 = arith.constant 2 : index
    %c0_23 = arith.constant 0 : index
    %12 = vector.load %arg5[%c0_21, %c0_22, %c2, %c0_23] : memref<2x6x6x32xf32, #tpu.memory_space<vmem>>, vector<2x4x4x32xf32>
    %13 = vector.shape_cast %12 : vector<2x4x4x32xf32> to vector<32x32xf32>
    %14 = arith.truncf %13 : vector<32x32xf32> to vector<32x32xbf16>
    %c0_24 = arith.constant 0 : index
    %c64 = arith.constant 64 : index
    %15 = vector.load %arg6[%c0_24, %c64] : memref<32x288xbf16, #tpu.memory_space<vmem>>, vector<32x32xbf16>
    tpu.vector_store %arg6[%c0_24, %c64], %14 {strides = array<i32>} : memref<32x288xbf16, #tpu.memory_space<vmem>>, vector<32x32xbf16>,
    %c0_25 = arith.constant 0 : index
    %c1_26 = arith.constant 1 : index
    %c0_27 = arith.constant 0 : index
    %c0_28 = arith.constant 0 : index
    %16 = vector.load %arg5[%c0_25, %c1_26, %c0_27, %c0_28] : memref<2x6x6x32xf32, #tpu.memory_space<vmem>>, vector<2x4x4x32xf32>
    %17 = vector.shape_cast %16 : vector<2x4x4x32xf32> to vector<32x32xf32>
    %18 = arith.truncf %17 : vector<32x32xf32> to vector<32x32xbf16>
    %c0_29 = arith.constant 0 : index
    %c96 = arith.constant 96 : index
    %19 = vector.load %arg6[%c0_29, %c96] : memref<32x288xbf16, #tpu.memory_space<vmem>>, vector<32x32xbf16>
    tpu.vector_store %arg6[%c0_29, %c96], %18 {strides = array<i32>} : memref<32x288xbf16, #tpu.memory_space<vmem>>, vector<32x32xbf16>,
    %c0_30 = arith.constant 0 : index
    %c1_31 = arith.constant 1 : index
    %c1_32 = arith.constant 1 : index
    %c0_33 = arith.constant 0 : index
    %20 = vector.load %arg5[%c0_30, %c1_31, %c1_32, %c0_33] : memref<2x6x6x32xf32, #tpu.memory_space<vmem>>, vector<2x4x4x32xf32>
    %21 = vector.shape_cast %20 : vector<2x4x4x32xf32> to vector<32x32xf32>
    %22 = arith.truncf %21 : vector<32x32xf32> to vector<32x32xbf16>
    %c0_34 = arith.constant 0 : index
    %c128 = arith.constant 128 : index
    %23 = vector.load %arg6[%c0_34, %c128] : memref<32x288xbf16, #tpu.memory_space<vmem>>, vector<32x32xbf16>
    tpu.vector_store %arg6[%c0_34, %c128], %22 {strides = array<i32>} : memref<32x288xbf16, #tpu.memory_space<vmem>>, vector<32x32xbf16>,
    %c0_35 = arith.constant 0 : index
    %c1_36 = arith.constant 1 : index
    %c2_37 = arith.constant 2 : index
    %c0_38 = arith.constant 0 : index
    %24 = vector.load %arg5[%c0_35, %c1_36, %c2_37, %c0_38] : memref<2x6x6x32xf32, #tpu.memory_space<vmem>>, vector<2x4x4x32xf32>
    %25 = vector.shape_cast %24 : vector<2x4x4x32xf32> to vector<32x32xf32>
    %26 = arith.truncf %25 : vector<32x32xf32> to vector<32x32xbf16>
    %c0_39 = arith.constant 0 : index
    %c160 = arith.constant 160 : index
    %27 = vector.load %arg6[%c0_39, %c160] : memref<32x288xbf16, #tpu.memory_space<vmem>>, vector<32x32xbf16>
    tpu.vector_store %arg6[%c0_39, %c160], %26 {strides = array<i32>} : memref<32x288xbf16, #tpu.memory_space<vmem>>, vector<32x32xbf16>,
    %c0_40 = arith.constant 0 : index
    %c2_41 = arith.constant 2 : index
    %c0_42 = arith.constant 0 : index
    %c0_43 = arith.constant 0 : index
    %28 = vector.load %arg5[%c0_40, %c2_41, %c0_42, %c0_43] : memref<2x6x6x32xf32, #tpu.memory_space<vmem>>, vector<2x4x4x32xf32>
    %29 = vector.shape_cast %28 : vector<2x4x4x32xf32> to vector<32x32xf32>
    %30 = arith.truncf %29 : vector<32x32xf32> to vector<32x32xbf16>
    %c0_44 = arith.constant 0 : index
    %c192 = arith.constant 192 : index
    %31 = vector.load %arg6[%c0_44, %c192] : memref<32x288xbf16, #tpu.memory_space<vmem>>, vector<32x32xbf16>
    tpu.vector_store %arg6[%c0_44, %c192], %30 {strides = array<i32>} : memref<32x288xbf16, #tpu.memory_space<vmem>>, vector<32x32xbf16>,
    %c0_45 = arith.constant 0 : index
    %c2_46 = arith.constant 2 : index
    %c1_47 = arith.constant 1 : index
    %c0_48 = arith.constant 0 : index
    %32 = vector.load %arg5[%c0_45, %c2_46, %c1_47, %c0_48] : memref<2x6x6x32xf32, #tpu.memory_space<vmem>>, vector<2x4x4x32xf32>
    %33 = vector.shape_cast %32 : vector<2x4x4x32xf32> to vector<32x32xf32>
    %34 = arith.truncf %33 : vector<32x32xf32> to vector<32x32xbf16>
    %c0_49 = arith.constant 0 : index
    %c224 = arith.constant 224 : index
    %35 = vector.load %arg6[%c0_49, %c224] : memref<32x288xbf16, #tpu.memory_space<vmem>>, vector<32x32xbf16>
    tpu.vector_store %arg6[%c0_49, %c224], %34 {strides = array<i32>} : memref<32x288xbf16, #tpu.memory_space<vmem>>, vector<32x32xbf16>,
    %c0_50 = arith.constant 0 : index
    %c2_51 = arith.constant 2 : index
    %c2_52 = arith.constant 2 : index
    %c0_53 = arith.constant 0 : index
    %36 = vector.load %arg5[%c0_50, %c2_51, %c2_52, %c0_53] : memref<2x6x6x32xf32, #tpu.memory_space<vmem>>, vector<2x4x4x32xf32>
    %37 = vector.shape_cast %36 : vector<2x4x4x32xf32> to vector<32x32xf32>
    %38 = arith.truncf %37 : vector<32x32xf32> to vector<32x32xbf16>
    %c0_54 = arith.constant 0 : index
    %c256 = arith.constant 256 : index
    %39 = vector.load %arg6[%c0_54, %c256] : memref<32x288xbf16, #tpu.memory_space<vmem>>, vector<32x32xbf16>
    tpu.vector_store %arg6[%c0_54, %c256], %38 {strides = array<i32>} : memref<32x288xbf16, #tpu.memory_space<vmem>>, vector<32x32xbf16>,
    %c0_55 = arith.constant 0 : index
    %c0_56 = arith.constant 0 : index
    %40 = vector.load %arg6[%c0_55, %c0_56] : memref<32x288xbf16, #tpu.memory_space<vmem>>, vector<32x288xbf16>
    %c0_57 = arith.constant 0 : index
    %c0_58 = arith.constant 0 : index
    %41 = vector.load %arg1[%c0_57, %c0_58] : memref<288x32xbf16, #tpu.memory_space<vmem>>, vector<288x32xbf16>
    %cst_59 = arith.constant dense<0.000000e+00> : vector<32x32xf32>
    %42 = tpu.matmul %40, %41, %cst_59 {dimension_numbers = #tpu.dot_dimension_numbers<[1], [0], [0], [1], [0, 0, 1, 1], [], []>} : vector<32x288xbf16>, vector<288x32xbf16>, vector<32x32xf32> -> vector<32x32xf32>
    %cst_60 = arith.constant dense<0.000000e+00> : vector<32xf32>
    %43 = vector.multi_reduction <add>, %42, %cst_60 [0] : vector<32x32xf32> to vector<32xf32>
    %44 = vector.shape_cast %43 : vector<32xf32> to vector<1x32xf32>
    %cst_61 = arith.constant 3.125000e-02 : f32
    %45 = vector.broadcast %cst_61 : f32 to vector<1x32xf32>
    %46 = arith.mulf %44, %45 : vector<1x32xf32>
    %47 = arith.mulf %42, %42 : vector<32x32xf32>
    %cst_62 = arith.constant dense<0.000000e+00> : vector<32xf32>
    %48 = vector.multi_reduction <add>, %47, %cst_62 [0] : vector<32x32xf32> to vector<32xf32>
    %49 = vector.shape_cast %48 : vector<32xf32> to vector<1x32xf32>
    %cst_63 = arith.constant 3.125000e-02 : f32
    %50 = vector.broadcast %cst_63 : f32 to vector<1x32xf32>
    %51 = arith.mulf %49, %50 : vector<1x32xf32>
    %52 = arith.mulf %46, %46 : vector<1x32xf32>
    %53 = arith.subf %51, %52 : vector<1x32xf32>
    %cst_64 = arith.constant 0.000000e+00 : f32
    %54 = vector.broadcast %cst_64 : f32 to vector<1x32xf32>
    %55 = arith.maximumf %53, %54 : vector<1x32xf32>
    %56 = vector.broadcast %46 : vector<1x32xf32> to vector<32x32xf32>
    %57 = arith.subf %42, %56 : vector<32x32xf32>
    %cst_65 = arith.constant 9.99999974E-6 : f32
    %58 = vector.broadcast %cst_65 : f32 to vector<1x32xf32>
    %59 = arith.addf %55, %58 : vector<1x32xf32>
    %60 = math.rsqrt %59 : vector<1x32xf32>
    %61 = vector.broadcast %60 : vector<1x32xf32> to vector<32x32xf32>
    %62 = arith.mulf %57, %61 : vector<32x32xf32>
    %c0_66 = arith.constant 0 : index
    %c0_67 = arith.constant 0 : index
    %63 = vector.load %arg2[%c0_66, %c0_67] : memref<1x32xf32, #tpu.memory_space<vmem>>, vector<1x32xf32>
    %64 = vector.broadcast %63 : vector<1x32xf32> to vector<32x32xf32>
    %65 = arith.mulf %62, %64 : vector<32x32xf32>
    %c0_68 = arith.constant 0 : index
    %c0_69 = arith.constant 0 : index
    %66 = vector.load %arg3[%c0_68, %c0_69] : memref<1x32xf32, #tpu.memory_space<vmem>>, vector<1x32xf32>
    %67 = vector.broadcast %66 : vector<1x32xf32> to vector<32x32xf32>
    %68 = arith.addf %65, %67 : vector<32x32xf32>
    %cst_70 = arith.constant 0.000000e+00 : f32
    %69 = vector.broadcast %cst_70 : f32 to vector<32x32xf32>
    %70 = arith.maximumf %68, %69 : vector<32x32xf32>
    %71 = vector.shape_cast %70 : vector<32x32xf32> to vector<2x4x2x2x32xf32>
    %72 = vector.extract_strided_slice %71 {offsets = [0, 0, 0, 0, 0], sizes = [2, 4, 2, 1, 32], strides = [1, 1, 1, 1, 1]} : vector<2x4x2x2x32xf32> to vector<2x4x2x1x32xf32>
    %73 = vector.shape_cast %72 : vector<2x4x2x1x32xf32> to vector<2x4x2x32xf32>
    %74 = vector.extract_strided_slice %71 {offsets = [0, 0, 0, 1, 0], sizes = [2, 4, 2, 1, 32], strides = [1, 1, 1, 1, 1]} : vector<2x4x2x2x32xf32> to vector<2x4x2x1x32xf32>
    %75 = vector.shape_cast %74 : vector<2x4x2x1x32xf32> to vector<2x4x2x32xf32>
    %76 = arith.addf %73, %75 : vector<2x4x2x32xf32>
    %77 = vector.shape_cast %76 : vector<2x4x2x32xf32> to vector<2x2x2x2x32xf32>
    %78 = vector.extract_strided_slice %77 {offsets = [0, 0, 0, 0, 0], sizes = [2, 2, 1, 2, 32], strides = [1, 1, 1, 1, 1]} : vector<2x2x2x2x32xf32> to vector<2x2x1x2x32xf32>
    %79 = vector.shape_cast %78 : vector<2x2x1x2x32xf32> to vector<2x2x2x32xf32>
    %80 = vector.extract_strided_slice %77 {offsets = [0, 0, 1, 0, 0], sizes = [2, 2, 1, 2, 32], strides = [1, 1, 1, 1, 1]} : vector<2x2x2x2x32xf32> to vector<2x2x1x2x32xf32>
    %81 = vector.shape_cast %80 : vector<2x2x1x2x32xf32> to vector<2x2x2x32xf32>
    %82 = arith.addf %79, %81 : vector<2x2x2x32xf32>
    %cst_71 = arith.constant 2.500000e-01 : f32
    %83 = vector.broadcast %cst_71 : f32 to vector<2x2x2x32xf32>
    %84 = arith.mulf %83, %82 : vector<2x2x2x32xf32>
    %85 = vector.shape_cast %84 : vector<2x2x2x32xf32> to vector<4x64xf32>
    %c0_72 = arith.constant 0 : index
    %c0_73 = arith.constant 0 : index
    %86 = vector.load %arg4[%c0_72, %c0_73] : memref<4x64xf32, #tpu.memory_space<vmem>>, vector<4x64xf32>
    tpu.vector_store %arg4[%c0_72, %c0_73], %85 {strides = array<i32>} : memref<4x64xf32, #tpu.memory_space<vmem>>, vector<4x64xf32>,
    return
  }
}

</mosaic_0001>

<llo_original>
// kernel: encoder_forward.5
$region0: #{encoder_forward.5}
  #allocation0 [shape = 'u32[]', space=smem, size = 0x4, offset = 0x4, fixed_abs, tag = 'smem constant byte address 0x4 - core index']
  #allocation1 [shape = 'u32[144,128]{1,0:T(1,128)}', space=vmem, size = 0x12000, scoped, tag = 'internal scratch']
  #allocation2 [shape = 'f32[2,6,6,32]{3,2,1,0:T(8,128)}', space=vmem, size = 0xc000, scoped, tag = 'scratch operand']
  #allocation3 [shape = 'bf16[32,288]{1,0:T(8,128)(2,1)}', space=vmem, size = 0x6000, scoped, tag = 'scratch operand']
  %s0 = inlined_call_operand.vmem [shape: f32[2,4,4,32], index: 0, kind: input, shape index: {}]
  %s1 = inlined_call_operand.vmem [shape: bf16[288,32], index: 1, kind: input, shape index: {}]
  %s2 = inlined_call_operand.vmem [shape: f32[1,32], index: 2, kind: input, shape index: {}]
  %s3 = inlined_call_operand.vmem [shape: f32[1,32], index: 3, kind: input, shape index: {}]
  %s4 = inlined_call_operand.vmem [shape: f32[4,64], index: 4, kind: output, shape index: {}]
  %s5 = sld [smem:[#allocation0]]
  $region26: #{encoder_forward.5} parent=0
    _
  %s7 = ssub.s32 1, %s5
  %s8 = scalar_select 0, %s7, %s5
  // Predicated region
  $region2: #{encoder_forward.5} parent=0 // pred_check
    _
  $region3: #{encoder_forward.5} parent=0 // pred_check_branch
    %10 = sbr.rel (0) target = $region5
  $region4: #{encoder_forward.5} parent=0 // pred_region
    _
  $region5: #{encoder_forward.5} parent=0 // pred_fallthru
    _
  // Predicated region
  $region6: #{encoder_forward.5} parent=0 // pred_check
    _
  $region7: #{encoder_forward.5} parent=0 // pred_check_branch
    %12 = sbr.rel (0) target = $region9
  $region8: #{encoder_forward.5} parent=0 // pred_region
    _
  $region9: #{encoder_forward.5} parent=0 // pred_fallthru
    _
  // Predicated region
  $region10: #{encoder_forward.5} parent=0 // pred_check
    _
  $region11: #{encoder_forward.5} parent=0 // pred_check_branch
    %14 = sbr.rel (0) target = $region13
  $region12: #{encoder_forward.5} parent=0 // pred_region
    _
  $region13: #{encoder_forward.5} parent=0 // pred_fallthru
    _
  // Predicated region
  $region14: #{encoder_forward.5} parent=0 // pred_check
    _
  $region15: #{encoder_forward.5} parent=0 // pred_check_branch
    %16 = sbr.rel (0) target = $region17
  $region16: #{encoder_forward.5} parent=0 // pred_region
    _
  $region17: #{encoder_forward.5} parent=0 // pred_fallthru
    _
  %vm18 = vcmask 259072
  %19 = vst.msk [vmem:[#allocation2] sm:$0x3f] %vm18, 0.0
  %20 = vst.msk [vmem:[#allocation2 + $0x8] sm:$0x3f] %vm18, 0.0
  %21 = vst.msk [vmem:[#allocation2 + $0x10] sm:$0x3f] %vm18, 0.0
  %22 = vst.msk [vmem:[#allocation2 + $0x18] sm:$0x3f] %vm18, 0.0
  %23 = vst.msk [vmem:[#allocation2 + $0x20] sm:$0x3f] %vm18, 0.0
  %24 = vst.msk [vmem:[#allocation2 + $0x28] sm:$0x3f] %vm18, 0.0
  %25 = vst.msk [vmem:[#allocation2 + $0x30] sm:$0x3f] %vm18, 0.0
  %26 = vst.msk [vmem:[#allocation2 + $0x38] sm:$0x3f] %vm18, 0.0
  %27 = vst.msk [vmem:[#allocation2 + $0x40] sm:$0x3f] %vm18, 0.0
  %28 = vst.msk [vmem:[#allocation2 + $0x48] sm:$0x3f] %vm18, 0.0
  %29 = vst.msk [vmem:[#allocation2 + $0x50] sm:$0x3f] %vm18, 0.0
  %30 = vst.msk [vmem:[#allocation2 + $0x58] sm:$0x3f] %vm18, 0.0
  %v31 = vld [vmem:[%s0] sm:$0xf]
  %v32 = vld [vmem:[%s0 + $0x4] sm:$0xf]
  %v33 = vld [vmem:[%s0 + $0x8] sm:$0xf]
  %v34 = vld [vmem:[%s0 + $0xc] sm:$0xf]
  %v35 = vld [vmem:[%s0 + $0x10] sm:$0xf]
  %v36 = vld [vmem:[%s0 + $0x14] sm:$0xf]
  %v37 = vld [vmem:[%s0 + $0x18] sm:$0xf]
  %v38 = vld [vmem:[%s0 + $0x1c] sm:$0xf]
  %s39 = scalar_lea.vmem [#allocation2], 8
  %vm40 = vcmask 257024
  %41 = vst.msk [vmem:[%s39 + $0x1] sm:$0xf] %vm40, %v31
  %42 = vst.msk [vmem:[%s39 + $0x9] sm:$0xf] %vm40, %v32
  %43 = vst.msk [vmem:[%s39 + $0x11] sm:$0xf] %vm40, %v33
  %44 = vst.msk [vmem:[%s39 + $0x19] sm:$0xf] %vm40, %v34
  %45 = vst.msk [vmem:[%s39 + $0x31] sm:$0xf] %vm40, %v35
  %46 = vst.msk [vmem:[%s39 + $0x39] sm:$0xf] %vm40, %v36
  %47 = vst.msk [vmem:[%s39 + $0x41] sm:$0xf] %vm40, %v37
  %48 = vst.msk [vmem:[%s39 + $0x49] sm:$0xf] %vm40, %v38
  %v49 = vld [vmem:[#allocation2] sm:$0xf]
  %v50 = vld [vmem:[#allocation2 + $0x8] sm:$0xf]
  %v51 = vld [vmem:[#allocation2 + $0x10] sm:$0xf]
  %v52 = vld [vmem:[#allocation2 + $0x18] sm:$0xf]
  %v53 = vld [vmem:[#allocation2 + $0x30] sm:$0xf]
  %v54 = vld [vmem:[#allocation2 + $0x38] sm:$0xf]
  %v55 = vld [vmem:[#allocation2 + $0x40] sm:$0xf]
  %v56 = vld [vmem:[#allocation2 + $0x48] sm:$0xf]
  %v65 = vcombine.low %v49, %v50
  %v66 = vcombine.low %v51, %v52
  %v67 = vcombine.low %v53, %v54
  %v68 = vcombine.low %v55, %v56
  %v73 = vpack.c.bf16 %v66, %v65
  %v74 = vpack.c.bf16 %v68, %v67
  %v77 = vunpack.c.l.b16 %v73
  %v78 = vunpack.c.h.b16 %v73
  %v79 = vunpack.c.l.b16 %v74
  %v80 = vunpack.c.h.b16 %v74
  %v81 = vpack.c.b16 %v77, %v77
  %v82 = vpack.c.b16 %v78, %v78
  %v83 = vpack.c.b16 %v79, %v79
  %v84 = vpack.c.b16 %v80, %v80
  %89 = vst.msk [vmem:[#allocation3] sm:$0xf] %vm40, %v81
  %90 = vst.msk [vmem:[#allocation3 + $0xc] sm:$0xf] %vm40, %v82
  %91 = vst.msk [vmem:[#allocation3 + $0x18] sm:$0xf] %vm40, %v83
  %92 = vst.msk [vmem:[#allocation3 + $0x24] sm:$0xf] %vm40, %v84
  %v93 = vld [vmem:[#allocation2 + $0x1] sm:$0xf]
  %v94 = vld [vmem:[#allocation2 + $0x9] sm:$0xf]
  %v95 = vld [vmem:[#allocation2 + $0x11] sm:$0xf]
  %v96 = vld [vmem:[#allocation2 + $0x19] sm:$0xf]
  %v97 = vld [vmem:[#allocation2 + $0x31] sm:$0xf]
  %v98 = vld [vmem:[#allocation2 + $0x39] sm:$0xf]
  %v99 = vld [vmem:[#allocation2 + $0x41] sm:$0xf]
  %v100 = vld [vmem:[#allocation2 + $0x49] sm:$0xf]
  %v109 = vcombine.low %v93, %v94
  %v110 = vcombine.low %v95, %v96
  %v111 = vcombine.low %v97, %v98
  %v112 = vcombine.low %v99, %v100
  %v117 = vpack.c.bf16 %v110, %v109
  %v118 = vpack.c.bf16 %v112, %v111
  %v121 = vunpack.c.l.b16 %v117
  %v122 = vunpack.c.h.b16 %v117
  %v123 = vunpack.c.l.b16 %v118
  %v124 = vunpack.c.h.b16 %v118
  %v125 = vpack.c.b16 %v121, %v121
  %v126 = vpack.c.b16 %v122, %v122
  %v127 = vpack.c.b16 %v123, %v123
  %v128 = vpack.c.b16 %v124, %v124
  %129 = vrot.lane.b32.xlu0 %v125, 32
  %v130 = vpop.permute.xlu0 %129
  %131 = vrot.lane.b32.xlu0 %v126, 32
  %v132 = vpop.permute.xlu0 %131
  %133 = vrot.lane.b32.xlu0 %v127, 32
  %v134 = vpop.permute.xlu0 %133
  %135 = vrot.lane.b32.xlu0 %v128, 32
  %v136 = vpop.permute.xlu0 %135
  %vm141 = vcmask 519424
  %142 = vst.msk [vmem:[#allocation3] sm:$0xf] %vm141, %v130
  %143 = vst.msk [vmem:[#allocation3 + $0xc] sm:$0xf] %vm141, %v132
  %144 = vst.msk [vmem:[#allocation3 + $0x18] sm:$0xf] %vm141, %v134
  %145 = vst.msk [vmem:[#allocation3 + $0x24] sm:$0xf] %vm141, %v136
  %v146 = vld [vmem:[#allocation2 + $0x2] sm:$0xf]
  %v147 = vld [vmem:[#allocation2 + $0xa] sm:$0xf]
  %v148 = vld [vmem:[#allocation2 + $0x12] sm:$0xf]
  %v149 = vld [vmem:[#allocation2 + $0x1a] sm:$0xf]
  %v150 = vld [vmem:[#allocation2 + $0x32] sm:$0xf]
  %v151 = vld [vmem:[#allocation2 + $0x3a] sm:$0xf]
  %v152 = vld [vmem:[#allocation2 + $0x42] sm:$0xf]
  %v153 = vld [vmem:[#allocation2 + $0x4a] sm:$0xf]
  %v162 = vcombine.low %v146, %v147
  %v163 = vcombine.low %v148, %v149
  %v164 = vcombine.low %v150, %v151
  %v165 = vcombine.low %v152, %v153
  %v170 = vpack.c.bf16 %v163, %v162
  %v171 = vpack.c.bf16 %v165, %v164
  %v174 = vunpack.c.l.b16 %v170
  %v175 = vunpack.c.h.b16 %v170
  %v176 = vunpack.c.l.b16 %v171
  %v177 = vunpack.c.h.b16 %v171
  %v178 = vpack.c.b16 %v174, %v174
  %v179 = vpack.c.b16 %v175, %v175
  %v180 = vpack.c.b16 %v176, %v176
  %v181 = vpack.c.b16 %v177, %v177
  %182 = vrot.lane.b32.xlu0 %v178, 64
  %v183 = vpop.permute.xlu0 %182
  %184 = vrot.lane.b32.xlu0 %v179, 64
  %v185 = vpop.permute.xlu0 %184
  %186 = vrot.lane.b32.xlu0 %v180, 64
  %v187 = vpop.permute.xlu0 %186
  %188 = vrot.lane.b32.xlu0 %v181, 64
  %v189 = vpop.permute.xlu0 %188
  %vm194 = vcmask 781824
  %195 = vst.msk [vmem:[#allocation3] sm:$0xf] %vm194, %v183
  %196 = vst.msk [vmem:[#allocation3 + $0xc] sm:$0xf] %vm194, %v185
  %197 = vst.msk [vmem:[#allocation3 + $0x18] sm:$0xf] %vm194, %v187
  %198 = vst.msk [vmem:[#allocation3 + $0x24] sm:$0xf] %vm194, %v189
  %v199 = vld [vmem:[%s39] sm:$0xf]
  %v200 = vld [vmem:[%s39 + $0x8] sm:$0xf]
  %v201 = vld [vmem:[%s39 + $0x10] sm:$0xf]
  %v202 = vld [vmem:[%s39 + $0x18] sm:$0xf]
  %v203 = vld [vmem:[%s39 + $0x30] sm:$0xf]
  %v204 = vld [vmem:[%s39 + $0x38] sm:$0xf]
  %v205 = vld [vmem:[%s39 + $0x40] sm:$0xf]
  %v206 = vld [vmem:[%s39 + $0x48] sm:$0xf]
  %v215 = vcombine.low %v199, %v200
  %v216 = vcombine.low %v201, %v202
  %v217 = vcombine.low %v203, %v204
  %v218 = vcombine.low %v205, %v206
  %v223 = vpack.c.bf16 %v216, %v215
  %v224 = vpack.c.bf16 %v218, %v217
  %v227 = vunpack.c.l.b16 %v223
  %v228 = vunpack.c.h.b16 %v223
  %v229 = vunpack.c.l.b16 %v224
  %v230 = vunpack.c.h.b16 %v224
  %v231 = vpack.c.b16 %v227, %v227
  %v232 = vpack.c.b16 %v228, %v228
  %v233 = vpack.c.b16 %v229, %v229
  %v234 = vpack.c.b16 %v230, %v230
  %235 = vrot.lane.b32.xlu0 %v231, 96
  %v236 = vpop.permute.xlu0 %235
  %237 = vrot.lane.b32.xlu0 %v232, 96
  %v238 = vpop.permute.xlu0 %237
  %239 = vrot.lane.b32.xlu0 %v233, 96
  %v240 = vpop.permute.xlu0 %239
  %241 = vrot.lane.b32.xlu0 %v234, 96
  %v242 = vpop.permute.xlu0 %241
  %vm247 = vcmask 1044224
  %248 = vst.msk [vmem:[#allocation3] sm:$0xf] %vm247, %v236
  %249 = vst.msk [vmem:[#allocation3 + $0xc] sm:$0xf] %vm247, %v238
  %250 = vst.msk [vmem:[#allocation3 + $0x18] sm:$0xf] %vm247, %v240
  %251 = vst.msk [vmem:[#allocation3 + $0x24] sm:$0xf] %vm247, %v242
  %v252 = vld [vmem:[%s39 + $0x1] sm:$0xf]
  %v253 = vld [vmem:[%s39 + $0x9] sm:$0xf]
  %v254 = vld [vmem:[%s39 + $0x11] sm:$0xf]
  %v255 = vld [vmem:[%s39 + $0x19] sm:$0xf]
  %v256 = vld [vmem:[%s39 + $0x31] sm:$0xf]
  %v257 = vld [vmem:[%s39 + $0x39] sm:$0xf]
  %v258 = vld [vmem:[%s39 + $0x41] sm:$0xf]
  %v259 = vld [vmem:[%s39 + $0x49] sm:$0xf]
  %v268 = vcombine.low %v252, %v253
  %v269 = vcombine.low %v254, %v255
  %v270 = vcombine.low %v256, %v257
  %v271 = vcombine.low %v258, %v259
  %v276 = vpack.c.bf16 %v269, %v268
  %v277 = vpack.c.bf16 %v271, %v270
  %v280 = vunpack.c.l.b16 %v276
  %v281 = vunpack.c.h.b16 %v276
  %v282 = vunpack.c.l.b16 %v277
  %v283 = vunpack.c.h.b16 %v277
  %v284 = vpack.c.b16 %v280, %v280
  %v285 = vpack.c.b16 %v281, %v281
  %v286 = vpack.c.b16 %v282, %v282
  %v287 = vpack.c.b16 %v283, %v283
  %292 = vst.msk [vmem:[#allocation3 + $0x4] sm:$0xf] %vm40, %v284
  %293 = vst.msk [vmem:[#allocation3 + $0x10] sm:$0xf] %vm40, %v285
  %294 = vst.msk [vmem:[#allocation3 + $0x1c] sm:$0xf] %vm40, %v286
  %295 = vst.msk [vmem:[#allocation3 + $0x28] sm:$0xf] %vm40, %v287
  %v296 = vld [vmem:[%s39 + $0x2] sm:$0xf]
  %v297 = vld [vmem:[%s39 + $0xa] sm:$0xf]
  %v298 = vld [vmem:[%s39 + $0x12] sm:$0xf]
  %v299 = vld [vmem:[%s39 + $0x1a] sm:$0xf]
  %v300 = vld [vmem:[%s39 + $0x32] sm:$0xf]
  %v301 = vld [vmem:[%s39 + $0x3a] sm:$0xf]
  %v302 = vld [vmem:[%s39 + $0x42] sm:$0xf]
  %v303 = vld [vmem:[%s39 + $0x4a] sm:$0xf]
  %v312 = vcombine.low %v296, %v297
  %v313 = vcombine.low %v298, %v299
  %v314 = vcombine.low %v300, %v301
  %v315 = vcombine.low %v302, %v303
  %v320 = vpack.c.bf16 %v313, %v312
  %v321 = vpack.c.bf16 %v315, %v314
  %v324 = vunpack.c.l.b16 %v320
  %v325 = vunpack.c.h.b16 %v320
  %v326 = vunpack.c.l.b16 %v321
  %v327 = vunpack.c.h.b16 %v321
  %v328 = vpack.c.b16 %v324, %v324
  %v329 = vpack.c.b16 %v325, %v325
  %v330 = vpack.c.b16 %v326, %v326
  %v331 = vpack.c.b16 %v327, %v327
  %332 = vrot.lane.b32.xlu0 %v328, 32
  %v333 = vpop.permute.xlu0 %332
  %334 = vrot.lane.b32.xlu0 %v329, 32
  %v335 = vpop.permute.xlu0 %334
  %336 = vrot.lane.b32.xlu0 %v330, 32
  %v337 = vpop.permute.xlu0 %336
  %338 = vrot.lane.b32.xlu0 %v331, 32
  %v339 = vpop.permute.xlu0 %338
  %344 = vst.msk [vmem:[#allocation3 + $0x4] sm:$0xf] %vm141, %v333
  %345 = vst.msk [vmem:[#allocation3 + $0x10] sm:$0xf] %vm141, %v335
  %346 = vst.msk [vmem:[#allocation3 + $0x1c] sm:$0xf] %vm141, %v337
  %347 = vst.msk [vmem:[#allocation3 + $0x28] sm:$0xf] %vm141, %v339
  %s348 = scalar_lea.vmem [#allocation2], 16
  %v349 = vld [vmem:[%s348] sm:$0xf]
  %v350 = vld [vmem:[%s348 + $0x8] sm:$0xf]
  %v351 = vld [vmem:[%s348 + $0x10] sm:$0xf]
  %v352 = vld [vmem:[%s348 + $0x18] sm:$0xf]
  %v353 = vld [vmem:[%s348 + $0x30] sm:$0xf]
  %v354 = vld [vmem:[%s348 + $0x38] sm:$0xf]
  %v355 = vld [vmem:[%s348 + $0x40] sm:$0xf]
  %v356 = vld [vmem:[%s348 + $0x48] sm:$0xf]
  %v365 = vcombine.low %v349, %v350
  %v366 = vcombine.low %v351, %v352
  %v367 = vcombine.low %v353, %v354
  %v368 = vcombine.low %v355, %v356
  %v373 = vpack.c.bf16 %v366, %v365
  %v374 = vpack.c.bf16 %v368, %v367
  %v377 = vunpack.c.l.b16 %v373
  %v378 = vunpack.c.h.b16 %v373
  %v379 = vunpack.c.l.b16 %v374
  %v380 = vunpack.c.h.b16 %v374
  %v381 = vpack.c.b16 %v377, %v377
  %v382 = vpack.c.b16 %v378, %v378
  %v383 = vpack.c.b16 %v379, %v379
  %v384 = vpack.c.b16 %v380, %v380
  %385 = vrot.lane.b32.xlu0 %v381, 64
  %v386 = vpop.permute.xlu0 %385
  %387 = vrot.lane.b32.xlu0 %v382, 64
  %v388 = vpop.permute.xlu0 %387
  %389 = vrot.lane.b32.xlu0 %v383, 64
  %v390 = vpop.permute.xlu0 %389
  %391 = vrot.lane.b32.xlu0 %v384, 64
  %v392 = vpop.permute.xlu0 %391
  %397 = vst.msk [vmem:[#allocation3 + $0x4] sm:$0xf] %vm194, %v386
  %398 = vst.msk [vmem:[#allocation3 + $0x10] sm:$0xf] %vm194, %v388
  %399 = vst.msk [vmem:[#allocation3 + $0x1c] sm:$0xf] %vm194, %v390
  %400 = vst.msk [vmem:[#allocation3 + $0x28] sm:$0xf] %vm194, %v392
  %v401 = vld [vmem:[%s348 + $0x1] sm:$0xf]
  %v402 = vld [vmem:[%s348 + $0x9] sm:$0xf]
  %v403 = vld [vmem:[%s348 + $0x11] sm:$0xf]
  %v404 = vld [vmem:[%s348 + $0x19] sm:$0xf]
  %v405 = vld [vmem:[%s348 + $0x31] sm:$0xf]
  %v406 = vld [vmem:[%s348 + $0x39] sm:$0xf]
  %v407 = vld [vmem:[%s348 + $0x41] sm:$0xf]
  %v408 = vld [vmem:[%s348 + $0x49] sm:$0xf]
  %v417 = vcombine.low %v401, %v402
  %v418 = vcombine.low %v403, %v404
  %v419 = vcombine.low %v405, %v406
  %v420 = vcombine.low %v407, %v408
  %v425 = vpack.c.bf16 %v418, %v417
  %v426 = vpack.c.bf16 %v420, %v419
  %v429 = vunpack.c.l.b16 %v425
  %v430 = vunpack.c.h.b16 %v425
  %v431 = vunpack.c.l.b16 %v426
  %v432 = vunpack.c.h.b16 %v426
  %v433 = vpack.c.b16 %v429, %v429
  %v434 = vpack.c.b16 %v430, %v430
  %v435 = vpack.c.b16 %v431, %v431
  %v436 = vpack.c.b16 %v432, %v432
  %437 = vrot.lane.b32.xlu0 %v433, 96
  %v438 = vpop.permute.xlu0 %437
  %439 = vrot.lane.b32.xlu0 %v434, 96
  %v440 = vpop.permute.xlu0 %439
  %441 = vrot.lane.b32.xlu0 %v435, 96
  %v442 = vpop.permute.xlu0 %441
  %443 = vrot.lane.b32.xlu0 %v436, 96
  %v444 = vpop.permute.xlu0 %443
  %449 = vst.msk [vmem:[#allocation3 + $0x4] sm:$0xf] %vm247, %v438
  %450 = vst.msk [vmem:[#allocation3 + $0x10] sm:$0xf] %vm247, %v440
  %451 = vst.msk [vmem:[#allocation3 + $0x1c] sm:$0xf] %vm247, %v442
  %452 = vst.msk [vmem:[#allocation3 + $0x28] sm:$0xf] %vm247, %v444
  %v453 = vld [vmem:[%s348 + $0x2] sm:$0xf]
  %v454 = vld [vmem:[%s348 + $0xa] sm:$0xf]
  %v455 = vld [vmem:[%s348 + $0x12] sm:$0xf]
  %v456 = vld [vmem:[%s348 + $0x1a] sm:$0xf]
  %v457 = vld [vmem:[%s348 + $0x32] sm:$0xf]
  %v458 = vld [vmem:[%s348 + $0x3a] sm:$0xf]
  %v459 = vld [vmem:[%s348 + $0x42] sm:$0xf]
  %v460 = vld [vmem:[%s348 + $0x4a] sm:$0xf]
  %v469 = vcombine.low %v453, %v454
  %v470 = vcombine.low %v455, %v456
  %v471 = vcombine.low %v457, %v458
  %v472 = vcombine.low %v459, %v460
  %v477 = vpack.c.bf16 %v470, %v469
  %v478 = vpack.c.bf16 %v472, %v471
  %v481 = vunpack.c.l.b16 %v477
  %v482 = vunpack.c.h.b16 %v477
  %v483 = vunpack.c.l.b16 %v478
  %v484 = vunpack.c.h.b16 %v478
  %v485 = vpack.c.b16 %v481, %v481
  %v486 = vpack.c.b16 %v482, %v482
  %v487 = vpack.c.b16 %v483, %v483
  %v488 = vpack.c.b16 %v484, %v484
  %493 = vst.msk [vmem:[#allocation3 + $0x8] sm:$0xf] %vm40, %v485
  %494 = vst.msk [vmem:[#allocation3 + $0x14] sm:$0xf] %vm40, %v486
  %495 = vst.msk [vmem:[#allocation3 + $0x20] sm:$0xf] %vm40, %v487
  %496 = vst.msk [vmem:[#allocation3 + $0x2c] sm:$0xf] %vm40, %v488
  %v497 = vld [vmem:[#allocation3] sm:$0xff]
  %v498 = vld [vmem:[#allocation3 + $0x8] sm:$0xf]
  %v499 = vld [vmem:[#allocation3 + $0xc] sm:$0xff]
  %v500 = vld [vmem:[#allocation3 + $0x14] sm:$0xf]
  %v501 = vld [vmem:[#allocation3 + $0x18] sm:$0xff]
  %v502 = vld [vmem:[#allocation3 + $0x20] sm:$0xf]
  %v503 = vld [vmem:[#allocation3 + $0x24] sm:$0xff]
  %v504 = vld [vmem:[#allocation3 + $0x2c] sm:$0xf]
  %v505 = vld [vmem:[%s1] sm:$0xf]
  %v506 = vld [vmem:[%s1 + $0x4] sm:$0xf]
  %v507 = vld [vmem:[%s1 + $0x8] sm:$0xf]
  %v508 = vld [vmem:[%s1 + $0xc] sm:$0xf]
  %v509 = vld [vmem:[%s1 + $0x10] sm:$0xf]
  %v510 = vld [vmem:[%s1 + $0x14] sm:$0xf]
  %v511 = vld [vmem:[%s1 + $0x18] sm:$0xf]
  %v512 = vld [vmem:[%s1 + $0x1c] sm:$0xf]
  %v513 = vld [vmem:[%s1 + $0x20] sm:$0xf]
  %v514 = vld [vmem:[%s1 + $0x24] sm:$0xf]
  %v515 = vld [vmem:[%s1 + $0x28] sm:$0xf]
  %v516 = vld [vmem:[%s1 + $0x2c] sm:$0xf]
  %v517 = vld [vmem:[%s1 + $0x30] sm:$0xf]
  %v518 = vld [vmem:[%s1 + $0x34] sm:$0xf]
  %v519 = vld [vmem:[%s1 + $0x38] sm:$0xf]
  %v520 = vld [vmem:[%s1 + $0x3c] sm:$0xf]
  %v521 = vld [vmem:[%s1 + $0x40] sm:$0xf]
  %v522 = vld [vmem:[%s1 + $0x44] sm:$0xf]
  %v523 = vld [vmem:[%s1 + $0x48] sm:$0xf]
  %v524 = vld [vmem:[%s1 + $0x4c] sm:$0xf]
  %v525 = vld [vmem:[%s1 + $0x50] sm:$0xf]
  %v526 = vld [vmem:[%s1 + $0x54] sm:$0xf]
  %v527 = vld [vmem:[%s1 + $0x58] sm:$0xf]
  %v528 = vld [vmem:[%s1 + $0x5c] sm:$0xf]
  %v529 = vld [vmem:[%s1 + $0x60] sm:$0xf]
  %v530 = vld [vmem:[%s1 + $0x64] sm:$0xf]
  %v531 = vld [vmem:[%s1 + $0x68] sm:$0xf]
  %v532 = vld [vmem:[%s1 + $0x6c] sm:$0xf]
  %v533 = vld [vmem:[%s1 + $0x70] sm:$0xf]
  %v534 = vld [vmem:[%s1 + $0x74] sm:$0xf]
  %v535 = vld [vmem:[%s1 + $0x78] sm:$0xf]
  %v536 = vld [vmem:[%s1 + $0x7c] sm:$0xf]
  %v537 = vld [vmem:[%s1 + $0x80] sm:$0xf]
  %v538 = vld [vmem:[%s1 + $0x84] sm:$0xf]
  %v539 = vld [vmem:[%s1 + $0x88] sm:$0xf]
  %v540 = vld [vmem:[%s1 + $0x8c] sm:$0xf]
  %v549 = vunpack.c.l.b16 %v497
  %v550 = vunpack.c.h.b16 %v497
  %v551 = vunpack.c.l.b16 %v498
  %v552 = vunpack.c.l.b16 %v499
  %v553 = vunpack.c.h.b16 %v499
  %v554 = vunpack.c.l.b16 %v500
  %v555 = vunpack.c.l.b16 %v501
  %v556 = vunpack.c.h.b16 %v501
  %v557 = vunpack.c.l.b16 %v502
  %v558 = vunpack.c.l.b16 %v503
  %v559 = vunpack.c.h.b16 %v503
  %v560 = vunpack.c.l.b16 %v504
  %v561 = vpack.c.b16 %v552, %v549
  %v562 = vpack.c.b16 %v553, %v550
  %v563 = vpack.c.b16 %v554, %v551
  %v564 = vpack.c.b16 %v558, %v555
  %v565 = vpack.c.b16 %v559, %v556
  %v566 = vpack.c.b16 %v560, %v557
  %v607 = vunpack.c.l.b16 %v505
  %v608 = vunpack.c.l.b16 %v506
  %v609 = vunpack.c.l.b16 %v507
  %v610 = vunpack.c.l.b16 %v508
  %v611 = vunpack.c.l.b16 %v509
  %v612 = vunpack.c.l.b16 %v510
  %v613 = vunpack.c.l.b16 %v511
  %v614 = vunpack.c.l.b16 %v512
  %v615 = vunpack.c.l.b16 %v513
  %v616 = vunpack.c.l.b16 %v514
  %v617 = vunpack.c.l.b16 %v515
  %v618 = vunpack.c.l.b16 %v516
  %v619 = vunpack.c.l.b16 %v517
  %v620 = vunpack.c.l.b16 %v518
  %v621 = vunpack.c.l.b16 %v519
  %v622 = vunpack.c.l.b16 %v520
  %v623 = vunpack.c.l.b16 %v521
  %v624 = vunpack.c.l.b16 %v522
  %v625 = vunpack.c.l.b16 %v523
  %v626 = vunpack.c.l.b16 %v524
  %v627 = vunpack.c.l.b16 %v525
  %v628 = vunpack.c.l.b16 %v526
  %v629 = vunpack.c.l.b16 %v527
  %v630 = vunpack.c.l.b16 %v528
  %v631 = vunpack.c.l.b16 %v529
  %v632 = vunpack.c.l.b16 %v530
  %v633 = vunpack.c.l.b16 %v531
  %v634 = vunpack.c.l.b16 %v532
  %v635 = vunpack.c.l.b16 %v533
  %v636 = vunpack.c.l.b16 %v534
  %v637 = vunpack.c.l.b16 %v535
  %v638 = vunpack.c.l.b16 %v536
  %v639 = vunpack.c.l.b16 %v537
  %v640 = vunpack.c.l.b16 %v538
  %v641 = vunpack.c.l.b16 %v539
  %v642 = vunpack.c.l.b16 %v540
  %v643 = vpack.c.b16 %v608, %v607
  %v644 = vpack.c.b16 %v610, %v609
  %v645 = vpack.c.b16 %v612, %v611
  %v646 = vpack.c.b16 %v614, %v613
  %v647 = vpack.c.b16 %v616, %v615
  %v648 = vpack.c.b16 %v618, %v617
  %v649 = vpack.c.b16 %v620, %v619
  %v650 = vpack.c.b16 %v622, %v621
  %v651 = vpack.c.b16 %v624, %v623
  %v652 = vpack.c.b16 %v626, %v625
  %v653 = vpack.c.b16 %v628, %v627
  %v654 = vpack.c.b16 %v630, %v629
  %v655 = vpack.c.b16 %v632, %v631
  %v656 = vpack.c.b16 %v634, %v633
  %v657 = vpack.c.b16 %v636, %v635
  %v658 = vpack.c.b16 %v638, %v637
  %v659 = vpack.c.b16 %v640, %v639
  %v660 = vpack.c.b16 %v642, %v641
  %vm679 = vcmask 261120
  %v681 = vsel %vm679, %v563, 0
  %v684 = vsel %vm679, %v566, 0
  %686 = vmatprep.subr.bf16.mxu0 0
  %687 = vmatpush1.bf16.msra.mxu0 %v650
  %688 = vmatprep.subr.bf16.mxu0 0
  %689 = vmatpush1.bf16.msra.mxu0 %v649
  %690 = vmatprep.subr.bf16.mxu0 0
  %691 = vmatpush1.bf16.msra.mxu0 %v648
  %692 = vmatprep.subr.bf16.mxu0 0
  %693 = vmatpush1.bf16.msra.mxu0 %v647
  %694 = vmatprep.subr.bf16.mxu0 0
  %695 = vmatpush1.bf16.msra.mxu0 %v646
  %696 = vmatprep.subr.bf16.mxu0 0
  %697 = vmatpush1.bf16.msra.mxu0 %v645
  %698 = vmatprep.subr.bf16.mxu0 0
  %699 = vmatpush1.bf16.msra.mxu0 %v644
  %700 = vmatprep.subr.bf16.mxu0 0
  %701 = vmatpush1.bf16.msra.mxu0 %v643
  %702 = vmatprep.subr.bf16.mxu0 0
  %703 = vmatpush2.bf16.msra.mxu0 %v658
  %704 = vmatprep.subr.bf16.mxu0 0
  %705 = vmatpush2.bf16.msra.mxu0 %v657
  %706 = vmatprep.subr.bf16.mxu0 0
  %707 = vmatpush2.bf16.msra.mxu0 %v656
  %708 = vmatprep.subr.bf16.mxu0 0
  %709 = vmatpush2.bf16.msra.mxu0 %v655
  %710 = vmatprep.subr.bf16.mxu0 0
  %711 = vmatpush2.bf16.msra.mxu0 %v654
  %712 = vmatprep.subr.bf16.mxu0 0
  %713 = vmatpush2.bf16.msra.mxu0 %v653
  %714 = vmatprep.subr.bf16.mxu0 0
  %715 = vmatpush2.bf16.msra.mxu0 %v652
  %716 = vmatprep.subr.bf16.mxu0 0
  %717 = vmatpush2.bf16.msra.mxu0 %v651
  %718 = vmatprep.mubr.bf16.mxu0 %v562
  %719 = vmatmul.mubr.bf16.gmra.mxu0 %v561
  %v720 = vpop.f32.mrf.mxu0
  %v721 = vadd.f32 0.0, %v720
  %v722 = vpop.f32.mrf.mxu0
  %v723 = vpop.f32.mrf.mxu0
  %v724 = vadd.f32 0.0, %v723
  %v725 = vpop.f32.mrf.mxu0
  %726 = vmatprep.mubr.bf16.mxu0 %v565
  %727 = vmatmul.mubr.bf16.gmra.mxu0 %v564
  %v728 = vpop.f32.mrf.mxu0
  %v729 = vadd.f32 0.0, %v728
  %v730 = vpop.f32.mrf.mxu0
  %v731 = vpop.f32.mrf.mxu0
  %v732 = vadd.f32 0.0, %v731
  %v733 = vpop.f32.mrf.mxu0
  %734 = vdwg.mxu0
  %735 = vmatprep.subr.bf16.mxu0 0
  %736 = vmatpush1.bf16.msra.mxu0 0
  %737 = vmatprep.subr.bf16.mxu0 0
  %738 = vmatpush1.bf16.msra.mxu0 0
  %739 = vmatprep.subr.bf16.mxu0 0
  %740 = vmatpush1.bf16.msra.mxu0 0
  %741 = vmatprep.subr.bf16.mxu0 0
  %742 = vmatpush1.bf16.msra.mxu0 0
  %743 = vmatprep.subr.bf16.mxu0 0
  %744 = vmatpush1.bf16.msra.mxu0 0
  %745 = vmatprep.subr.bf16.mxu0 0
  %746 = vmatpush1.bf16.msra.mxu0 0
  %747 = vmatprep.subr.bf16.mxu0 0
  %748 = vmatpush1.bf16.msra.mxu0 %v660
  %749 = vmatprep.subr.bf16.mxu0 0
  %750 = vmatpush1.bf16.msra.mxu0 %v659
  %751 = vmatprep.subr.bf16.mxu0 0
  %752 = vmatpush2.bf16.msra.mxu0 0
  %753 = vmatprep.subr.bf16.mxu0 0
  %754 = vmatpush2.bf16.msra.mxu0 0
  %755 = vmatprep.subr.bf16.mxu0 0
  %756 = vmatpush2.bf16.msra.mxu0 0
  %757 = vmatprep.subr.bf16.mxu0 0
  %758 = vmatpush2.bf16.msra.mxu0 0
  %759 = vmatprep.subr.bf16.mxu0 0
  %760 = vmatpush2.bf16.msra.mxu0 0
  %761 = vmatprep.subr.bf16.mxu0 0
  %762 = vmatpush2.bf16.msra.mxu0 0
  %763 = vmatprep.subr.bf16.mxu0 0
  %764 = vmatpush2.bf16.msra.mxu0 0
  %765 = vmatprep.subr.bf16.mxu0 0
  %766 = vmatpush2.bf16.msra.mxu0 0
  %767 = vmatprep.mubr.bf16.mxu0 0
  %768 = vmatmul.mubr.bf16.gmra.mxu0 %v681
  %v769 = vpop.f32.mrf.mxu0
  %v770 = vadd.f32 %v721, %v769
  %v771 = vpop.f32.mrf.mxu0
  %v772 = vpop.f32.mrf.mxu0
  %v773 = vadd.f32 %v724, %v772
  %v774 = vpop.f32.mrf.mxu0
  %775 = vmatprep.mubr.bf16.mxu0 0
  %776 = vmatmul.mubr.bf16.gmra.mxu0 %v684
  %v777 = vpop.f32.mrf.mxu0
  %v778 = vadd.f32 %v729, %v777
  %v779 = vpop.f32.mrf.mxu0
  %v780 = vpop.f32.mrf.mxu0
  %v781 = vadd.f32 %v732, %v780
  %v782 = vpop.f32.mrf.mxu0
  %783 = vdwg.mxu0
  %v784 = vsel %vm679, %v770, 0.0
  %v785 = vsel %vm679, %v773, 0.0
  %v786 = vadd.f32 %v784, %v785
  %v787 = vsel %vm679, %v778, 0.0
  %v788 = vadd.f32 %v786, %v787
  %v789 = vsel %vm679, %v781, 0.0
  %v790 = vadd.f32 %v788, %v789
  %v791 = vrot.slane %v790, 4
  %v792 = vadd.f32 %v790, %v791
  %v793 = vrot.slane %v792, 2
  %v794 = vadd.f32 %v792, %v793
  %v795 = vrot.slane %v794, 1
  %v796 = vadd.f32 %v794, %v795
  %v797 = vmul.f32 %v796, 0.03125
  %v798 = vmul.f32 %v770, %v770
  %v799 = vmul.f32 %v773, %v773
  %v800 = vmul.f32 %v778, %v778
  %v801 = vmul.f32 %v781, %v781
  %v802 = vsel %vm679, %v798, 0.0
  %v803 = vsel %vm679, %v799, 0.0
  %v804 = vadd.f32 %v802, %v803
  %v805 = vsel %vm679, %v800, 0.0
  %v806 = vadd.f32 %v804, %v805
  %v807 = vsel %vm679, %v801, 0.0
  %v808 = vadd.f32 %v806, %v807
  %v809 = vrot.slane %v808, 4
  %v810 = vadd.f32 %v808, %v809
  %v811 = vrot.slane %v810, 2
  %v812 = vadd.f32 %v810, %v811
  %v813 = vrot.slane %v812, 1
  %v814 = vadd.f32 %v812, %v813
  %v815 = vmul.f32 %v814, 0.03125
  %v816 = vmul.f32 %v797, %v797
  %v817 = vsub.f32 %v815, %v816
  %v818 = vmax.f32 %v817, 0.0
  %v819 = vsub.f32 %v770, %v797
  %v820 = vsub.f32 %v773, %v797
  %v821 = vsub.f32 %v778, %v797
  %v822 = vsub.f32 %v781, %v797
  %v823 = vadd.f32 %v818, 1e-05
  %v824 = vrsqrt.pop %v823
  %v825 = vmul.f32 %v819, %v824
  %v826 = vmul.f32 %v820, %v824
  %v827 = vmul.f32 %v821, %v824
  %v828 = vmul.f32 %v822, %v824
  %v829 = vld [vmem:[%s2] sm:$0x1]
  %v831 = vlaneseq
  %v832 = vshrl.u32 %v831, 7
  %v833 = vsub.s32 0, %v832
  %v834 = vrot.slane %v829, %v833
  %v836 = vmul.f32 %v825, %v834
  %v837 = vmul.f32 %v826, %v834
  %v838 = vmul.f32 %v827, %v834
  %v839 = vmul.f32 %v828, %v834
  %v840 = vld [vmem:[%s3] sm:$0x1]
  %v842 = vlaneseq
  %v843 = vshrl.u32 %v842, 7
  %v844 = vsub.s32 0, %v843
  %v845 = vrot.slane %v840, %v844
  %v847 = vadd.f32 %v836, %v845
  %v848 = vadd.f32 %v837, %v845
  %v849 = vadd.f32 %v838, %v845
  %v850 = vadd.f32 %v839, %v845
  %v851 = vmax.f32 %v847, 0.0
  %v852 = vmax.f32 %v848, 0.0
  %v853 = vmax.f32 %v849, 0.0
  %v854 = vmax.f32 %v850, 0.0
  %v859 = vcombine.high %v851, %v851
  %v861 = vunpack.c.l.s4 1983009808
  %v862 = vunpack.c.0.s8 %v861
  %v863 = vlaneseq
  %v864 = vshrl.u32 %v863, 7
  %v865 = vsub.s32 %v862, %v864
  %v866 = vrot.slane %v851, %v865
  %v868 = vunpack.c.l.s4 1983009808
  %v869 = vunpack.c.0.s8 %v868
  %v870 = vlaneseq
  %v871 = vshrl.u32 %v870, 7
  %v872 = vsub.s32 %v869, %v871
  %v873 = vrot.slane %v859, %v872
  %v874 = vcombine.high %v866, %v866
  %v875 = vcombine.high %v873, %v873
  %v876 = vcombine.high %v852, %v852
  %v878 = vunpack.c.l.s4 1983009808
  %v879 = vunpack.c.0.s8 %v878
  %v880 = vlaneseq
  %v881 = vshrl.u32 %v880, 7
  %v882 = vsub.s32 %v879, %v881
  %v883 = vrot.slane %v852, %v882
  %v885 = vunpack.c.l.s4 1983009808
  %v886 = vunpack.c.0.s8 %v885
  %v887 = vlaneseq
  %v888 = vshrl.u32 %v887, 7
  %v889 = vsub.s32 %v886, %v888
  %v890 = vrot.slane %v876, %v889
  %v891 = vcombine.high %v883, %v883
  %v892 = vcombine.high %v890, %v890
  %v893 = vcombine.high %v853, %v853
  %v895 = vunpack.c.l.s4 1983009808
  %v896 = vunpack.c.0.s8 %v895
  %v897 = vlaneseq
  %v898 = vshrl.u32 %v897, 7
  %v899 = vsub.s32 %v896, %v898
  %v900 = vrot.slane %v853, %v899
  %v902 = vunpack.c.l.s4 1983009808
  %v903 = vunpack.c.0.s8 %v902
  %v904 = vlaneseq
  %v905 = vshrl.u32 %v904, 7
  %v906 = vsub.s32 %v903, %v905
  %v907 = vrot.slane %v893, %v906
  %v908 = vcombine.high %v900, %v900
  %v909 = vcombine.high %v907, %v907
  %v910 = vcombine.high %v854, %v854
  %v912 = vunpack.c.l.s4 1983009808
  %v913 = vunpack.c.0.s8 %v912
  %v914 = vlaneseq
  %v915 = vshrl.u32 %v914, 7
  %v916 = vsub.s32 %v913, %v915
  %v917 = vrot.slane %v854, %v916
  %v919 = vunpack.c.l.s4 1983009808
  %v920 = vunpack.c.0.s8 %v919
  %v921 = vlaneseq
  %v922 = vshrl.u32 %v921, 7
  %v923 = vsub.s32 %v920, %v922
  %v924 = vrot.slane %v910, %v923
  %v925 = vcombine.high %v917, %v917
  %v926 = vcombine.high %v924, %v924
  %v943 = vrot.slane %v866, 7
  %v944 = vrot.slane %v943, 2
  %v945 = vrot.slane %v874, 7
  %v946 = vrot.slane %v945, 2
  %v947 = vrot.slane %v873, 7
  %v948 = vrot.slane %v947, 2
  %v949 = vrot.slane %v875, 7
  %v950 = vrot.slane %v949, 2
  %v951 = vrot.slane %v883, 7
  %v952 = vrot.slane %v951, 2
  %v953 = vrot.slane %v891, 7
  %v954 = vrot.slane %v953, 2
  %v955 = vrot.slane %v890, 7
  %v956 = vrot.slane %v955, 2
  %v957 = vrot.slane %v892, 7
  %v958 = vrot.slane %v957, 2
  %v959 = vrot.slane %v900, 7
  %v960 = vrot.slane %v959, 2
  %v961 = vrot.slane %v908, 7
  %v962 = vrot.slane %v961, 2
  %v963 = vrot.slane %v907, 7
  %v964 = vrot.slane %v963, 2
  %v965 = vrot.slane %v909, 7
  %v966 = vrot.slane %v965, 2
  %v967 = vrot.slane %v917, 7
  %v968 = vrot.slane %v967, 2
  %v969 = vrot.slane %v925, 7
  %v970 = vrot.slane %v969, 2
  %v971 = vrot.slane %v924, 7
  %v972 = vrot.slane %v971, 2
  %v973 = vrot.slane %v926, 7
  %v974 = vrot.slane %v973, 2
  %v991 = vadd.f32 %v866, %v944
  %v992 = vadd.f32 %v874, %v946
  %v993 = vadd.f32 %v873, %v948
  %v994 = vadd.f32 %v875, %v950
  %v995 = vadd.f32 %v883, %v952
  %v996 = vadd.f32 %v891, %v954
  %v997 = vadd.f32 %v890, %v956
  %v998 = vadd.f32 %v892, %v958
  %v999 = vadd.f32 %v900, %v960
  %v1000 = vadd.f32 %v908, %v962
  %v1001 = vadd.f32 %v907, %v964
  %v1002 = vadd.f32 %v909, %v966
  %v1003 = vadd.f32 %v917, %v968
  %v1004 = vadd.f32 %v925, %v970
  %v1005 = vadd.f32 %v924, %v972
  %v1006 = vadd.f32 %v926, %v974
  %v1007 = vadd.f32 %v991, %v993
  %v1008 = vadd.f32 %v992, %v994
  %v1009 = vadd.f32 %v995, %v997
  %v1010 = vadd.f32 %v996, %v998
  %v1011 = vadd.f32 %v999, %v1001
  %v1012 = vadd.f32 %v1000, %v1002
  %v1013 = vadd.f32 %v1003, %v1005
  %v1014 = vadd.f32 %v1004, %v1006
  %v1015 = vmul.f32 %v1007, 0.25
  %v1016 = vmul.f32 %v1008, 0.25
  %v1017 = vmul.f32 %v1009, 0.25
  %v1018 = vmul.f32 %v1010, 0.25
  %v1019 = vmul.f32 %v1011, 0.25
  %v1020 = vmul.f32 %v1012, 0.25
  %v1021 = vmul.f32 %v1013, 0.25
  %v1022 = vmul.f32 %v1014, 0.25
  %vm1031 = vcmask 1044484
  %v1032 = vsel %vm1031, %v1015, %v1015
  %vm1033 = vcmask 1046534
  %v1034 = vsel %vm1033, %v1015, %v1032
  %v1035 = vrot.slane %v1016, 7
  %vm1036 = vcmask 1041409
  %v1037 = vsel %vm1036, %v1035, %v1034
  %vm1038 = vcmask 1043459
  %v1039 = vsel %vm1038, %v1035, %v1037
  %vm1040 = vcmask 1045509
  %v1041 = vsel %vm1040, %v1035, %v1039
  %vm1042 = vcmask 1047559
  %v1043 = vsel %vm1042, %v1035, %v1041
  %v1044 = vsel %vm1031, %v1017, %v1017
  %v1045 = vsel %vm1033, %v1017, %v1044
  %v1046 = vrot.slane %v1018, 7
  %v1047 = vsel %vm1036, %v1046, %v1045
  %v1048 = vsel %vm1038, %v1046, %v1047
  %v1049 = vsel %vm1040, %v1046, %v1048
  %v1050 = vsel %vm1042, %v1046, %v1049
  %v1051 = vsel %vm1031, %v1019, %v1019
  %v1052 = vsel %vm1033, %v1019, %v1051
  %v1053 = vrot.slane %v1020, 7
  %v1054 = vsel %vm1036, %v1053, %v1052
  %v1055 = vsel %vm1038, %v1053, %v1054
  %v1056 = vsel %vm1040, %v1053, %v1055
  %v1057 = vsel %vm1042, %v1053, %v1056
  %v1058 = vsel %vm1031, %v1021, %v1021
  %v1059 = vsel %vm1033, %v1021, %v1058
  %v1060 = vrot.slane %v1022, 7
  %v1061 = vsel %vm1036, %v1060, %v1059
  %v1062 = vsel %vm1038, %v1060, %v1061
  %v1063 = vsel %vm1040, %v1060, %v1062
  %v1064 = vsel %vm1042, %v1060, %v1063
  %v1069 = vcombine.low %v1043, %v1050
  %v1071 = vunpack.c.l.s4 1934713408
  %v1072 = vunpack.c.0.s8 %v1071
  %v1073 = vlaneseq
  %v1074 = vshrl.u32 %v1073, 7
  %v1075 = vsub.s32 %v1072, %v1074
  %v1076 = vrot.slane %v1069, %v1075
  %v1077 = vcombine.high %v1076, 0.0
  %v1078 = vcombine.low %v1057, %v1064
  %v1080 = vunpack.c.l.s4 1934713408
  %v1081 = vunpack.c.0.s8 %v1080
  %v1082 = vlaneseq
  %v1083 = vshrl.u32 %v1082, 7
  %v1084 = vsub.s32 %v1081, %v1083
  %v1085 = vrot.slane %v1078, %v1084
  %v1086 = vcombine.high %v1085, 0.0
  %v1089 = vcombine.low %v1076, %v1085
  %v1091 = vunpack.c.l.s4 1983009808
  %v1092 = vunpack.c.0.s8 %v1091
  %v1093 = vlaneseq
  %v1094 = vshrl.u32 %v1093, 7
  %v1095 = vsub.s32 %v1092, %v1094
  %v1096 = vrot.slane %v1089, %v1095
  %v1100 = vcombine.low %v1077, %v1086
  %v1102 = vunpack.c.l.s4 1983009808
  %v1103 = vunpack.c.0.s8 %v1102
  %v1104 = vlaneseq
  %v1105 = vshrl.u32 %v1104, 7
  %v1106 = vsub.s32 %v1103, %v1105
  %v1107 = vrot.slane %v1100, %v1106
  %1108 = vrot.lane.b32.xlu0 %v1107, 32
  %v1109 = vpop.permute.xlu0 %1108
  %v1111 = vsel %vm679, %v1096, %v1109
  %vm1112 = vcmask 519168
  %1113 = vst.msk [vmem:[%s4] sm:$0xf] %vm1112, %v1111
  // Predicated region
  $region18: #{encoder_forward.5} parent=0 // pred_check
    _
  $region19: #{encoder_forward.5} parent=0 // pred_check_branch
    %1115 = sbr.rel (0) target = $region21
  $region20: #{encoder_forward.5} parent=0 // pred_region
    _
  $region21: #{encoder_forward.5} parent=0 // pred_fallthru
    _
  // Predicated region
  $region22: #{encoder_forward.5} parent=0 // pred_check
    _
  $region23: #{encoder_forward.5} parent=0 // pred_check_branch
    %1117 = sbr.rel (0) target = $region25
  $region24: #{encoder_forward.5} parent=0 // pred_region
    _
  $region25: #{encoder_forward.5} parent=0 // pred_fallthru
    _

// kernel: encoder_forward.4
$region0: #{encoder_forward.4}
  #allocation0 [shape = 'u32[]', space=smem, size = 0x4, offset = 0x4, fixed_abs, tag = 'smem constant byte address 0x4 - core index']
  #allocation1 [shape = 'u32[144,128]{1,0:T(1,128)}', space=vmem, size = 0x12000, scoped, tag = 'internal scratch']
  #allocation2 [shape = 'f32[2,10,10,16]{3,2,1,0:T(8,128)}', space=vmem, size = 0x28000, scoped, tag = 'scratch operand']
  #allocation3 [shape = 'bf16[128,144]{1,0:T(8,128)(2,1)}', space=vmem, size = 0x10000, scoped, tag = 'scratch operand']
  %s0 = inlined_call_operand.vmem [shape: f32[2,8,8,16], index: 0, kind: input, shape index: {}]
  %s1 = inlined_call_operand.vmem [shape: bf16[144,32], index: 1, kind: input, shape index: {}]
  %s2 = inlined_call_operand.vmem [shape: f32[1,32], index: 2, kind: input, shape index: {}]
  %s3 = inlined_call_operand.vmem [shape: f32[1,32], index: 3, kind: input, shape index: {}]
  %s4 = inlined_call_operand.vmem [shape: f32[8,128], index: 4, kind: output, shape index: {}]
  %s5 = sld [smem:[#allocation0]]
  $region26: #{encoder_forward.4} parent=0
    _
  %s7 = ssub.s32 1, %s5
  %s8 = scalar_select 0, %s7, %s5
  // Predicated region
  $region2: #{encoder_forward.4} parent=0 // pred_check
    _
  $region3: #{encoder_forward.4} parent=0 // pred_check_branch
    %10 = sbr.rel (0) target = $region5
  $region4: #{encoder_forward.4} parent=0 // pred_region
    _
  $region5: #{encoder_forward.4} parent=0 // pred_fallthru
    _
  // Predicated region
  $region6: #{encoder_forward.4} parent=0 // pred_check
    _
  $region7: #{encoder_forward.4} parent=0 // pred_check_branch
    %12 = sbr.rel (0) target = $region9
  $region8: #{encoder_forward.4} parent=0 // pred_region
    _
  $region9: #{encoder_forward.4} parent=0 // pred_fallthru
    _
  // Predicated region
  $region10: #{encoder_forward.4} parent=0 // pred_check
    _
  $region11: #{encoder_forward.4} parent=0 // pred_check_branch
    %14 = sbr.rel (0) target = $region13
  $region12: #{encoder_forward.4} parent=0 // pred_region
    _
  $region13: #{encoder_forward.4} parent=0 // pred_fallthru
    _
  // Predicated region
  $region14: #{encoder_forward.4} parent=0 // pred_check
    _
  $region15: #{encoder_forward.4} parent=0 // pred_check_branch
    %16 = sbr.rel (0) target = $region17
  $region16: #{encoder_forward.4} parent=0 // pred_region
    _
  $region17: #{encoder_forward.4} parent=0 // pred_fallthru
    _
  %vm18 = vcmask 130048
  %19 = vst.msk [vmem:[#allocation2] sm:$0xff] %vm18, 0.0
  %vm20 = vcmask 123904
  %21 = vst.msk [vmem:[#allocation2 + $0x8] sm:$0x3] %vm20, 0.0
  %22 = vst.msk [vmem:[#allocation2 + $0x10] sm:$0xff] %vm18, 0.0
  %23 = vst.msk [vmem:[#allocation2 + $0x18] sm:$0x3] %vm20, 0.0
  %24 = vst.msk [vmem:[#allocation2 + $0x20] sm:$0xff] %vm18, 0.0
  %25 = vst.msk [vmem:[#allocation2 + $0x28] sm:$0x3] %vm20, 0.0
  %26 = vst.msk [vmem:[#allocation2 + $0x30] sm:$0xff] %vm18, 0.0
  %27 = vst.msk [vmem:[#allocation2 + $0x38] sm:$0x3] %vm20, 0.0
  %28 = vst.msk [vmem:[#allocation2 + $0x40] sm:$0xff] %vm18, 0.0
  %29 = vst.msk [vmem:[#allocation2 + $0x48] sm:$0x3] %vm20, 0.0
  %30 = vst.msk [vmem:[#allocation2 + $0x50] sm:$0xff] %vm18, 0.0
  %31 = vst.msk [vmem:[#allocation2 + $0x58] sm:$0x3] %vm20, 0.0
  %32 = vst.msk [vmem:[#allocation2 + $0x60] sm:$0xff] %vm18, 0.0
  %33 = vst.msk [vmem:[#allocation2 + $0x68] sm:$0x3] %vm20, 0.0
  %34 = vst.msk [vmem:[#allocation2 + $0x70] sm:$0xff] %vm18, 0.0
  %35 = vst.msk [vmem:[#allocation2 + $0x78] sm:$0x3] %vm20, 0.0
  %36 = vst.msk [vmem:[#allocation2 + $0x80] sm:$0xff] %vm18, 0.0
  %37 = vst.msk [vmem:[#allocation2 + $0x88] sm:$0x3] %vm20, 0.0
  %38 = vst.msk [vmem:[#allocation2 + $0x90] sm:$0xff] %vm18, 0.0
  %39 = vst.msk [vmem:[#allocation2 + $0x98] sm:$0x3] %vm20, 0.0
  %40 = vst.msk [vmem:[#allocation2 + $0xa0] sm:$0xff] %vm18, 0.0
  %41 = vst.msk [vmem:[#allocation2 + $0xa8] sm:$0x3] %vm20, 0.0
  %42 = vst.msk [vmem:[#allocation2 + $0xb0] sm:$0xff] %vm18, 0.0
  %43 = vst.msk [vmem:[#allocation2 + $0xb8] sm:$0x3] %vm20, 0.0
  %44 = vst.msk [vmem:[#allocation2 + $0xc0] sm:$0xff] %vm18, 0.0
  %45 = vst.msk [vmem:[#allocation2 + $0xc8] sm:$0x3] %vm20, 0.0
  %46 = vst.msk [vmem:[#allocation2 + $0xd0] sm:$0xff] %vm18, 0.0
  %47 = vst.msk [vmem:[#allocation2 + $0xd8] sm:$0x3] %vm20, 0.0
  %48 = vst.msk [vmem:[#allocation2 + $0xe0] sm:$0xff] %vm18, 0.0
  %49 = vst.msk [vmem:[#allocation2 + $0xe8] sm:$0x3] %vm20, 0.0
  %50 = vst.msk [vmem:[#allocation2 + $0xf0] sm:$0xff] %vm18, 0.0
  %51 = vst.msk [vmem:[#allocation2 + $0xf8] sm:$0x3] %vm20, 0.0
  %52 = vst.msk [vmem:[#allocation2 + $0x100] sm:$0xff] %vm18, 0.0
  %53 = vst.msk [vmem:[#allocation2 + $0x108] sm:$0x3] %vm20, 0.0
  %54 = vst.msk [vmem:[#allocation2 + $0x110] sm:$0xff] %vm18, 0.0
  %55 = vst.msk [vmem:[#allocation2 + $0x118] sm:$0x3] %vm20, 0.0
  %56 = vst.msk [vmem:[#allocation2 + $0x120] sm:$0xff] %vm18, 0.0
  %57 = vst.msk [vmem:[#allocation2 + $0x128] sm:$0x3] %vm20, 0.0
  %58 = vst.msk [vmem:[#allocation2 + $0x130] sm:$0xff] %vm18, 0.0
  %59 = vst.msk [vmem:[#allocation2 + $0x138] sm:$0x3] %vm20, 0.0
  %v60 = vld [vmem:[%s0] sm:$0xff]
  %v61 = vld [vmem:[%s0 + $0x8] sm:$0xff]
  %v62 = vld [vmem:[%s0 + $0x10] sm:$0xff]
  %v63 = vld [vmem:[%s0 + $0x18] sm:$0xff]
  %v64 = vld [vmem:[%s0 + $0x20] sm:$0xff]
  %v65 = vld [vmem:[%s0 + $0x28] sm:$0xff]
  %v66 = vld [vmem:[%s0 + $0x30] sm:$0xff]
  %v67 = vld [vmem:[%s0 + $0x38] sm:$0xff]
  %v68 = vld [vmem:[%s0 + $0x40] sm:$0xff]
  %v69 = vld [vmem:[%s0 + $0x48] sm:$0xff]
  %v70 = vld [vmem:[%s0 + $0x50] sm:$0xff]
  %v71 = vld [vmem:[%s0 + $0x58] sm:$0xff]
  %v72 = vld [vmem:[%s0 + $0x60] sm:$0xff]
  %v73 = vld [vmem:[%s0 + $0x68] sm:$0xff]
  %v74 = vld [vmem:[%s0 + $0x70] sm:$0xff]
  %v75 = vld [vmem:[%s0 + $0x78] sm:$0xff]
  %s76 = scalar_lea.vmem [#allocation2], 16
  %77 = vst.msk [vmem:[%s76 + $0x1] sm:$0xff] %vm18, %v60
  %78 = vst.msk [vmem:[%s76 + $0x11] sm:$0xff] %vm18, %v61
  %79 = vst.msk [vmem:[%s76 + $0x21] sm:$0xff] %vm18, %v62
  %80 = vst.msk [vmem:[%s76 + $0x31] sm:$0xff] %vm18, %v63
  %81 = vst.msk [vmem:[%s76 + $0x41] sm:$0xff] %vm18, %v64
  %82 = vst.msk [vmem:[%s76 + $0x51] sm:$0xff] %vm18, %v65
  %83 = vst.msk [vmem:[%s76 + $0x61] sm:$0xff] %vm18, %v66
  %84 = vst.msk [vmem:[%s76 + $0x71] sm:$0xff] %vm18, %v67
  %85 = vst.msk [vmem:[%s76 + $0xa1] sm:$0xff] %vm18, %v68
  %86 = vst.msk [vmem:[%s76 + $0xb1] sm:$0xff] %vm18, %v69
  %87 = vst.msk [vmem:[%s76 + $0xc1] sm:$0xff] %vm18, %v70
  %88 = vst.msk [vmem:[%s76 + $0xd1] sm:$0xff] %vm18, %v71
  %89 = vst.msk [vmem:[%s76 + $0xe1] sm:$0xff] %vm18, %v72
  %90 = vst.msk [vmem:[%s76 + $0xf1] sm:$0xff] %vm18, %v73
  %91 = vst.msk [vmem:[%s76 + $0x101] sm:$0xff] %vm18, %v74
  %92 = vst.msk [vmem:[%s76 + $0x111] sm:$0xff] %vm18, %v75
  %v93 = vld [vmem:[#allocation2] sm:$0xff]
  %v94 = vld [vmem:[#allocation2 + $0x10] sm:$0xff]
  %v95 = vld [vmem:[#allocation2 + $0x20] sm:$0xff]
  %v96 = vld [vmem:[#allocation2 + $0x30] sm:$0xff]
  %v97 = vld [vmem:[#allocation2 + $0x40] sm:$0xff]
  %v98 = vld [vmem:[#allocation2 + $0x50] sm:$0xff]
  %v99 = vld [vmem:[#allocation2 + $0x60] sm:$0xff]
  %v100 = vld [vmem:[#allocation2 + $0x70] sm:$0xff]
  %v101 = vld [vmem:[#allocation2 + $0xa0] sm:$0xff]
  %v102 = vld [vmem:[#allocation2 + $0xb0] sm:$0xff]
  %v103 = vld [vmem:[#allocation2 + $0xc0] sm:$0xff]
  %v104 = vld [vmem:[#allocation2 + $0xd0] sm:$0xff]
  %v105 = vld [vmem:[#allocation2 + $0xe0] sm:$0xff]
  %v106 = vld [vmem:[#allocation2 + $0xf0] sm:$0xff]
  %v107 = vld [vmem:[#allocation2 + $0x100] sm:$0xff]
  %v108 = vld [vmem:[#allocation2 + $0x110] sm:$0xff]
  %v109 = vpack.c.bf16 %v94, %v93
  %v110 = vpack.c.bf16 %v96, %v95
  %v111 = vpack.c.bf16 %v98, %v97
  %v112 = vpack.c.bf16 %v100, %v99
  %v113 = vpack.c.bf16 %v102, %v101
  %v114 = vpack.c.bf16 %v104, %v103
  %v115 = vpack.c.bf16 %v106, %v105
  %v116 = vpack.c.bf16 %v108, %v107
  %v125 = vunpack.c.l.b16 %v109
  %v126 = vunpack.c.h.b16 %v109
  %v127 = vunpack.c.l.b16 %v110
  %v128 = vunpack.c.h.b16 %v110
  %v129 = vunpack.c.l.b16 %v111
  %v130 = vunpack.c.h.b16 %v111
  %v131 = vunpack.c.l.b16 %v112
  %v132 = vunpack.c.h.b16 %v112
  %v133 = vunpack.c.l.b16 %v113
  %v134 = vunpack.c.h.b16 %v113
  %v135 = vunpack.c.l.b16 %v114
  %v136 = vunpack.c.h.b16 %v114
  %v137 = vunpack.c.l.b16 %v115
  %v138 = vunpack.c.h.b16 %v115
  %v139 = vunpack.c.l.b16 %v116
  %v140 = vunpack.c.h.b16 %v116
  %v141 = vpack.c.b16 %v125, %v125
  %v142 = vpack.c.b16 %v126, %v126
  %v143 = vpack.c.b16 %v127, %v127
  %v144 = vpack.c.b16 %v128, %v128
  %v145 = vpack.c.b16 %v129, %v129
  %v146 = vpack.c.b16 %v130, %v130
  %v147 = vpack.c.b16 %v131, %v131
  %v148 = vpack.c.b16 %v132, %v132
  %v149 = vpack.c.b16 %v133, %v133
  %v150 = vpack.c.b16 %v134, %v134
  %v151 = vpack.c.b16 %v135, %v135
  %v152 = vpack.c.b16 %v136, %v136
  %v153 = vpack.c.b16 %v137, %v137
  %v154 = vpack.c.b16 %v138, %v138
  %v155 = vpack.c.b16 %v139, %v139
  %v156 = vpack.c.b16 %v140, %v140
  %vm173 = vcmask 125952
  %174 = vst.msk [vmem:[#allocation3] sm:$0xf] %vm173, %v141
  %175 = vst.msk [vmem:[#allocation3 + $0x8] sm:$0xf] %vm173, %v142
  %176 = vst.msk [vmem:[#allocation3 + $0x10] sm:$0xf] %vm173, %v143
  %177 = vst.msk [vmem:[#allocation3 + $0x18] sm:$0xf] %vm173, %v144
  %178 = vst.msk [vmem:[#allocation3 + $0x20] sm:$0xf] %vm173, %v145
  %179 = vst.msk [vmem:[#allocation3 + $0x28] sm:$0xf] %vm173, %v146
  %180 = vst.msk [vmem:[#allocation3 + $0x30] sm:$0xf] %vm173, %v147
  %181 = vst.msk [vmem:[#allocation3 + $0x38] sm:$0xf] %vm173, %v148
  %182 = vst.msk [vmem:[#allocation3 + $0x40] sm:$0xf] %vm173, %v149
  %183 = vst.msk [vmem:[#allocation3 + $0x48] sm:$0xf] %vm173, %v150
  %184 = vst.msk [vmem:[#allocation3 + $0x50] sm:$0xf] %vm173, %v151
  %185 = vst.msk [vmem:[#allocation3 + $0x58] sm:$0xf] %vm173, %v152
  %186 = vst.msk [vmem:[#allocation3 + $0x60] sm:$0xf] %vm173, %v153
  %187 = vst.msk [vmem:[#allocation3 + $0x68] sm:$0xf] %vm173, %v154
  %188 = vst.msk [vmem:[#allocation3 + $0x70] sm:$0xf] %vm173, %v155
  %189 = vst.msk [vmem:[#allocation3 + $0x78] sm:$0xf] %vm173, %v156
  %v190 = vld [vmem:[#allocation2 + $0x1] sm:$0xff]
  %v191 = vld [vmem:[#allocation2 + $0x11] sm:$0xff]
  %v192 = vld [vmem:[#allocation2 + $0x21] sm:$0xff]
  %v193 = vld [vmem:[#allocation2 + $0x31] sm:$0xff]
  %v194 = vld [vmem:[#allocation2 + $0x41] sm:$0xff]
  %v195 = vld [vmem:[#allocation2 + $0x51] sm:$0xff]
  %v196 = vld [vmem:[#allocation2 + $0x61] sm:$0xff]
  %v197 = vld [vmem:[#allocation2 + $0x71] sm:$0xff]
  %v198 = vld [vmem:[#allocation2 + $0xa1] sm:$0xff]
  %v199 = vld [vmem:[#allocation2 + $0xb1] sm:$0xff]
  %v200 = vld [vmem:[#allocation2 + $0xc1] sm:$0xff]
  %v201 = vld [vmem:[#allocation2 + $0xd1] sm:$0xff]
  %v202 = vld [vmem:[#allocation2 + $0xe1] sm:$0xff]
  %v203 = vld [vmem:[#allocation2 + $0xf1] sm:$0xff]
  %v204 = vld [vmem:[#allocation2 + $0x101] sm:$0xff]
  %v205 = vld [vmem:[#allocation2 + $0x111] sm:$0xff]
  %v206 = vpack.c.bf16 %v191, %v190
  %v207 = vpack.c.bf16 %v193, %v192
  %v208 = vpack.c.bf16 %v195, %v194
  %v209 = vpack.c.bf16 %v197, %v196
  %v210 = vpack.c.bf16 %v199, %v198
  %v211 = vpack.c.bf16 %v201, %v200
  %v212 = vpack.c.bf16 %v203, %v202
  %v213 = vpack.c.bf16 %v205, %v204
  %v222 = vunpack.c.l.b16 %v206
  %v223 = vunpack.c.h.b16 %v206
  %v224 = vunpack.c.l.b16 %v207
  %v225 = vunpack.c.h.b16 %v207
  %v226 = vunpack.c.l.b16 %v208
  %v227 = vunpack.c.h.b16 %v208
  %v228 = vunpack.c.l.b16 %v209
  %v229 = vunpack.c.h.b16 %v209
  %v230 = vunpack.c.l.b16 %v210
  %v231 = vunpack.c.h.b16 %v210
  %v232 = vunpack.c.l.b16 %v211
  %v233 = vunpack.c.h.b16 %v211
  %v234 = vunpack.c.l.b16 %v212
  %v235 = vunpack.c.h.b16 %v212
  %v236 = vunpack.c.l.b16 %v213
  %v237 = vunpack.c.h.b16 %v213
  %v238 = vpack.c.b16 %v222, %v222
  %v239 = vpack.c.b16 %v223, %v223
  %v240 = vpack.c.b16 %v224, %v224
  %v241 = vpack.c.b16 %v225, %v225
  %v242 = vpack.c.b16 %v226, %v226
  %v243 = vpack.c.b16 %v227, %v227
  %v244 = vpack.c.b16 %v228, %v228
  %v245 = vpack.c.b16 %v229, %v229
  %v246 = vpack.c.b16 %v230, %v230
  %v247 = vpack.c.b16 %v231, %v231
  %v248 = vpack.c.b16 %v232, %v232
  %v249 = vpack.c.b16 %v233, %v233
  %v250 = vpack.c.b16 %v234, %v234
  %v251 = vpack.c.b16 %v235, %v235
  %v252 = vpack.c.b16 %v236, %v236
  %v253 = vpack.c.b16 %v237, %v237
  %254 = vrot.lane.b32.xlu0 %v238, 16
  %v255 = vpop.permute.xlu0 %254
  %256 = vrot.lane.b32.xlu0 %v239, 16
  %v257 = vpop.permute.xlu0 %256
  %258 = vrot.lane.b32.xlu0 %v240, 16
  %v259 = vpop.permute.xlu0 %258
  %260 = vrot.lane.b32.xlu0 %v241, 16
  %v261 = vpop.permute.xlu0 %260
  %262 = vrot.lane.b32.xlu0 %v242, 16
  %v263 = vpop.permute.xlu0 %262
  %264 = vrot.lane.b32.xlu0 %v243, 16
  %v265 = vpop.permute.xlu0 %264
  %266 = vrot.lane.b32.xlu0 %v244, 16
  %v267 = vpop.permute.xlu0 %266
  %268 = vrot.lane.b32.xlu0 %v245, 16
  %v269 = vpop.permute.xlu0 %268
  %270 = vrot.lane.b32.xlu0 %v246, 16
  %v271 = vpop.permute.xlu0 %270
  %272 = vrot.lane.b32.xlu0 %v247, 16
  %v273 = vpop.permute.xlu0 %272
  %274 = vrot.lane.b32.xlu0 %v248, 16
  %v275 = vpop.permute.xlu0 %274
  %276 = vrot.lane.b32.xlu0 %v249, 16
  %v277 = vpop.permute.xlu0 %276
  %278 = vrot.lane.b32.xlu0 %v250, 16
  %v279 = vpop.permute.xlu0 %278
  %280 = vrot.lane.b32.xlu0 %v251, 16
  %v281 = vpop.permute.xlu0 %280
  %282 = vrot.lane.b32.xlu0 %v252, 16
  %v283 = vpop.permute.xlu0 %282
  %284 = vrot.lane.b32.xlu0 %v253, 16
  %v285 = vpop.permute.xlu0 %284
  %vm302 = vcmask 257152
  %303 = vst.msk [vmem:[#allocation3] sm:$0xf] %vm302, %v255
  %304 = vst.msk [vmem:[#allocation3 + $0x8] sm:$0xf] %vm302, %v257
  %305 = vst.msk [vmem:[#allocation3 + $0x10] sm:$0xf] %vm302, %v259
  %306 = vst.msk [vmem:[#allocation3 + $0x18] sm:$0xf] %vm302, %v261
  %307 = vst.msk [vmem:[#allocation3 + $0x20] sm:$0xf] %vm302, %v263
  %308 = vst.msk [vmem:[#allocation3 + $0x28] sm:$0xf] %vm302, %v265
  %309 = vst.msk [vmem:[#allocation3 + $0x30] sm:$0xf] %vm302, %v267
  %310 = vst.msk [vmem:[#allocation3 + $0x38] sm:$0xf] %vm302, %v269
  %311 = vst.msk [vmem:[#allocation3 + $0x40] sm:$0xf] %vm302, %v271
  %312 = vst.msk [vmem:[#allocation3 + $0x48] sm:$0xf] %vm302, %v273
  %313 = vst.msk [vmem:[#allocation3 + $0x50] sm:$0xf] %vm302, %v275
  %314 = vst.msk [vmem:[#allocation3 + $0x58] sm:$0xf] %vm302, %v277
  %315 = vst.msk [vmem:[#allocation3 + $0x60] sm:$0xf] %vm302, %v279
  %316 = vst.msk [vmem:[#allocation3 + $0x68] sm:$0xf] %vm302, %v281
  %317 = vst.msk [vmem:[#allocation3 + $0x70] sm:$0xf] %vm302, %v283
  %318 = vst.msk [vmem:[#allocation3 + $0x78] sm:$0xf] %vm302, %v285
  %v319 = vld [vmem:[#allocation2 + $0x2] sm:$0xff]
  %v320 = vld [vmem:[#allocation2 + $0x12] sm:$0xff]
  %v321 = vld [vmem:[#allocation2 + $0x22] sm:$0xff]
  %v322 = vld [vmem:[#allocation2 + $0x32] sm:$0xff]
  %v323 = vld [vmem:[#allocation2 + $0x42] sm:$0xff]
  %v324 = vld [vmem:[#allocation2 + $0x52] sm:$0xff]
  %v325 = vld [vmem:[#allocation2 + $0x62] sm:$0xff]
  %v326 = vld [vmem:[#allocation2 + $0x72] sm:$0xff]
  %v327 = vld [vmem:[#allocation2 + $0xa2] sm:$0xff]
  %v328 = vld [vmem:[#allocation2 + $0xb2] sm:$0xff]
  %v329 = vld [vmem:[#allocation2 + $0xc2] sm:$0xff]
  %v330 = vld [vmem:[#allocation2 + $0xd2] sm:$0xff]
  %v331 = vld [vmem:[#allocation2 + $0xe2] sm:$0xff]
  %v332 = vld [vmem:[#allocation2 + $0xf2] sm:$0xff]
  %v333 = vld [vmem:[#allocation2 + $0x102] sm:$0xff]
  %v334 = vld [vmem:[#allocation2 + $0x112] sm:$0xff]
  %v335 = vpack.c.bf16 %v320, %v319
  %v336 = vpack.c.bf16 %v322, %v321
  %v337 = vpack.c.bf16 %v324, %v323
  %v338 = vpack.c.bf16 %v326, %v325
  %v339 = vpack.c.bf16 %v328, %v327
  %v340 = vpack.c.bf16 %v330, %v329
  %v341 = vpack.c.bf16 %v332, %v331
  %v342 = vpack.c.bf16 %v334, %v333
  %v351 = vunpack.c.l.b16 %v335
  %v352 = vunpack.c.h.b16 %v335
  %v353 = vunpack.c.l.b16 %v336
  %v354 = vunpack.c.h.b16 %v336
  %v355 = vunpack.c.l.b16 %v337
  %v356 = vunpack.c.h.b16 %v337
  %v357 = vunpack.c.l.b16 %v338
  %v358 = vunpack.c.h.b16 %v338
  %v359 = vunpack.c.l.b16 %v339
  %v360 = vunpack.c.h.b16 %v339
  %v361 = vunpack.c.l.b16 %v340
  %v362 = vunpack.c.h.b16 %v340
  %v363 = vunpack.c.l.b16 %v341
  %v364 = vunpack.c.h.b16 %v341
  %v365 = vunpack.c.l.b16 %v342
  %v366 = vunpack.c.h.b16 %v342
  %v367 = vpack.c.b16 %v351, %v351
  %v368 = vpack.c.b16 %v352, %v352
  %v369 = vpack.c.b16 %v353, %v353
  %v370 = vpack.c.b16 %v354, %v354
  %v371 = vpack.c.b16 %v355, %v355
  %v372 = vpack.c.b16 %v356, %v356
  %v373 = vpack.c.b16 %v357, %v357
  %v374 = vpack.c.b16 %v358, %v358
  %v375 = vpack.c.b16 %v359, %v359
  %v376 = vpack.c.b16 %v360, %v360
  %v377 = vpack.c.b16 %v361, %v361
  %v378 = vpack.c.b16 %v362, %v362
  %v379 = vpack.c.b16 %v363, %v363
  %v380 = vpack.c.b16 %v364, %v364
  %v381 = vpack.c.b16 %v365, %v365
  %v382 = vpack.c.b16 %v366, %v366
  %383 = vrot.lane.b32.xlu0 %v367, 32
  %v384 = vpop.permute.xlu0 %383
  %385 = vrot.lane.b32.xlu0 %v368, 32
  %v386 = vpop.permute.xlu0 %385
  %387 = vrot.lane.b32.xlu0 %v369, 32
  %v388 = vpop.permute.xlu0 %387
  %389 = vrot.lane.b32.xlu0 %v370, 32
  %v390 = vpop.permute.xlu0 %389
  %391 = vrot.lane.b32.xlu0 %v371, 32
  %v392 = vpop.permute.xlu0 %391
  %393 = vrot.lane.b32.xlu0 %v372, 32
  %v394 = vpop.permute.xlu0 %393
  %395 = vrot.lane.b32.xlu0 %v373, 32
  %v396 = vpop.permute.xlu0 %395
  %397 = vrot.lane.b32.xlu0 %v374, 32
  %v398 = vpop.permute.xlu0 %397
  %399 = vrot.lane.b32.xlu0 %v375, 32
  %v400 = vpop.permute.xlu0 %399
  %401 = vrot.lane.b32.xlu0 %v376, 32
  %v402 = vpop.permute.xlu0 %401
  %403 = vrot.lane.b32.xlu0 %v377, 32
  %v404 = vpop.permute.xlu0 %403
  %405 = vrot.lane.b32.xlu0 %v378, 32
  %v406 = vpop.permute.xlu0 %405
  %407 = vrot.lane.b32.xlu0 %v379, 32
  %v408 = vpop.permute.xlu0 %407
  %409 = vrot.lane.b32.xlu0 %v380, 32
  %v410 = vpop.permute.xlu0 %409
  %411 = vrot.lane.b32.xlu0 %v381, 32
  %v412 = vpop.permute.xlu0 %411
  %413 = vrot.lane.b32.xlu0 %v382, 32
  %v414 = vpop.permute.xlu0 %413
  %vm431 = vcmask 388352
  %432 = vst.msk [vmem:[#allocation3] sm:$0xf] %vm431, %v384
  %433 = vst.msk [vmem:[#allocation3 + $0x8] sm:$0xf] %vm431, %v386
  %434 = vst.msk [vmem:[#allocation3 + $0x10] sm:$0xf] %vm431, %v388
  %435 = vst.msk [vmem:[#allocation3 + $0x18] sm:$0xf] %vm431, %v390
  %436 = vst.msk [vmem:[#allocation3 + $0x20] sm:$0xf] %vm431, %v392
  %437 = vst.msk [vmem:[#allocation3 + $0x28] sm:$0xf] %vm431, %v394
  %438 = vst.msk [vmem:[#allocation3 + $0x30] sm:$0xf] %vm431, %v396
  %439 = vst.msk [vmem:[#allocation3 + $0x38] sm:$0xf] %vm431, %v398
  %440 = vst.msk [vmem:[#allocation3 + $0x40] sm:$0xf] %vm431, %v400
  %441 = vst.msk [vmem:[#allocation3 + $0x48] sm:$0xf] %vm431, %v402
  %442 = vst.msk [vmem:[#allocation3 + $0x50] sm:$0xf] %vm431, %v404
  %443 = vst.msk [vmem:[#allocation3 + $0x58] sm:$0xf] %vm431, %v406
  %444 = vst.msk [vmem:[#allocation3 + $0x60] sm:$0xf] %vm431, %v408
  %445 = vst.msk [vmem:[#allocation3 + $0x68] sm:$0xf] %vm431, %v410
  %446 = vst.msk [vmem:[#allocation3 + $0x70] sm:$0xf] %vm431, %v412
  %447 = vst.msk [vmem:[#allocation3 + $0x78] sm:$0xf] %vm431, %v414
  %v448 = vld [vmem:[%s76] sm:$0xff]
  %v449 = vld [vmem:[%s76 + $0x10] sm:$0xff]
  %v450 = vld [vmem:[%s76 + $0x20] sm:$0xff]
  %v451 = vld [vmem:[%s76 + $0x30] sm:$0xff]
  %v452 = vld [vmem:[%s76 + $0x40] sm:$0xff]
  %v453 = vld [vmem:[%s76 + $0x50] sm:$0xff]
  %v454 = vld [vmem:[%s76 + $0x60] sm:$0xff]
  %v455 = vld [vmem:[%s76 + $0x70] sm:$0xff]
  %v456 = vld [vmem:[%s76 + $0xa0] sm:$0xff]
  %v457 = vld [vmem:[%s76 + $0xb0] sm:$0xff]
  %v458 = vld [vmem:[%s76 + $0xc0] sm:$0xff]
  %v459 = vld [vmem:[%s76 + $0xd0] sm:$0xff]
  %v460 = vld [vmem:[%s76 + $0xe0] sm:$0xff]
  %v461 = vld [vmem:[%s76 + $0xf0] sm:$0xff]
  %v462 = vld [vmem:[%s76 + $0x100] sm:$0xff]
  %v463 = vld [vmem:[%s76 + $0x110] sm:$0xff]
  %v464 = vpack.c.bf16 %v449, %v448
  %v465 = vpack.c.bf16 %v451, %v450
  %v466 = vpack.c.bf16 %v453, %v452
  %v467 = vpack.c.bf16 %v455, %v454
  %v468 = vpack.c.bf16 %v457, %v456
  %v469 = vpack.c.bf16 %v459, %v458
  %v470 = vpack.c.bf16 %v461, %v460
  %v471 = vpack.c.bf16 %v463, %v462
  %v480 = vunpack.c.l.b16 %v464
  %v481 = vunpack.c.h.b16 %v464
  %v482 = vunpack.c.l.b16 %v465
  %v483 = vunpack.c.h.b16 %v465
  %v484 = vunpack.c.l.b16 %v466
  %v485 = vunpack.c.h.b16 %v466
  %v486 = vunpack.c.l.b16 %v467
  %v487 = vunpack.c.h.b16 %v467
  %v488 = vunpack.c.l.b16 %v468
  %v489 = vunpack.c.h.b16 %v468
  %v490 = vunpack.c.l.b16 %v469
  %v491 = vunpack.c.h.b16 %v469
  %v492 = vunpack.c.l.b16 %v470
  %v493 = vunpack.c.h.b16 %v470
  %v494 = vunpack.c.l.b16 %v471
  %v495 = vunpack.c.h.b16 %v471
  %v496 = vpack.c.b16 %v480, %v480
  %v497 = vpack.c.b16 %v481, %v481
  %v498 = vpack.c.b16 %v482, %v482
  %v499 = vpack.c.b16 %v483, %v483
  %v500 = vpack.c.b16 %v484, %v484
  %v501 = vpack.c.b16 %v485, %v485
  %v502 = vpack.c.b16 %v486, %v486
  %v503 = vpack.c.b16 %v487, %v487
  %v504 = vpack.c.b16 %v488, %v488
  %v505 = vpack.c.b16 %v489, %v489
  %v506 = vpack.c.b16 %v490, %v490
  %v507 = vpack.c.b16 %v491, %v491
  %v508 = vpack.c.b16 %v492, %v492
  %v509 = vpack.c.b16 %v493, %v493
  %v510 = vpack.c.b16 %v494, %v494
  %v511 = vpack.c.b16 %v495, %v495
  %512 = vrot.lane.b32.xlu0 %v496, 48
  %v513 = vpop.permute.xlu0 %512
  %514 = vrot.lane.b32.xlu0 %v497, 48
  %v515 = vpop.permute.xlu0 %514
  %516 = vrot.lane.b32.xlu0 %v498, 48
  %v517 = vpop.permute.xlu0 %516
  %518 = vrot.lane.b32.xlu0 %v499, 48
  %v519 = vpop.permute.xlu0 %518
  %520 = vrot.lane.b32.xlu0 %v500, 48
  %v521 = vpop.permute.xlu0 %520
  %522 = vrot.lane.b32.xlu0 %v501, 48
  %v523 = vpop.permute.xlu0 %522
  %524 = vrot.lane.b32.xlu0 %v502, 48
  %v525 = vpop.permute.xlu0 %524
  %526 = vrot.lane.b32.xlu0 %v503, 48
  %v527 = vpop.permute.xlu0 %526
  %528 = vrot.lane.b32.xlu0 %v504, 48
  %v529 = vpop.permute.xlu0 %528
  %530 = vrot.lane.b32.xlu0 %v505, 48
  %v531 = vpop.permute.xlu0 %530
  %532 = vrot.lane.b32.xlu0 %v506, 48
  %v533 = vpop.permute.xlu0 %532
  %534 = vrot.lane.b32.xlu0 %v507, 48
  %v535 = vpop.permute.xlu0 %534
  %536 = vrot.lane.b32.xlu0 %v508, 48
  %v537 = vpop.permute.xlu0 %536
  %538 = vrot.lane.b32.xlu0 %v509, 48
  %v539 = vpop.permute.xlu0 %538
  %540 = vrot.lane.b32.xlu0 %v510, 48
  %v541 = vpop.permute.xlu0 %540
  %542 = vrot.lane.b32.xlu0 %v511, 48
  %v543 = vpop.permute.xlu0 %542
  %vm560 = vcmask 519552
  %561 = vst.msk [vmem:[#allocation3] sm:$0xf] %vm560, %v513
  %562 = vst.msk [vmem:[#allocation3 + $0x8] sm:$0xf] %vm560, %v515
  %563 = vst.msk [vmem:[#allocation3 + $0x10] sm:$0xf] %vm560, %v517
  %564 = vst.msk [vmem:[#allocation3 + $0x18] sm:$0xf] %vm560, %v519
  %565 = vst.msk [vmem:[#allocation3 + $0x20] sm:$0xf] %vm560, %v521
  %566 = vst.msk [vmem:[#allocation3 + $0x28] sm:$0xf] %vm560, %v523
  %567 = vst.msk [vmem:[#allocation3 + $0x30] sm:$0xf] %vm560, %v525
  %568 = vst.msk [vmem:[#allocation3 + $0x38] sm:$0xf] %vm560, %v527
  %569 = vst.msk [vmem:[#allocation3 + $0x40] sm:$0xf] %vm560, %v529
  %570 = vst.msk [vmem:[#allocation3 + $0x48] sm:$0xf] %vm560, %v531
  %571 = vst.msk [vmem:[#allocation3 + $0x50] sm:$0xf] %vm560, %v533
  %572 = vst.msk [vmem:[#allocation3 + $0x58] sm:$0xf] %vm560, %v535
  %573 = vst.msk [vmem:[#allocation3 + $0x60] sm:$0xf] %vm560, %v537
  %574 = vst.msk [vmem:[#allocation3 + $0x68] sm:$0xf] %vm560, %v539
  %575 = vst.msk [vmem:[#allocation3 + $0x70] sm:$0xf] %vm560, %v541
  %576 = vst.msk [vmem:[#allocation3 + $0x78] sm:$0xf] %vm560, %v543
  %v577 = vld [vmem:[%s76 + $0x1] sm:$0xff]
  %v578 = vld [vmem:[%s76 + $0x11] sm:$0xff]
  %v579 = vld [vmem:[%s76 + $0x21] sm:$0xff]
  %v580 = vld [vmem:[%s76 + $0x31] sm:$0xff]
  %v581 = vld [vmem:[%s76 + $0x41] sm:$0xff]
  %v582 = vld [vmem:[%s76 + $0x51] sm:$0xff]
  %v583 = vld [vmem:[%s76 + $0x61] sm:$0xff]
  %v584 = vld [vmem:[%s76 + $0x71] sm:$0xff]
  %v585 = vld [vmem:[%s76 + $0xa1] sm:$0xff]
  %v586 = vld [vmem:[%s76 + $0xb1] sm:$0xff]
  %v587 = vld [vmem:[%s76 + $0xc1] sm:$0xff]
  %v588 = vld [vmem:[%s76 + $0xd1] sm:$0xff]
  %v589 = vld [vmem:[%s76 + $0xe1] sm:$0xff]
  %v590 = vld [vmem:[%s76 + $0xf1] sm:$0xff]
  %v591 = vld [vmem:[%s76 + $0x101] sm:$0xff]
  %v592 = vld [vmem:[%s76 + $0x111] sm:$0xff]
  %v593 = vpack.c.bf16 %v578, %v577
  %v594 = vpack.c.bf16 %v580, %v579
  %v595 = vpack.c.bf16 %v582, %v581
  %v596 = vpack.c.bf16 %v584, %v583
  %v597 = vpack.c.bf16 %v586, %v585
  %v598 = vpack.c.bf16 %v588, %v587
  %v599 = vpack.c.bf16 %v590, %v589
  %v600 = vpack.c.bf16 %v592, %v591
  %v609 = vunpack.c.l.b16 %v593
  %v610 = vunpack.c.h.b16 %v593
  %v611 = vunpack.c.l.b16 %v594
  %v612 = vunpack.c.h.b16 %v594
  %v613 = vunpack.c.l.b16 %v595
  %v614 = vunpack.c.h.b16 %v595
  %v615 = vunpack.c.l.b16 %v596
  %v616 = vunpack.c.h.b16 %v596
  %v617 = vunpack.c.l.b16 %v597
  %v618 = vunpack.c.h.b16 %v597
  %v619 = vunpack.c.l.b16 %v598
  %v620 = vunpack.c.h.b16 %v598
  %v621 = vunpack.c.l.b16 %v599
  %v622 = vunpack.c.h.b16 %v599
  %v623 = vunpack.c.l.b16 %v600
  %v624 = vunpack.c.h.b16 %v600
  %v625 = vpack.c.b16 %v609, %v609
  %v626 = vpack.c.b16 %v610, %v610
  %v627 = vpack.c.b16 %v611, %v611
  %v628 = vpack.c.b16 %v612, %v612
  %v629 = vpack.c.b16 %v613, %v613
  %v630 = vpack.c.b16 %v614, %v614
  %v631 = vpack.c.b16 %v615, %v615
  %v632 = vpack.c.b16 %v616, %v616
  %v633 = vpack.c.b16 %v617, %v617
  %v634 = vpack.c.b16 %v618, %v618
  %v635 = vpack.c.b16 %v619, %v619
  %v636 = vpack.c.b16 %v620, %v620
  %v637 = vpack.c.b16 %v621, %v621
  %v638 = vpack.c.b16 %v622, %v622
  %v639 = vpack.c.b16 %v623, %v623
  %v640 = vpack.c.b16 %v624, %v624
  %641 = vrot.lane.b32.xlu0 %v625, 64
  %v642 = vpop.permute.xlu0 %641
  %643 = vrot.lane.b32.xlu0 %v626, 64
  %v644 = vpop.permute.xlu0 %643
  %645 = vrot.lane.b32.xlu0 %v627, 64
  %v646 = vpop.permute.xlu0 %645
  %647 = vrot.lane.b32.xlu0 %v628, 64
  %v648 = vpop.permute.xlu0 %647
  %649 = vrot.lane.b32.xlu0 %v629, 64
  %v650 = vpop.permute.xlu0 %649
  %651 = vrot.lane.b32.xlu0 %v630, 64
  %v652 = vpop.permute.xlu0 %651
  %653 = vrot.lane.b32.xlu0 %v631, 64
  %v654 = vpop.permute.xlu0 %653
  %655 = vrot.lane.b32.xlu0 %v632, 64
  %v656 = vpop.permute.xlu0 %655
  %657 = vrot.lane.b32.xlu0 %v633, 64
  %v658 = vpop.permute.xlu0 %657
  %659 = vrot.lane.b32.xlu0 %v634, 64
  %v660 = vpop.permute.xlu0 %659
  %661 = vrot.lane.b32.xlu0 %v635, 64
  %v662 = vpop.permute.xlu0 %661
  %663 = vrot.lane.b32.xlu0 %v636, 64
  %v664 = vpop.permute.xlu0 %663
  %665 = vrot.lane.b32.xlu0 %v637, 64
  %v666 = vpop.permute.xlu0 %665
  %667 = vrot.lane.b32.xlu0 %v638, 64
  %v668 = vpop.permute.xlu0 %667
  %669 = vrot.lane.b32.xlu0 %v639, 64
  %v670 = vpop.permute.xlu0 %669
  %671 = vrot.lane.b32.xlu0 %v640, 64
  %v672 = vpop.permute.xlu0 %671
  %vm689 = vcmask 650752
  %690 = vst.msk [vmem:[#allocation3] sm:$0xf] %vm689, %v642
  %691 = vst.msk [vmem:[#allocation3 + $0x8] sm:$0xf] %vm689, %v644
  %692 = vst.msk [vmem:[#allocation3 + $0x10] sm:$0xf] %vm689, %v646
  %693 = vst.msk [vmem:[#allocation3 + $0x18] sm:$0xf] %vm689, %v648
  %694 = vst.msk [vmem:[#allocation3 + $0x20] sm:$0xf] %vm689, %v650
  %695 = vst.msk [vmem:[#allocation3 + $0x28] sm:$0xf] %vm689, %v652
  %696 = vst.msk [vmem:[#allocation3 + $0x30] sm:$0xf] %vm689, %v654
  %697 = vst.msk [vmem:[#allocation3 + $0x38] sm:$0xf] %vm689, %v656
  %698 = vst.msk [vmem:[#allocation3 + $0x40] sm:$0xf] %vm689, %v658
  %699 = vst.msk [vmem:[#allocation3 + $0x48] sm:$0xf] %vm689, %v660
  %700 = vst.msk [vmem:[#allocation3 + $0x50] sm:$0xf] %vm689, %v662
  %701 = vst.msk [vmem:[#allocation3 + $0x58] sm:$0xf] %vm689, %v664
  %702 = vst.msk [vmem:[#allocation3 + $0x60] sm:$0xf] %vm689, %v666
  %703 = vst.msk [vmem:[#allocation3 + $0x68] sm:$0xf] %vm689, %v668
  %704 = vst.msk [vmem:[#allocation3 + $0x70] sm:$0xf] %vm689, %v670
  %705 = vst.msk [vmem:[#allocation3 + $0x78] sm:$0xf] %vm689, %v672
  %v706 = vld [vmem:[%s76 + $0x2] sm:$0xff]
  %v707 = vld [vmem:[%s76 + $0x12] sm:$0xff]
  %v708 = vld [vmem:[%s76 + $0x22] sm:$0xff]
  %v709 = vld [vmem:[%s76 + $0x32] sm:$0xff]
  %v710 = vld [vmem:[%s76 + $0x42] sm:$0xff]
  %v711 = vld [vmem:[%s76 + $0x52] sm:$0xff]
  %v712 = vld [vmem:[%s76 + $0x62] sm:$0xff]
  %v713 = vld [vmem:[%s76 + $0x72] sm:$0xff]
  %v714 = vld [vmem:[%s76 + $0xa2] sm:$0xff]
  %v715 = vld [vmem:[%s76 + $0xb2] sm:$0xff]
  %v716 = vld [vmem:[%s76 + $0xc2] sm:$0xff]
  %v717 = vld [vmem:[%s76 + $0xd2] sm:$0xff]
  %v718 = vld [vmem:[%s76 + $0xe2] sm:$0xff]
  %v719 = vld [vmem:[%s76 + $0xf2] sm:$0xff]
  %v720 = vld [vmem:[%s76 + $0x102] sm:$0xff]
  %v721 = vld [vmem:[%s76 + $0x112] sm:$0xff]
  %v722 = vpack.c.bf16 %v707, %v706
  %v723 = vpack.c.bf16 %v709, %v708
  %v724 = vpack.c.bf16 %v711, %v710
  %v725 = vpack.c.bf16 %v713, %v712
  %v726 = vpack.c.bf16 %v715, %v714
  %v727 = vpack.c.bf16 %v717, %v716
  %v728 = vpack.c.bf16 %v719, %v718
  %v729 = vpack.c.bf16 %v721, %v720
  %v738 = vunpack.c.l.b16 %v722
  %v739 = vunpack.c.h.b16 %v722
  %v740 = vunpack.c.l.b16 %v723
  %v741 = vunpack.c.h.b16 %v723
  %v742 = vunpack.c.l.b16 %v724
  %v743 = vunpack.c.h.b16 %v724
  %v744 = vunpack.c.l.b16 %v725
  %v745 = vunpack.c.h.b16 %v725
  %v746 = vunpack.c.l.b16 %v726
  %v747 = vunpack.c.h.b16 %v726
  %v748 = vunpack.c.l.b16 %v727
  %v749 = vunpack.c.h.b16 %v727
  %v750 = vunpack.c.l.b16 %v728
  %v751 = vunpack.c.h.b16 %v728
  %v752 = vunpack.c.l.b16 %v729
  %v753 = vunpack.c.h.b16 %v729
  %v754 = vpack.c.b16 %v738, %v738
  %v755 = vpack.c.b16 %v739, %v739
  %v756 = vpack.c.b16 %v740, %v740
  %v757 = vpack.c.b16 %v741, %v741
  %v758 = vpack.c.b16 %v742, %v742
  %v759 = vpack.c.b16 %v743, %v743
  %v760 = vpack.c.b16 %v744, %v744
  %v761 = vpack.c.b16 %v745, %v745
  %v762 = vpack.c.b16 %v746, %v746
  %v763 = vpack.c.b16 %v747, %v747
  %v764 = vpack.c.b16 %v748, %v748
  %v765 = vpack.c.b16 %v749, %v749
  %v766 = vpack.c.b16 %v750, %v750
  %v767 = vpack.c.b16 %v751, %v751
  %v768 = vpack.c.b16 %v752, %v752
  %v769 = vpack.c.b16 %v753, %v753
  %770 = vrot.lane.b32.xlu0 %v754, 80
  %v771 = vpop.permute.xlu0 %770
  %772 = vrot.lane.b32.xlu0 %v755, 80
  %v773 = vpop.permute.xlu0 %772
  %774 = vrot.lane.b32.xlu0 %v756, 80
  %v775 = vpop.permute.xlu0 %774
  %776 = vrot.lane.b32.xlu0 %v757, 80
  %v777 = vpop.permute.xlu0 %776
  %778 = vrot.lane.b32.xlu0 %v758, 80
  %v779 = vpop.permute.xlu0 %778
  %780 = vrot.lane.b32.xlu0 %v759, 80
  %v781 = vpop.permute.xlu0 %780
  %782 = vrot.lane.b32.xlu0 %v760, 80
  %v783 = vpop.permute.xlu0 %782
  %784 = vrot.lane.b32.xlu0 %v761, 80
  %v785 = vpop.permute.xlu0 %784
  %786 = vrot.lane.b32.xlu0 %v762, 80
  %v787 = vpop.permute.xlu0 %786
  %788 = vrot.lane.b32.xlu0 %v763, 80
  %v789 = vpop.permute.xlu0 %788
  %790 = vrot.lane.b32.xlu0 %v764, 80
  %v791 = vpop.permute.xlu0 %790
  %792 = vrot.lane.b32.xlu0 %v765, 80
  %v793 = vpop.permute.xlu0 %792
  %794 = vrot.lane.b32.xlu0 %v766, 80
  %v795 = vpop.permute.xlu0 %794
  %796 = vrot.lane.b32.xlu0 %v767, 80
  %v797 = vpop.permute.xlu0 %796
  %798 = vrot.lane.b32.xlu0 %v768, 80
  %v799 = vpop.permute.xlu0 %798
  %800 = vrot.lane.b32.xlu0 %v769, 80
  %v801 = vpop.permute.xlu0 %800
  %vm818 = vcmask 781952
  %819 = vst.msk [vmem:[#allocation3] sm:$0xf] %vm818, %v771
  %820 = vst.msk [vmem:[#allocation3 + $0x8] sm:$0xf] %vm818, %v773
  %821 = vst.msk [vmem:[#allocation3 + $0x10] sm:$0xf] %vm818, %v775
  %822 = vst.msk [vmem:[#allocation3 + $0x18] sm:$0xf] %vm818, %v777
  %823 = vst.msk [vmem:[#allocation3 + $0x20] sm:$0xf] %vm818, %v779
  %824 = vst.msk [vmem:[#allocation3 + $0x28] sm:$0xf] %vm818, %v781
  %825 = vst.msk [vmem:[#allocation3 + $0x30] sm:$0xf] %vm818, %v783
  %826 = vst.msk [vmem:[#allocation3 + $0x38] sm:$0xf] %vm818, %v785
  %827 = vst.msk [vmem:[#allocation3 + $0x40] sm:$0xf] %vm818, %v787
  %828 = vst.msk [vmem:[#allocation3 + $0x48] sm:$0xf] %vm818, %v789
  %829 = vst.msk [vmem:[#allocation3 + $0x50] sm:$0xf] %vm818, %v791
  %830 = vst.msk [vmem:[#allocation3 + $0x58] sm:$0xf] %vm818, %v793
  %831 = vst.msk [vmem:[#allocation3 + $0x60] sm:$0xf] %vm818, %v795
  %832 = vst.msk [vmem:[#allocation3 + $0x68] sm:$0xf] %vm818, %v797
  %833 = vst.msk [vmem:[#allocation3 + $0x70] sm:$0xf] %vm818, %v799
  %834 = vst.msk [vmem:[#allocation3 + $0x78] sm:$0xf] %vm818, %v801
  %s835 = scalar_lea.vmem [#allocation2], 32
  %v836 = vld [vmem:[%s835] sm:$0xff]
  %v837 = vld [vmem:[%s835 + $0x10] sm:$0xff]
  %v838 = vld [vmem:[%s835 + $0x20] sm:$0xff]
  %v839 = vld [vmem:[%s835 + $0x30] sm:$0xff]
  %v840 = vld [vmem:[%s835 + $0x40] sm:$0xff]
  %v841 = vld [vmem:[%s835 + $0x50] sm:$0xff]
  %v842 = vld [vmem:[%s835 + $0x60] sm:$0xff]
  %v843 = vld [vmem:[%s835 + $0x70] sm:$0xff]
  %v844 = vld [vmem:[%s835 + $0xa0] sm:$0xff]
  %v845 = vld [vmem:[%s835 + $0xb0] sm:$0xff]
  %v846 = vld [vmem:[%s835 + $0xc0] sm:$0xff]
  %v847 = vld [vmem:[%s835 + $0xd0] sm:$0xff]
  %v848 = vld [vmem:[%s835 + $0xe0] sm:$0xff]
  %v849 = vld [vmem:[%s835 + $0xf0] sm:$0xff]
  %v850 = vld [vmem:[%s835 + $0x100] sm:$0xff]
  %v851 = vld [vmem:[%s835 + $0x110] sm:$0xff]
  %v852 = vpack.c.bf16 %v837, %v836
  %v853 = vpack.c.bf16 %v839, %v838
  %v854 = vpack.c.bf16 %v841, %v840
  %v855 = vpack.c.bf16 %v843, %v842
  %v856 = vpack.c.bf16 %v845, %v844
  %v857 = vpack.c.bf16 %v847, %v846
  %v858 = vpack.c.bf16 %v849, %v848
  %v859 = vpack.c.bf16 %v851, %v850
  %v868 = vunpack.c.l.b16 %v852
  %v869 = vunpack.c.h.b16 %v852
  %v870 = vunpack.c.l.b16 %v853
  %v871 = vunpack.c.h.b16 %v853
  %v872 = vunpack.c.l.b16 %v854
  %v873 = vunpack.c.h.b16 %v854
  %v874 = vunpack.c.l.b16 %v855
  %v875 = vunpack.c.h.b16 %v855
  %v876 = vunpack.c.l.b16 %v856
  %v877 = vunpack.c.h.b16 %v856
  %v878 = vunpack.c.l.b16 %v857
  %v879 = vunpack.c.h.b16 %v857
  %v880 = vunpack.c.l.b16 %v858
  %v881 = vunpack.c.h.b16 %v858
  %v882 = vunpack.c.l.b16 %v859
  %v883 = vunpack.c.h.b16 %v859
  %v884 = vpack.c.b16 %v868, %v868
  %v885 = vpack.c.b16 %v869, %v869
  %v886 = vpack.c.b16 %v870, %v870
  %v887 = vpack.c.b16 %v871, %v871
  %v888 = vpack.c.b16 %v872, %v872
  %v889 = vpack.c.b16 %v873, %v873
  %v890 = vpack.c.b16 %v874, %v874
  %v891 = vpack.c.b16 %v875, %v875
  %v892 = vpack.c.b16 %v876, %v876
  %v893 = vpack.c.b16 %v877, %v877
  %v894 = vpack.c.b16 %v878, %v878
  %v895 = vpack.c.b16 %v879, %v879
  %v896 = vpack.c.b16 %v880, %v880
  %v897 = vpack.c.b16 %v881, %v881
  %v898 = vpack.c.b16 %v882, %v882
  %v899 = vpack.c.b16 %v883, %v883
  %900 = vrot.lane.b32.xlu0 %v884, 96
  %v901 = vpop.permute.xlu0 %900
  %902 = vrot.lane.b32.xlu0 %v885, 96
  %v903 = vpop.permute.xlu0 %902
  %904 = vrot.lane.b32.xlu0 %v886, 96
  %v905 = vpop.permute.xlu0 %904
  %906 = vrot.lane.b32.xlu0 %v887, 96
  %v907 = vpop.permute.xlu0 %906
  %908 = vrot.lane.b32.xlu0 %v888, 96
  %v909 = vpop.permute.xlu0 %908
  %910 = vrot.lane.b32.xlu0 %v889, 96
  %v911 = vpop.permute.xlu0 %910
  %912 = vrot.lane.b32.xlu0 %v890, 96
  %v913 = vpop.permute.xlu0 %912
  %914 = vrot.lane.b32.xlu0 %v891, 96
  %v915 = vpop.permute.xlu0 %914
  %916 = vrot.lane.b32.xlu0 %v892, 96
  %v917 = vpop.permute.xlu0 %916
  %918 = vrot.lane.b32.xlu0 %v893, 96
  %v919 = vpop.permute.xlu0 %918
  %920 = vrot.lane.b32.xlu0 %v894, 96
  %v921 = vpop.permute.xlu0 %920
  %922 = vrot.lane.b32.xlu0 %v895, 96
  %v923 = vpop.permute.xlu0 %922
  %924 = vrot.lane.b32.xlu0 %v896, 96
  %v925 = vpop.permute.xlu0 %924
  %926 = vrot.lane.b32.xlu0 %v897, 96
  %v927 = vpop.permute.xlu0 %926
  %928 = vrot.lane.b32.xlu0 %v898, 96
  %v929 = vpop.permute.xlu0 %928
  %930 = vrot.lane.b32.xlu0 %v899, 96
  %v931 = vpop.permute.xlu0 %930
  %vm948 = vcmask 913152
  %949 = vst.msk [vmem:[#allocation3] sm:$0xf] %vm948, %v901
  %950 = vst.msk [vmem:[#allocation3 + $0x8] sm:$0xf] %vm948, %v903
  %951 = vst.msk [vmem:[#allocation3 + $0x10] sm:$0xf] %vm948, %v905
  %952 = vst.msk [vmem:[#allocation3 + $0x18] sm:$0xf] %vm948, %v907
  %953 = vst.msk [vmem:[#allocation3 + $0x20] sm:$0xf] %vm948, %v909
  %954 = vst.msk [vmem:[#allocation3 + $0x28] sm:$0xf] %vm948, %v911
  %955 = vst.msk [vmem:[#allocation3 + $0x30] sm:$0xf] %vm948, %v913
  %956 = vst.msk [vmem:[#allocation3 + $0x38] sm:$0xf] %vm948, %v915
  %957 = vst.msk [vmem:[#allocation3 + $0x40] sm:$0xf] %vm948, %v917
  %958 = vst.msk [vmem:[#allocation3 + $0x48] sm:$0xf] %vm948, %v919
  %959 = vst.msk [vmem:[#allocation3 + $0x50] sm:$0xf] %vm948, %v921
  %960 = vst.msk [vmem:[#allocation3 + $0x58] sm:$0xf] %vm948, %v923
  %961 = vst.msk [vmem:[#allocation3 + $0x60] sm:$0xf] %vm948, %v925
  %962 = vst.msk [vmem:[#allocation3 + $0x68] sm:$0xf] %vm948, %v927
  %963 = vst.msk [vmem:[#allocation3 + $0x70] sm:$0xf] %vm948, %v929
  %964 = vst.msk [vmem:[#allocation3 + $0x78] sm:$0xf] %vm948, %v931
  %v965 = vld [vmem:[%s835 + $0x1] sm:$0xff]
  %v966 = vld [vmem:[%s835 + $0x11] sm:$0xff]
  %v967 = vld [vmem:[%s835 + $0x21] sm:$0xff]
  %v968 = vld [vmem:[%s835 + $0x31] sm:$0xff]
  %v969 = vld [vmem:[%s835 + $0x41] sm:$0xff]
  %v970 = vld [vmem:[%s835 + $0x51] sm:$0xff]
  %v971 = vld [vmem:[%s835 + $0x61] sm:$0xff]
  %v972 = vld [vmem:[%s835 + $0x71] sm:$0xff]
  %v973 = vld [vmem:[%s835 + $0xa1] sm:$0xff]
  %v974 = vld [vmem:[%s835 + $0xb1] sm:$0xff]
  %v975 = vld [vmem:[%s835 + $0xc1] sm:$0xff]
  %v976 = vld [vmem:[%s835 + $0xd1] sm:$0xff]
  %v977 = vld [vmem:[%s835 + $0xe1] sm:$0xff]
  %v978 = vld [vmem:[%s835 + $0xf1] sm:$0xff]
  %v979 = vld [vmem:[%s835 + $0x101] sm:$0xff]
  %v980 = vld [vmem:[%s835 + $0x111] sm:$0xff]
  %v981 = vpack.c.bf16 %v966, %v965
  %v982 = vpack.c.bf16 %v968, %v967
  %v983 = vpack.c.bf16 %v970, %v969
  %v984 = vpack.c.bf16 %v972, %v971
  %v985 = vpack.c.bf16 %v974, %v973
  %v986 = vpack.c.bf16 %v976, %v975
  %v987 = vpack.c.bf16 %v978, %v977
  %v988 = vpack.c.bf16 %v980, %v979
  %v997 = vunpack.c.l.b16 %v981
  %v998 = vunpack.c.h.b16 %v981
  %v999 = vunpack.c.l.b16 %v982
  %v1000 = vunpack.c.h.b16 %v982
  %v1001 = vunpack.c.l.b16 %v983
  %v1002 = vunpack.c.h.b16 %v983
  %v1003 = vunpack.c.l.b16 %v984
  %v1004 = vunpack.c.h.b16 %v984
  %v1005 = vunpack.c.l.b16 %v985
  %v1006 = vunpack.c.h.b16 %v985
  %v1007 = vunpack.c.l.b16 %v986
  %v1008 = vunpack.c.h.b16 %v986
  %v1009 = vunpack.c.l.b16 %v987
  %v1010 = vunpack.c.h.b16 %v987
  %v1011 = vunpack.c.l.b16 %v988
  %v1012 = vunpack.c.h.b16 %v988
  %v1013 = vpack.c.b16 %v997, %v997
  %v1014 = vpack.c.b16 %v998, %v998
  %v1015 = vpack.c.b16 %v999, %v999
  %v1016 = vpack.c.b16 %v1000, %v1000
  %v1017 = vpack.c.b16 %v1001, %v1001
  %v1018 = vpack.c.b16 %v1002, %v1002
  %v1019 = vpack.c.b16 %v1003, %v1003
  %v1020 = vpack.c.b16 %v1004, %v1004
  %v1021 = vpack.c.b16 %v1005, %v1005
  %v1022 = vpack.c.b16 %v1006, %v1006
  %v1023 = vpack.c.b16 %v1007, %v1007
  %v1024 = vpack.c.b16 %v1008, %v1008
  %v1025 = vpack.c.b16 %v1009, %v1009
  %v1026 = vpack.c.b16 %v1010, %v1010
  %v1027 = vpack.c.b16 %v1011, %v1011
  %v1028 = vpack.c.b16 %v1012, %v1012
  %1029 = vrot.lane.b32.xlu0 %v1013, 112
  %v1030 = vpop.permute.xlu0 %1029
  %1031 = vrot.lane.b32.xlu0 %v1014, 112
  %v1032 = vpop.permute.xlu0 %1031
  %1033 = vrot.lane.b32.xlu0 %v1015, 112
  %v1034 = vpop.permute.xlu0 %1033
  %1035 = vrot.lane.b32.xlu0 %v1016, 112
  %v1036 = vpop.permute.xlu0 %1035
  %1037 = vrot.lane.b32.xlu0 %v1017, 112
  %v1038 = vpop.permute.xlu0 %1037
  %1039 = vrot.lane.b32.xlu0 %v1018, 112
  %v1040 = vpop.permute.xlu0 %1039
  %1041 = vrot.lane.b32.xlu0 %v1019, 112
  %v1042 = vpop.permute.xlu0 %1041
  %1043 = vrot.lane.b32.xlu0 %v1020, 112
  %v1044 = vpop.permute.xlu0 %1043
  %1045 = vrot.lane.b32.xlu0 %v1021, 112
  %v1046 = vpop.permute.xlu0 %1045
  %1047 = vrot.lane.b32.xlu0 %v1022, 112
  %v1048 = vpop.permute.xlu0 %1047
  %1049 = vrot.lane.b32.xlu0 %v1023, 112
  %v1050 = vpop.permute.xlu0 %1049
  %1051 = vrot.lane.b32.xlu0 %v1024, 112
  %v1052 = vpop.permute.xlu0 %1051
  %1053 = vrot.lane.b32.xlu0 %v1025, 112
  %v1054 = vpop.permute.xlu0 %1053
  %1055 = vrot.lane.b32.xlu0 %v1026, 112
  %v1056 = vpop.permute.xlu0 %1055
  %1057 = vrot.lane.b32.xlu0 %v1027, 112
  %v1058 = vpop.permute.xlu0 %1057
  %1059 = vrot.lane.b32.xlu0 %v1028, 112
  %v1060 = vpop.permute.xlu0 %1059
  %vm1077 = vcmask 1044352
  %1078 = vst.msk [vmem:[#allocation3] sm:$0xf] %vm1077, %v1030
  %1079 = vst.msk [vmem:[#allocation3 + $0x8] sm:$0xf] %vm1077, %v1032
  %1080 = vst.msk [vmem:[#allocation3 + $0x10] sm:$0xf] %vm1077, %v1034
  %1081 = vst.msk [vmem:[#allocation3 + $0x18] sm:$0xf] %vm1077, %v1036
  %1082 = vst.msk [vmem:[#allocation3 + $0x20] sm:$0xf] %vm1077, %v1038
  %1083 = vst.msk [vmem:[#allocation3 + $0x28] sm:$0xf] %vm1077, %v1040
  %1084 = vst.msk [vmem:[#allocation3 + $0x30] sm:$0xf] %vm1077, %v1042
  %1085 = vst.msk [vmem:[#allocation3 + $0x38] sm:$0xf] %vm1077, %v1044
  %1086 = vst.msk [vmem:[#allocation3 + $0x40] sm:$0xf] %vm1077, %v1046
  %1087 = vst.msk [vmem:[#allocation3 + $0x48] sm:$0xf] %vm1077, %v1048
  %1088 = vst.msk [vmem:[#allocation3 + $0x50] sm:$0xf] %vm1077, %v1050
  %1089 = vst.msk [vmem:[#allocation3 + $0x58] sm:$0xf] %vm1077, %v1052
  %1090 = vst.msk [vmem:[#allocation3 + $0x60] sm:$0xf] %vm1077, %v1054
  %1091 = vst.msk [vmem:[#allocation3 + $0x68] sm:$0xf] %vm1077, %v1056
  %1092 = vst.msk [vmem:[#allocation3 + $0x70] sm:$0xf] %vm1077, %v1058
  %1093 = vst.msk [vmem:[#allocation3 + $0x78] sm:$0xf] %vm1077, %v1060
  %v1094 = vld [vmem:[%s835 + $0x2] sm:$0xff]
  %v1095 = vld [vmem:[%s835 + $0x12] sm:$0xff]
  %v1096 = vld [vmem:[%s835 + $0x22] sm:$0xff]
  %v1097 = vld [vmem:[%s835 + $0x32] sm:$0xff]
  %v1098 = vld [vmem:[%s835 + $0x42] sm:$0xff]
  %v1099 = vld [vmem:[%s835 + $0x52] sm:$0xff]
  %v1100 = vld [vmem:[%s835 + $0x62] sm:$0xff]
  %v1101 = vld [vmem:[%s835 + $0x72] sm:$0xff]
  %v1102 = vld [vmem:[%s835 + $0xa2] sm:$0xff]
  %v1103 = vld [vmem:[%s835 + $0xb2] sm:$0xff]
  %v1104 = vld [vmem:[%s835 + $0xc2] sm:$0xff]
  %v1105 = vld [vmem:[%s835 + $0xd2] sm:$0xff]
  %v1106 = vld [vmem:[%s835 + $0xe2] sm:$0xff]
  %v1107 = vld [vmem:[%s835 + $0xf2] sm:$0xff]
  %v1108 = vld [vmem:[%s835 + $0x102] sm:$0xff]
  %v1109 = vld [vmem:[%s835 + $0x112] sm:$0xff]
  %v1110 = vpack.c.bf16 %v1095, %v1094
  %v1111 = vpack.c.bf16 %v1097, %v1096
  %v1112 = vpack.c.bf16 %v1099, %v1098
  %v1113 = vpack.c.bf16 %v1101, %v1100
  %v1114 = vpack.c.bf16 %v1103, %v1102
  %v1115 = vpack.c.bf16 %v1105, %v1104
  %v1116 = vpack.c.bf16 %v1107, %v1106
  %v1117 = vpack.c.bf16 %v1109, %v1108
  %v1126 = vunpack.c.l.b16 %v1110
  %v1127 = vunpack.c.h.b16 %v1110
  %v1128 = vunpack.c.l.b16 %v1111
  %v1129 = vunpack.c.h.b16 %v1111
  %v1130 = vunpack.c.l.b16 %v1112
  %v1131 = vunpack.c.h.b16 %v1112
  %v1132 = vunpack.c.l.b16 %v1113
  %v1133 = vunpack.c.h.b16 %v1113
  %v1134 = vunpack.c.l.b16 %v1114
  %v1135 = vunpack.c.h.b16 %v1114
  %v1136 = vunpack.c.l.b16 %v1115
  %v1137 = vunpack.c.h.b16 %v1115
  %v1138 = vunpack.c.l.b16 %v1116
  %v1139 = vunpack.c.h.b16 %v1116
  %v1140 = vunpack.c.l.b16 %v1117
  %v1141 = vunpack.c.h.b16 %v1117
  %v1142 = vpack.c.b16 %v1126, %v1126
  %v1143 = vpack.c.b16 %v1127, %v1127
  %v1144 = vpack.c.b16 %v1128, %v1128
  %v1145 = vpack.c.b16 %v1129, %v1129
  %v1146 = vpack.c.b16 %v1130, %v1130
  %v1147 = vpack.c.b16 %v1131, %v1131
  %v1148 = vpack.c.b16 %v1132, %v1132
  %v1149 = vpack.c.b16 %v1133, %v1133
  %v1150 = vpack.c.b16 %v1134, %v1134
  %v1151 = vpack.c.b16 %v1135, %v1135
  %v1152 = vpack.c.b16 %v1136, %v1136
  %v1153 = vpack.c.b16 %v1137, %v1137
  %v1154 = vpack.c.b16 %v1138, %v1138
  %v1155 = vpack.c.b16 %v1139, %v1139
  %v1156 = vpack.c.b16 %v1140, %v1140
  %v1157 = vpack.c.b16 %v1141, %v1141
  %1174 = vst.msk [vmem:[#allocation3 + $0x4] sm:$0xf] %vm173, %v1142
  %1175 = vst.msk [vmem:[#allocation3 + $0xc] sm:$0xf] %vm173, %v1143
  %1176 = vst.msk [vmem:[#allocation3 + $0x14] sm:$0xf] %vm173, %v1144
  %1177 = vst.msk [vmem:[#allocation3 + $0x1c] sm:$0xf] %vm173, %v1145
  %1178 = vst.msk [vmem:[#allocation3 + $0x24] sm:$0xf] %vm173, %v1146
  %1179 = vst.msk [vmem:[#allocation3 + $0x2c] sm:$0xf] %vm173, %v1147
  %1180 = vst.msk [vmem:[#allocation3 + $0x34] sm:$0xf] %vm173, %v1148
  %1181 = vst.msk [vmem:[#allocation3 + $0x3c] sm:$0xf] %vm173, %v1149
  %1182 = vst.msk [vmem:[#allocation3 + $0x44] sm:$0xf] %vm173, %v1150
  %1183 = vst.msk [vmem:[#allocation3 + $0x4c] sm:$0xf] %vm173, %v1151
  %1184 = vst.msk [vmem:[#allocation3 + $0x54] sm:$0xf] %vm173, %v1152
  %1185 = vst.msk [vmem:[#allocation3 + $0x5c] sm:$0xf] %vm173, %v1153
  %1186 = vst.msk [vmem:[#allocation3 + $0x64] sm:$0xf] %vm173, %v1154
  %1187 = vst.msk [vmem:[#allocation3 + $0x6c] sm:$0xf] %vm173, %v1155
  %1188 = vst.msk [vmem:[#allocation3 + $0x74] sm:$0xf] %vm173, %v1156
  %1189 = vst.msk [vmem:[#allocation3 + $0x7c] sm:$0xf] %vm173, %v1157
  %v1190 = vld [vmem:[#allocation3] sm:$0xff]
  %v1191 = vld [vmem:[#allocation3 + $0x8] sm:$0xff]
  %v1192 = vld [vmem:[#allocation3 + $0x10] sm:$0xff]
  %v1193 = vld [vmem:[#allocation3 + $0x18] sm:$0xff]
  %v1194 = vld [vmem:[#allocation3 + $0x20] sm:$0xff]
  %v1195 = vld [vmem:[#allocation3 + $0x28] sm:$0xff]
  %v1196 = vld [vmem:[#allocation3 + $0x30] sm:$0xff]
  %v1197 = vld [vmem:[#allocation3 + $0x38] sm:$0xff]
  %v1198 = vld [vmem:[#allocation3 + $0x40] sm:$0xff]
  %v1199 = vld [vmem:[#allocation3 + $0x48] sm:$0xff]
  %v1200 = vld [vmem:[#allocation3 + $0x50] sm:$0xff]
  %v1201 = vld [vmem:[#allocation3 + $0x58] sm:$0xff]
  %v1202 = vld [vmem:[#allocation3 + $0x60] sm:$0xff]
  %v1203 = vld [vmem:[#allocation3 + $0x68] sm:$0xff]
  %v1204 = vld [vmem:[#allocation3 + $0x70] sm:$0xff]
  %v1205 = vld [vmem:[#allocation3 + $0x78] sm:$0xff]
  %v1206 = vld [vmem:[%s1] sm:$0xf]
  %v1207 = vld [vmem:[%s1 + $0x4] sm:$0xf]
  %v1208 = vld [vmem:[%s1 + $0x8] sm:$0xf]
  %v1209 = vld [vmem:[%s1 + $0xc] sm:$0xf]
  %v1210 = vld [vmem:[%s1 + $0x10] sm:$0xf]
  %v1211 = vld [vmem:[%s1 + $0x14] sm:$0xf]
  %v1212 = vld [vmem:[%s1 + $0x18] sm:$0xf]
  %v1213 = vld [vmem:[%s1 + $0x1c] sm:$0xf]
  %v1214 = vld [vmem:[%s1 + $0x20] sm:$0xf]
  %v1215 = vld [vmem:[%s1 + $0x24] sm:$0xf]
  %v1216 = vld [vmem:[%s1 + $0x28] sm:$0xf]
  %v1217 = vld [vmem:[%s1 + $0x2c] sm:$0xf]
  %v1218 = vld [vmem:[%s1 + $0x30] sm:$0xf]
  %v1219 = vld [vmem:[%s1 + $0x34] sm:$0xf]
  %v1220 = vld [vmem:[%s1 + $0x38] sm:$0xf]
  %v1221 = vld [vmem:[%s1 + $0x3c] sm:$0xf]
  %v1222 = vld [vmem:[%s1 + $0x40] sm:$0xf]
  %v1223 = vld [vmem:[%s1 + $0x44] sm:$0xf]
  %v1240 = vunpack.c.l.b16 %v1190
  %v1241 = vunpack.c.h.b16 %v1190
  %v1242 = vunpack.c.l.b16 %v1191
  %v1243 = vunpack.c.h.b16 %v1191
  %v1244 = vunpack.c.l.b16 %v1192
  %v1245 = vunpack.c.h.b16 %v1192
  %v1246 = vunpack.c.l.b16 %v1193
  %v1247 = vunpack.c.h.b16 %v1193
  %v1248 = vunpack.c.l.b16 %v1194
  %v1249 = vunpack.c.h.b16 %v1194
  %v1250 = vunpack.c.l.b16 %v1195
  %v1251 = vunpack.c.h.b16 %v1195
  %v1252 = vunpack.c.l.b16 %v1196
  %v1253 = vunpack.c.h.b16 %v1196
  %v1254 = vunpack.c.l.b16 %v1197
  %v1255 = vunpack.c.h.b16 %v1197
  %v1256 = vunpack.c.l.b16 %v1198
  %v1257 = vunpack.c.h.b16 %v1198
  %v1258 = vunpack.c.l.b16 %v1199
  %v1259 = vunpack.c.h.b16 %v1199
  %v1260 = vunpack.c.l.b16 %v1200
  %v1261 = vunpack.c.h.b16 %v1200
  %v1262 = vunpack.c.l.b16 %v1201
  %v1263 = vunpack.c.h.b16 %v1201
  %v1264 = vunpack.c.l.b16 %v1202
  %v1265 = vunpack.c.h.b16 %v1202
  %v1266 = vunpack.c.l.b16 %v1203
  %v1267 = vunpack.c.h.b16 %v1203
  %v1268 = vunpack.c.l.b16 %v1204
  %v1269 = vunpack.c.h.b16 %v1204
  %v1270 = vunpack.c.l.b16 %v1205
  %v1271 = vunpack.c.h.b16 %v1205
  %v1272 = vpack.c.b16 %v1242, %v1240
  %v1273 = vpack.c.b16 %v1243, %v1241
  %v1274 = vpack.c.b16 %v1246, %v1244
  %v1275 = vpack.c.b16 %v1247, %v1245
  %v1276 = vpack.c.b16 %v1250, %v1248
  %v1277 = vpack.c.b16 %v1251, %v1249
  %v1278 = vpack.c.b16 %v1254, %v1252
  %v1279 = vpack.c.b16 %v1255, %v1253
  %v1280 = vpack.c.b16 %v1258, %v1256
  %v1281 = vpack.c.b16 %v1259, %v1257
  %v1282 = vpack.c.b16 %v1262, %v1260
  %v1283 = vpack.c.b16 %v1263, %v1261
  %v1284 = vpack.c.b16 %v1266, %v1264
  %v1285 = vpack.c.b16 %v1267, %v1265
  %v1286 = vpack.c.b16 %v1270, %v1268
  %v1287 = vpack.c.b16 %v1271, %v1269
  %v1314 = vunpack.c.l.b16 %v1206
  %v1315 = vunpack.c.l.b16 %v1207
  %v1316 = vunpack.c.l.b16 %v1208
  %v1317 = vunpack.c.l.b16 %v1209
  %v1318 = vunpack.c.l.b16 %v1210
  %v1319 = vunpack.c.l.b16 %v1211
  %v1320 = vunpack.c.l.b16 %v1212
  %v1321 = vunpack.c.l.b16 %v1213
  %v1322 = vunpack.c.l.b16 %v1214
  %v1323 = vunpack.c.l.b16 %v1215
  %v1324 = vunpack.c.l.b16 %v1216
  %v1325 = vunpack.c.l.b16 %v1217
  %v1326 = vunpack.c.l.b16 %v1218
  %v1327 = vunpack.c.l.b16 %v1219
  %v1328 = vunpack.c.l.b16 %v1220
  %v1329 = vunpack.c.l.b16 %v1221
  %v1330 = vunpack.c.l.b16 %v1222
  %v1331 = vunpack.c.l.b16 %v1223
  %v1332 = vpack.c.b16 %v1315, %v1314
  %v1333 = vpack.c.b16 %v1317, %v1316
  %v1334 = vpack.c.b16 %v1319, %v1318
  %v1335 = vpack.c.b16 %v1321, %v1320
  %v1336 = vpack.c.b16 %v1323, %v1322
  %v1337 = vpack.c.b16 %v1325, %v1324
  %v1338 = vpack.c.b16 %v1327, %v1326
  %v1339 = vpack.c.b16 %v1329, %v1328
  %v1340 = vpack.c.b16 %v1331, %v1330
  %v1351 = vsel %vm18, %v1273, 0
  %v1354 = vsel %vm18, %v1275, 0
  %v1357 = vsel %vm18, %v1277, 0
  %v1360 = vsel %vm18, %v1279, 0
  %v1363 = vsel %vm18, %v1281, 0
  %v1366 = vsel %vm18, %v1283, 0
  %v1369 = vsel %vm18, %v1285, 0
  %v1372 = vsel %vm18, %v1287, 0
  %1374 = vmatprep.subr.bf16.mxu0 0
  %1375 = vmatpush1.bf16.msra.mxu0 %v1339
  %1376 = vmatprep.subr.bf16.mxu0 0
  %1377 = vmatpush1.bf16.msra.mxu0 %v1338
  %1378 = vmatprep.subr.bf16.mxu0 0
  %1379 = vmatpush1.bf16.msra.mxu0 %v1337
  %1380 = vmatprep.subr.bf16.mxu0 0
  %1381 = vmatpush1.bf16.msra.mxu0 %v1336
  %1382 = vmatprep.subr.bf16.mxu0 0
  %1383 = vmatpush1.bf16.msra.mxu0 %v1335
  %1384 = vmatprep.subr.bf16.mxu0 0
  %1385 = vmatpush1.bf16.msra.mxu0 %v1334
  %1386 = vmatprep.subr.bf16.mxu0 0
  %1387 = vmatpush1.bf16.msra.mxu0 %v1333
  %1388 = vmatprep.subr.bf16.mxu0 0
  %1389 = vmatpush1.bf16.msra.mxu0 %v1332
  %1390 = vmatprep.subr.bf16.mxu0 0
  %1391 = vmatpush2.bf16.msra.mxu0 0
  %1392 = vmatprep.subr.bf16.mxu0 0
  %1393 = vmatpush2.bf16.msra.mxu0 0
  %1394 = vmatprep.subr.bf16.mxu0 0
  %1395 = vmatpush2.bf16.msra.mxu0 0
  %1396 = vmatprep.subr.bf16.mxu0 0
  %1397 = vmatpush2.bf16.msra.mxu0 0
  %1398 = vmatprep.subr.bf16.mxu0 0
  %1399 = vmatpush2.bf16.msra.mxu0 0
  %1400 = vmatprep.subr.bf16.mxu0 0
  %1401 = vmatpush2.bf16.msra.mxu0 0
  %1402 = vmatprep.subr.bf16.mxu0 0
  %1403 = vmatpush2.bf16.msra.mxu0 0
  %1404 = vmatprep.subr.bf16.mxu0 0
  %1405 = vmatpush2.bf16.msra.mxu0 %v1340
  %1406 = vmatprep.mubr.bf16.mxu0 %v1351
  %1407 = vmatmul.mubr.bf16.gmra.mxu0 %v1272
  %v1408 = vpop.f32.mrf.mxu0
  %v1409 = vadd.f32 0.0, %v1408
  %v1410 = vpop.f32.mrf.mxu0
  %v1411 = vpop.f32.mrf.mxu0
  %v1412 = vadd.f32 0.0, %v1411
  %v1413 = vpop.f32.mrf.mxu0
  %1414 = vmatprep.mubr.bf16.mxu0 %v1354
  %1415 = vmatmul.mubr.bf16.gmra.mxu0 %v1274
  %v1416 = vpop.f32.mrf.mxu0
  %v1417 = vadd.f32 0.0, %v1416
  %v1418 = vpop.f32.mrf.mxu0
  %v1419 = vpop.f32.mrf.mxu0
  %v1420 = vadd.f32 0.0, %v1419
  %v1421 = vpop.f32.mrf.mxu0
  %1422 = vmatprep.mubr.bf16.mxu0 %v1357
  %1423 = vmatmul.mubr.bf16.gmra.mxu0 %v1276
  %v1424 = vpop.f32.mrf.mxu0
  %v1425 = vadd.f32 0.0, %v1424
  %v1426 = vpop.f32.mrf.mxu0
  %v1427 = vpop.f32.mrf.mxu0
  %v1428 = vadd.f32 0.0, %v1427
  %v1429 = vpop.f32.mrf.mxu0
  %1430 = vmatprep.mubr.bf16.mxu0 %v1360
  %1431 = vmatmul.mubr.bf16.gmra.mxu0 %v1278
  %v1432 = vpop.f32.mrf.mxu0
  %v1433 = vadd.f32 0.0, %v1432
  %v1434 = vpop.f32.mrf.mxu0
  %v1435 = vpop.f32.mrf.mxu0
  %v1436 = vadd.f32 0.0, %v1435
  %v1437 = vpop.f32.mrf.mxu0
  %1438 = vmatprep.mubr.bf16.mxu0 %v1363
  %1439 = vmatmul.mubr.bf16.gmra.mxu0 %v1280
  %v1440 = vpop.f32.mrf.mxu0
  %v1441 = vadd.f32 0.0, %v1440
  %v1442 = vpop.f32.mrf.mxu0
  %v1443 = vpop.f32.mrf.mxu0
  %v1444 = vadd.f32 0.0, %v1443
  %v1445 = vpop.f32.mrf.mxu0
  %1446 = vmatprep.mubr.bf16.mxu0 %v1366
  %1447 = vmatmul.mubr.bf16.gmra.mxu0 %v1282
  %v1448 = vpop.f32.mrf.mxu0
  %v1449 = vadd.f32 0.0, %v1448
  %v1450 = vpop.f32.mrf.mxu0
  %v1451 = vpop.f32.mrf.mxu0
  %v1452 = vadd.f32 0.0, %v1451
  %v1453 = vpop.f32.mrf.mxu0
  %1454 = vmatprep.mubr.bf16.mxu0 %v1369
  %1455 = vmatmul.mubr.bf16.gmra.mxu0 %v1284
  %v1456 = vpop.f32.mrf.mxu0
  %v1457 = vadd.f32 0.0, %v1456
  %v1458 = vpop.f32.mrf.mxu0
  %v1459 = vpop.f32.mrf.mxu0
  %v1460 = vadd.f32 0.0, %v1459
  %v1461 = vpop.f32.mrf.mxu0
  %1462 = vmatprep.mubr.bf16.mxu0 %v1372
  %1463 = vmatmul.mubr.bf16.gmra.mxu0 %v1286
  %v1464 = vpop.f32.mrf.mxu0
  %v1465 = vadd.f32 0.0, %v1464
  %v1466 = vpop.f32.mrf.mxu0
  %v1467 = vpop.f32.mrf.mxu0
  %v1468 = vadd.f32 0.0, %v1467
  %v1469 = vpop.f32.mrf.mxu0
  %1470 = vdwg.mxu0
  %vm1471 = vcmask 261120
  %v1472 = vsel %vm1471, %v1409, 0.0
  %v1473 = vsel %vm1471, %v1412, 0.0
  %v1474 = vadd.f32 %v1472, %v1473
  %v1475 = vsel %vm1471, %v1417, 0.0
  %v1476 = vadd.f32 %v1474, %v1475
  %v1477 = vsel %vm1471, %v1420, 0.0
  %v1478 = vadd.f32 %v1476, %v1477
  %v1479 = vsel %vm1471, %v1425, 0.0
  %v1480 = vadd.f32 %v1478, %v1479
  %v1481 = vsel %vm1471, %v1428, 0.0
  %v1482 = vadd.f32 %v1480, %v1481
  %v1483 = vsel %vm1471, %v1433, 0.0
  %v1484 = vadd.f32 %v1482, %v1483
  %v1485 = vsel %vm1471, %v1436, 0.0
  %v1486 = vadd.f32 %v1484, %v1485
  %v1487 = vsel %vm1471, %v1441, 0.0
  %v1488 = vadd.f32 %v1486, %v1487
  %v1489 = vsel %vm1471, %v1444, 0.0
  %v1490 = vadd.f32 %v1488, %v1489
  %v1491 = vsel %vm1471, %v1449, 0.0
  %v1492 = vadd.f32 %v1490, %v1491
  %v1493 = vsel %vm1471, %v1452, 0.0
  %v1494 = vadd.f32 %v1492, %v1493
  %v1495 = vsel %vm1471, %v1457, 0.0
  %v1496 = vadd.f32 %v1494, %v1495
  %v1497 = vsel %vm1471, %v1460, 0.0
  %v1498 = vadd.f32 %v1496, %v1497
  %v1499 = vsel %vm1471, %v1465, 0.0
  %v1500 = vadd.f32 %v1498, %v1499
  %v1501 = vsel %vm1471, %v1468, 0.0
  %v1502 = vadd.f32 %v1500, %v1501
  %v1503 = vrot.slane %v1502, 4
  %v1504 = vadd.f32 %v1502, %v1503
  %v1505 = vrot.slane %v1504, 2
  %v1506 = vadd.f32 %v1504, %v1505
  %v1507 = vrot.slane %v1506, 1
  %v1508 = vadd.f32 %v1506, %v1507
  %v1509 = vmul.f32 %v1508, 0.0078125
  %v1510 = vmul.f32 %v1409, %v1409
  %v1511 = vmul.f32 %v1412, %v1412
  %v1512 = vmul.f32 %v1417, %v1417
  %v1513 = vmul.f32 %v1420, %v1420
  %v1514 = vmul.f32 %v1425, %v1425
  %v1515 = vmul.f32 %v1428, %v1428
  %v1516 = vmul.f32 %v1433, %v1433
  %v1517 = vmul.f32 %v1436, %v1436
  %v1518 = vmul.f32 %v1441, %v1441
  %v1519 = vmul.f32 %v1444, %v1444
  %v1520 = vmul.f32 %v1449, %v1449
  %v1521 = vmul.f32 %v1452, %v1452
  %v1522 = vmul.f32 %v1457, %v1457
  %v1523 = vmul.f32 %v1460, %v1460
  %v1524 = vmul.f32 %v1465, %v1465
  %v1525 = vmul.f32 %v1468, %v1468
  %v1526 = vsel %vm1471, %v1510, 0.0
  %v1527 = vsel %vm1471, %v1511, 0.0
  %v1528 = vadd.f32 %v1526, %v1527
  %v1529 = vsel %vm1471, %v1512, 0.0
  %v1530 = vadd.f32 %v1528, %v1529
  %v1531 = vsel %vm1471, %v1513, 0.0
  %v1532 = vadd.f32 %v1530, %v1531
  %v1533 = vsel %vm1471, %v1514, 0.0
  %v1534 = vadd.f32 %v1532, %v1533
  %v1535 = vsel %vm1471, %v1515, 0.0
  %v1536 = vadd.f32 %v1534, %v1535
  %v1537 = vsel %vm1471, %v1516, 0.0
  %v1538 = vadd.f32 %v1536, %v1537
  %v1539 = vsel %vm1471, %v1517, 0.0
  %v1540 = vadd.f32 %v1538, %v1539
  %v1541 = vsel %vm1471, %v1518, 0.0
  %v1542 = vadd.f32 %v1540, %v1541
  %v1543 = vsel %vm1471, %v1519, 0.0
  %v1544 = vadd.f32 %v1542, %v1543
  %v1545 = vsel %vm1471, %v1520, 0.0
  %v1546 = vadd.f32 %v1544, %v1545
  %v1547 = vsel %vm1471, %v1521, 0.0
  %v1548 = vadd.f32 %v1546, %v1547
  %v1549 = vsel %vm1471, %v1522, 0.0
  %v1550 = vadd.f32 %v1548, %v1549
  %v1551 = vsel %vm1471, %v1523, 0.0
  %v1552 = vadd.f32 %v1550, %v1551
  %v1553 = vsel %vm1471, %v1524, 0.0
  %v1554 = vadd.f32 %v1552, %v1553
  %v1555 = vsel %vm1471, %v1525, 0.0
  %v1556 = vadd.f32 %v1554, %v1555
  %v1557 = vrot.slane %v1556, 4
  %v1558 = vadd.f32 %v1556, %v1557
  %v1559 = vrot.slane %v1558, 2
  %v1560 = vadd.f32 %v1558, %v1559
  %v1561 = vrot.slane %v1560, 1
  %v1562 = vadd.f32 %v1560, %v1561
  %v1563 = vmul.f32 %v1562, 0.0078125
  %v1564 = vmul.f32 %v1509, %v1509
  %v1565 = vsub.f32 %v1563, %v1564
  %v1566 = vmax.f32 %v1565, 0.0
  %v1567 = vsub.f32 %v1409, %v1509
  %v1568 = vsub.f32 %v1412, %v1509
  %v1569 = vsub.f32 %v1417, %v1509
  %v1570 = vsub.f32 %v1420, %v1509
  %v1571 = vsub.f32 %v1425, %v1509
  %v1572 = vsub.f32 %v1428, %v1509
  %v1573 = vsub.f32 %v1433, %v1509
  %v1574 = vsub.f32 %v1436, %v1509
  %v1575 = vsub.f32 %v1441, %v1509
  %v1576 = vsub.f32 %v1444, %v1509
  %v1577 = vsub.f32 %v1449, %v1509
  %v1578 = vsub.f32 %v1452, %v1509
  %v1579 = vsub.f32 %v1457, %v1509
  %v1580 = vsub.f32 %v1460, %v1509
  %v1581 = vsub.f32 %v1465, %v1509
  %v1582 = vsub.f32 %v1468, %v1509
  %v1583 = vadd.f32 %v1566, 1e-05
  %v1584 = vrsqrt.pop %v1583
  %v1585 = vmul.f32 %v1567, %v1584
  %v1586 = vmul.f32 %v1568, %v1584
  %v1587 = vmul.f32 %v1569, %v1584
  %v1588 = vmul.f32 %v1570, %v1584
  %v1589 = vmul.f32 %v1571, %v1584
  %v1590 = vmul.f32 %v1572, %v1584
  %v1591 = vmul.f32 %v1573, %v1584
  %v1592 = vmul.f32 %v1574, %v1584
  %v1593 = vmul.f32 %v1575, %v1584
  %v1594 = vmul.f32 %v1576, %v1584
  %v1595 = vmul.f32 %v1577, %v1584
  %v1596 = vmul.f32 %v1578, %v1584
  %v1597 = vmul.f32 %v1579, %v1584
  %v1598 = vmul.f32 %v1580, %v1584
  %v1599 = vmul.f32 %v1581, %v1584
  %v1600 = vmul.f32 %v1582, %v1584
  %v1601 = vld [vmem:[%s2] sm:$0x1]
  %v1603 = vlaneseq
  %v1604 = vshrl.u32 %v1603, 7
  %v1605 = vsub.s32 0, %v1604
  %v1606 = vrot.slane %v1601, %v1605
  %v1608 = vmul.f32 %v1585, %v1606
  %v1609 = vmul.f32 %v1586, %v1606
  %v1610 = vmul.f32 %v1587, %v1606
  %v1611 = vmul.f32 %v1588, %v1606
  %v1612 = vmul.f32 %v1589, %v1606
  %v1613 = vmul.f32 %v1590, %v1606
  %v1614 = vmul.f32 %v1591, %v1606
  %v1615 = vmul.f32 %v1592, %v1606
  %v1616 = vmul.f32 %v1593, %v1606
  %v1617 = vmul.f32 %v1594, %v1606
  %v1618 = vmul.f32 %v1595, %v1606
  %v1619 = vmul.f32 %v1596, %v1606
  %v1620 = vmul.f32 %v1597, %v1606
  %v1621 = vmul.f32 %v1598, %v1606
  %v1622 = vmul.f32 %v1599, %v1606
  %v1623 = vmul.f32 %v1600, %v1606
  %v1624 = vld [vmem:[%s3] sm:$0x1]
  %v1626 = vlaneseq
  %v1627 = vshrl.u32 %v1626, 7
  %v1628 = vsub.s32 0, %v1627
  %v1629 = vrot.slane %v1624, %v1628
  %v1631 = vadd.f32 %v1608, %v1629
  %v1632 = vadd.f32 %v1609, %v1629
  %v1633 = vadd.f32 %v1610, %v1629
  %v1634 = vadd.f32 %v1611, %v1629
  %v1635 = vadd.f32 %v1612, %v1629
  %v1636 = vadd.f32 %v1613, %v1629
  %v1637 = vadd.f32 %v1614, %v1629
  %v1638 = vadd.f32 %v1615, %v1629
  %v1639 = vadd.f32 %v1616, %v1629
  %v1640 = vadd.f32 %v1617, %v1629
  %v1641 = vadd.f32 %v1618, %v1629
  %v1642 = vadd.f32 %v1619, %v1629
  %v1643 = vadd.f32 %v1620, %v1629
  %v1644 = vadd.f32 %v1621, %v1629
  %v1645 = vadd.f32 %v1622, %v1629
  %v1646 = vadd.f32 %v1623, %v1629
  %v1647 = vmax.f32 %v1631, 0.0
  %v1648 = vmax.f32 %v1632, 0.0
  %v1649 = vmax.f32 %v1633, 0.0
  %v1650 = vmax.f32 %v1634, 0.0
  %v1651 = vmax.f32 %v1635, 0.0
  %v1652 = vmax.f32 %v1636, 0.0
  %v1653 = vmax.f32 %v1637, 0.0
  %v1654 = vmax.f32 %v1638, 0.0
  %v1655 = vmax.f32 %v1639, 0.0
  %v1656 = vmax.f32 %v1640, 0.0
  %v1657 = vmax.f32 %v1641, 0.0
  %v1658 = vmax.f32 %v1642, 0.0
  %v1659 = vmax.f32 %v1643, 0.0
  %v1660 = vmax.f32 %v1644, 0.0
  %v1661 = vmax.f32 %v1645, 0.0
  %v1662 = vmax.f32 %v1646, 0.0
  %v1679 = vcombine.high %v1647, %v1647
  %v1681 = vunpack.c.l.s4 1983009808
  %v1682 = vunpack.c.0.s8 %v1681
  %v1683 = vlaneseq
  %v1684 = vshrl.u32 %v1683, 7
  %v1685 = vsub.s32 %v1682, %v1684
  %v1686 = vrot.slane %v1647, %v1685
  %v1688 = vunpack.c.l.s4 1983009808
  %v1689 = vunpack.c.0.s8 %v1688
  %v1690 = vlaneseq
  %v1691 = vshrl.u32 %v1690, 7
  %v1692 = vsub.s32 %v1689, %v1691
  %v1693 = vrot.slane %v1679, %v1692
  %v1694 = vcombine.high %v1686, %v1686
  %v1695 = vcombine.high %v1693, %v1693
  %v1696 = vcombine.high %v1648, %v1648
  %v1698 = vunpack.c.l.s4 1983009808
  %v1699 = vunpack.c.0.s8 %v1698
  %v1700 = vlaneseq
  %v1701 = vshrl.u32 %v1700, 7
  %v1702 = vsub.s32 %v1699, %v1701
  %v1703 = vrot.slane %v1648, %v1702
  %v1705 = vunpack.c.l.s4 1983009808
  %v1706 = vunpack.c.0.s8 %v1705
  %v1707 = vlaneseq
  %v1708 = vshrl.u32 %v1707, 7
  %v1709 = vsub.s32 %v1706, %v1708
  %v1710 = vrot.slane %v1696, %v1709
  %v1711 = vcombine.high %v1703, %v1703
  %v1712 = vcombine.high %v1710, %v1710
  %v1713 = vcombine.high %v1649, %v1649
  %v1715 = vunpack.c.l.s4 1983009808
  %v1716 = vunpack.c.0.s8 %v1715
  %v1717 = vlaneseq
  %v1718 = vshrl.u32 %v1717, 7
  %v1719 = vsub.s32 %v1716, %v1718
  %v1720 = vrot.slane %v1649, %v1719
  %v1722 = vunpack.c.l.s4 1983009808
  %v1723 = vunpack.c.0.s8 %v1722
  %v1724 = vlaneseq
  %v1725 = vshrl.u32 %v1724, 7
  %v1726 = vsub.s32 %v1723, %v1725
  %v1727 = vrot.slane %v1713, %v1726
  %v1728 = vcombine.high %v1720, %v1720
  %v1729 = vcombine.high %v1727, %v1727
  %v1730 = vcombine.high %v1650, %v1650
  %v1732 = vunpack.c.l.s4 1983009808
  %v1733 = vunpack.c.0.s8 %v1732
  %v1734 = vlaneseq
  %v1735 = vshrl.u32 %v1734, 7
  %v1736 = vsub.s32 %v1733, %v1735
  %v1737 = vrot.slane %v1650, %v1736
  %v1739 = vunpack.c.l.s4 1983009808
  %v1740 = vunpack.c.0.s8 %v1739
  %v1741 = vlaneseq
  %v1742 = vshrl.u32 %v1741, 7
  %v1743 = vsub.s32 %v1740, %v1742
  %v1744 = vrot.slane %v1730, %v1743
  %v1745 = vcombine.high %v1737, %v1737
  %v1746 = vcombine.high %v1744, %v1744
  %v1747 = vcombine.high %v1651, %v1651
  %v1749 = vunpack.c.l.s4 1983009808
  %v1750 = vunpack.c.0.s8 %v1749
  %v1751 = vlaneseq
  %v1752 = vshrl.u32 %v1751, 7
  %v1753 = vsub.s32 %v1750, %v1752
  %v1754 = vrot.slane %v1651, %v1753
  %v1756 = vunpack.c.l.s4 1983009808
  %v1757 = vunpack.c.0.s8 %v1756
  %v1758 = vlaneseq
  %v1759 = vshrl.u32 %v1758, 7
  %v1760 = vsub.s32 %v1757, %v1759
  %v1761 = vrot.slane %v1747, %v1760
  %v1762 = vcombine.high %v1754, %v1754
  %v1763 = vcombine.high %v1761, %v1761
  %v1764 = vcombine.high %v1652, %v1652
  %v1766 = vunpack.c.l.s4 1983009808
  %v1767 = vunpack.c.0.s8 %v1766
  %v1768 = vlaneseq
  %v1769 = vshrl.u32 %v1768, 7
  %v1770 = vsub.s32 %v1767, %v1769
  %v1771 = vrot.slane %v1652, %v1770
  %v1773 = vunpack.c.l.s4 1983009808
  %v1774 = vunpack.c.0.s8 %v1773
  %v1775 = vlaneseq
  %v1776 = vshrl.u32 %v1775, 7
  %v1777 = vsub.s32 %v1774, %v1776
  %v1778 = vrot.slane %v1764, %v1777
  %v1779 = vcombine.high %v1771, %v1771
  %v1780 = vcombine.high %v1778, %v1778
  %v1781 = vcombine.high %v1653, %v1653
  %v1783 = vunpack.c.l.s4 1983009808
  %v1784 = vunpack.c.0.s8 %v1783
  %v1785 = vlaneseq
  %v1786 = vshrl.u32 %v1785, 7
  %v1787 = vsub.s32 %v1784, %v1786
  %v1788 = vrot.slane %v1653, %v1787
  %v1790 = vunpack.c.l.s4 1983009808
  %v1791 = vunpack.c.0.s8 %v1790
  %v1792 = vlaneseq
  %v1793 = vshrl.u32 %v1792, 7
  %v1794 = vsub.s32 %v1791, %v1793
  %v1795 = vrot.slane %v1781, %v1794
  %v1796 = vcombine.high %v1788, %v1788
  %v1797 = vcombine.high %v1795, %v1795
  %v1798 = vcombine.high %v1654, %v1654
  %v1800 = vunpack.c.l.s4 1983009808
  %v1801 = vunpack.c.0.s8 %v1800
  %v1802 = vlaneseq
  %v1803 = vshrl.u32 %v1802, 7
  %v1804 = vsub.s32 %v1801, %v1803
  %v1805 = vrot.slane %v1654, %v1804
  %v1807 = vunpack.c.l.s4 1983009808
  %v1808 = vunpack.c.0.s8 %v1807
  %v1809 = vlaneseq
  %v1810 = vshrl.u32 %v1809, 7
  %v1811 = vsub.s32 %v1808, %v1810
  %v1812 = vrot.slane %v1798, %v1811
  %v1813 = vcombine.high %v1805, %v1805
  %v1814 = vcombine.high %v1812, %v1812
  %v1815 = vcombine.high %v1655, %v1655
  %v1817 = vunpack.c.l.s4 1983009808
  %v1818 = vunpack.c.0.s8 %v1817
  %v1819 = vlaneseq
  %v1820 = vshrl.u32 %v1819, 7
  %v1821 = vsub.s32 %v1818, %v1820
  %v1822 = vrot.slane %v1655, %v1821
  %v1824 = vunpack.c.l.s4 1983009808
  %v1825 = vunpack.c.0.s8 %v1824
  %v1826 = vlaneseq
  %v1827 = vshrl.u32 %v1826, 7
  %v1828 = vsub.s32 %v1825, %v1827
  %v1829 = vrot.slane %v1815, %v1828
  %v1830 = vcombine.high %v1822, %v1822
  %v1831 = vcombine.high %v1829, %v1829
  %v1832 = vcombine.high %v1656, %v1656
  %v1834 = vunpack.c.l.s4 1983009808
  %v1835 = vunpack.c.0.s8 %v1834
  %v1836 = vlaneseq
  %v1837 = vshrl.u32 %v1836, 7
  %v1838 = vsub.s32 %v1835, %v1837
  %v1839 = vrot.slane %v1656, %v1838
  %v1841 = vunpack.c.l.s4 1983009808
  %v1842 = vunpack.c.0.s8 %v1841
  %v1843 = vlaneseq
  %v1844 = vshrl.u32 %v1843, 7
  %v1845 = vsub.s32 %v1842, %v1844
  %v1846 = vrot.slane %v1832, %v1845
  %v1847 = vcombine.high %v1839, %v1839
  %v1848 = vcombine.high %v1846, %v1846
  %v1849 = vcombine.high %v1657, %v1657
  %v1851 = vunpack.c.l.s4 1983009808
  %v1852 = vunpack.c.0.s8 %v1851
  %v1853 = vlaneseq
  %v1854 = vshrl.u32 %v1853, 7
  %v1855 = vsub.s32 %v1852, %v1854
  %v1856 = vrot.slane %v1657, %v1855
  %v1858 = vunpack.c.l.s4 1983009808
  %v1859 = vunpack.c.0.s8 %v1858
  %v1860 = vlaneseq
  %v1861 = vshrl.u32 %v1860, 7
  %v1862 = vsub.s32 %v1859, %v1861
  %v1863 = vrot.slane %v1849, %v1862
  %v1864 = vcombine.high %v1856, %v1856
  %v1865 = vcombine.high %v1863, %v1863
  %v1866 = vcombine.high %v1658, %v1658
  %v1868 = vunpack.c.l.s4 1983009808
  %v1869 = vunpack.c.0.s8 %v1868
  %v1870 = vlaneseq
  %v1871 = vshrl.u32 %v1870, 7
  %v1872 = vsub.s32 %v1869, %v1871
  %v1873 = vrot.slane %v1658, %v1872
  %v1875 = vunpack.c.l.s4 1983009808
  %v1876 = vunpack.c.0.s8 %v1875
  %v1877 = vlaneseq
  %v1878 = vshrl.u32 %v1877, 7
  %v1879 = vsub.s32 %v1876, %v1878
  %v1880 = vrot.slane %v1866, %v1879
  %v1881 = vcombine.high %v1873, %v1873
  %v1882 = vcombine.high %v1880, %v1880
  %v1883 = vcombine.high %v1659, %v1659
  %v1885 = vunpack.c.l.s4 1983009808
  %v1886 = vunpack.c.0.s8 %v1885
  %v1887 = vlaneseq
  %v1888 = vshrl.u32 %v1887, 7
  %v1889 = vsub.s32 %v1886, %v1888
  %v1890 = vrot.slane %v1659, %v1889
  %v1892 = vunpack.c.l.s4 1983009808
  %v1893 = vunpack.c.0.s8 %v1892
  %v1894 = vlaneseq
  %v1895 = vshrl.u32 %v1894, 7
  %v1896 = vsub.s32 %v1893, %v1895
  %v1897 = vrot.slane %v1883, %v1896
  %v1898 = vcombine.high %v1890, %v1890
  %v1899 = vcombine.high %v1897, %v1897
  %v1900 = vcombine.high %v1660, %v1660
  %v1902 = vunpack.c.l.s4 1983009808
  %v1903 = vunpack.c.0.s8 %v1902
  %v1904 = vlaneseq
  %v1905 = vshrl.u32 %v1904, 7
  %v1906 = vsub.s32 %v1903, %v1905
  %v1907 = vrot.slane %v1660, %v1906
  %v1909 = vunpack.c.l.s4 1983009808
  %v1910 = vunpack.c.0.s8 %v1909
  %v1911 = vlaneseq
  %v1912 = vshrl.u32 %v1911, 7
  %v1913 = vsub.s32 %v1910, %v1912
  %v1914 = vrot.slane %v1900, %v1913
  %v1915 = vcombine.high %v1907, %v1907
  %v1916 = vcombine.high %v1914, %v1914
  %v1917 = vcombine.high %v1661, %v1661
  %v1919 = vunpack.c.l.s4 1983009808
  %v1920 = vunpack.c.0.s8 %v1919
  %v1921 = vlaneseq
  %v1922 = vshrl.u32 %v1921, 7
  %v1923 = vsub.s32 %v1920, %v1922
  %v1924 = vrot.slane %v1661, %v1923
  %v1926 = vunpack.c.l.s4 1983009808
  %v1927 = vunpack.c.0.s8 %v1926
  %v1928 = vlaneseq
  %v1929 = vshrl.u32 %v1928, 7
  %v1930 = vsub.s32 %v1927, %v1929
  %v1931 = vrot.slane %v1917, %v1930
  %v1932 = vcombine.high %v1924, %v1924
  %v1933 = vcombine.high %v1931, %v1931
  %v1934 = vcombine.high %v1662, %v1662
  %v1936 = vunpack.c.l.s4 1983009808
  %v1937 = vunpack.c.0.s8 %v1936
  %v1938 = vlaneseq
  %v1939 = vshrl.u32 %v1938, 7
  %v1940 = vsub.s32 %v1937, %v1939
  %v1941 = vrot.slane %v1662, %v1940
  %v1943 = vunpack.c.l.s4 1983009808
  %v1944 = vunpack.c.0.s8 %v1943
  %v1945 = vlaneseq
  %v1946 = vshrl.u32 %v1945, 7
  %v1947 = vsub.s32 %v1944, %v1946
  %v1948 = vrot.slane %v1934, %v1947
  %v1949 = vcombine.high %v1941, %v1941
  %v1950 = vcombine.high %v1948, %v1948
  %v2015 = vrot.slane %v1686, 7
  %v2016 = vrot.slane %v2015, 2
  %v2017 = vrot.slane %v1694, 7
  %v2018 = vrot.slane %v2017, 2
  %v2019 = vrot.slane %v1693, 7
  %v2020 = vrot.slane %v2019, 2
  %v2021 = vrot.slane %v1695, 7
  %v2022 = vrot.slane %v2021, 2
  %v2023 = vrot.slane %v1703, 7
  %v2024 = vrot.slane %v2023, 2
  %v2025 = vrot.slane %v1711, 7
  %v2026 = vrot.slane %v2025, 2
  %v2027 = vrot.slane %v1710, 7
  %v2028 = vrot.slane %v2027, 2
  %v2029 = vrot.slane %v1712, 7
  %v2030 = vrot.slane %v2029, 2
  %v2031 = vrot.slane %v1720, 7
  %v2032 = vrot.slane %v2031, 2
  %v2033 = vrot.slane %v1728, 7
  %v2034 = vrot.slane %v2033, 2
  %v2035 = vrot.slane %v1727, 7
  %v2036 = vrot.slane %v2035, 2
  %v2037 = vrot.slane %v1729, 7
  %v2038 = vrot.slane %v2037, 2
  %v2039 = vrot.slane %v1737, 7
  %v2040 = vrot.slane %v2039, 2
  %v2041 = vrot.slane %v1745, 7
  %v2042 = vrot.slane %v2041, 2
  %v2043 = vrot.slane %v1744, 7
  %v2044 = vrot.slane %v2043, 2
  %v2045 = vrot.slane %v1746, 7
  %v2046 = vrot.slane %v2045, 2
  %v2047 = vrot.slane %v1754, 7
  %v2048 = vrot.slane %v2047, 2
  %v2049 = vrot.slane %v1762, 7
  %v2050 = vrot.slane %v2049, 2
  %v2051 = vrot.slane %v1761, 7
  %v2052 = vrot.slane %v2051, 2
  %v2053 = vrot.slane %v1763, 7
  %v2054 = vrot.slane %v2053, 2
  %v2055 = vrot.slane %v1771, 7
  %v2056 = vrot.slane %v2055, 2
  %v2057 = vrot.slane %v1779, 7
  %v2058 = vrot.slane %v2057, 2
  %v2059 = vrot.slane %v1778, 7
  %v2060 = vrot.slane %v2059, 2
  %v2061 = vrot.slane %v1780, 7
  %v2062 = vrot.slane %v2061, 2
  %v2063 = vrot.slane %v1788, 7
  %v2064 = vrot.slane %v2063, 2
  %v2065 = vrot.slane %v1796, 7
  %v2066 = vrot.slane %v2065, 2
  %v2067 = vrot.slane %v1795, 7
  %v2068 = vrot.slane %v2067, 2
  %v2069 = vrot.slane %v1797, 7
  %v2070 = vrot.slane %v2069, 2
  %v2071 = vrot.slane %v1805, 7
  %v2072 = vrot.slane %v2071, 2
  %v2073 = vrot.slane %v1813, 7
  %v2074 = vrot.slane %v2073, 2
  %v2075 = vrot.slane %v1812, 7
  %v2076 = vrot.slane %v2075, 2
  %v2077 = vrot.slane %v1814, 7
  %v2078 = vrot.slane %v2077, 2
  %v2079 = vrot.slane %v1822, 7
  %v2080 = vrot.slane %v2079, 2
  %v2081 = vrot.slane %v1830, 7
  %v2082 = vrot.slane %v2081, 2
  %v2083 = vrot.slane %v1829, 7
  %v2084 = vrot.slane %v2083, 2
  %v2085 = vrot.slane %v1831, 7
  %v2086 = vrot.slane %v2085, 2
  %v2087 = vrot.slane %v1839, 7
  %v2088 = vrot.slane %v2087, 2
  %v2089 = vrot.slane %v1847, 7
  %v2090 = vrot.slane %v2089, 2
  %v2091 = vrot.slane %v1846, 7
  %v2092 = vrot.slane %v2091, 2
  %v2093 = vrot.slane %v1848, 7
  %v2094 = vrot.slane %v2093, 2
  %v2095 = vrot.slane %v1856, 7
  %v2096 = vrot.slane %v2095, 2
  %v2097 = vrot.slane %v1864, 7
  %v2098 = vrot.slane %v2097, 2
  %v2099 = vrot.slane %v1863, 7
  %v2100 = vrot.slane %v2099, 2
  %v2101 = vrot.slane %v1865, 7
  %v2102 = vrot.slane %v2101, 2
  %v2103 = vrot.slane %v1873, 7
  %v2104 = vrot.slane %v2103, 2
  %v2105 = vrot.slane %v1881, 7
  %v2106 = vrot.slane %v2105, 2
  %v2107 = vrot.slane %v1880, 7
  %v2108 = vrot.slane %v2107, 2
  %v2109 = vrot.slane %v1882, 7
  %v2110 = vrot.slane %v2109, 2
  %v2111 = vrot.slane %v1890, 7
  %v2112 = vrot.slane %v2111, 2
  %v2113 = vrot.slane %v1898, 7
  %v2114 = vrot.slane %v2113, 2
  %v2115 = vrot.slane %v1897, 7
  %v2116 = vrot.slane %v2115, 2
  %v2117 = vrot.slane %v1899, 7
  %v2118 = vrot.slane %v2117, 2
  %v2119 = vrot.slane %v1907, 7
  %v2120 = vrot.slane %v2119, 2
  %v2121 = vrot.slane %v1915, 7
  %v2122 = vrot.slane %v2121, 2
  %v2123 = vrot.slane %v1914, 7
  %v2124 = vrot.slane %v2123, 2
  %v2125 = vrot.slane %v1916, 7
  %v2126 = vrot.slane %v2125, 2
  %v2127 = vrot.slane %v1924, 7
  %v2128 = vrot.slane %v2127, 2
  %v2129 = vrot.slane %v1932, 7
  %v2130 = vrot.slane %v2129, 2
  %v2131 = vrot.slane %v1931, 7
  %v2132 = vrot.slane %v2131, 2
  %v2133 = vrot.slane %v1933, 7
  %v2134 = vrot.slane %v2133, 2
  %v2135 = vrot.slane %v1941, 7
  %v2136 = vrot.slane %v2135, 2
  %v2137 = vrot.slane %v1949, 7
  %v2138 = vrot.slane %v2137, 2
  %v2139 = vrot.slane %v1948, 7
  %v2140 = vrot.slane %v2139, 2
  %v2141 = vrot.slane %v1950, 7
  %v2142 = vrot.slane %v2141, 2
  %v2207 = vadd.f32 %v1686, %v2016
  %v2208 = vadd.f32 %v1694, %v2018
  %v2209 = vadd.f32 %v1693, %v2020
  %v2210 = vadd.f32 %v1695, %v2022
  %v2211 = vadd.f32 %v1703, %v2024
  %v2212 = vadd.f32 %v1711, %v2026
  %v2213 = vadd.f32 %v1710, %v2028
  %v2214 = vadd.f32 %v1712, %v2030
  %v2215 = vadd.f32 %v1720, %v2032
  %v2216 = vadd.f32 %v1728, %v2034
  %v2217 = vadd.f32 %v1727, %v2036
  %v2218 = vadd.f32 %v1729, %v2038
  %v2219 = vadd.f32 %v1737, %v2040
  %v2220 = vadd.f32 %v1745, %v2042
  %v2221 = vadd.f32 %v1744, %v2044
  %v2222 = vadd.f32 %v1746, %v2046
  %v2223 = vadd.f32 %v1754, %v2048
  %v2224 = vadd.f32 %v1762, %v2050
  %v2225 = vadd.f32 %v1761, %v2052
  %v2226 = vadd.f32 %v1763, %v2054
  %v2227 = vadd.f32 %v1771, %v2056
  %v2228 = vadd.f32 %v1779, %v2058
  %v2229 = vadd.f32 %v1778, %v2060
  %v2230 = vadd.f32 %v1780, %v2062
  %v2231 = vadd.f32 %v1788, %v2064
  %v2232 = vadd.f32 %v1796, %v2066
  %v2233 = vadd.f32 %v1795, %v2068
  %v2234 = vadd.f32 %v1797, %v2070
  %v2235 = vadd.f32 %v1805, %v2072
  %v2236 = vadd.f32 %v1813, %v2074
  %v2237 = vadd.f32 %v1812, %v2076
  %v2238 = vadd.f32 %v1814, %v2078
  %v2239 = vadd.f32 %v1822, %v2080
  %v2240 = vadd.f32 %v1830, %v2082
  %v2241 = vadd.f32 %v1829, %v2084
  %v2242 = vadd.f32 %v1831, %v2086
  %v2243 = vadd.f32 %v1839, %v2088
  %v2244 = vadd.f32 %v1847, %v2090
  %v2245 = vadd.f32 %v1846, %v2092
  %v2246 = vadd.f32 %v1848, %v2094
  %v2247 = vadd.f32 %v1856, %v2096
  %v2248 = vadd.f32 %v1864, %v2098
  %v2249 = vadd.f32 %v1863, %v2100
  %v2250 = vadd.f32 %v1865, %v2102
  %v2251 = vadd.f32 %v1873, %v2104
  %v2252 = vadd.f32 %v1881, %v2106
  %v2253 = vadd.f32 %v1880, %v2108
  %v2254 = vadd.f32 %v1882, %v2110
  %v2255 = vadd.f32 %v1890, %v2112
  %v2256 = vadd.f32 %v1898, %v2114
  %v2257 = vadd.f32 %v1897, %v2116
  %v2258 = vadd.f32 %v1899, %v2118
  %v2259 = vadd.f32 %v1907, %v2120
  %v2260 = vadd.f32 %v1915, %v2122
  %v2261 = vadd.f32 %v1914, %v2124
  %v2262 = vadd.f32 %v1916, %v2126
  %v2263 = vadd.f32 %v1924, %v2128
  %v2264 = vadd.f32 %v1932, %v2130
  %v2265 = vadd.f32 %v1931, %v2132
  %v2266 = vadd.f32 %v1933, %v2134
  %v2267 = vadd.f32 %v1941, %v2136
  %v2268 = vadd.f32 %v1949, %v2138
  %v2269 = vadd.f32 %v1948, %v2140
  %v2270 = vadd.f32 %v1950, %v2142
  %v2271 = vadd.f32 %v2207, %v2211
  %v2272 = vadd.f32 %v2208, %v2212
  %v2273 = vadd.f32 %v2209, %v2213
  %v2274 = vadd.f32 %v2210, %v2214
  %v2275 = vadd.f32 %v2215, %v2219
  %v2276 = vadd.f32 %v2216, %v2220
  %v2277 = vadd.f32 %v2217, %v2221
  %v2278 = vadd.f32 %v2218, %v2222
  %v2279 = vadd.f32 %v2223, %v2227
  %v2280 = vadd.f32 %v2224, %v2228
  %v2281 = vadd.f32 %v2225, %v2229
  %v2282 = vadd.f32 %v2226, %v2230
  %v2283 = vadd.f32 %v2231, %v2235
  %v2284 = vadd.f32 %v2232, %v2236
  %v2285 = vadd.f32 %v2233, %v2237
  %v2286 = vadd.f32 %v2234, %v2238
  %v2287 = vadd.f32 %v2239, %v2243
  %v2288 = vadd.f32 %v2240, %v2244
  %v2289 = vadd.f32 %v2241, %v2245
  %v2290 = vadd.f32 %v2242, %v2246
  %v2291 = vadd.f32 %v2247, %v2251
  %v2292 = vadd.f32 %v2248, %v2252
  %v2293 = vadd.f32 %v2249, %v2253
  %v2294 = vadd.f32 %v2250, %v2254
  %v2295 = vadd.f32 %v2255, %v2259
  %v2296 = vadd.f32 %v2256, %v2260
  %v2297 = vadd.f32 %v2257, %v2261
  %v2298 = vadd.f32 %v2258, %v2262
  %v2299 = vadd.f32 %v2263, %v2267
  %v2300 = vadd.f32 %v2264, %v2268
  %v2301 = vadd.f32 %v2265, %v2269
  %v2302 = vadd.f32 %v2266, %v2270
  %v2303 = vmul.f32 %v2271, 0.25
  %v2304 = vmul.f32 %v2272, 0.25
  %v2305 = vmul.f32 %v2273, 0.25
  %v2306 = vmul.f32 %v2274, 0.25
  %v2307 = vmul.f32 %v2275, 0.25
  %v2308 = vmul.f32 %v2276, 0.25
  %v2309 = vmul.f32 %v2277, 0.25
  %v2310 = vmul.f32 %v2278, 0.25
  %v2311 = vmul.f32 %v2279, 0.25
  %v2312 = vmul.f32 %v2280, 0.25
  %v2313 = vmul.f32 %v2281, 0.25
  %v2314 = vmul.f32 %v2282, 0.25
  %v2315 = vmul.f32 %v2283, 0.25
  %v2316 = vmul.f32 %v2284, 0.25
  %v2317 = vmul.f32 %v2285, 0.25
  %v2318 = vmul.f32 %v2286, 0.25
  %v2319 = vmul.f32 %v2287, 0.25
  %v2320 = vmul.f32 %v2288, 0.25
  %v2321 = vmul.f32 %v2289, 0.25
  %v2322 = vmul.f32 %v2290, 0.25
  %v2323 = vmul.f32 %v2291, 0.25
  %v2324 = vmul.f32 %v2292, 0.25
  %v2325 = vmul.f32 %v2293, 0.25
  %v2326 = vmul.f32 %v2294, 0.25
  %v2327 = vmul.f32 %v2295, 0.25
  %v2328 = vmul.f32 %v2296, 0.25
  %v2329 = vmul.f32 %v2297, 0.25
  %v2330 = vmul.f32 %v2298, 0.25
  %v2331 = vmul.f32 %v2299, 0.25
  %v2332 = vmul.f32 %v2300, 0.25
  %v2333 = vmul.f32 %v2301, 0.25
  %v2334 = vmul.f32 %v2302, 0.25
  %vm2367 = vcmask 1044484
  %v2368 = vsel %vm2367, %v2303, %v2303
  %vm2369 = vcmask 1046534
  %v2370 = vsel %vm2369, %v2303, %v2368
  %v2371 = vrot.slane %v2304, 7
  %vm2372 = vcmask 1041409
  %v2373 = vsel %vm2372, %v2371, %v2370
  %vm2374 = vcmask 1043459
  %v2375 = vsel %vm2374, %v2371, %v2373
  %vm2376 = vcmask 1045509
  %v2377 = vsel %vm2376, %v2371, %v2375
  %vm2378 = vcmask 1047559
  %v2379 = vsel %vm2378, %v2371, %v2377
  %v2380 = vsel %vm2367, %v2305, %v2305
  %v2381 = vsel %vm2369, %v2305, %v2380
  %v2382 = vrot.slane %v2306, 7
  %v2383 = vsel %vm2372, %v2382, %v2381
  %v2384 = vsel %vm2374, %v2382, %v2383
  %v2385 = vsel %vm2376, %v2382, %v2384
  %v2386 = vsel %vm2378, %v2382, %v2385
  %v2387 = vsel %vm2367, %v2307, %v2307
  %v2388 = vsel %vm2369, %v2307, %v2387
  %v2389 = vrot.slane %v2308, 7
  %v2390 = vsel %vm2372, %v2389, %v2388
  %v2391 = vsel %vm2374, %v2389, %v2390
  %v2392 = vsel %vm2376, %v2389, %v2391
  %v2393 = vsel %vm2378, %v2389, %v2392
  %v2394 = vsel %vm2367, %v2309, %v2309
  %v2395 = vsel %vm2369, %v2309, %v2394
  %v2396 = vrot.slane %v2310, 7
  %v2397 = vsel %vm2372, %v2396, %v2395
  %v2398 = vsel %vm2374, %v2396, %v2397
  %v2399 = vsel %vm2376, %v2396, %v2398
  %v2400 = vsel %vm2378, %v2396, %v2399
  %v2401 = vsel %vm2367, %v2311, %v2311
  %v2402 = vsel %vm2369, %v2311, %v2401
  %v2403 = vrot.slane %v2312, 7
  %v2404 = vsel %vm2372, %v2403, %v2402
  %v2405 = vsel %vm2374, %v2403, %v2404
  %v2406 = vsel %vm2376, %v2403, %v2405
  %v2407 = vsel %vm2378, %v2403, %v2406
  %v2408 = vsel %vm2367, %v2313, %v2313
  %v2409 = vsel %vm2369, %v2313, %v2408
  %v2410 = vrot.slane %v2314, 7
  %v2411 = vsel %vm2372, %v2410, %v2409
  %v2412 = vsel %vm2374, %v2410, %v2411
  %v2413 = vsel %vm2376, %v2410, %v2412
  %v2414 = vsel %vm2378, %v2410, %v2413
  %v2415 = vsel %vm2367, %v2315, %v2315
  %v2416 = vsel %vm2369, %v2315, %v2415
  %v2417 = vrot.slane %v2316, 7
  %v2418 = vsel %vm2372, %v2417, %v2416
  %v2419 = vsel %vm2374, %v2417, %v2418
  %v2420 = vsel %vm2376, %v2417, %v2419
  %v2421 = vsel %vm2378, %v2417, %v2420
  %v2422 = vsel %vm2367, %v2317, %v2317
  %v2423 = vsel %vm2369, %v2317, %v2422
  %v2424 = vrot.slane %v2318, 7
  %v2425 = vsel %vm2372, %v2424, %v2423
  %v2426 = vsel %vm2374, %v2424, %v2425
  %v2427 = vsel %vm2376, %v2424, %v2426
  %v2428 = vsel %vm2378, %v2424, %v2427
  %v2429 = vsel %vm2367, %v2319, %v2319
  %v2430 = vsel %vm2369, %v2319, %v2429
  %v2431 = vrot.slane %v2320, 7
  %v2432 = vsel %vm2372, %v2431, %v2430
  %v2433 = vsel %vm2374, %v2431, %v2432
  %v2434 = vsel %vm2376, %v2431, %v2433
  %v2435 = vsel %vm2378, %v2431, %v2434
  %v2436 = vsel %vm2367, %v2321, %v2321
  %v2437 = vsel %vm2369, %v2321, %v2436
  %v2438 = vrot.slane %v2322, 7
  %v2439 = vsel %vm2372, %v2438, %v2437
  %v2440 = vsel %vm2374, %v2438, %v2439
  %v2441 = vsel %vm2376, %v2438, %v2440
  %v2442 = vsel %vm2378, %v2438, %v2441
  %v2443 = vsel %vm2367, %v2323, %v2323
  %v2444 = vsel %vm2369, %v2323, %v2443
  %v2445 = vrot.slane %v2324, 7
  %v2446 = vsel %vm2372, %v2445, %v2444
  %v2447 = vsel %vm2374, %v2445, %v2446
  %v2448 = vsel %vm2376, %v2445, %v2447
  %v2449 = vsel %vm2378, %v2445, %v2448
  %v2450 = vsel %vm2367, %v2325, %v2325
  %v2451 = vsel %vm2369, %v2325, %v2450
  %v2452 = vrot.slane %v2326, 7
  %v2453 = vsel %vm2372, %v2452, %v2451
  %v2454 = vsel %vm2374, %v2452, %v2453
  %v2455 = vsel %vm2376, %v2452, %v2454
  %v2456 = vsel %vm2378, %v2452, %v2455
  %v2457 = vsel %vm2367, %v2327, %v2327
  %v2458 = vsel %vm2369, %v2327, %v2457
  %v2459 = vrot.slane %v2328, 7
  %v2460 = vsel %vm2372, %v2459, %v2458
  %v2461 = vsel %vm2374, %v2459, %v2460
  %v2462 = vsel %vm2376, %v2459, %v2461
  %v2463 = vsel %vm2378, %v2459, %v2462
  %v2464 = vsel %vm2367, %v2329, %v2329
  %v2465 = vsel %vm2369, %v2329, %v2464
  %v2466 = vrot.slane %v2330, 7
  %v2467 = vsel %vm2372, %v2466, %v2465
  %v2468 = vsel %vm2374, %v2466, %v2467
  %v2469 = vsel %vm2376, %v2466, %v2468
  %v2470 = vsel %vm2378, %v2466, %v2469
  %v2471 = vsel %vm2367, %v2331, %v2331
  %v2472 = vsel %vm2369, %v2331, %v2471
  %v2473 = vrot.slane %v2332, 7
  %v2474 = vsel %vm2372, %v2473, %v2472
  %v2475 = vsel %vm2374, %v2473, %v2474
  %v2476 = vsel %vm2376, %v2473, %v2475
  %v2477 = vsel %vm2378, %v2473, %v2476
  %v2478 = vsel %vm2367, %v2333, %v2333
  %v2479 = vsel %vm2369, %v2333, %v2478
  %v2480 = vrot.slane %v2334, 7
  %v2481 = vsel %vm2372, %v2480, %v2479
  %v2482 = vsel %vm2374, %v2480, %v2481
  %v2483 = vsel %vm2376, %v2480, %v2482
  %v2484 = vsel %vm2378, %v2480, %v2483
  %v2501 = vcombine.low %v2379, %v2393
  %v2503 = vunpack.c.l.s4 1934713408
  %v2504 = vunpack.c.0.s8 %v2503
  %v2505 = vlaneseq
  %v2506 = vshrl.u32 %v2505, 7
  %v2507 = vsub.s32 %v2504, %v2506
  %v2508 = vrot.slane %v2501, %v2507
  %v2509 = vcombine.high %v2508, 0.0
  %v2510 = vcombine.low %v2407, %v2421
  %v2512 = vunpack.c.l.s4 1934713408
  %v2513 = vunpack.c.0.s8 %v2512
  %v2514 = vlaneseq
  %v2515 = vshrl.u32 %v2514, 7
  %v2516 = vsub.s32 %v2513, %v2515
  %v2517 = vrot.slane %v2510, %v2516
  %v2518 = vcombine.high %v2517, 0.0
  %v2519 = vcombine.low %v2435, %v2449
  %v2521 = vunpack.c.l.s4 1934713408
  %v2522 = vunpack.c.0.s8 %v2521
  %v2523 = vlaneseq
  %v2524 = vshrl.u32 %v2523, 7
  %v2525 = vsub.s32 %v2522, %v2524
  %v2526 = vrot.slane %v2519, %v2525
  %v2527 = vcombine.high %v2526, 0.0
  %v2528 = vcombine.low %v2463, %v2477
  %v2530 = vunpack.c.l.s4 1934713408
  %v2531 = vunpack.c.0.s8 %v2530
  %v2532 = vlaneseq
  %v2533 = vshrl.u32 %v2532, 7
  %v2534 = vsub.s32 %v2531, %v2533
  %v2535 = vrot.slane %v2528, %v2534
  %v2536 = vcombine.high %v2535, 0.0
  %v2537 = vcombine.low %v2386, %v2400
  %v2539 = vunpack.c.l.s4 1934713408
  %v2540 = vunpack.c.0.s8 %v2539
  %v2541 = vlaneseq
  %v2542 = vshrl.u32 %v2541, 7
  %v2543 = vsub.s32 %v2540, %v2542
  %v2544 = vrot.slane %v2537, %v2543
  %v2545 = vcombine.high %v2544, 0.0
  %v2546 = vcombine.low %v2414, %v2428
  %v2548 = vunpack.c.l.s4 1934713408
  %v2549 = vunpack.c.0.s8 %v2548
  %v2550 = vlaneseq
  %v2551 = vshrl.u32 %v2550, 7
  %v2552 = vsub.s32 %v2549, %v2551
  %v2553 = vrot.slane %v2546, %v2552
  %v2554 = vcombine.high %v2553, 0.0
  %v2555 = vcombine.low %v2442, %v2456
  %v2557 = vunpack.c.l.s4 1934713408
  %v2558 = vunpack.c.0.s8 %v2557
  %v2559 = vlaneseq
  %v2560 = vshrl.u32 %v2559, 7
  %v2561 = vsub.s32 %v2558, %v2560
  %v2562 = vrot.slane %v2555, %v2561
  %v2563 = vcombine.high %v2562, 0.0
  %v2564 = vcombine.low %v2470, %v2484
  %v2566 = vunpack.c.l.s4 1934713408
  %v2567 = vunpack.c.0.s8 %v2566
  %v2568 = vlaneseq
  %v2569 = vshrl.u32 %v2568, 7
  %v2570 = vsub.s32 %v2567, %v2569
  %v2571 = vrot.slane %v2564, %v2570
  %v2572 = vcombine.high %v2571, 0.0
  %v2577 = vcombine.low %v2508, %v2517
  %v2578 = vcombine.low %v2526, %v2535
  %v2580 = vunpack.c.l.s4 1983009808
  %v2581 = vunpack.c.0.s8 %v2580
  %v2582 = vlaneseq
  %v2583 = vshrl.u32 %v2582, 7
  %v2584 = vsub.s32 %v2581, %v2583
  %v2585 = vrot.slane %v2577, %v2584
  %v2587 = vunpack.c.l.s4 1983009808
  %v2588 = vunpack.c.0.s8 %v2587
  %v2589 = vlaneseq
  %v2590 = vshrl.u32 %v2589, 7
  %v2591 = vsub.s32 %v2588, %v2590
  %v2592 = vrot.slane %v2578, %v2591
  %v2593 = vcombine.low %v2585, %v2592
  %v2599 = vcombine.low %v2509, %v2518
  %v2600 = vcombine.low %v2527, %v2536
  %v2602 = vunpack.c.l.s4 1983009808
  %v2603 = vunpack.c.0.s8 %v2602
  %v2604 = vlaneseq
  %v2605 = vshrl.u32 %v2604, 7
  %v2606 = vsub.s32 %v2603, %v2605
  %v2607 = vrot.slane %v2599, %v2606
  %v2609 = vunpack.c.l.s4 1983009808
  %v2610 = vunpack.c.0.s8 %v2609
  %v2611 = vlaneseq
  %v2612 = vshrl.u32 %v2611, 7
  %v2613 = vsub.s32 %v2610, %v2612
  %v2614 = vrot.slane %v2600, %v2613
  %v2615 = vcombine.low %v2607, %v2614
  %2616 = vrot.lane.b32.xlu0 %v2615, 32
  %v2617 = vpop.permute.xlu0 %2616
  %v2623 = vcombine.low %v2544, %v2553
  %v2624 = vcombine.low %v2562, %v2571
  %v2626 = vunpack.c.l.s4 1983009808
  %v2627 = vunpack.c.0.s8 %v2626
  %v2628 = vlaneseq
  %v2629 = vshrl.u32 %v2628, 7
  %v2630 = vsub.s32 %v2627, %v2629
  %v2631 = vrot.slane %v2623, %v2630
  %v2633 = vunpack.c.l.s4 1983009808
  %v2634 = vunpack.c.0.s8 %v2633
  %v2635 = vlaneseq
  %v2636 = vshrl.u32 %v2635, 7
  %v2637 = vsub.s32 %v2634, %v2636
  %v2638 = vrot.slane %v2624, %v2637
  %v2639 = vcombine.low %v2631, %v2638
  %2640 = vrot.lane.b32.xlu0 %v2639, 64
  %v2641 = vpop.permute.xlu0 %2640
  %v2647 = vcombine.low %v2545, %v2554
  %v2648 = vcombine.low %v2563, %v2572
  %v2650 = vunpack.c.l.s4 1983009808
  %v2651 = vunpack.c.0.s8 %v2650
  %v2652 = vlaneseq
  %v2653 = vshrl.u32 %v2652, 7
  %v2654 = vsub.s32 %v2651, %v2653
  %v2655 = vrot.slane %v2647, %v2654
  %v2657 = vunpack.c.l.s4 1983009808
  %v2658 = vunpack.c.0.s8 %v2657
  %v2659 = vlaneseq
  %v2660 = vshrl.u32 %v2659, 7
  %v2661 = vsub.s32 %v2658, %v2660
  %v2662 = vrot.slane %v2648, %v2661
  %v2663 = vcombine.low %v2655, %v2662
  %2664 = vrot.lane.b32.xlu0 %v2663, 96
  %v2665 = vpop.permute.xlu0 %2664
  %v2667 = vsel %vm1471, %v2593, %v2617
  %vm2668 = vcmask 523264
  %v2669 = vsel %vm2668, %v2667, %v2641
  %vm2670 = vcmask 785408
  %v2671 = vsel %vm2670, %v2669, %v2665
  %2672 = vst [vmem:[%s4] sm:$0xff] %v2671
  // Predicated region
  $region18: #{encoder_forward.4} parent=0 // pred_check
    _
  $region19: #{encoder_forward.4} parent=0 // pred_check_branch
    %2674 = sbr.rel (0) target = $region21
  $region20: #{encoder_forward.4} parent=0 // pred_region
    _
  $region21: #{encoder_forward.4} parent=0 // pred_fallthru
    _
  // Predicated region
  $region22: #{encoder_forward.4} parent=0 // pred_check
    _
  $region23: #{encoder_forward.4} parent=0 // pred_check_branch
    %2676 = sbr.rel (0) target = $region25
  $region24: #{encoder_forward.4} parent=0 // pred_region
    _
  $region25: #{encoder_forward.4} parent=0 // pred_fallthru
    _

// kernel: encoder_forward.3
$region0: #{encoder_forward.3}
  #allocation0 [shape = 'u32[]', space=smem, size = 0x4, offset = 0x4, fixed_abs, tag = 'smem constant byte address 0x4 - core index']
  #allocation1 [shape = 'u32[144,128]{1,0:T(1,128)}', space=vmem, size = 0x12000, scoped, tag = 'internal scratch']
  #allocation2 [shape = 'f32[2,18,18,4]{3,2,1,0:T(8,128)}', space=vmem, size = 0x6c000, scoped, tag = 'scratch operand']
  #allocation3 [shape = 'bf16[512,36]{1,0:T(8,128)(2,1)}', space=vmem, size = 0x20000, scoped, tag = 'scratch operand']
  %s0 = inlined_call_operand.vmem [shape: f32[2,16,16,4], index: 0, kind: input, shape index: {}]
  %s1 = inlined_call_operand.vmem [shape: bf16[36,16], index: 1, kind: input, shape index: {}]
  %s2 = inlined_call_operand.vmem [shape: f32[1,16], index: 2, kind: input, shape index: {}]
  %s3 = inlined_call_operand.vmem [shape: f32[1,16], index: 3, kind: input, shape index: {}]
  %s4 = inlined_call_operand.vmem [shape: f32[16,128], index: 4, kind: output, shape index: {}]
  %s5 = sld [smem:[#allocation0]]
  $region26: #{encoder_forward.3} parent=0
    _
  %s7 = ssub.s32 1, %s5
  %s8 = scalar_select 0, %s7, %s5
  // Predicated region
  $region2: #{encoder_forward.3} parent=0 // pred_check
    _
  $region3: #{encoder_forward.3} parent=0 // pred_check_branch
    %10 = sbr.rel (0) target = $region5
  $region4: #{encoder_forward.3} parent=0 // pred_region
    _
  $region5: #{encoder_forward.3} parent=0 // pred_fallthru
    _
  // Predicated region
  $region6: #{encoder_forward.3} parent=0 // pred_check
    _
  $region7: #{encoder_forward.3} parent=0 // pred_check_branch
    %12 = sbr.rel (0) target = $region9
  $region8: #{encoder_forward.3} parent=0 // pred_region
    _
  $region9: #{encoder_forward.3} parent=0 // pred_fallthru
    _
  // Predicated region
  $region10: #{encoder_forward.3} parent=0 // pred_check
    _
  $region11: #{encoder_forward.3} parent=0 // pred_check_branch
    %14 = sbr.rel (0) target = $region13
  $region12: #{encoder_forward.3} parent=0 // pred_region
    _
  $region13: #{encoder_forward.3} parent=0 // pred_fallthru
    _
  // Predicated region
  $region14: #{encoder_forward.3} parent=0 // pred_check
    _
  $region15: #{encoder_forward.3} parent=0 // pred_check_branch
    %16 = sbr.rel (0) target = $region17
  $region16: #{encoder_forward.3} parent=0 // pred_region
    _
  $region17: #{encoder_forward.3} parent=0 // pred_fallthru
    _
  %vm18 = vcmask 31744
  %19 = vst.msk [vmem:[#allocation2] sm:$0xff] %vm18, 0.0
  %20 = vst.msk [vmem:[#allocation2 + $0x8] sm:$0xff] %vm18, 0.0
  %vm21 = vcmask 25600
  %22 = vst.msk [vmem:[#allocation2 + $0x10] sm:$0x3] %vm21, 0.0
  %23 = vst.msk [vmem:[#allocation2 + $0x18] sm:$0xff] %vm18, 0.0
  %24 = vst.msk [vmem:[#allocation2 + $0x20] sm:$0xff] %vm18, 0.0
  %25 = vst.msk [vmem:[#allocation2 + $0x28] sm:$0x3] %vm21, 0.0
  %26 = vst.msk [vmem:[#allocation2 + $0x30] sm:$0xff] %vm18, 0.0
  %27 = vst.msk [vmem:[#allocation2 + $0x38] sm:$0xff] %vm18, 0.0
  %28 = vst.msk [vmem:[#allocation2 + $0x40] sm:$0x3] %vm21, 0.0
  %29 = vst.msk [vmem:[#allocation2 + $0x48] sm:$0xff] %vm18, 0.0
  %30 = vst.msk [vmem:[#allocation2 + $0x50] sm:$0xff] %vm18, 0.0
  %31 = vst.msk [vmem:[#allocation2 + $0x58] sm:$0x3] %vm21, 0.0
  %32 = vst.msk [vmem:[#allocation2 + $0x60] sm:$0xff] %vm18, 0.0
  %33 = vst.msk [vmem:[#allocation2 + $0x68] sm:$0xff] %vm18, 0.0
  %34 = vst.msk [vmem:[#allocation2 + $0x70] sm:$0x3] %vm21, 0.0
  %35 = vst.msk [vmem:[#allocation2 + $0x78] sm:$0xff] %vm18, 0.0
  %36 = vst.msk [vmem:[#allocation2 + $0x80] sm:$0xff] %vm18, 0.0
  %37 = vst.msk [vmem:[#allocation2 + $0x88] sm:$0x3] %vm21, 0.0
  %38 = vst.msk [vmem:[#allocation2 + $0x90] sm:$0xff] %vm18, 0.0
  %39 = vst.msk [vmem:[#allocation2 + $0x98] sm:$0xff] %vm18, 0.0
  %40 = vst.msk [vmem:[#allocation2 + $0xa0] sm:$0x3] %vm21, 0.0
  %41 = vst.msk [vmem:[#allocation2 + $0xa8] sm:$0xff] %vm18, 0.0
  %42 = vst.msk [vmem:[#allocation2 + $0xb0] sm:$0xff] %vm18, 0.0
  %43 = vst.msk [vmem:[#allocation2 + $0xb8] sm:$0x3] %vm21, 0.0
  %44 = vst.msk [vmem:[#allocation2 + $0xc0] sm:$0xff] %vm18, 0.0
  %45 = vst.msk [vmem:[#allocation2 + $0xc8] sm:$0xff] %vm18, 0.0
  %46 = vst.msk [vmem:[#allocation2 + $0xd0] sm:$0x3] %vm21, 0.0
  %47 = vst.msk [vmem:[#allocation2 + $0xd8] sm:$0xff] %vm18, 0.0
  %48 = vst.msk [vmem:[#allocation2 + $0xe0] sm:$0xff] %vm18, 0.0
  %49 = vst.msk [vmem:[#allocation2 + $0xe8] sm:$0x3] %vm21, 0.0
  %50 = vst.msk [vmem:[#allocation2 + $0xf0] sm:$0xff] %vm18, 0.0
  %51 = vst.msk [vmem:[#allocation2 + $0xf8] sm:$0xff] %vm18, 0.0
  %52 = vst.msk [vmem:[#allocation2 + $0x100] sm:$0x3] %vm21, 0.0
  %53 = vst.msk [vmem:[#allocation2 + $0x108] sm:$0xff] %vm18, 0.0
  %54 = vst.msk [vmem:[#allocation2 + $0x110] sm:$0xff] %vm18, 0.0
  %55 = vst.msk [vmem:[#allocation2 + $0x118] sm:$0x3] %vm21, 0.0
  %56 = vst.msk [vmem:[#allocation2 + $0x120] sm:$0xff] %vm18, 0.0
  %57 = vst.msk [vmem:[#allocation2 + $0x128] sm:$0xff] %vm18, 0.0
  %58 = vst.msk [vmem:[#allocation2 + $0x130] sm:$0x3] %vm21, 0.0
  %59 = vst.msk [vmem:[#allocation2 + $0x138] sm:$0xff] %vm18, 0.0
  %60 = vst.msk [vmem:[#allocation2 + $0x140] sm:$0xff] %vm18, 0.0
  %61 = vst.msk [vmem:[#allocation2 + $0x148] sm:$0x3] %vm21, 0.0
  %62 = vst.msk [vmem:[#allocation2 + $0x150] sm:$0xff] %vm18, 0.0
  %63 = vst.msk [vmem:[#allocation2 + $0x158] sm:$0xff] %vm18, 0.0
  %64 = vst.msk [vmem:[#allocation2 + $0x160] sm:$0x3] %vm21, 0.0
  %65 = vst.msk [vmem:[#allocation2 + $0x168] sm:$0xff] %vm18, 0.0
  %66 = vst.msk [vmem:[#allocation2 + $0x170] sm:$0xff] %vm18, 0.0
  %67 = vst.msk [vmem:[#allocation2 + $0x178] sm:$0x3] %vm21, 0.0
  %68 = vst.msk [vmem:[#allocation2 + $0x180] sm:$0xff] %vm18, 0.0
  %69 = vst.msk [vmem:[#allocation2 + $0x188] sm:$0xff] %vm18, 0.0
  %70 = vst.msk [vmem:[#allocation2 + $0x190] sm:$0x3] %vm21, 0.0
  %71 = vst.msk [vmem:[#allocation2 + $0x198] sm:$0xff] %vm18, 0.0
  %72 = vst.msk [vmem:[#allocation2 + $0x1a0] sm:$0xff] %vm18, 0.0
  %73 = vst.msk [vmem:[#allocation2 + $0x1a8] sm:$0x3] %vm21, 0.0
  %74 = vst.msk [vmem:[#allocation2 + $0x1b0] sm:$0xff] %vm18, 0.0
  %75 = vst.msk [vmem:[#allocation2 + $0x1b8] sm:$0xff] %vm18, 0.0
  %76 = vst.msk [vmem:[#allocation2 + $0x1c0] sm:$0x3] %vm21, 0.0
  %77 = vst.msk [vmem:[#allocation2 + $0x1c8] sm:$0xff] %vm18, 0.0
  %78 = vst.msk [vmem:[#allocation2 + $0x1d0] sm:$0xff] %vm18, 0.0
  %79 = vst.msk [vmem:[#allocation2 + $0x1d8] sm:$0x3] %vm21, 0.0
  %80 = vst.msk [vmem:[#allocation2 + $0x1e0] sm:$0xff] %vm18, 0.0
  %81 = vst.msk [vmem:[#allocation2 + $0x1e8] sm:$0xff] %vm18, 0.0
  %82 = vst.msk [vmem:[#allocation2 + $0x1f0] sm:$0x3] %vm21, 0.0
  %83 = vst.msk [vmem:[#allocation2 + $0x1f8] sm:$0xff] %vm18, 0.0
  %84 = vst.msk [vmem:[#allocation2 + $0x200] sm:$0xff] %vm18, 0.0
  %85 = vst.msk [vmem:[#allocation2 + $0x208] sm:$0x3] %vm21, 0.0
  %86 = vst.msk [vmem:[#allocation2 + $0x210] sm:$0xff] %vm18, 0.0
  %87 = vst.msk [vmem:[#allocation2 + $0x218] sm:$0xff] %vm18, 0.0
  %88 = vst.msk [vmem:[#allocation2 + $0x220] sm:$0x3] %vm21, 0.0
  %89 = vst.msk [vmem:[#allocation2 + $0x228] sm:$0xff] %vm18, 0.0
  %90 = vst.msk [vmem:[#allocation2 + $0x230] sm:$0xff] %vm18, 0.0
  %91 = vst.msk [vmem:[#allocation2 + $0x238] sm:$0x3] %vm21, 0.0
  %92 = vst.msk [vmem:[#allocation2 + $0x240] sm:$0xff] %vm18, 0.0
  %93 = vst.msk [vmem:[#allocation2 + $0x248] sm:$0xff] %vm18, 0.0
  %94 = vst.msk [vmem:[#allocation2 + $0x250] sm:$0x3] %vm21, 0.0
  %95 = vst.msk [vmem:[#allocation2 + $0x258] sm:$0xff] %vm18, 0.0
  %96 = vst.msk [vmem:[#allocation2 + $0x260] sm:$0xff] %vm18, 0.0
  %97 = vst.msk [vmem:[#allocation2 + $0x268] sm:$0x3] %vm21, 0.0
  %98 = vst.msk [vmem:[#allocation2 + $0x270] sm:$0xff] %vm18, 0.0
  %99 = vst.msk [vmem:[#allocation2 + $0x278] sm:$0xff] %vm18, 0.0
  %100 = vst.msk [vmem:[#allocation2 + $0x280] sm:$0x3] %vm21, 0.0
  %101 = vst.msk [vmem:[#allocation2 + $0x288] sm:$0xff] %vm18, 0.0
  %102 = vst.msk [vmem:[#allocation2 + $0x290] sm:$0xff] %vm18, 0.0
  %103 = vst.msk [vmem:[#allocation2 + $0x298] sm:$0x3] %vm21, 0.0
  %104 = vst.msk [vmem:[#allocation2 + $0x2a0] sm:$0xff] %vm18, 0.0
  %105 = vst.msk [vmem:[#allocation2 + $0x2a8] sm:$0xff] %vm18, 0.0
  %106 = vst.msk [vmem:[#allocation2 + $0x2b0] sm:$0x3] %vm21, 0.0
  %107 = vst.msk [vmem:[#allocation2 + $0x2b8] sm:$0xff] %vm18, 0.0
  %108 = vst.msk [vmem:[#allocation2 + $0x2c0] sm:$0xff] %vm18, 0.0
  %109 = vst.msk [vmem:[#allocation2 + $0x2c8] sm:$0x3] %vm21, 0.0
  %110 = vst.msk [vmem:[#allocation2 + $0x2d0] sm:$0xff] %vm18, 0.0
  %111 = vst.msk [vmem:[#allocation2 + $0x2d8] sm:$0xff] %vm18, 0.0
  %112 = vst.msk [vmem:[#allocation2 + $0x2e0] sm:$0x3] %vm21, 0.0
  %113 = vst.msk [vmem:[#allocation2 + $0x2e8] sm:$0xff] %vm18, 0.0
  %114 = vst.msk [vmem:[#allocation2 + $0x2f0] sm:$0xff] %vm18, 0.0
  %115 = vst.msk [vmem:[#allocation2 + $0x2f8] sm:$0x3] %vm21, 0.0
  %116 = vst.msk [vmem:[#allocation2 + $0x300] sm:$0xff] %vm18, 0.0
  %117 = vst.msk [vmem:[#allocation2 + $0x308] sm:$0xff] %vm18, 0.0
  %118 = vst.msk [vmem:[#allocation2 + $0x310] sm:$0x3] %vm21, 0.0
  %119 = vst.msk [vmem:[#allocation2 + $0x318] sm:$0xff] %vm18, 0.0
  %120 = vst.msk [vmem:[#allocation2 + $0x320] sm:$0xff] %vm18, 0.0
  %121 = vst.msk [vmem:[#allocation2 + $0x328] sm:$0x3] %vm21, 0.0
  %122 = vst.msk [vmem:[#allocation2 + $0x330] sm:$0xff] %vm18, 0.0
  %123 = vst.msk [vmem:[#allocation2 + $0x338] sm:$0xff] %vm18, 0.0
  %124 = vst.msk [vmem:[#allocation2 + $0x340] sm:$0x3] %vm21, 0.0
  %125 = vst.msk [vmem:[#allocation2 + $0x348] sm:$0xff] %vm18, 0.0
  %126 = vst.msk [vmem:[#allocation2 + $0x350] sm:$0xff] %vm18, 0.0
  %127 = vst.msk [vmem:[#allocation2 + $0x358] sm:$0x3] %vm21, 0.0
  %v128 = vld [vmem:[%s0] sm:$0xff]
  %v129 = vld [vmem:[%s0 + $0x8] sm:$0xff]
  %v130 = vld [vmem:[%s0 + $0x10] sm:$0xff]
  %v131 = vld [vmem:[%s0 + $0x18] sm:$0xff]
  %v132 = vld [vmem:[%s0 + $0x20] sm:$0xff]
  %v133 = vld [vmem:[%s0 + $0x28] sm:$0xff]
  %v134 = vld [vmem:[%s0 + $0x30] sm:$0xff]
  %v135 = vld [vmem:[%s0 + $0x38] sm:$0xff]
  %v136 = vld [vmem:[%s0 + $0x40] sm:$0xff]
  %v137 = vld [vmem:[%s0 + $0x48] sm:$0xff]
  %v138 = vld [vmem:[%s0 + $0x50] sm:$0xff]
  %v139 = vld [vmem:[%s0 + $0x58] sm:$0xff]
  %v140 = vld [vmem:[%s0 + $0x60] sm:$0xff]
  %v141 = vld [vmem:[%s0 + $0x68] sm:$0xff]
  %v142 = vld [vmem:[%s0 + $0x70] sm:$0xff]
  %v143 = vld [vmem:[%s0 + $0x78] sm:$0xff]
  %v144 = vld [vmem:[%s0 + $0x80] sm:$0xff]
  %v145 = vld [vmem:[%s0 + $0x88] sm:$0xff]
  %v146 = vld [vmem:[%s0 + $0x90] sm:$0xff]
  %v147 = vld [vmem:[%s0 + $0x98] sm:$0xff]
  %v148 = vld [vmem:[%s0 + $0xa0] sm:$0xff]
  %v149 = vld [vmem:[%s0 + $0xa8] sm:$0xff]
  %v150 = vld [vmem:[%s0 + $0xb0] sm:$0xff]
  %v151 = vld [vmem:[%s0 + $0xb8] sm:$0xff]
  %v152 = vld [vmem:[%s0 + $0xc0] sm:$0xff]
  %v153 = vld [vmem:[%s0 + $0xc8] sm:$0xff]
  %v154 = vld [vmem:[%s0 + $0xd0] sm:$0xff]
  %v155 = vld [vmem:[%s0 + $0xd8] sm:$0xff]
  %v156 = vld [vmem:[%s0 + $0xe0] sm:$0xff]
  %v157 = vld [vmem:[%s0 + $0xe8] sm:$0xff]
  %v158 = vld [vmem:[%s0 + $0xf0] sm:$0xff]
  %v159 = vld [vmem:[%s0 + $0xf8] sm:$0xff]
  %v160 = vld [vmem:[%s0 + $0x100] sm:$0xff]
  %v161 = vld [vmem:[%s0 + $0x108] sm:$0xff]
  %v162 = vld [vmem:[%s0 + $0x110] sm:$0xff]
  %v163 = vld [vmem:[%s0 + $0x118] sm:$0xff]
  %v164 = vld [vmem:[%s0 + $0x120] sm:$0xff]
  %v165 = vld [vmem:[%s0 + $0x128] sm:$0xff]
  %v166 = vld [vmem:[%s0 + $0x130] sm:$0xff]
  %v167 = vld [vmem:[%s0 + $0x138] sm:$0xff]
  %v168 = vld [vmem:[%s0 + $0x140] sm:$0xff]
  %v169 = vld [vmem:[%s0 + $0x148] sm:$0xff]
  %v170 = vld [vmem:[%s0 + $0x150] sm:$0xff]
  %v171 = vld [vmem:[%s0 + $0x158] sm:$0xff]
  %v172 = vld [vmem:[%s0 + $0x160] sm:$0xff]
  %v173 = vld [vmem:[%s0 + $0x168] sm:$0xff]
  %v174 = vld [vmem:[%s0 + $0x170] sm:$0xff]
  %v175 = vld [vmem:[%s0 + $0x178] sm:$0xff]
  %v176 = vld [vmem:[%s0 + $0x180] sm:$0xff]
  %v177 = vld [vmem:[%s0 + $0x188] sm:$0xff]
  %v178 = vld [vmem:[%s0 + $0x190] sm:$0xff]
  %v179 = vld [vmem:[%s0 + $0x198] sm:$0xff]
  %v180 = vld [vmem:[%s0 + $0x1a0] sm:$0xff]
  %v181 = vld [vmem:[%s0 + $0x1a8] sm:$0xff]
  %v182 = vld [vmem:[%s0 + $0x1b0] sm:$0xff]
  %v183 = vld [vmem:[%s0 + $0x1b8] sm:$0xff]
  %v184 = vld [vmem:[%s0 + $0x1c0] sm:$0xff]
  %v185 = vld [vmem:[%s0 + $0x1c8] sm:$0xff]
  %v186 = vld [vmem:[%s0 + $0x1d0] sm:$0xff]
  %v187 = vld [vmem:[%s0 + $0x1d8] sm:$0xff]
  %v188 = vld [vmem:[%s0 + $0x1e0] sm:$0xff]
  %v189 = vld [vmem:[%s0 + $0x1e8] sm:$0xff]
  %v190 = vld [vmem:[%s0 + $0x1f0] sm:$0xff]
  %v191 = vld [vmem:[%s0 + $0x1f8] sm:$0xff]
  %s192 = scalar_lea.vmem [#allocation2], 24
  %193 = vst.msk [vmem:[%s192 + $0x1] sm:$0xff] %vm18, %v128
  %194 = vst.msk [vmem:[%s192 + $0x9] sm:$0xff] %vm18, %v129
  %195 = vst.msk [vmem:[%s192 + $0x19] sm:$0xff] %vm18, %v130
  %196 = vst.msk [vmem:[%s192 + $0x21] sm:$0xff] %vm18, %v131
  %197 = vst.msk [vmem:[%s192 + $0x31] sm:$0xff] %vm18, %v132
  %198 = vst.msk [vmem:[%s192 + $0x39] sm:$0xff] %vm18, %v133
  %199 = vst.msk [vmem:[%s192 + $0x49] sm:$0xff] %vm18, %v134
  %200 = vst.msk [vmem:[%s192 + $0x51] sm:$0xff] %vm18, %v135
  %201 = vst.msk [vmem:[%s192 + $0x61] sm:$0xff] %vm18, %v136
  %202 = vst.msk [vmem:[%s192 + $0x69] sm:$0xff] %vm18, %v137
  %203 = vst.msk [vmem:[%s192 + $0x79] sm:$0xff] %vm18, %v138
  %204 = vst.msk [vmem:[%s192 + $0x81] sm:$0xff] %vm18, %v139
  %205 = vst.msk [vmem:[%s192 + $0x91] sm:$0xff] %vm18, %v140
  %206 = vst.msk [vmem:[%s192 + $0x99] sm:$0xff] %vm18, %v141
  %207 = vst.msk [vmem:[%s192 + $0xa9] sm:$0xff] %vm18, %v142
  %208 = vst.msk [vmem:[%s192 + $0xb1] sm:$0xff] %vm18, %v143
  %209 = vst.msk [vmem:[%s192 + $0xc1] sm:$0xff] %vm18, %v144
  %210 = vst.msk [vmem:[%s192 + $0xc9] sm:$0xff] %vm18, %v145
  %211 = vst.msk [vmem:[%s192 + $0xd9] sm:$0xff] %vm18, %v146
  %212 = vst.msk [vmem:[%s192 + $0xe1] sm:$0xff] %vm18, %v147
  %213 = vst.msk [vmem:[%s192 + $0xf1] sm:$0xff] %vm18, %v148
  %214 = vst.msk [vmem:[%s192 + $0xf9] sm:$0xff] %vm18, %v149
  %215 = vst.msk [vmem:[%s192 + $0x109] sm:$0xff] %vm18, %v150
  %216 = vst.msk [vmem:[%s192 + $0x111] sm:$0xff] %vm18, %v151
  %217 = vst.msk [vmem:[%s192 + $0x121] sm:$0xff] %vm18, %v152
  %218 = vst.msk [vmem:[%s192 + $0x129] sm:$0xff] %vm18, %v153
  %219 = vst.msk [vmem:[%s192 + $0x139] sm:$0xff] %vm18, %v154
  %220 = vst.msk [vmem:[%s192 + $0x141] sm:$0xff] %vm18, %v155
  %221 = vst.msk [vmem:[%s192 + $0x151] sm:$0xff] %vm18, %v156
  %222 = vst.msk [vmem:[%s192 + $0x159] sm:$0xff] %vm18, %v157
  %223 = vst.msk [vmem:[%s192 + $0x169] sm:$0xff] %vm18, %v158
  %224 = vst.msk [vmem:[%s192 + $0x171] sm:$0xff] %vm18, %v159
  %225 = vst.msk [vmem:[%s192 + $0x1b1] sm:$0xff] %vm18, %v160
  %226 = vst.msk [vmem:[%s192 + $0x1b9] sm:$0xff] %vm18, %v161
  %227 = vst.msk [vmem:[%s192 + $0x1c9] sm:$0xff] %vm18, %v162
  %228 = vst.msk [vmem:[%s192 + $0x1d1] sm:$0xff] %vm18, %v163
  %229 = vst.msk [vmem:[%s192 + $0x1e1] sm:$0xff] %vm18, %v164
  %230 = vst.msk [vmem:[%s192 + $0x1e9] sm:$0xff] %vm18, %v165
  %231 = vst.msk [vmem:[%s192 + $0x1f9] sm:$0xff] %vm18, %v166
  %232 = vst.msk [vmem:[%s192 + $0x201] sm:$0xff] %vm18, %v167
  %233 = vst.msk [vmem:[%s192 + $0x211] sm:$0xff] %vm18, %v168
  %234 = vst.msk [vmem:[%s192 + $0x219] sm:$0xff] %vm18, %v169
  %235 = vst.msk [vmem:[%s192 + $0x229] sm:$0xff] %vm18, %v170
  %236 = vst.msk [vmem:[%s192 + $0x231] sm:$0xff] %vm18, %v171
  %237 = vst.msk [vmem:[%s192 + $0x241] sm:$0xff] %vm18, %v172
  %238 = vst.msk [vmem:[%s192 + $0x249] sm:$0xff] %vm18, %v173
  %239 = vst.msk [vmem:[%s192 + $0x259] sm:$0xff] %vm18, %v174
  %240 = vst.msk [vmem:[%s192 + $0x261] sm:$0xff] %vm18, %v175
  %241 = vst.msk [vmem:[%s192 + $0x271] sm:$0xff] %vm18, %v176
  %242 = vst.msk [vmem:[%s192 + $0x279] sm:$0xff] %vm18, %v177
  %243 = vst.msk [vmem:[%s192 + $0x289] sm:$0xff] %vm18, %v178
  %244 = vst.msk [vmem:[%s192 + $0x291] sm:$0xff] %vm18, %v179
  %245 = vst.msk [vmem:[%s192 + $0x2a1] sm:$0xff] %vm18, %v180
  %246 = vst.msk [vmem:[%s192 + $0x2a9] sm:$0xff] %vm18, %v181
  %247 = vst.msk [vmem:[%s192 + $0x2b9] sm:$0xff] %vm18, %v182
  %248 = vst.msk [vmem:[%s192 + $0x2c1] sm:$0xff] %vm18, %v183
  %249 = vst.msk [vmem:[%s192 + $0x2d1] sm:$0xff] %vm18, %v184
  %250 = vst.msk [vmem:[%s192 + $0x2d9] sm:$0xff] %vm18, %v185
  %251 = vst.msk [vmem:[%s192 + $0x2e9] sm:$0xff] %vm18, %v186
  %252 = vst.msk [vmem:[%s192 + $0x2f1] sm:$0xff] %vm18, %v187
  %253 = vst.msk [vmem:[%s192 + $0x301] sm:$0xff] %vm18, %v188
  %254 = vst.msk [vmem:[%s192 + $0x309] sm:$0xff] %vm18, %v189
  %255 = vst.msk [vmem:[%s192 + $0x319] sm:$0xff] %vm18, %v190
  %256 = vst.msk [vmem:[%s192 + $0x321] sm:$0xff] %vm18, %v191
  %v257 = vld [vmem:[#allocation2] sm:$0xff]
  %v258 = vld [vmem:[#allocation2 + $0x8] sm:$0xff]
  %v259 = vld [vmem:[#allocation2 + $0x18] sm:$0xff]
  %v260 = vld [vmem:[#allocation2 + $0x20] sm:$0xff]
  %v261 = vld [vmem:[#allocation2 + $0x30] sm:$0xff]
  %v262 = vld [vmem:[#allocation2 + $0x38] sm:$0xff]
  %v263 = vld [vmem:[#allocation2 + $0x48] sm:$0xff]
  %v264 = vld [vmem:[#allocation2 + $0x50] sm:$0xff]
  %v265 = vld [vmem:[#allocation2 + $0x60] sm:$0xff]
  %v266 = vld [vmem:[#allocation2 + $0x68] sm:$0xff]
  %v267 = vld [vmem:[#allocation2 + $0x78] sm:$0xff]
  %v268 = vld [vmem:[#allocation2 + $0x80] sm:$0xff]
  %v269 = vld [vmem:[#allocation2 + $0x90] sm:$0xff]
  %v270 = vld [vmem:[#allocation2 + $0x98] sm:$0xff]
  %v271 = vld [vmem:[#allocation2 + $0xa8] sm:$0xff]
  %v272 = vld [vmem:[#allocation2 + $0xb0] sm:$0xff]
  %v273 = vld [vmem:[#allocation2 + $0xc0] sm:$0xff]
  %v274 = vld [vmem:[#allocation2 + $0xc8] sm:$0xff]
  %v275 = vld [vmem:[#allocation2 + $0xd8] sm:$0xff]
  %v276 = vld [vmem:[#allocation2 + $0xe0] sm:$0xff]
  %v277 = vld [vmem:[#allocation2 + $0xf0] sm:$0xff]
  %v278 = vld [vmem:[#allocation2 + $0xf8] sm:$0xff]
  %v279 = vld [vmem:[#allocation2 + $0x108] sm:$0xff]
  %v280 = vld [vmem:[#allocation2 + $0x110] sm:$0xff]
  %v281 = vld [vmem:[#allocation2 + $0x120] sm:$0xff]
  %v282 = vld [vmem:[#allocation2 + $0x128] sm:$0xff]
  %v283 = vld [vmem:[#allocation2 + $0x138] sm:$0xff]
  %v284 = vld [vmem:[#allocation2 + $0x140] sm:$0xff]
  %v285 = vld [vmem:[#allocation2 + $0x150] sm:$0xff]
  %v286 = vld [vmem:[#allocation2 + $0x158] sm:$0xff]
  %v287 = vld [vmem:[#allocation2 + $0x168] sm:$0xff]
  %v288 = vld [vmem:[#allocation2 + $0x170] sm:$0xff]
  %v289 = vld [vmem:[#allocation2 + $0x1b0] sm:$0xff]
  %v290 = vld [vmem:[#allocation2 + $0x1b8] sm:$0xff]
  %v291 = vld [vmem:[#allocation2 + $0x1c8] sm:$0xff]
  %v292 = vld [vmem:[#allocation2 + $0x1d0] sm:$0xff]
  %v293 = vld [vmem:[#allocation2 + $0x1e0] sm:$0xff]
  %v294 = vld [vmem:[#allocation2 + $0x1e8] sm:$0xff]
  %v295 = vld [vmem:[#allocation2 + $0x1f8] sm:$0xff]
  %v296 = vld [vmem:[#allocation2 + $0x200] sm:$0xff]
  %v297 = vld [vmem:[#allocation2 + $0x210] sm:$0xff]
  %v298 = vld [vmem:[#allocation2 + $0x218] sm:$0xff]
  %v299 = vld [vmem:[#allocation2 + $0x228] sm:$0xff]
  %v300 = vld [vmem:[#allocation2 + $0x230] sm:$0xff]
  %v301 = vld [vmem:[#allocation2 + $0x240] sm:$0xff]
  %v302 = vld [vmem:[#allocation2 + $0x248] sm:$0xff]
  %v303 = vld [vmem:[#allocation2 + $0x258] sm:$0xff]
  %v304 = vld [vmem:[#allocation2 + $0x260] sm:$0xff]
  %v305 = vld [vmem:[#allocation2 + $0x270] sm:$0xff]
  %v306 = vld [vmem:[#allocation2 + $0x278] sm:$0xff]
  %v307 = vld [vmem:[#allocation2 + $0x288] sm:$0xff]
  %v308 = vld [vmem:[#allocation2 + $0x290] sm:$0xff]
  %v309 = vld [vmem:[#allocation2 + $0x2a0] sm:$0xff]
  %v310 = vld [vmem:[#allocation2 + $0x2a8] sm:$0xff]
  %v311 = vld [vmem:[#allocation2 + $0x2b8] sm:$0xff]
  %v312 = vld [vmem:[#allocation2 + $0x2c0] sm:$0xff]
  %v313 = vld [vmem:[#allocation2 + $0x2d0] sm:$0xff]
  %v314 = vld [vmem:[#allocation2 + $0x2d8] sm:$0xff]
  %v315 = vld [vmem:[#allocation2 + $0x2e8] sm:$0xff]
  %v316 = vld [vmem:[#allocation2 + $0x2f0] sm:$0xff]
  %v317 = vld [vmem:[#allocation2 + $0x300] sm:$0xff]
  %v318 = vld [vmem:[#allocation2 + $0x308] sm:$0xff]
  %v319 = vld [vmem:[#allocation2 + $0x318] sm:$0xff]
  %v320 = vld [vmem:[#allocation2 + $0x320] sm:$0xff]
  %v321 = vpack.c.bf16 %v258, %v257
  %v322 = vpack.c.bf16 %v260, %v259
  %v323 = vpack.c.bf16 %v262, %v261
  %v324 = vpack.c.bf16 %v264, %v263
  %v325 = vpack.c.bf16 %v266, %v265
  %v326 = vpack.c.bf16 %v268, %v267
  %v327 = vpack.c.bf16 %v270, %v269
  %v328 = vpack.c.bf16 %v272, %v271
  %v329 = vpack.c.bf16 %v274, %v273
  %v330 = vpack.c.bf16 %v276, %v275
  %v331 = vpack.c.bf16 %v278, %v277
  %v332 = vpack.c.bf16 %v280, %v279
  %v333 = vpack.c.bf16 %v282, %v281
  %v334 = vpack.c.bf16 %v284, %v283
  %v335 = vpack.c.bf16 %v286, %v285
  %v336 = vpack.c.bf16 %v288, %v287
  %v337 = vpack.c.bf16 %v290, %v289
  %v338 = vpack.c.bf16 %v292, %v291
  %v339 = vpack.c.bf16 %v294, %v293
  %v340 = vpack.c.bf16 %v296, %v295
  %v341 = vpack.c.bf16 %v298, %v297
  %v342 = vpack.c.bf16 %v300, %v299
  %v343 = vpack.c.bf16 %v302, %v301
  %v344 = vpack.c.bf16 %v304, %v303
  %v345 = vpack.c.bf16 %v306, %v305
  %v346 = vpack.c.bf16 %v308, %v307
  %v347 = vpack.c.bf16 %v310, %v309
  %v348 = vpack.c.bf16 %v312, %v311
  %v349 = vpack.c.bf16 %v314, %v313
  %v350 = vpack.c.bf16 %v316, %v315
  %v351 = vpack.c.bf16 %v318, %v317
  %v352 = vpack.c.bf16 %v320, %v319
  %v385 = vunpack.c.l.b16 %v321
  %v386 = vunpack.c.h.b16 %v321
  %v387 = vunpack.c.l.b16 %v322
  %v388 = vunpack.c.h.b16 %v322
  %v389 = vunpack.c.l.b16 %v323
  %v390 = vunpack.c.h.b16 %v323
  %v391 = vunpack.c.l.b16 %v324
  %v392 = vunpack.c.h.b16 %v324
  %v393 = vunpack.c.l.b16 %v325
  %v394 = vunpack.c.h.b16 %v325
  %v395 = vunpack.c.l.b16 %v326
  %v396 = vunpack.c.h.b16 %v326
  %v397 = vunpack.c.l.b16 %v327
  %v398 = vunpack.c.h.b16 %v327
  %v399 = vunpack.c.l.b16 %v328
  %v400 = vunpack.c.h.b16 %v328
  %v401 = vunpack.c.l.b16 %v329
  %v402 = vunpack.c.h.b16 %v329
  %v403 = vunpack.c.l.b16 %v330
  %v404 = vunpack.c.h.b16 %v330
  %v405 = vunpack.c.l.b16 %v331
  %v406 = vunpack.c.h.b16 %v331
  %v407 = vunpack.c.l.b16 %v332
  %v408 = vunpack.c.h.b16 %v332
  %v409 = vunpack.c.l.b16 %v333
  %v410 = vunpack.c.h.b16 %v333
  %v411 = vunpack.c.l.b16 %v334
  %v412 = vunpack.c.h.b16 %v334
  %v413 = vunpack.c.l.b16 %v335
  %v414 = vunpack.c.h.b16 %v335
  %v415 = vunpack.c.l.b16 %v336
  %v416 = vunpack.c.h.b16 %v336
  %v417 = vunpack.c.l.b16 %v337
  %v418 = vunpack.c.h.b16 %v337
  %v419 = vunpack.c.l.b16 %v338
  %v420 = vunpack.c.h.b16 %v338
  %v421 = vunpack.c.l.b16 %v339
  %v422 = vunpack.c.h.b16 %v339
  %v423 = vunpack.c.l.b16 %v340
  %v424 = vunpack.c.h.b16 %v340
  %v425 = vunpack.c.l.b16 %v341
  %v426 = vunpack.c.h.b16 %v341
  %v427 = vunpack.c.l.b16 %v342
  %v428 = vunpack.c.h.b16 %v342
  %v429 = vunpack.c.l.b16 %v343
  %v430 = vunpack.c.h.b16 %v343
  %v431 = vunpack.c.l.b16 %v344
  %v432 = vunpack.c.h.b16 %v344
  %v433 = vunpack.c.l.b16 %v345
  %v434 = vunpack.c.h.b16 %v345
  %v435 = vunpack.c.l.b16 %v346
  %v436 = vunpack.c.h.b16 %v346
  %v437 = vunpack.c.l.b16 %v347
  %v438 = vunpack.c.h.b16 %v347
  %v439 = vunpack.c.l.b16 %v348
  %v440 = vunpack.c.h.b16 %v348
  %v441 = vunpack.c.l.b16 %v349
  %v442 = vunpack.c.h.b16 %v349
  %v443 = vunpack.c.l.b16 %v350
  %v444 = vunpack.c.h.b16 %v350
  %v445 = vunpack.c.l.b16 %v351
  %v446 = vunpack.c.h.b16 %v351
  %v447 = vunpack.c.l.b16 %v352
  %v448 = vunpack.c.h.b16 %v352
  %v449 = vpack.c.b16 %v385, %v385
  %v450 = vpack.c.b16 %v386, %v386
  %v451 = vpack.c.b16 %v387, %v387
  %v452 = vpack.c.b16 %v388, %v388
  %v453 = vpack.c.b16 %v389, %v389
  %v454 = vpack.c.b16 %v390, %v390
  %v455 = vpack.c.b16 %v391, %v391
  %v456 = vpack.c.b16 %v392, %v392
  %v457 = vpack.c.b16 %v393, %v393
  %v458 = vpack.c.b16 %v394, %v394
  %v459 = vpack.c.b16 %v395, %v395
  %v460 = vpack.c.b16 %v396, %v396
  %v461 = vpack.c.b16 %v397, %v397
  %v462 = vpack.c.b16 %v398, %v398
  %v463 = vpack.c.b16 %v399, %v399
  %v464 = vpack.c.b16 %v400, %v400
  %v465 = vpack.c.b16 %v401, %v401
  %v466 = vpack.c.b16 %v402, %v402
  %v467 = vpack.c.b16 %v403, %v403
  %v468 = vpack.c.b16 %v404, %v404
  %v469 = vpack.c.b16 %v405, %v405
  %v470 = vpack.c.b16 %v406, %v406
  %v471 = vpack.c.b16 %v407, %v407
  %v472 = vpack.c.b16 %v408, %v408
  %v473 = vpack.c.b16 %v409, %v409
  %v474 = vpack.c.b16 %v410, %v410
  %v475 = vpack.c.b16 %v411, %v411
  %v476 = vpack.c.b16 %v412, %v412
  %v477 = vpack.c.b16 %v413, %v413
  %v478 = vpack.c.b16 %v414, %v414
  %v479 = vpack.c.b16 %v415, %v415
  %v480 = vpack.c.b16 %v416, %v416
  %v481 = vpack.c.b16 %v417, %v417
  %v482 = vpack.c.b16 %v418, %v418
  %v483 = vpack.c.b16 %v419, %v419
  %v484 = vpack.c.b16 %v420, %v420
  %v485 = vpack.c.b16 %v421, %v421
  %v486 = vpack.c.b16 %v422, %v422
  %v487 = vpack.c.b16 %v423, %v423
  %v488 = vpack.c.b16 %v424, %v424
  %v489 = vpack.c.b16 %v425, %v425
  %v490 = vpack.c.b16 %v426, %v426
  %v491 = vpack.c.b16 %v427, %v427
  %v492 = vpack.c.b16 %v428, %v428
  %v493 = vpack.c.b16 %v429, %v429
  %v494 = vpack.c.b16 %v430, %v430
  %v495 = vpack.c.b16 %v431, %v431
  %v496 = vpack.c.b16 %v432, %v432
  %v497 = vpack.c.b16 %v433, %v433
  %v498 = vpack.c.b16 %v434, %v434
  %v499 = vpack.c.b16 %v435, %v435
  %v500 = vpack.c.b16 %v436, %v436
  %v501 = vpack.c.b16 %v437, %v437
  %v502 = vpack.c.b16 %v438, %v438
  %v503 = vpack.c.b16 %v439, %v439
  %v504 = vpack.c.b16 %v440, %v440
  %v505 = vpack.c.b16 %v441, %v441
  %v506 = vpack.c.b16 %v442, %v442
  %v507 = vpack.c.b16 %v443, %v443
  %v508 = vpack.c.b16 %v444, %v444
  %v509 = vpack.c.b16 %v445, %v445
  %v510 = vpack.c.b16 %v446, %v446
  %v511 = vpack.c.b16 %v447, %v447
  %v512 = vpack.c.b16 %v448, %v448
  %vm577 = vcmask 27648
  %578 = vst.msk [vmem:[#allocation3] sm:$0xf] %vm577, %v449
  %579 = vst.msk [vmem:[#allocation3 + $0x4] sm:$0xf] %vm577, %v450
  %580 = vst.msk [vmem:[#allocation3 + $0x8] sm:$0xf] %vm577, %v451
  %581 = vst.msk [vmem:[#allocation3 + $0xc] sm:$0xf] %vm577, %v452
  %582 = vst.msk [vmem:[#allocation3 + $0x10] sm:$0xf] %vm577, %v453
  %583 = vst.msk [vmem:[#allocation3 + $0x14] sm:$0xf] %vm577, %v454
  %584 = vst.msk [vmem:[#allocation3 + $0x18] sm:$0xf] %vm577, %v455
  %585 = vst.msk [vmem:[#allocation3 + $0x1c] sm:$0xf] %vm577, %v456
  %586 = vst.msk [vmem:[#allocation3 + $0x20] sm:$0xf] %vm577, %v457
  %587 = vst.msk [vmem:[#allocation3 + $0x24] sm:$0xf] %vm577, %v458
  %588 = vst.msk [vmem:[#allocation3 + $0x28] sm:$0xf] %vm577, %v459
  %589 = vst.msk [vmem:[#allocation3 + $0x2c] sm:$0xf] %vm577, %v460
  %590 = vst.msk [vmem:[#allocation3 + $0x30] sm:$0xf] %vm577, %v461
  %591 = vst.msk [vmem:[#allocation3 + $0x34] sm:$0xf] %vm577, %v462
  %592 = vst.msk [vmem:[#allocation3 + $0x38] sm:$0xf] %vm577, %v463
  %593 = vst.msk [vmem:[#allocation3 + $0x3c] sm:$0xf] %vm577, %v464
  %594 = vst.msk [vmem:[#allocation3 + $0x40] sm:$0xf] %vm577, %v465
  %595 = vst.msk [vmem:[#allocation3 + $0x44] sm:$0xf] %vm577, %v466
  %596 = vst.msk [vmem:[#allocation3 + $0x48] sm:$0xf] %vm577, %v467
  %597 = vst.msk [vmem:[#allocation3 + $0x4c] sm:$0xf] %vm577, %v468
  %598 = vst.msk [vmem:[#allocation3 + $0x50] sm:$0xf] %vm577, %v469
  %599 = vst.msk [vmem:[#allocation3 + $0x54] sm:$0xf] %vm577, %v470
  %600 = vst.msk [vmem:[#allocation3 + $0x58] sm:$0xf] %vm577, %v471
  %601 = vst.msk [vmem:[#allocation3 + $0x5c] sm:$0xf] %vm577, %v472
  %602 = vst.msk [vmem:[#allocation3 + $0x60] sm:$0xf] %vm577, %v473
  %603 = vst.msk [vmem:[#allocation3 + $0x64] sm:$0xf] %vm577, %v474
  %604 = vst.msk [vmem:[#allocation3 + $0x68] sm:$0xf] %vm577, %v475
  %605 = vst.msk [vmem:[#allocation3 + $0x6c] sm:$0xf] %vm577, %v476
  %606 = vst.msk [vmem:[#allocation3 + $0x70] sm:$0xf] %vm577, %v477
  %607 = vst.msk [vmem:[#allocation3 + $0x74] sm:$0xf] %vm577, %v478
  %608 = vst.msk [vmem:[#allocation3 + $0x78] sm:$0xf] %vm577, %v479
  %609 = vst.msk [vmem:[#allocation3 + $0x7c] sm:$0xf] %vm577, %v480
  %610 = vst.msk [vmem:[#allocation3 + $0x80] sm:$0xf] %vm577, %v481
  %611 = vst.msk [vmem:[#allocation3 + $0x84] sm:$0xf] %vm577, %v482
  %612 = vst.msk [vmem:[#allocation3 + $0x88] sm:$0xf] %vm577, %v483
  %613 = vst.msk [vmem:[#allocation3 + $0x8c] sm:$0xf] %vm577, %v484
  %614 = vst.msk [vmem:[#allocation3 + $0x90] sm:$0xf] %vm577, %v485
  %615 = vst.msk [vmem:[#allocation3 + $0x94] sm:$0xf] %vm577, %v486
  %616 = vst.msk [vmem:[#allocation3 + $0x98] sm:$0xf] %vm577, %v487
  %617 = vst.msk [vmem:[#allocation3 + $0x9c] sm:$0xf] %vm577, %v488
  %618 = vst.msk [vmem:[#allocation3 + $0xa0] sm:$0xf] %vm577, %v489
  %619 = vst.msk [vmem:[#allocation3 + $0xa4] sm:$0xf] %vm577, %v490
  %620 = vst.msk [vmem:[#allocation3 + $0xa8] sm:$0xf] %vm577, %v491
  %621 = vst.msk [vmem:[#allocation3 + $0xac] sm:$0xf] %vm577, %v492
  %622 = vst.msk [vmem:[#allocation3 + $0xb0] sm:$0xf] %vm577, %v493
  %623 = vst.msk [vmem:[#allocation3 + $0xb4] sm:$0xf] %vm577, %v494
  %624 = vst.msk [vmem:[#allocation3 + $0xb8] sm:$0xf] %vm577, %v495
  %625 = vst.msk [vmem:[#allocation3 + $0xbc] sm:$0xf] %vm577, %v496
  %626 = vst.msk [vmem:[#allocation3 + $0xc0] sm:$0xf] %vm577, %v497
  %627 = vst.msk [vmem:[#allocation3 + $0xc4] sm:$0xf] %vm577, %v498
  %628 = vst.msk [vmem:[#allocation3 + $0xc8] sm:$0xf] %vm577, %v499
  %629 = vst.msk [vmem:[#allocation3 + $0xcc] sm:$0xf] %vm577, %v500
  %630 = vst.msk [vmem:[#allocation3 + $0xd0] sm:$0xf] %vm577, %v501
  %631 = vst.msk [vmem:[#allocation3 + $0xd4] sm:$0xf] %vm577, %v502
  %632 = vst.msk [vmem:[#allocation3 + $0xd8] sm:$0xf] %vm577, %v503
  %633 = vst.msk [vmem:[#allocation3 + $0xdc] sm:$0xf] %vm577, %v504
  %634 = vst.msk [vmem:[#allocation3 + $0xe0] sm:$0xf] %vm577, %v505
  %635 = vst.msk [vmem:[#allocation3 + $0xe4] sm:$0xf] %vm577, %v506
  %636 = vst.msk [vmem:[#allocation3 + $0xe8] sm:$0xf] %vm577, %v507
  %637 = vst.msk [vmem:[#allocation3 + $0xec] sm:$0xf] %vm577, %v508
  %638 = vst.msk [vmem:[#allocation3 + $0xf0] sm:$0xf] %vm577, %v509
  %639 = vst.msk [vmem:[#allocation3 + $0xf4] sm:$0xf] %vm577, %v510
  %640 = vst.msk [vmem:[#allocation3 + $0xf8] sm:$0xf] %vm577, %v511
  %641 = vst.msk [vmem:[#allocation3 + $0xfc] sm:$0xf] %vm577, %v512
  %v642 = vld [vmem:[#allocation2 + $0x1] sm:$0xff]
  %v643 = vld [vmem:[#allocation2 + $0x9] sm:$0xff]
  %v644 = vld [vmem:[#allocation2 + $0x19] sm:$0xff]
  %v645 = vld [vmem:[#allocation2 + $0x21] sm:$0xff]
  %v646 = vld [vmem:[#allocation2 + $0x31] sm:$0xff]
  %v647 = vld [vmem:[#allocation2 + $0x39] sm:$0xff]
  %v648 = vld [vmem:[#allocation2 + $0x49] sm:$0xff]
  %v649 = vld [vmem:[#allocation2 + $0x51] sm:$0xff]
  %v650 = vld [vmem:[#allocation2 + $0x61] sm:$0xff]
  %v651 = vld [vmem:[#allocation2 + $0x69] sm:$0xff]
  %v652 = vld [vmem:[#allocation2 + $0x79] sm:$0xff]
  %v653 = vld [vmem:[#allocation2 + $0x81] sm:$0xff]
  %v654 = vld [vmem:[#allocation2 + $0x91] sm:$0xff]
  %v655 = vld [vmem:[#allocation2 + $0x99] sm:$0xff]
  %v656 = vld [vmem:[#allocation2 + $0xa9] sm:$0xff]
  %v657 = vld [vmem:[#allocation2 + $0xb1] sm:$0xff]
  %v658 = vld [vmem:[#allocation2 + $0xc1] sm:$0xff]
  %v659 = vld [vmem:[#allocation2 + $0xc9] sm:$0xff]
  %v660 = vld [vmem:[#allocation2 + $0xd9] sm:$0xff]
  %v661 = vld [vmem:[#allocation2 + $0xe1] sm:$0xff]
  %v662 = vld [vmem:[#allocation2 + $0xf1] sm:$0xff]
  %v663 = vld [vmem:[#allocation2 + $0xf9] sm:$0xff]
  %v664 = vld [vmem:[#allocation2 + $0x109] sm:$0xff]
  %v665 = vld [vmem:[#allocation2 + $0x111] sm:$0xff]
  %v666 = vld [vmem:[#allocation2 + $0x121] sm:$0xff]
  %v667 = vld [vmem:[#allocation2 + $0x129] sm:$0xff]
  %v668 = vld [vmem:[#allocation2 + $0x139] sm:$0xff]
  %v669 = vld [vmem:[#allocation2 + $0x141] sm:$0xff]
  %v670 = vld [vmem:[#allocation2 + $0x151] sm:$0xff]
  %v671 = vld [vmem:[#allocation2 + $0x159] sm:$0xff]
  %v672 = vld [vmem:[#allocation2 + $0x169] sm:$0xff]
  %v673 = vld [vmem:[#allocation2 + $0x171] sm:$0xff]
  %v674 = vld [vmem:[#allocation2 + $0x1b1] sm:$0xff]
  %v675 = vld [vmem:[#allocation2 + $0x1b9] sm:$0xff]
  %v676 = vld [vmem:[#allocation2 + $0x1c9] sm:$0xff]
  %v677 = vld [vmem:[#allocation2 + $0x1d1] sm:$0xff]
  %v678 = vld [vmem:[#allocation2 + $0x1e1] sm:$0xff]
  %v679 = vld [vmem:[#allocation2 + $0x1e9] sm:$0xff]
  %v680 = vld [vmem:[#allocation2 + $0x1f9] sm:$0xff]
  %v681 = vld [vmem:[#allocation2 + $0x201] sm:$0xff]
  %v682 = vld [vmem:[#allocation2 + $0x211] sm:$0xff]
  %v683 = vld [vmem:[#allocation2 + $0x219] sm:$0xff]
  %v684 = vld [vmem:[#allocation2 + $0x229] sm:$0xff]
  %v685 = vld [vmem:[#allocation2 + $0x231] sm:$0xff]
  %v686 = vld [vmem:[#allocation2 + $0x241] sm:$0xff]
  %v687 = vld [vmem:[#allocation2 + $0x249] sm:$0xff]
  %v688 = vld [vmem:[#allocation2 + $0x259] sm:$0xff]
  %v689 = vld [vmem:[#allocation2 + $0x261] sm:$0xff]
  %v690 = vld [vmem:[#allocation2 + $0x271] sm:$0xff]
  %v691 = vld [vmem:[#allocation2 + $0x279] sm:$0xff]
  %v692 = vld [vmem:[#allocation2 + $0x289] sm:$0xff]
  %v693 = vld [vmem:[#allocation2 + $0x291] sm:$0xff]
  %v694 = vld [vmem:[#allocation2 + $0x2a1] sm:$0xff]
  %v695 = vld [vmem:[#allocation2 + $0x2a9] sm:$0xff]
  %v696 = vld [vmem:[#allocation2 + $0x2b9] sm:$0xff]
  %v697 = vld [vmem:[#allocation2 + $0x2c1] sm:$0xff]
  %v698 = vld [vmem:[#allocation2 + $0x2d1] sm:$0xff]
  %v699 = vld [vmem:[#allocation2 + $0x2d9] sm:$0xff]
  %v700 = vld [vmem:[#allocation2 + $0x2e9] sm:$0xff]
  %v701 = vld [vmem:[#allocation2 + $0x2f1] sm:$0xff]
  %v702 = vld [vmem:[#allocation2 + $0x301] sm:$0xff]
  %v703 = vld [vmem:[#allocation2 + $0x309] sm:$0xff]
  %v704 = vld [vmem:[#allocation2 + $0x319] sm:$0xff]
  %v705 = vld [vmem:[#allocation2 + $0x321] sm:$0xff]
  %v706 = vpack.c.bf16 %v643, %v642
  %v707 = vpack.c.bf16 %v645, %v644
  %v708 = vpack.c.bf16 %v647, %v646
  %v709 = vpack.c.bf16 %v649, %v648
  %v710 = vpack.c.bf16 %v651, %v650
  %v711 = vpack.c.bf16 %v653, %v652
  %v712 = vpack.c.bf16 %v655, %v654
  %v713 = vpack.c.bf16 %v657, %v656
  %v714 = vpack.c.bf16 %v659, %v658
  %v715 = vpack.c.bf16 %v661, %v660
  %v716 = vpack.c.bf16 %v663, %v662
  %v717 = vpack.c.bf16 %v665, %v664
  %v718 = vpack.c.bf16 %v667, %v666
  %v719 = vpack.c.bf16 %v669, %v668
  %v720 = vpack.c.bf16 %v671, %v670
  %v721 = vpack.c.bf16 %v673, %v672
  %v722 = vpack.c.bf16 %v675, %v674
  %v723 = vpack.c.bf16 %v677, %v676
  %v724 = vpack.c.bf16 %v679, %v678
  %v725 = vpack.c.bf16 %v681, %v680
  %v726 = vpack.c.bf16 %v683, %v682
  %v727 = vpack.c.bf16 %v685, %v684
  %v728 = vpack.c.bf16 %v687, %v686
  %v729 = vpack.c.bf16 %v689, %v688
  %v730 = vpack.c.bf16 %v691, %v690
  %v731 = vpack.c.bf16 %v693, %v692
  %v732 = vpack.c.bf16 %v695, %v694
  %v733 = vpack.c.bf16 %v697, %v696
  %v734 = vpack.c.bf16 %v699, %v698
  %v735 = vpack.c.bf16 %v701, %v700
  %v736 = vpack.c.bf16 %v703, %v702
  %v737 = vpack.c.bf16 %v705, %v704
  %v770 = vunpack.c.l.b16 %v706
  %v771 = vunpack.c.h.b16 %v706
  %v772 = vunpack.c.l.b16 %v707
  %v773 = vunpack.c.h.b16 %v707
  %v774 = vunpack.c.l.b16 %v708
  %v775 = vunpack.c.h.b16 %v708
  %v776 = vunpack.c.l.b16 %v709
  %v777 = vunpack.c.h.b16 %v709
  %v778 = vunpack.c.l.b16 %v710
  %v779 = vunpack.c.h.b16 %v710
  %v780 = vunpack.c.l.b16 %v711
  %v781 = vunpack.c.h.b16 %v711
  %v782 = vunpack.c.l.b16 %v712
  %v783 = vunpack.c.h.b16 %v712
  %v784 = vunpack.c.l.b16 %v713
  %v785 = vunpack.c.h.b16 %v713
  %v786 = vunpack.c.l.b16 %v714
  %v787 = vunpack.c.h.b16 %v714
  %v788 = vunpack.c.l.b16 %v715
  %v789 = vunpack.c.h.b16 %v715
  %v790 = vunpack.c.l.b16 %v716
  %v791 = vunpack.c.h.b16 %v716
  %v792 = vunpack.c.l.b16 %v717
  %v793 = vunpack.c.h.b16 %v717
  %v794 = vunpack.c.l.b16 %v718
  %v795 = vunpack.c.h.b16 %v718
  %v796 = vunpack.c.l.b16 %v719
  %v797 = vunpack.c.h.b16 %v719
  %v798 = vunpack.c.l.b16 %v720
  %v799 = vunpack.c.h.b16 %v720
  %v800 = vunpack.c.l.b16 %v721
  %v801 = vunpack.c.h.b16 %v721
  %v802 = vunpack.c.l.b16 %v722
  %v803 = vunpack.c.h.b16 %v722
  %v804 = vunpack.c.l.b16 %v723
  %v805 = vunpack.c.h.b16 %v723
  %v806 = vunpack.c.l.b16 %v724
  %v807 = vunpack.c.h.b16 %v724
  %v808 = vunpack.c.l.b16 %v725
  %v809 = vunpack.c.h.b16 %v725
  %v810 = vunpack.c.l.b16 %v726
  %v811 = vunpack.c.h.b16 %v726
  %v812 = vunpack.c.l.b16 %v727
  %v813 = vunpack.c.h.b16 %v727
  %v814 = vunpack.c.l.b16 %v728
  %v815 = vunpack.c.h.b16 %v728
  %v816 = vunpack.c.l.b16 %v729
  %v817 = vunpack.c.h.b16 %v729
  %v818 = vunpack.c.l.b16 %v730
  %v819 = vunpack.c.h.b16 %v730
  %v820 = vunpack.c.l.b16 %v731
  %v821 = vunpack.c.h.b16 %v731
  %v822 = vunpack.c.l.b16 %v732
  %v823 = vunpack.c.h.b16 %v732
  %v824 = vunpack.c.l.b16 %v733
  %v825 = vunpack.c.h.b16 %v733
  %v826 = vunpack.c.l.b16 %v734
  %v827 = vunpack.c.h.b16 %v734
  %v828 = vunpack.c.l.b16 %v735
  %v829 = vunpack.c.h.b16 %v735
  %v830 = vunpack.c.l.b16 %v736
  %v831 = vunpack.c.h.b16 %v736
  %v832 = vunpack.c.l.b16 %v737
  %v833 = vunpack.c.h.b16 %v737
  %v834 = vpack.c.b16 %v770, %v770
  %v835 = vpack.c.b16 %v771, %v771
  %v836 = vpack.c.b16 %v772, %v772
  %v837 = vpack.c.b16 %v773, %v773
  %v838 = vpack.c.b16 %v774, %v774
  %v839 = vpack.c.b16 %v775, %v775
  %v840 = vpack.c.b16 %v776, %v776
  %v841 = vpack.c.b16 %v777, %v777
  %v842 = vpack.c.b16 %v778, %v778
  %v843 = vpack.c.b16 %v779, %v779
  %v844 = vpack.c.b16 %v780, %v780
  %v845 = vpack.c.b16 %v781, %v781
  %v846 = vpack.c.b16 %v782, %v782
  %v847 = vpack.c.b16 %v783, %v783
  %v848 = vpack.c.b16 %v784, %v784
  %v849 = vpack.c.b16 %v785, %v785
  %v850 = vpack.c.b16 %v786, %v786
  %v851 = vpack.c.b16 %v787, %v787
  %v852 = vpack.c.b16 %v788, %v788
  %v853 = vpack.c.b16 %v789, %v789
  %v854 = vpack.c.b16 %v790, %v790
  %v855 = vpack.c.b16 %v791, %v791
  %v856 = vpack.c.b16 %v792, %v792
  %v857 = vpack.c.b16 %v793, %v793
  %v858 = vpack.c.b16 %v794, %v794
  %v859 = vpack.c.b16 %v795, %v795
  %v860 = vpack.c.b16 %v796, %v796
  %v861 = vpack.c.b16 %v797, %v797
  %v862 = vpack.c.b16 %v798, %v798
  %v863 = vpack.c.b16 %v799, %v799
  %v864 = vpack.c.b16 %v800, %v800
  %v865 = vpack.c.b16 %v801, %v801
  %v866 = vpack.c.b16 %v802, %v802
  %v867 = vpack.c.b16 %v803, %v803
  %v868 = vpack.c.b16 %v804, %v804
  %v869 = vpack.c.b16 %v805, %v805
  %v870 = vpack.c.b16 %v806, %v806
  %v871 = vpack.c.b16 %v807, %v807
  %v872 = vpack.c.b16 %v808, %v808
  %v873 = vpack.c.b16 %v809, %v809
  %v874 = vpack.c.b16 %v810, %v810
  %v875 = vpack.c.b16 %v811, %v811
  %v876 = vpack.c.b16 %v812, %v812
  %v877 = vpack.c.b16 %v813, %v813
  %v878 = vpack.c.b16 %v814, %v814
  %v879 = vpack.c.b16 %v815, %v815
  %v880 = vpack.c.b16 %v816, %v816
  %v881 = vpack.c.b16 %v817, %v817
  %v882 = vpack.c.b16 %v818, %v818
  %v883 = vpack.c.b16 %v819, %v819
  %v884 = vpack.c.b16 %v820, %v820
  %v885 = vpack.c.b16 %v821, %v821
  %v886 = vpack.c.b16 %v822, %v822
  %v887 = vpack.c.b16 %v823, %v823
  %v888 = vpack.c.b16 %v824, %v824
  %v889 = vpack.c.b16 %v825, %v825
  %v890 = vpack.c.b16 %v826, %v826
  %v891 = vpack.c.b16 %v827, %v827
  %v892 = vpack.c.b16 %v828, %v828
  %v893 = vpack.c.b16 %v829, %v829
  %v894 = vpack.c.b16 %v830, %v830
  %v895 = vpack.c.b16 %v831, %v831
  %v896 = vpack.c.b16 %v832, %v832
  %v897 = vpack.c.b16 %v833, %v833
  %898 = vrot.lane.b32.xlu0 %v834, 4
  %v899 = vpop.permute.xlu0 %898
  %900 = vrot.lane.b32.xlu0 %v835, 4
  %v901 = vpop.permute.xlu0 %900
  %902 = vrot.lane.b32.xlu0 %v836, 4
  %v903 = vpop.permute.xlu0 %902
  %904 = vrot.lane.b32.xlu0 %v837, 4
  %v905 = vpop.permute.xlu0 %904
  %906 = vrot.lane.b32.xlu0 %v838, 4
  %v907 = vpop.permute.xlu0 %906
  %908 = vrot.lane.b32.xlu0 %v839, 4
  %v909 = vpop.permute.xlu0 %908
  %910 = vrot.lane.b32.xlu0 %v840, 4
  %v911 = vpop.permute.xlu0 %910
  %912 = vrot.lane.b32.xlu0 %v841, 4
  %v913 = vpop.permute.xlu0 %912
  %914 = vrot.lane.b32.xlu0 %v842, 4
  %v915 = vpop.permute.xlu0 %914
  %916 = vrot.lane.b32.xlu0 %v843, 4
  %v917 = vpop.permute.xlu0 %916
  %918 = vrot.lane.b32.xlu0 %v844, 4
  %v919 = vpop.permute.xlu0 %918
  %920 = vrot.lane.b32.xlu0 %v845, 4
  %v921 = vpop.permute.xlu0 %920
  %922 = vrot.lane.b32.xlu0 %v846, 4
  %v923 = vpop.permute.xlu0 %922
  %924 = vrot.lane.b32.xlu0 %v847, 4
  %v925 = vpop.permute.xlu0 %924
  %926 = vrot.lane.b32.xlu0 %v848, 4
  %v927 = vpop.permute.xlu0 %926
  %928 = vrot.lane.b32.xlu0 %v849, 4
  %v929 = vpop.permute.xlu0 %928
  %930 = vrot.lane.b32.xlu0 %v850, 4
  %v931 = vpop.permute.xlu0 %930
  %932 = vrot.lane.b32.xlu0 %v851, 4
  %v933 = vpop.permute.xlu0 %932
  %934 = vrot.lane.b32.xlu0 %v852, 4
  %v935 = vpop.permute.xlu0 %934
  %936 = vrot.lane.b32.xlu0 %v853, 4
  %v937 = vpop.permute.xlu0 %936
  %938 = vrot.lane.b32.xlu0 %v854, 4
  %v939 = vpop.permute.xlu0 %938
  %940 = vrot.lane.b32.xlu0 %v855, 4
  %v941 = vpop.permute.xlu0 %940
  %942 = vrot.lane.b32.xlu0 %v856, 4
  %v943 = vpop.permute.xlu0 %942
  %944 = vrot.lane.b32.xlu0 %v857, 4
  %v945 = vpop.permute.xlu0 %944
  %946 = vrot.lane.b32.xlu0 %v858, 4
  %v947 = vpop.permute.xlu0 %946
  %948 = vrot.lane.b32.xlu0 %v859, 4
  %v949 = vpop.permute.xlu0 %948
  %950 = vrot.lane.b32.xlu0 %v860, 4
  %v951 = vpop.permute.xlu0 %950
  %952 = vrot.lane.b32.xlu0 %v861, 4
  %v953 = vpop.permute.xlu0 %952
  %954 = vrot.lane.b32.xlu0 %v862, 4
  %v955 = vpop.permute.xlu0 %954
  %956 = vrot.lane.b32.xlu0 %v863, 4
  %v957 = vpop.permute.xlu0 %956
  %958 = vrot.lane.b32.xlu0 %v864, 4
  %v959 = vpop.permute.xlu0 %958
  %960 = vrot.lane.b32.xlu0 %v865, 4
  %v961 = vpop.permute.xlu0 %960
  %962 = vrot.lane.b32.xlu0 %v866, 4
  %v963 = vpop.permute.xlu0 %962
  %964 = vrot.lane.b32.xlu0 %v867, 4
  %v965 = vpop.permute.xlu0 %964
  %966 = vrot.lane.b32.xlu0 %v868, 4
  %v967 = vpop.permute.xlu0 %966
  %968 = vrot.lane.b32.xlu0 %v869, 4
  %v969 = vpop.permute.xlu0 %968
  %970 = vrot.lane.b32.xlu0 %v870, 4
  %v971 = vpop.permute.xlu0 %970
  %972 = vrot.lane.b32.xlu0 %v871, 4
  %v973 = vpop.permute.xlu0 %972
  %974 = vrot.lane.b32.xlu0 %v872, 4
  %v975 = vpop.permute.xlu0 %974
  %976 = vrot.lane.b32.xlu0 %v873, 4
  %v977 = vpop.permute.xlu0 %976
  %978 = vrot.lane.b32.xlu0 %v874, 4
  %v979 = vpop.permute.xlu0 %978
  %980 = vrot.lane.b32.xlu0 %v875, 4
  %v981 = vpop.permute.xlu0 %980
  %982 = vrot.lane.b32.xlu0 %v876, 4
  %v983 = vpop.permute.xlu0 %982
  %984 = vrot.lane.b32.xlu0 %v877, 4
  %v985 = vpop.permute.xlu0 %984
  %986 = vrot.lane.b32.xlu0 %v878, 4
  %v987 = vpop.permute.xlu0 %986
  %988 = vrot.lane.b32.xlu0 %v879, 4
  %v989 = vpop.permute.xlu0 %988
  %990 = vrot.lane.b32.xlu0 %v880, 4
  %v991 = vpop.permute.xlu0 %990
  %992 = vrot.lane.b32.xlu0 %v881, 4
  %v993 = vpop.permute.xlu0 %992
  %994 = vrot.lane.b32.xlu0 %v882, 4
  %v995 = vpop.permute.xlu0 %994
  %996 = vrot.lane.b32.xlu0 %v883, 4
  %v997 = vpop.permute.xlu0 %996
  %998 = vrot.lane.b32.xlu0 %v884, 4
  %v999 = vpop.permute.xlu0 %998
  %1000 = vrot.lane.b32.xlu0 %v885, 4
  %v1001 = vpop.permute.xlu0 %1000
  %1002 = vrot.lane.b32.xlu0 %v886, 4
  %v1003 = vpop.permute.xlu0 %1002
  %1004 = vrot.lane.b32.xlu0 %v887, 4
  %v1005 = vpop.permute.xlu0 %1004
  %1006 = vrot.lane.b32.xlu0 %v888, 4
  %v1007 = vpop.permute.xlu0 %1006
  %1008 = vrot.lane.b32.xlu0 %v889, 4
  %v1009 = vpop.permute.xlu0 %1008
  %1010 = vrot.lane.b32.xlu0 %v890, 4
  %v1011 = vpop.permute.xlu0 %1010
  %1012 = vrot.lane.b32.xlu0 %v891, 4
  %v1013 = vpop.permute.xlu0 %1012
  %1014 = vrot.lane.b32.xlu0 %v892, 4
  %v1015 = vpop.permute.xlu0 %1014
  %1016 = vrot.lane.b32.xlu0 %v893, 4
  %v1017 = vpop.permute.xlu0 %1016
  %1018 = vrot.lane.b32.xlu0 %v894, 4
  %v1019 = vpop.permute.xlu0 %1018
  %1020 = vrot.lane.b32.xlu0 %v895, 4
  %v1021 = vpop.permute.xlu0 %1020
  %1022 = vrot.lane.b32.xlu0 %v896, 4
  %v1023 = vpop.permute.xlu0 %1022
  %1024 = vrot.lane.b32.xlu0 %v897, 4
  %v1025 = vpop.permute.xlu0 %1024
  %vm1090 = vcmask 60448
  %1091 = vst.msk [vmem:[#allocation3] sm:$0xf] %vm1090, %v899
  %1092 = vst.msk [vmem:[#allocation3 + $0x4] sm:$0xf] %vm1090, %v901
  %1093 = vst.msk [vmem:[#allocation3 + $0x8] sm:$0xf] %vm1090, %v903
  %1094 = vst.msk [vmem:[#allocation3 + $0xc] sm:$0xf] %vm1090, %v905
  %1095 = vst.msk [vmem:[#allocation3 + $0x10] sm:$0xf] %vm1090, %v907
  %1096 = vst.msk [vmem:[#allocation3 + $0x14] sm:$0xf] %vm1090, %v909
  %1097 = vst.msk [vmem:[#allocation3 + $0x18] sm:$0xf] %vm1090, %v911
  %1098 = vst.msk [vmem:[#allocation3 + $0x1c] sm:$0xf] %vm1090, %v913
  %1099 = vst.msk [vmem:[#allocation3 + $0x20] sm:$0xf] %vm1090, %v915
  %1100 = vst.msk [vmem:[#allocation3 + $0x24] sm:$0xf] %vm1090, %v917
  %1101 = vst.msk [vmem:[#allocation3 + $0x28] sm:$0xf] %vm1090, %v919
  %1102 = vst.msk [vmem:[#allocation3 + $0x2c] sm:$0xf] %vm1090, %v921
  %1103 = vst.msk [vmem:[#allocation3 + $0x30] sm:$0xf] %vm1090, %v923
  %1104 = vst.msk [vmem:[#allocation3 + $0x34] sm:$0xf] %vm1090, %v925
  %1105 = vst.msk [vmem:[#allocation3 + $0x38] sm:$0xf] %vm1090, %v927
  %1106 = vst.msk [vmem:[#allocation3 + $0x3c] sm:$0xf] %vm1090, %v929
  %1107 = vst.msk [vmem:[#allocation3 + $0x40] sm:$0xf] %vm1090, %v931
  %1108 = vst.msk [vmem:[#allocation3 + $0x44] sm:$0xf] %vm1090, %v933
  %1109 = vst.msk [vmem:[#allocation3 + $0x48] sm:$0xf] %vm1090, %v935
  %1110 = vst.msk [vmem:[#allocation3 + $0x4c] sm:$0xf] %vm1090, %v937
  %1111 = vst.msk [vmem:[#allocation3 + $0x50] sm:$0xf] %vm1090, %v939
  %1112 = vst.msk [vmem:[#allocation3 + $0x54] sm:$0xf] %vm1090, %v941
  %1113 = vst.msk [vmem:[#allocation3 + $0x58] sm:$0xf] %vm1090, %v943
  %1114 = vst.msk [vmem:[#allocation3 + $0x5c] sm:$0xf] %vm1090, %v945
  %1115 = vst.msk [vmem:[#allocation3 + $0x60] sm:$0xf] %vm1090, %v947
  %1116 = vst.msk [vmem:[#allocation3 + $0x64] sm:$0xf] %vm1090, %v949
  %1117 = vst.msk [vmem:[#allocation3 + $0x68] sm:$0xf] %vm1090, %v951
  %1118 = vst.msk [vmem:[#allocation3 + $0x6c] sm:$0xf] %vm1090, %v953
  %1119 = vst.msk [vmem:[#allocation3 + $0x70] sm:$0xf] %vm1090, %v955
  %1120 = vst.msk [vmem:[#allocation3 + $0x74] sm:$0xf] %vm1090, %v957
  %1121 = vst.msk [vmem:[#allocation3 + $0x78] sm:$0xf] %vm1090, %v959
  %1122 = vst.msk [vmem:[#allocation3 + $0x7c] sm:$0xf] %vm1090, %v961
  %1123 = vst.msk [vmem:[#allocation3 + $0x80] sm:$0xf] %vm1090, %v963
  %1124 = vst.msk [vmem:[#allocation3 + $0x84] sm:$0xf] %vm1090, %v965
  %1125 = vst.msk [vmem:[#allocation3 + $0x88] sm:$0xf] %vm1090, %v967
  %1126 = vst.msk [vmem:[#allocation3 + $0x8c] sm:$0xf] %vm1090, %v969
  %1127 = vst.msk [vmem:[#allocation3 + $0x90] sm:$0xf] %vm1090, %v971
  %1128 = vst.msk [vmem:[#allocation3 + $0x94] sm:$0xf] %vm1090, %v973
  %1129 = vst.msk [vmem:[#allocation3 + $0x98] sm:$0xf] %vm1090, %v975
  %1130 = vst.msk [vmem:[#allocation3 + $0x9c] sm:$0xf] %vm1090, %v977
  %1131 = vst.msk [vmem:[#allocation3 + $0xa0] sm:$0xf] %vm1090, %v979
  %1132 = vst.msk [vmem:[#allocation3 + $0xa4] sm:$0xf] %vm1090, %v981
  %1133 = vst.msk [vmem:[#allocation3 + $0xa8] sm:$0xf] %vm1090, %v983
  %1134 = vst.msk [vmem:[#allocation3 + $0xac] sm:$0xf] %vm1090, %v985
  %1135 = vst.msk [vmem:[#allocation3 + $0xb0] sm:$0xf] %vm1090, %v987
  %1136 = vst.msk [vmem:[#allocation3 + $0xb4] sm:$0xf] %vm1090, %v989
  %1137 = vst.msk [vmem:[#allocation3 + $0xb8] sm:$0xf] %vm1090, %v991
  %1138 = vst.msk [vmem:[#allocation3 + $0xbc] sm:$0xf] %vm1090, %v993
  %1139 = vst.msk [vmem:[#allocation3 + $0xc0] sm:$0xf] %vm1090, %v995
  %1140 = vst.msk [vmem:[#allocation3 + $0xc4] sm:$0xf] %vm1090, %v997
  %1141 = vst.msk [vmem:[#allocation3 + $0xc8] sm:$0xf] %vm1090, %v999
  %1142 = vst.msk [vmem:[#allocation3 + $0xcc] sm:$0xf] %vm1090, %v1001
  %1143 = vst.msk [vmem:[#allocation3 + $0xd0] sm:$0xf] %vm1090, %v1003
  %1144 = vst.msk [vmem:[#allocation3 + $0xd4] sm:$0xf] %vm1090, %v1005
  %1145 = vst.msk [vmem:[#allocation3 + $0xd8] sm:$0xf] %vm1090, %v1007
  %1146 = vst.msk [vmem:[#allocation3 + $0xdc] sm:$0xf] %vm1090, %v1009
  %1147 = vst.msk [vmem:[#allocation3 + $0xe0] sm:$0xf] %vm1090, %v1011
  %1148 = vst.msk [vmem:[#allocation3 + $0xe4] sm:$0xf] %vm1090, %v1013
  %1149 = vst.msk [vmem:[#allocation3 + $0xe8] sm:$0xf] %vm1090, %v1015
  %1150 = vst.msk [vmem:[#allocation3 + $0xec] sm:$0xf] %vm1090, %v1017
  %1151 = vst.msk [vmem:[#allocation3 + $0xf0] sm:$0xf] %vm1090, %v1019
  %1152 = vst.msk [vmem:[#allocation3 + $0xf4] sm:$0xf] %vm1090, %v1021
  %1153 = vst.msk [vmem:[#allocation3 + $0xf8] sm:$0xf] %vm1090, %v1023
  %1154 = vst.msk [vmem:[#allocation3 + $0xfc] sm:$0xf] %vm1090, %v1025
  %v1155 = vld [vmem:[#allocation2 + $0x2] sm:$0xff]
  %v1156 = vld [vmem:[#allocation2 + $0xa] sm:$0xff]
  %v1157 = vld [vmem:[#allocation2 + $0x1a] sm:$0xff]
  %v1158 = vld [vmem:[#allocation2 + $0x22] sm:$0xff]
  %v1159 = vld [vmem:[#allocation2 + $0x32] sm:$0xff]
  %v1160 = vld [vmem:[#allocation2 + $0x3a] sm:$0xff]
  %v1161 = vld [vmem:[#allocation2 + $0x4a] sm:$0xff]
  %v1162 = vld [vmem:[#allocation2 + $0x52] sm:$0xff]
  %v1163 = vld [vmem:[#allocation2 + $0x62] sm:$0xff]
  %v1164 = vld [vmem:[#allocation2 + $0x6a] sm:$0xff]
  %v1165 = vld [vmem:[#allocation2 + $0x7a] sm:$0xff]
  %v1166 = vld [vmem:[#allocation2 + $0x82] sm:$0xff]
  %v1167 = vld [vmem:[#allocation2 + $0x92] sm:$0xff]
  %v1168 = vld [vmem:[#allocation2 + $0x9a] sm:$0xff]
  %v1169 = vld [vmem:[#allocation2 + $0xaa] sm:$0xff]
  %v1170 = vld [vmem:[#allocation2 + $0xb2] sm:$0xff]
  %v1171 = vld [vmem:[#allocation2 + $0xc2] sm:$0xff]
  %v1172 = vld [vmem:[#allocation2 + $0xca] sm:$0xff]
  %v1173 = vld [vmem:[#allocation2 + $0xda] sm:$0xff]
  %v1174 = vld [vmem:[#allocation2 + $0xe2] sm:$0xff]
  %v1175 = vld [vmem:[#allocation2 + $0xf2] sm:$0xff]
  %v1176 = vld [vmem:[#allocation2 + $0xfa] sm:$0xff]
  %v1177 = vld [vmem:[#allocation2 + $0x10a] sm:$0xff]
  %v1178 = vld [vmem:[#allocation2 + $0x112] sm:$0xff]
  %v1179 = vld [vmem:[#allocation2 + $0x122] sm:$0xff]
  %v1180 = vld [vmem:[#allocation2 + $0x12a] sm:$0xff]
  %v1181 = vld [vmem:[#allocation2 + $0x13a] sm:$0xff]
  %v1182 = vld [vmem:[#allocation2 + $0x142] sm:$0xff]
  %v1183 = vld [vmem:[#allocation2 + $0x152] sm:$0xff]
  %v1184 = vld [vmem:[#allocation2 + $0x15a] sm:$0xff]
  %v1185 = vld [vmem:[#allocation2 + $0x16a] sm:$0xff]
  %v1186 = vld [vmem:[#allocation2 + $0x172] sm:$0xff]
  %v1187 = vld [vmem:[#allocation2 + $0x1b2] sm:$0xff]
  %v1188 = vld [vmem:[#allocation2 + $0x1ba] sm:$0xff]
  %v1189 = vld [vmem:[#allocation2 + $0x1ca] sm:$0xff]
  %v1190 = vld [vmem:[#allocation2 + $0x1d2] sm:$0xff]
  %v1191 = vld [vmem:[#allocation2 + $0x1e2] sm:$0xff]
  %v1192 = vld [vmem:[#allocation2 + $0x1ea] sm:$0xff]
  %v1193 = vld [vmem:[#allocation2 + $0x1fa] sm:$0xff]
  %v1194 = vld [vmem:[#allocation2 + $0x202] sm:$0xff]
  %v1195 = vld [vmem:[#allocation2 + $0x212] sm:$0xff]
  %v1196 = vld [vmem:[#allocation2 + $0x21a] sm:$0xff]
  %v1197 = vld [vmem:[#allocation2 + $0x22a] sm:$0xff]
  %v1198 = vld [vmem:[#allocation2 + $0x232] sm:$0xff]
  %v1199 = vld [vmem:[#allocation2 + $0x242] sm:$0xff]
  %v1200 = vld [vmem:[#allocation2 + $0x24a] sm:$0xff]
  %v1201 = vld [vmem:[#allocation2 + $0x25a] sm:$0xff]
  %v1202 = vld [vmem:[#allocation2 + $0x262] sm:$0xff]
  %v1203 = vld [vmem:[#allocation2 + $0x272] sm:$0xff]
  %v1204 = vld [vmem:[#allocation2 + $0x27a] sm:$0xff]
  %v1205 = vld [vmem:[#allocation2 + $0x28a] sm:$0xff]
  %v1206 = vld [vmem:[#allocation2 + $0x292] sm:$0xff]
  %v1207 = vld [vmem:[#allocation2 + $0x2a2] sm:$0xff]
  %v1208 = vld [vmem:[#allocation2 + $0x2aa] sm:$0xff]
  %v1209 = vld [vmem:[#allocation2 + $0x2ba] sm:$0xff]
  %v1210 = vld [vmem:[#allocation2 + $0x2c2] sm:$0xff]
  %v1211 = vld [vmem:[#allocation2 + $0x2d2] sm:$0xff]
  %v1212 = vld [vmem:[#allocation2 + $0x2da] sm:$0xff]
  %v1213 = vld [vmem:[#allocation2 + $0x2ea] sm:$0xff]
  %v1214 = vld [vmem:[#allocation2 + $0x2f2] sm:$0xff]
  %v1215 = vld [vmem:[#allocation2 + $0x302] sm:$0xff]
  %v1216 = vld [vmem:[#allocation2 + $0x30a] sm:$0xff]
  %v1217 = vld [vmem:[#allocation2 + $0x31a] sm:$0xff]
  %v1218 = vld [vmem:[#allocation2 + $0x322] sm:$0xff]
  %v1219 = vpack.c.bf16 %v1156, %v1155
  %v1220 = vpack.c.bf16 %v1158, %v1157
  %v1221 = vpack.c.bf16 %v1160, %v1159
  %v1222 = vpack.c.bf16 %v1162, %v1161
  %v1223 = vpack.c.bf16 %v1164, %v1163
  %v1224 = vpack.c.bf16 %v1166, %v1165
  %v1225 = vpack.c.bf16 %v1168, %v1167
  %v1226 = vpack.c.bf16 %v1170, %v1169
  %v1227 = vpack.c.bf16 %v1172, %v1171
  %v1228 = vpack.c.bf16 %v1174, %v1173
  %v1229 = vpack.c.bf16 %v1176, %v1175
  %v1230 = vpack.c.bf16 %v1178, %v1177
  %v1231 = vpack.c.bf16 %v1180, %v1179
  %v1232 = vpack.c.bf16 %v1182, %v1181
  %v1233 = vpack.c.bf16 %v1184, %v1183
  %v1234 = vpack.c.bf16 %v1186, %v1185
  %v1235 = vpack.c.bf16 %v1188, %v1187
  %v1236 = vpack.c.bf16 %v1190, %v1189
  %v1237 = vpack.c.bf16 %v1192, %v1191
  %v1238 = vpack.c.bf16 %v1194, %v1193
  %v1239 = vpack.c.bf16 %v1196, %v1195
  %v1240 = vpack.c.bf16 %v1198, %v1197
  %v1241 = vpack.c.bf16 %v1200, %v1199
  %v1242 = vpack.c.bf16 %v1202, %v1201
  %v1243 = vpack.c.bf16 %v1204, %v1203
  %v1244 = vpack.c.bf16 %v1206, %v1205
  %v1245 = vpack.c.bf16 %v1208, %v1207
  %v1246 = vpack.c.bf16 %v1210, %v1209
  %v1247 = vpack.c.bf16 %v1212, %v1211
  %v1248 = vpack.c.bf16 %v1214, %v1213
  %v1249 = vpack.c.bf16 %v1216, %v1215
  %v1250 = vpack.c.bf16 %v1218, %v1217
  %v1283 = vunpack.c.l.b16 %v1219
  %v1284 = vunpack.c.h.b16 %v1219
  %v1285 = vunpack.c.l.b16 %v1220
  %v1286 = vunpack.c.h.b16 %v1220
  %v1287 = vunpack.c.l.b16 %v1221
  %v1288 = vunpack.c.h.b16 %v1221
  %v1289 = vunpack.c.l.b16 %v1222
  %v1290 = vunpack.c.h.b16 %v1222
  %v1291 = vunpack.c.l.b16 %v1223
  %v1292 = vunpack.c.h.b16 %v1223
  %v1293 = vunpack.c.l.b16 %v1224
  %v1294 = vunpack.c.h.b16 %v1224
  %v1295 = vunpack.c.l.b16 %v1225
  %v1296 = vunpack.c.h.b16 %v1225
  %v1297 = vunpack.c.l.b16 %v1226
  %v1298 = vunpack.c.h.b16 %v1226
  %v1299 = vunpack.c.l.b16 %v1227
  %v1300 = vunpack.c.h.b16 %v1227
  %v1301 = vunpack.c.l.b16 %v1228
  %v1302 = vunpack.c.h.b16 %v1228
  %v1303 = vunpack.c.l.b16 %v1229
  %v1304 = vunpack.c.h.b16 %v1229
  %v1305 = vunpack.c.l.b16 %v1230
  %v1306 = vunpack.c.h.b16 %v1230
  %v1307 = vunpack.c.l.b16 %v1231
  %v1308 = vunpack.c.h.b16 %v1231
  %v1309 = vunpack.c.l.b16 %v1232
  %v1310 = vunpack.c.h.b16 %v1232
  %v1311 = vunpack.c.l.b16 %v1233
  %v1312 = vunpack.c.h.b16 %v1233
  %v1313 = vunpack.c.l.b16 %v1234
  %v1314 = vunpack.c.h.b16 %v1234
  %v1315 = vunpack.c.l.b16 %v1235
  %v1316 = vunpack.c.h.b16 %v1235
  %v1317 = vunpack.c.l.b16 %v1236
  %v1318 = vunpack.c.h.b16 %v1236
  %v1319 = vunpack.c.l.b16 %v1237
  %v1320 = vunpack.c.h.b16 %v1237
  %v1321 = vunpack.c.l.b16 %v1238
  %v1322 = vunpack.c.h.b16 %v1238
  %v1323 = vunpack.c.l.b16 %v1239
  %v1324 = vunpack.c.h.b16 %v1239
  %v1325 = vunpack.c.l.b16 %v1240
  %v1326 = vunpack.c.h.b16 %v1240
  %v1327 = vunpack.c.l.b16 %v1241
  %v1328 = vunpack.c.h.b16 %v1241
  %v1329 = vunpack.c.l.b16 %v1242
  %v1330 = vunpack.c.h.b16 %v1242
  %v1331 = vunpack.c.l.b16 %v1243
  %v1332 = vunpack.c.h.b16 %v1243
  %v1333 = vunpack.c.l.b16 %v1244
  %v1334 = vunpack.c.h.b16 %v1244
  %v1335 = vunpack.c.l.b16 %v1245
  %v1336 = vunpack.c.h.b16 %v1245
  %v1337 = vunpack.c.l.b16 %v1246
  %v1338 = vunpack.c.h.b16 %v1246
  %v1339 = vunpack.c.l.b16 %v1247
  %v1340 = vunpack.c.h.b16 %v1247
  %v1341 = vunpack.c.l.b16 %v1248
  %v1342 = vunpack.c.h.b16 %v1248
  %v1343 = vunpack.c.l.b16 %v1249
  %v1344 = vunpack.c.h.b16 %v1249
  %v1345 = vunpack.c.l.b16 %v1250
  %v1346 = vunpack.c.h.b16 %v1250
  %v1347 = vpack.c.b16 %v1283, %v1283
  %v1348 = vpack.c.b16 %v1284, %v1284
  %v1349 = vpack.c.b16 %v1285, %v1285
  %v1350 = vpack.c.b16 %v1286, %v1286
  %v1351 = vpack.c.b16 %v1287, %v1287
  %v1352 = vpack.c.b16 %v1288, %v1288
  %v1353 = vpack.c.b16 %v1289, %v1289
  %v1354 = vpack.c.b16 %v1290, %v1290
  %v1355 = vpack.c.b16 %v1291, %v1291
  %v1356 = vpack.c.b16 %v1292, %v1292
  %v1357 = vpack.c.b16 %v1293, %v1293
  %v1358 = vpack.c.b16 %v1294, %v1294
  %v1359 = vpack.c.b16 %v1295, %v1295
  %v1360 = vpack.c.b16 %v1296, %v1296
  %v1361 = vpack.c.b16 %v1297, %v1297
  %v1362 = vpack.c.b16 %v1298, %v1298
  %v1363 = vpack.c.b16 %v1299, %v1299
  %v1364 = vpack.c.b16 %v1300, %v1300
  %v1365 = vpack.c.b16 %v1301, %v1301
  %v1366 = vpack.c.b16 %v1302, %v1302
  %v1367 = vpack.c.b16 %v1303, %v1303
  %v1368 = vpack.c.b16 %v1304, %v1304
  %v1369 = vpack.c.b16 %v1305, %v1305
  %v1370 = vpack.c.b16 %v1306, %v1306
  %v1371 = vpack.c.b16 %v1307, %v1307
  %v1372 = vpack.c.b16 %v1308, %v1308
  %v1373 = vpack.c.b16 %v1309, %v1309
  %v1374 = vpack.c.b16 %v1310, %v1310
  %v1375 = vpack.c.b16 %v1311, %v1311
  %v1376 = vpack.c.b16 %v1312, %v1312
  %v1377 = vpack.c.b16 %v1313, %v1313
  %v1378 = vpack.c.b16 %v1314, %v1314
  %v1379 = vpack.c.b16 %v1315, %v1315
  %v1380 = vpack.c.b16 %v1316, %v1316
  %v1381 = vpack.c.b16 %v1317, %v1317
  %v1382 = vpack.c.b16 %v1318, %v1318
  %v1383 = vpack.c.b16 %v1319, %v1319
  %v1384 = vpack.c.b16 %v1320, %v1320
  %v1385 = vpack.c.b16 %v1321, %v1321
  %v1386 = vpack.c.b16 %v1322, %v1322
  %v1387 = vpack.c.b16 %v1323, %v1323
  %v1388 = vpack.c.b16 %v1324, %v1324
  %v1389 = vpack.c.b16 %v1325, %v1325
  %v1390 = vpack.c.b16 %v1326, %v1326
  %v1391 = vpack.c.b16 %v1327, %v1327
  %v1392 = vpack.c.b16 %v1328, %v1328
  %v1393 = vpack.c.b16 %v1329, %v1329
  %v1394 = vpack.c.b16 %v1330, %v1330
  %v1395 = vpack.c.b16 %v1331, %v1331
  %v1396 = vpack.c.b16 %v1332, %v1332
  %v1397 = vpack.c.b16 %v1333, %v1333
  %v1398 = vpack.c.b16 %v1334, %v1334
  %v1399 = vpack.c.b16 %v1335, %v1335
  %v1400 = vpack.c.b16 %v1336, %v1336
  %v1401 = vpack.c.b16 %v1337, %v1337
  %v1402 = vpack.c.b16 %v1338, %v1338
  %v1403 = vpack.c.b16 %v1339, %v1339
  %v1404 = vpack.c.b16 %v1340, %v1340
  %v1405 = vpack.c.b16 %v1341, %v1341
  %v1406 = vpack.c.b16 %v1342, %v1342
  %v1407 = vpack.c.b16 %v1343, %v1343
  %v1408 = vpack.c.b16 %v1344, %v1344
  %v1409 = vpack.c.b16 %v1345, %v1345
  %v1410 = vpack.c.b16 %v1346, %v1346
  %1411 = vrot.lane.b32.xlu0 %v1347, 8
  %v1412 = vpop.permute.xlu0 %1411
  %1413 = vrot.lane.b32.xlu0 %v1348, 8
  %v1414 = vpop.permute.xlu0 %1413
  %1415 = vrot.lane.b32.xlu0 %v1349, 8
  %v1416 = vpop.permute.xlu0 %1415
  %1417 = vrot.lane.b32.xlu0 %v1350, 8
  %v1418 = vpop.permute.xlu0 %1417
  %1419 = vrot.lane.b32.xlu0 %v1351, 8
  %v1420 = vpop.permute.xlu0 %1419
  %1421 = vrot.lane.b32.xlu0 %v1352, 8
  %v1422 = vpop.permute.xlu0 %1421
  %1423 = vrot.lane.b32.xlu0 %v1353, 8
  %v1424 = vpop.permute.xlu0 %1423
  %1425 = vrot.lane.b32.xlu0 %v1354, 8
  %v1426 = vpop.permute.xlu0 %1425
  %1427 = vrot.lane.b32.xlu0 %v1355, 8
  %v1428 = vpop.permute.xlu0 %1427
  %1429 = vrot.lane.b32.xlu0 %v1356, 8
  %v1430 = vpop.permute.xlu0 %1429
  %1431 = vrot.lane.b32.xlu0 %v1357, 8
  %v1432 = vpop.permute.xlu0 %1431
  %1433 = vrot.lane.b32.xlu0 %v1358, 8
  %v1434 = vpop.permute.xlu0 %1433
  %1435 = vrot.lane.b32.xlu0 %v1359, 8
  %v1436 = vpop.permute.xlu0 %1435
  %1437 = vrot.lane.b32.xlu0 %v1360, 8
  %v1438 = vpop.permute.xlu0 %1437
  %1439 = vrot.lane.b32.xlu0 %v1361, 8
  %v1440 = vpop.permute.xlu0 %1439
  %1441 = vrot.lane.b32.xlu0 %v1362, 8
  %v1442 = vpop.permute.xlu0 %1441
  %1443 = vrot.lane.b32.xlu0 %v1363, 8
  %v1444 = vpop.permute.xlu0 %1443
  %1445 = vrot.lane.b32.xlu0 %v1364, 8
  %v1446 = vpop.permute.xlu0 %1445
  %1447 = vrot.lane.b32.xlu0 %v1365, 8
  %v1448 = vpop.permute.xlu0 %1447
  %1449 = vrot.lane.b32.xlu0 %v1366, 8
  %v1450 = vpop.permute.xlu0 %1449
  %1451 = vrot.lane.b32.xlu0 %v1367, 8
  %v1452 = vpop.permute.xlu0 %1451
  %1453 = vrot.lane.b32.xlu0 %v1368, 8
  %v1454 = vpop.permute.xlu0 %1453
  %1455 = vrot.lane.b32.xlu0 %v1369, 8
  %v1456 = vpop.permute.xlu0 %1455
  %1457 = vrot.lane.b32.xlu0 %v1370, 8
  %v1458 = vpop.permute.xlu0 %1457
  %1459 = vrot.lane.b32.xlu0 %v1371, 8
  %v1460 = vpop.permute.xlu0 %1459
  %1461 = vrot.lane.b32.xlu0 %v1372, 8
  %v1462 = vpop.permute.xlu0 %1461
  %1463 = vrot.lane.b32.xlu0 %v1373, 8
  %v1464 = vpop.permute.xlu0 %1463
  %1465 = vrot.lane.b32.xlu0 %v1374, 8
  %v1466 = vpop.permute.xlu0 %1465
  %1467 = vrot.lane.b32.xlu0 %v1375, 8
  %v1468 = vpop.permute.xlu0 %1467
  %1469 = vrot.lane.b32.xlu0 %v1376, 8
  %v1470 = vpop.permute.xlu0 %1469
  %1471 = vrot.lane.b32.xlu0 %v1377, 8
  %v1472 = vpop.permute.xlu0 %1471
  %1473 = vrot.lane.b32.xlu0 %v1378, 8
  %v1474 = vpop.permute.xlu0 %1473
  %1475 = vrot.lane.b32.xlu0 %v1379, 8
  %v1476 = vpop.permute.xlu0 %1475
  %1477 = vrot.lane.b32.xlu0 %v1380, 8
  %v1478 = vpop.permute.xlu0 %1477
  %1479 = vrot.lane.b32.xlu0 %v1381, 8
  %v1480 = vpop.permute.xlu0 %1479
  %1481 = vrot.lane.b32.xlu0 %v1382, 8
  %v1482 = vpop.permute.xlu0 %1481
  %1483 = vrot.lane.b32.xlu0 %v1383, 8
  %v1484 = vpop.permute.xlu0 %1483
  %1485 = vrot.lane.b32.xlu0 %v1384, 8
  %v1486 = vpop.permute.xlu0 %1485
  %1487 = vrot.lane.b32.xlu0 %v1385, 8
  %v1488 = vpop.permute.xlu0 %1487
  %1489 = vrot.lane.b32.xlu0 %v1386, 8
  %v1490 = vpop.permute.xlu0 %1489
  %1491 = vrot.lane.b32.xlu0 %v1387, 8
  %v1492 = vpop.permute.xlu0 %1491
  %1493 = vrot.lane.b32.xlu0 %v1388, 8
  %v1494 = vpop.permute.xlu0 %1493
  %1495 = vrot.lane.b32.xlu0 %v1389, 8
  %v1496 = vpop.permute.xlu0 %1495
  %1497 = vrot.lane.b32.xlu0 %v1390, 8
  %v1498 = vpop.permute.xlu0 %1497
  %1499 = vrot.lane.b32.xlu0 %v1391, 8
  %v1500 = vpop.permute.xlu0 %1499
  %1501 = vrot.lane.b32.xlu0 %v1392, 8
  %v1502 = vpop.permute.xlu0 %1501
  %1503 = vrot.lane.b32.xlu0 %v1393, 8
  %v1504 = vpop.permute.xlu0 %1503
  %1505 = vrot.lane.b32.xlu0 %v1394, 8
  %v1506 = vpop.permute.xlu0 %1505
  %1507 = vrot.lane.b32.xlu0 %v1395, 8
  %v1508 = vpop.permute.xlu0 %1507
  %1509 = vrot.lane.b32.xlu0 %v1396, 8
  %v1510 = vpop.permute.xlu0 %1509
  %1511 = vrot.lane.b32.xlu0 %v1397, 8
  %v1512 = vpop.permute.xlu0 %1511
  %1513 = vrot.lane.b32.xlu0 %v1398, 8
  %v1514 = vpop.permute.xlu0 %1513
  %1515 = vrot.lane.b32.xlu0 %v1399, 8
  %v1516 = vpop.permute.xlu0 %1515
  %1517 = vrot.lane.b32.xlu0 %v1400, 8
  %v1518 = vpop.permute.xlu0 %1517
  %1519 = vrot.lane.b32.xlu0 %v1401, 8
  %v1520 = vpop.permute.xlu0 %1519
  %1521 = vrot.lane.b32.xlu0 %v1402, 8
  %v1522 = vpop.permute.xlu0 %1521
  %1523 = vrot.lane.b32.xlu0 %v1403, 8
  %v1524 = vpop.permute.xlu0 %1523
  %1525 = vrot.lane.b32.xlu0 %v1404, 8
  %v1526 = vpop.permute.xlu0 %1525
  %1527 = vrot.lane.b32.xlu0 %v1405, 8
  %v1528 = vpop.permute.xlu0 %1527
  %1529 = vrot.lane.b32.xlu0 %v1406, 8
  %v1530 = vpop.permute.xlu0 %1529
  %1531 = vrot.lane.b32.xlu0 %v1407, 8
  %v1532 = vpop.permute.xlu0 %1531
  %1533 = vrot.lane.b32.xlu0 %v1408, 8
  %v1534 = vpop.permute.xlu0 %1533
  %1535 = vrot.lane.b32.xlu0 %v1409, 8
  %v1536 = vpop.permute.xlu0 %1535
  %1537 = vrot.lane.b32.xlu0 %v1410, 8
  %v1538 = vpop.permute.xlu0 %1537
  %vm1603 = vcmask 93248
  %1604 = vst.msk [vmem:[#allocation3] sm:$0xf] %vm1603, %v1412
  %1605 = vst.msk [vmem:[#allocation3 + $0x4] sm:$0xf] %vm1603, %v1414
  %1606 = vst.msk [vmem:[#allocation3 + $0x8] sm:$0xf] %vm1603, %v1416
  %1607 = vst.msk [vmem:[#allocation3 + $0xc] sm:$0xf] %vm1603, %v1418
  %1608 = vst.msk [vmem:[#allocation3 + $0x10] sm:$0xf] %vm1603, %v1420
  %1609 = vst.msk [vmem:[#allocation3 + $0x14] sm:$0xf] %vm1603, %v1422
  %1610 = vst.msk [vmem:[#allocation3 + $0x18] sm:$0xf] %vm1603, %v1424
  %1611 = vst.msk [vmem:[#allocation3 + $0x1c] sm:$0xf] %vm1603, %v1426
  %1612 = vst.msk [vmem:[#allocation3 + $0x20] sm:$0xf] %vm1603, %v1428
  %1613 = vst.msk [vmem:[#allocation3 + $0x24] sm:$0xf] %vm1603, %v1430
  %1614 = vst.msk [vmem:[#allocation3 + $0x28] sm:$0xf] %vm1603, %v1432
  %1615 = vst.msk [vmem:[#allocation3 + $0x2c] sm:$0xf] %vm1603, %v1434
  %1616 = vst.msk [vmem:[#allocation3 + $0x30] sm:$0xf] %vm1603, %v1436
  %1617 = vst.msk [vmem:[#allocation3 + $0x34] sm:$0xf] %vm1603, %v1438
  %1618 = vst.msk [vmem:[#allocation3 + $0x38] sm:$0xf] %vm1603, %v1440
  %1619 = vst.msk [vmem:[#allocation3 + $0x3c] sm:$0xf] %vm1603, %v1442
  %1620 = vst.msk [vmem:[#allocation3 + $0x40] sm:$0xf] %vm1603, %v1444
  %1621 = vst.msk [vmem:[#allocation3 + $0x44] sm:$0xf] %vm1603, %v1446
  %1622 = vst.msk [vmem:[#allocation3 + $0x48] sm:$0xf] %vm1603, %v1448
  %1623 = vst.msk [vmem:[#allocation3 + $0x4c] sm:$0xf] %vm1603, %v1450
  %1624 = vst.msk [vmem:[#allocation3 + $0x50] sm:$0xf] %vm1603, %v1452
  %1625 = vst.msk [vmem:[#allocation3 + $0x54] sm:$0xf] %vm1603, %v1454
  %1626 = vst.msk [vmem:[#allocation3 + $0x58] sm:$0xf] %vm1603, %v1456
  %1627 = vst.msk [vmem:[#allocation3 + $0x5c] sm:$0xf] %vm1603, %v1458
  %1628 = vst.msk [vmem:[#allocation3 + $0x60] sm:$0xf] %vm1603, %v1460
  %1629 = vst.msk [vmem:[#allocation3 + $0x64] sm:$0xf] %vm1603, %v1462
  %1630 = vst.msk [vmem:[#allocation3 + $0x68] sm:$0xf] %vm1603, %v1464
  %1631 = vst.msk [vmem:[#allocation3 + $0x6c] sm:$0xf] %vm1603, %v1466
  %1632 = vst.msk [vmem:[#allocation3 + $0x70] sm:$0xf] %vm1603, %v1468
  %1633 = vst.msk [vmem:[#allocation3 + $0x74] sm:$0xf] %vm1603, %v1470
  %1634 = vst.msk [vmem:[#allocation3 + $0x78] sm:$0xf] %vm1603, %v1472
  %1635 = vst.msk [vmem:[#allocation3 + $0x7c] sm:$0xf] %vm1603, %v1474
  %1636 = vst.msk [vmem:[#allocation3 + $0x80] sm:$0xf] %vm1603, %v1476
  %1637 = vst.msk [vmem:[#allocation3 + $0x84] sm:$0xf] %vm1603, %v1478
  %1638 = vst.msk [vmem:[#allocation3 + $0x88] sm:$0xf] %vm1603, %v1480
  %1639 = vst.msk [vmem:[#allocation3 + $0x8c] sm:$0xf] %vm1603, %v1482
  %1640 = vst.msk [vmem:[#allocation3 + $0x90] sm:$0xf] %vm1603, %v1484
  %1641 = vst.msk [vmem:[#allocation3 + $0x94] sm:$0xf] %vm1603, %v1486
  %1642 = vst.msk [vmem:[#allocation3 + $0x98] sm:$0xf] %vm1603, %v1488
  %1643 = vst.msk [vmem:[#allocation3 + $0x9c] sm:$0xf] %vm1603, %v1490
  %1644 = vst.msk [vmem:[#allocation3 + $0xa0] sm:$0xf] %vm1603, %v1492
  %1645 = vst.msk [vmem:[#allocation3 + $0xa4] sm:$0xf] %vm1603, %v1494
  %1646 = vst.msk [vmem:[#allocation3 + $0xa8] sm:$0xf] %vm1603, %v1496
  %1647 = vst.msk [vmem:[#allocation3 + $0xac] sm:$0xf] %vm1603, %v1498
  %1648 = vst.msk [vmem:[#allocation3 + $0xb0] sm:$0xf] %vm1603, %v1500
  %1649 = vst.msk [vmem:[#allocation3 + $0xb4] sm:$0xf] %vm1603, %v1502
  %1650 = vst.msk [vmem:[#allocation3 + $0xb8] sm:$0xf] %vm1603, %v1504
  %1651 = vst.msk [vmem:[#allocation3 + $0xbc] sm:$0xf] %vm1603, %v1506
  %1652 = vst.msk [vmem:[#allocation3 + $0xc0] sm:$0xf] %vm1603, %v1508
  %1653 = vst.msk [vmem:[#allocation3 + $0xc4] sm:$0xf] %vm1603, %v1510
  %1654 = vst.msk [vmem:[#allocation3 + $0xc8] sm:$0xf] %vm1603, %v1512
  %1655 = vst.msk [vmem:[#allocation3 + $0xcc] sm:$0xf] %vm1603, %v1514
  %1656 = vst.msk [vmem:[#allocation3 + $0xd0] sm:$0xf] %vm1603, %v1516
  %1657 = vst.msk [vmem:[#allocation3 + $0xd4] sm:$0xf] %vm1603, %v1518
  %1658 = vst.msk [vmem:[#allocation3 + $0xd8] sm:$0xf] %vm1603, %v1520
  %1659 = vst.msk [vmem:[#allocation3 + $0xdc] sm:$0xf] %vm1603, %v1522
  %1660 = vst.msk [vmem:[#allocation3 + $0xe0] sm:$0xf] %vm1603, %v1524
  %1661 = vst.msk [vmem:[#allocation3 + $0xe4] sm:$0xf] %vm1603, %v1526
  %1662 = vst.msk [vmem:[#allocation3 + $0xe8] sm:$0xf] %vm1603, %v1528
  %1663 = vst.msk [vmem:[#allocation3 + $0xec] sm:$0xf] %vm1603, %v1530
  %1664 = vst.msk [vmem:[#allocation3 + $0xf0] sm:$0xf] %vm1603, %v1532
  %1665 = vst.msk [vmem:[#allocation3 + $0xf4] sm:$0xf] %vm1603, %v1534
  %1666 = vst.msk [vmem:[#allocation3 + $0xf8] sm:$0xf] %vm1603, %v1536
  %1667 = vst.msk [vmem:[#allocation3 + $0xfc] sm:$0xf] %vm1603, %v1538
  %v1668 = vld [vmem:[%s192] sm:$0xff]
  %v1669 = vld [vmem:[%s192 + $0x8] sm:$0xff]
  %v1670 = vld [vmem:[%s192 + $0x18] sm:$0xff]
  %v1671 = vld [vmem:[%s192 + $0x20] sm:$0xff]
  %v1672 = vld [vmem:[%s192 + $0x30] sm:$0xff]
  %v1673 = vld [vmem:[%s192 + $0x38] sm:$0xff]
  %v1674 = vld [vmem:[%s192 + $0x48] sm:$0xff]
  %v1675 = vld [vmem:[%s192 + $0x50] sm:$0xff]
  %v1676 = vld [vmem:[%s192 + $0x60] sm:$0xff]
  %v1677 = vld [vmem:[%s192 + $0x68] sm:$0xff]
  %v1678 = vld [vmem:[%s192 + $0x78] sm:$0xff]
  %v1679 = vld [vmem:[%s192 + $0x80] sm:$0xff]
  %v1680 = vld [vmem:[%s192 + $0x90] sm:$0xff]
  %v1681 = vld [vmem:[%s192 + $0x98] sm:$0xff]
  %v1682 = vld [vmem:[%s192 + $0xa8] sm:$0xff]
  %v1683 = vld [vmem:[%s192 + $0xb0] sm:$0xff]
  %v1684 = vld [vmem:[%s192 + $0xc0] sm:$0xff]
  %v1685 = vld [vmem:[%s192 + $0xc8] sm:$0xff]
  %v1686 = vld [vmem:[%s192 + $0xd8] sm:$0xff]
  %v1687 = vld [vmem:[%s192 + $0xe0] sm:$0xff]
  %v1688 = vld [vmem:[%s192 + $0xf0] sm:$0xff]
  %v1689 = vld [vmem:[%s192 + $0xf8] sm:$0xff]
  %v1690 = vld [vmem:[%s192 + $0x108] sm:$0xff]
  %v1691 = vld [vmem:[%s192 + $0x110] sm:$0xff]
  %v1692 = vld [vmem:[%s192 + $0x120] sm:$0xff]
  %v1693 = vld [vmem:[%s192 + $0x128] sm:$0xff]
  %v1694 = vld [vmem:[%s192 + $0x138] sm:$0xff]
  %v1695 = vld [vmem:[%s192 + $0x140] sm:$0xff]
  %v1696 = vld [vmem:[%s192 + $0x150] sm:$0xff]
  %v1697 = vld [vmem:[%s192 + $0x158] sm:$0xff]
  %v1698 = vld [vmem:[%s192 + $0x168] sm:$0xff]
  %v1699 = vld [vmem:[%s192 + $0x170] sm:$0xff]
  %v1700 = vld [vmem:[%s192 + $0x1b0] sm:$0xff]
  %v1701 = vld [vmem:[%s192 + $0x1b8] sm:$0xff]
  %v1702 = vld [vmem:[%s192 + $0x1c8] sm:$0xff]
  %v1703 = vld [vmem:[%s192 + $0x1d0] sm:$0xff]
  %v1704 = vld [vmem:[%s192 + $0x1e0] sm:$0xff]
  %v1705 = vld [vmem:[%s192 + $0x1e8] sm:$0xff]
  %v1706 = vld [vmem:[%s192 + $0x1f8] sm:$0xff]
  %v1707 = vld [vmem:[%s192 + $0x200] sm:$0xff]
  %v1708 = vld [vmem:[%s192 + $0x210] sm:$0xff]
  %v1709 = vld [vmem:[%s192 + $0x218] sm:$0xff]
  %v1710 = vld [vmem:[%s192 + $0x228] sm:$0xff]
  %v1711 = vld [vmem:[%s192 + $0x230] sm:$0xff]
  %v1712 = vld [vmem:[%s192 + $0x240] sm:$0xff]
  %v1713 = vld [vmem:[%s192 + $0x248] sm:$0xff]
  %v1714 = vld [vmem:[%s192 + $0x258] sm:$0xff]
  %v1715 = vld [vmem:[%s192 + $0x260] sm:$0xff]
  %v1716 = vld [vmem:[%s192 + $0x270] sm:$0xff]
  %v1717 = vld [vmem:[%s192 + $0x278] sm:$0xff]
  %v1718 = vld [vmem:[%s192 + $0x288] sm:$0xff]
  %v1719 = vld [vmem:[%s192 + $0x290] sm:$0xff]
  %v1720 = vld [vmem:[%s192 + $0x2a0] sm:$0xff]
  %v1721 = vld [vmem:[%s192 + $0x2a8] sm:$0xff]
  %v1722 = vld [vmem:[%s192 + $0x2b8] sm:$0xff]
  %v1723 = vld [vmem:[%s192 + $0x2c0] sm:$0xff]
  %v1724 = vld [vmem:[%s192 + $0x2d0] sm:$0xff]
  %v1725 = vld [vmem:[%s192 + $0x2d8] sm:$0xff]
  %v1726 = vld [vmem:[%s192 + $0x2e8] sm:$0xff]
  %v1727 = vld [vmem:[%s192 + $0x2f0] sm:$0xff]
  %v1728 = vld [vmem:[%s192 + $0x300] sm:$0xff]
  %v1729 = vld [vmem:[%s192 + $0x308] sm:$0xff]
  %v1730 = vld [vmem:[%s192 + $0x318] sm:$0xff]
  %v1731 = vld [vmem:[%s192 + $0x320] sm:$0xff]
  %v1732 = vpack.c.bf16 %v1669, %v1668
  %v1733 = vpack.c.bf16 %v1671, %v1670
  %v1734 = vpack.c.bf16 %v1673, %v1672
  %v1735 = vpack.c.bf16 %v1675, %v1674
  %v1736 = vpack.c.bf16 %v1677, %v1676
  %v1737 = vpack.c.bf16 %v1679, %v1678
  %v1738 = vpack.c.bf16 %v1681, %v1680
  %v1739 = vpack.c.bf16 %v1683, %v1682
  %v1740 = vpack.c.bf16 %v1685, %v1684
  %v1741 = vpack.c.bf16 %v1687, %v1686
  %v1742 = vpack.c.bf16 %v1689, %v1688
  %v1743 = vpack.c.bf16 %v1691, %v1690
  %v1744 = vpack.c.bf16 %v1693, %v1692
  %v1745 = vpack.c.bf16 %v1695, %v1694
  %v1746 = vpack.c.bf16 %v1697, %v1696
  %v1747 = vpack.c.bf16 %v1699, %v1698
  %v1748 = vpack.c.bf16 %v1701, %v1700
  %v1749 = vpack.c.bf16 %v1703, %v1702
  %v1750 = vpack.c.bf16 %v1705, %v1704
  %v1751 = vpack.c.bf16 %v1707, %v1706
  %v1752 = vpack.c.bf16 %v1709, %v1708
  %v1753 = vpack.c.bf16 %v1711, %v1710
  %v1754 = vpack.c.bf16 %v1713, %v1712
  %v1755 = vpack.c.bf16 %v1715, %v1714
  %v1756 = vpack.c.bf16 %v1717, %v1716
  %v1757 = vpack.c.bf16 %v1719, %v1718
  %v1758 = vpack.c.bf16 %v1721, %v1720
  %v1759 = vpack.c.bf16 %v1723, %v1722
  %v1760 = vpack.c.bf16 %v1725, %v1724
  %v1761 = vpack.c.bf16 %v1727, %v1726
  %v1762 = vpack.c.bf16 %v1729, %v1728
  %v1763 = vpack.c.bf16 %v1731, %v1730
  %v1796 = vunpack.c.l.b16 %v1732
  %v1797 = vunpack.c.h.b16 %v1732
  %v1798 = vunpack.c.l.b16 %v1733
  %v1799 = vunpack.c.h.b16 %v1733
  %v1800 = vunpack.c.l.b16 %v1734
  %v1801 = vunpack.c.h.b16 %v1734
  %v1802 = vunpack.c.l.b16 %v1735
  %v1803 = vunpack.c.h.b16 %v1735
  %v1804 = vunpack.c.l.b16 %v1736
  %v1805 = vunpack.c.h.b16 %v1736
  %v1806 = vunpack.c.l.b16 %v1737
  %v1807 = vunpack.c.h.b16 %v1737
  %v1808 = vunpack.c.l.b16 %v1738
  %v1809 = vunpack.c.h.b16 %v1738
  %v1810 = vunpack.c.l.b16 %v1739
  %v1811 = vunpack.c.h.b16 %v1739
  %v1812 = vunpack.c.l.b16 %v1740
  %v1813 = vunpack.c.h.b16 %v1740
  %v1814 = vunpack.c.l.b16 %v1741
  %v1815 = vunpack.c.h.b16 %v1741
  %v1816 = vunpack.c.l.b16 %v1742
  %v1817 = vunpack.c.h.b16 %v1742
  %v1818 = vunpack.c.l.b16 %v1743
  %v1819 = vunpack.c.h.b16 %v1743
  %v1820 = vunpack.c.l.b16 %v1744
  %v1821 = vunpack.c.h.b16 %v1744
  %v1822 = vunpack.c.l.b16 %v1745
  %v1823 = vunpack.c.h.b16 %v1745
  %v1824 = vunpack.c.l.b16 %v1746
  %v1825 = vunpack.c.h.b16 %v1746
  %v1826 = vunpack.c.l.b16 %v1747
  %v1827 = vunpack.c.h.b16 %v1747
  %v1828 = vunpack.c.l.b16 %v1748
  %v1829 = vunpack.c.h.b16 %v1748
  %v1830 = vunpack.c.l.b16 %v1749
  %v1831 = vunpack.c.h.b16 %v1749
  %v1832 = vunpack.c.l.b16 %v1750
  %v1833 = vunpack.c.h.b16 %v1750
  %v1834 = vunpack.c.l.b16 %v1751
  %v1835 = vunpack.c.h.b16 %v1751
  %v1836 = vunpack.c.l.b16 %v1752
  %v1837 = vunpack.c.h.b16 %v1752
  %v1838 = vunpack.c.l.b16 %v1753
  %v1839 = vunpack.c.h.b16 %v1753
  %v1840 = vunpack.c.l.b16 %v1754
  %v1841 = vunpack.c.h.b16 %v1754
  %v1842 = vunpack.c.l.b16 %v1755
  %v1843 = vunpack.c.h.b16 %v1755
  %v1844 = vunpack.c.l.b16 %v1756
  %v1845 = vunpack.c.h.b16 %v1756
  %v1846 = vunpack.c.l.b16 %v1757
  %v1847 = vunpack.c.h.b16 %v1757
  %v1848 = vunpack.c.l.b16 %v1758
  %v1849 = vunpack.c.h.b16 %v1758
  %v1850 = vunpack.c.l.b16 %v1759
  %v1851 = vunpack.c.h.b16 %v1759
  %v1852 = vunpack.c.l.b16 %v1760
  %v1853 = vunpack.c.h.b16 %v1760
  %v1854 = vunpack.c.l.b16 %v1761
  %v1855 = vunpack.c.h.b16 %v1761
  %v1856 = vunpack.c.l.b16 %v1762
  %v1857 = vunpack.c.h.b16 %v1762
  %v1858 = vunpack.c.l.b16 %v1763
  %v1859 = vunpack.c.h.b16 %v1763
  %v1860 = vpack.c.b16 %v1796, %v1796
  %v1861 = vpack.c.b16 %v1797, %v1797
  %v1862 = vpack.c.b16 %v1798, %v1798
  %v1863 = vpack.c.b16 %v1799, %v1799
  %v1864 = vpack.c.b16 %v1800, %v1800
  %v1865 = vpack.c.b16 %v1801, %v1801
  %v1866 = vpack.c.b16 %v1802, %v1802
  %v1867 = vpack.c.b16 %v1803, %v1803
  %v1868 = vpack.c.b16 %v1804, %v1804
  %v1869 = vpack.c.b16 %v1805, %v1805
  %v1870 = vpack.c.b16 %v1806, %v1806
  %v1871 = vpack.c.b16 %v1807, %v1807
  %v1872 = vpack.c.b16 %v1808, %v1808
  %v1873 = vpack.c.b16 %v1809, %v1809
  %v1874 = vpack.c.b16 %v1810, %v1810
  %v1875 = vpack.c.b16 %v1811, %v1811
  %v1876 = vpack.c.b16 %v1812, %v1812
  %v1877 = vpack.c.b16 %v1813, %v1813
  %v1878 = vpack.c.b16 %v1814, %v1814
  %v1879 = vpack.c.b16 %v1815, %v1815
  %v1880 = vpack.c.b16 %v1816, %v1816
  %v1881 = vpack.c.b16 %v1817, %v1817
  %v1882 = vpack.c.b16 %v1818, %v1818
  %v1883 = vpack.c.b16 %v1819, %v1819
  %v1884 = vpack.c.b16 %v1820, %v1820
  %v1885 = vpack.c.b16 %v1821, %v1821
  %v1886 = vpack.c.b16 %v1822, %v1822
  %v1887 = vpack.c.b16 %v1823, %v1823
  %v1888 = vpack.c.b16 %v1824, %v1824
  %v1889 = vpack.c.b16 %v1825, %v1825
  %v1890 = vpack.c.b16 %v1826, %v1826
  %v1891 = vpack.c.b16 %v1827, %v1827
  %v1892 = vpack.c.b16 %v1828, %v1828
  %v1893 = vpack.c.b16 %v1829, %v1829
  %v1894 = vpack.c.b16 %v1830, %v1830
  %v1895 = vpack.c.b16 %v1831, %v1831
  %v1896 = vpack.c.b16 %v1832, %v1832
  %v1897 = vpack.c.b16 %v1833, %v1833
  %v1898 = vpack.c.b16 %v1834, %v1834
  %v1899 = vpack.c.b16 %v1835, %v1835
  %v1900 = vpack.c.b16 %v1836, %v1836
  %v1901 = vpack.c.b16 %v1837, %v1837
  %v1902 = vpack.c.b16 %v1838, %v1838
  %v1903 = vpack.c.b16 %v1839, %v1839
  %v1904 = vpack.c.b16 %v1840, %v1840
  %v1905 = vpack.c.b16 %v1841, %v1841
  %v1906 = vpack.c.b16 %v1842, %v1842
  %v1907 = vpack.c.b16 %v1843, %v1843
  %v1908 = vpack.c.b16 %v1844, %v1844
  %v1909 = vpack.c.b16 %v1845, %v1845
  %v1910 = vpack.c.b16 %v1846, %v1846
  %v1911 = vpack.c.b16 %v1847, %v1847
  %v1912 = vpack.c.b16 %v1848, %v1848
  %v1913 = vpack.c.b16 %v1849, %v1849
  %v1914 = vpack.c.b16 %v1850, %v1850
  %v1915 = vpack.c.b16 %v1851, %v1851
  %v1916 = vpack.c.b16 %v1852, %v1852
  %v1917 = vpack.c.b16 %v1853, %v1853
  %v1918 = vpack.c.b16 %v1854, %v1854
  %v1919 = vpack.c.b16 %v1855, %v1855
  %v1920 = vpack.c.b16 %v1856, %v1856
  %v1921 = vpack.c.b16 %v1857, %v1857
  %v1922 = vpack.c.b16 %v1858, %v1858
  %v1923 = vpack.c.b16 %v1859, %v1859
  %1924 = vrot.lane.b32.xlu0 %v1860, 12
  %v1925 = vpop.permute.xlu0 %1924
  %1926 = vrot.lane.b32.xlu0 %v1861, 12
  %v1927 = vpop.permute.xlu0 %1926
  %1928 = vrot.lane.b32.xlu0 %v1862, 12
  %v1929 = vpop.permute.xlu0 %1928
  %1930 = vrot.lane.b32.xlu0 %v1863, 12
  %v1931 = vpop.permute.xlu0 %1930
  %1932 = vrot.lane.b32.xlu0 %v1864, 12
  %v1933 = vpop.permute.xlu0 %1932
  %1934 = vrot.lane.b32.xlu0 %v1865, 12
  %v1935 = vpop.permute.xlu0 %1934
  %1936 = vrot.lane.b32.xlu0 %v1866, 12
  %v1937 = vpop.permute.xlu0 %1936
  %1938 = vrot.lane.b32.xlu0 %v1867, 12
  %v1939 = vpop.permute.xlu0 %1938
  %1940 = vrot.lane.b32.xlu0 %v1868, 12
  %v1941 = vpop.permute.xlu0 %1940
  %1942 = vrot.lane.b32.xlu0 %v1869, 12
  %v1943 = vpop.permute.xlu0 %1942
  %1944 = vrot.lane.b32.xlu0 %v1870, 12
  %v1945 = vpop.permute.xlu0 %1944
  %1946 = vrot.lane.b32.xlu0 %v1871, 12
  %v1947 = vpop.permute.xlu0 %1946
  %1948 = vrot.lane.b32.xlu0 %v1872, 12
  %v1949 = vpop.permute.xlu0 %1948
  %1950 = vrot.lane.b32.xlu0 %v1873, 12
  %v1951 = vpop.permute.xlu0 %1950
  %1952 = vrot.lane.b32.xlu0 %v1874, 12
  %v1953 = vpop.permute.xlu0 %1952
  %1954 = vrot.lane.b32.xlu0 %v1875, 12
  %v1955 = vpop.permute.xlu0 %1954
  %1956 = vrot.lane.b32.xlu0 %v1876, 12
  %v1957 = vpop.permute.xlu0 %1956
  %1958 = vrot.lane.b32.xlu0 %v1877, 12
  %v1959 = vpop.permute.xlu0 %1958
  %1960 = vrot.lane.b32.xlu0 %v1878, 12
  %v1961 = vpop.permute.xlu0 %1960
  %1962 = vrot.lane.b32.xlu0 %v1879, 12
  %v1963 = vpop.permute.xlu0 %1962
  %1964 = vrot.lane.b32.xlu0 %v1880, 12
  %v1965 = vpop.permute.xlu0 %1964
  %1966 = vrot.lane.b32.xlu0 %v1881, 12
  %v1967 = vpop.permute.xlu0 %1966
  %1968 = vrot.lane.b32.xlu0 %v1882, 12
  %v1969 = vpop.permute.xlu0 %1968
  %1970 = vrot.lane.b32.xlu0 %v1883, 12
  %v1971 = vpop.permute.xlu0 %1970
  %1972 = vrot.lane.b32.xlu0 %v1884, 12
  %v1973 = vpop.permute.xlu0 %1972
  %1974 = vrot.lane.b32.xlu0 %v1885, 12
  %v1975 = vpop.permute.xlu0 %1974
  %1976 = vrot.lane.b32.xlu0 %v1886, 12
  %v1977 = vpop.permute.xlu0 %1976
  %1978 = vrot.lane.b32.xlu0 %v1887, 12
  %v1979 = vpop.permute.xlu0 %1978
  %1980 = vrot.lane.b32.xlu0 %v1888, 12
  %v1981 = vpop.permute.xlu0 %1980
  %1982 = vrot.lane.b32.xlu0 %v1889, 12
  %v1983 = vpop.permute.xlu0 %1982
  %1984 = vrot.lane.b32.xlu0 %v1890, 12
  %v1985 = vpop.permute.xlu0 %1984
  %1986 = vrot.lane.b32.xlu0 %v1891, 12
  %v1987 = vpop.permute.xlu0 %1986
  %1988 = vrot.lane.b32.xlu0 %v1892, 12
  %v1989 = vpop.permute.xlu0 %1988
  %1990 = vrot.lane.b32.xlu0 %v1893, 12
  %v1991 = vpop.permute.xlu0 %1990
  %1992 = vrot.lane.b32.xlu0 %v1894, 12
  %v1993 = vpop.permute.xlu0 %1992
  %1994 = vrot.lane.b32.xlu0 %v1895, 12
  %v1995 = vpop.permute.xlu0 %1994
  %1996 = vrot.lane.b32.xlu0 %v1896, 12
  %v1997 = vpop.permute.xlu0 %1996
  %1998 = vrot.lane.b32.xlu0 %v1897, 12
  %v1999 = vpop.permute.xlu0 %1998
  %2000 = vrot.lane.b32.xlu0 %v1898, 12
  %v2001 = vpop.permute.xlu0 %2000
  %2002 = vrot.lane.b32.xlu0 %v1899, 12
  %v2003 = vpop.permute.xlu0 %2002
  %2004 = vrot.lane.b32.xlu0 %v1900, 12
  %v2005 = vpop.permute.xlu0 %2004
  %2006 = vrot.lane.b32.xlu0 %v1901, 12
  %v2007 = vpop.permute.xlu0 %2006
  %2008 = vrot.lane.b32.xlu0 %v1902, 12
  %v2009 = vpop.permute.xlu0 %2008
  %2010 = vrot.lane.b32.xlu0 %v1903, 12
  %v2011 = vpop.permute.xlu0 %2010
  %2012 = vrot.lane.b32.xlu0 %v1904, 12
  %v2013 = vpop.permute.xlu0 %2012
  %2014 = vrot.lane.b32.xlu0 %v1905, 12
  %v2015 = vpop.permute.xlu0 %2014
  %2016 = vrot.lane.b32.xlu0 %v1906, 12
  %v2017 = vpop.permute.xlu0 %2016
  %2018 = vrot.lane.b32.xlu0 %v1907, 12
  %v2019 = vpop.permute.xlu0 %2018
  %2020 = vrot.lane.b32.xlu0 %v1908, 12
  %v2021 = vpop.permute.xlu0 %2020
  %2022 = vrot.lane.b32.xlu0 %v1909, 12
  %v2023 = vpop.permute.xlu0 %2022
  %2024 = vrot.lane.b32.xlu0 %v1910, 12
  %v2025 = vpop.permute.xlu0 %2024
  %2026 = vrot.lane.b32.xlu0 %v1911, 12
  %v2027 = vpop.permute.xlu0 %2026
  %2028 = vrot.lane.b32.xlu0 %v1912, 12
  %v2029 = vpop.permute.xlu0 %2028
  %2030 = vrot.lane.b32.xlu0 %v1913, 12
  %v2031 = vpop.permute.xlu0 %2030
  %2032 = vrot.lane.b32.xlu0 %v1914, 12
  %v2033 = vpop.permute.xlu0 %2032
  %2034 = vrot.lane.b32.xlu0 %v1915, 12
  %v2035 = vpop.permute.xlu0 %2034
  %2036 = vrot.lane.b32.xlu0 %v1916, 12
  %v2037 = vpop.permute.xlu0 %2036
  %2038 = vrot.lane.b32.xlu0 %v1917, 12
  %v2039 = vpop.permute.xlu0 %2038
  %2040 = vrot.lane.b32.xlu0 %v1918, 12
  %v2041 = vpop.permute.xlu0 %2040
  %2042 = vrot.lane.b32.xlu0 %v1919, 12
  %v2043 = vpop.permute.xlu0 %2042
  %2044 = vrot.lane.b32.xlu0 %v1920, 12
  %v2045 = vpop.permute.xlu0 %2044
  %2046 = vrot.lane.b32.xlu0 %v1921, 12
  %v2047 = vpop.permute.xlu0 %2046
  %2048 = vrot.lane.b32.xlu0 %v1922, 12
  %v2049 = vpop.permute.xlu0 %2048
  %2050 = vrot.lane.b32.xlu0 %v1923, 12
  %v2051 = vpop.permute.xlu0 %2050
  %vm2116 = vcmask 126048
  %2117 = vst.msk [vmem:[#allocation3] sm:$0xf] %vm2116, %v1925
  %2118 = vst.msk [vmem:[#allocation3 + $0x4] sm:$0xf] %vm2116, %v1927
  %2119 = vst.msk [vmem:[#allocation3 + $0x8] sm:$0xf] %vm2116, %v1929
  %2120 = vst.msk [vmem:[#allocation3 + $0xc] sm:$0xf] %vm2116, %v1931
  %2121 = vst.msk [vmem:[#allocation3 + $0x10] sm:$0xf] %vm2116, %v1933
  %2122 = vst.msk [vmem:[#allocation3 + $0x14] sm:$0xf] %vm2116, %v1935
  %2123 = vst.msk [vmem:[#allocation3 + $0x18] sm:$0xf] %vm2116, %v1937
  %2124 = vst.msk [vmem:[#allocation3 + $0x1c] sm:$0xf] %vm2116, %v1939
  %2125 = vst.msk [vmem:[#allocation3 + $0x20] sm:$0xf] %vm2116, %v1941
  %2126 = vst.msk [vmem:[#allocation3 + $0x24] sm:$0xf] %vm2116, %v1943
  %2127 = vst.msk [vmem:[#allocation3 + $0x28] sm:$0xf] %vm2116, %v1945
  %2128 = vst.msk [vmem:[#allocation3 + $0x2c] sm:$0xf] %vm2116, %v1947
  %2129 = vst.msk [vmem:[#allocation3 + $0x30] sm:$0xf] %vm2116, %v1949
  %2130 = vst.msk [vmem:[#allocation3 + $0x34] sm:$0xf] %vm2116, %v1951
  %2131 = vst.msk [vmem:[#allocation3 + $0x38] sm:$0xf] %vm2116, %v1953
  %2132 = vst.msk [vmem:[#allocation3 + $0x3c] sm:$0xf] %vm2116, %v1955
  %2133 = vst.msk [vmem:[#allocation3 + $0x40] sm:$0xf] %vm2116, %v1957
  %2134 = vst.msk [vmem:[#allocation3 + $0x44] sm:$0xf] %vm2116, %v1959
  %2135 = vst.msk [vmem:[#allocation3 + $0x48] sm:$0xf] %vm2116, %v1961
  %2136 = vst.msk [vmem:[#allocation3 + $0x4c] sm:$0xf] %vm2116, %v1963
  %2137 = vst.msk [vmem:[#allocation3 + $0x50] sm:$0xf] %vm2116, %v1965
  %2138 = vst.msk [vmem:[#allocation3 + $0x54] sm:$0xf] %vm2116, %v1967
  %2139 = vst.msk [vmem:[#allocation3 + $0x58] sm:$0xf] %vm2116, %v1969
  %2140 = vst.msk [vmem:[#allocation3 + $0x5c] sm:$0xf] %vm2116, %v1971
  %2141 = vst.msk [vmem:[#allocation3 + $0x60] sm:$0xf] %vm2116, %v1973
  %2142 = vst.msk [vmem:[#allocation3 + $0x64] sm:$0xf] %vm2116, %v1975
  %2143 = vst.msk [vmem:[#allocation3 + $0x68] sm:$0xf] %vm2116, %v1977
  %2144 = vst.msk [vmem:[#allocation3 + $0x6c] sm:$0xf] %vm2116, %v1979
  %2145 = vst.msk [vmem:[#allocation3 + $0x70] sm:$0xf] %vm2116, %v1981
  %2146 = vst.msk [vmem:[#allocation3 + $0x74] sm:$0xf] %vm2116, %v1983
  %2147 = vst.msk [vmem:[#allocation3 + $0x78] sm:$0xf] %vm2116, %v1985
  %2148 = vst.msk [vmem:[#allocation3 + $0x7c] sm:$0xf] %vm2116, %v1987
  %2149 = vst.msk [vmem:[#allocation3 + $0x80] sm:$0xf] %vm2116, %v1989
  %2150 = vst.msk [vmem:[#allocation3 + $0x84] sm:$0xf] %vm2116, %v1991
  %2151 = vst.msk [vmem:[#allocation3 + $0x88] sm:$0xf] %vm2116, %v1993
  %2152 = vst.msk [vmem:[#allocation3 + $0x8c] sm:$0xf] %vm2116, %v1995
  %2153 = vst.msk [vmem:[#allocation3 + $0x90] sm:$0xf] %vm2116, %v1997
  %2154 = vst.msk [vmem:[#allocation3 + $0x94] sm:$0xf] %vm2116, %v1999
  %2155 = vst.msk [vmem:[#allocation3 + $0x98] sm:$0xf] %vm2116, %v2001
  %2156 = vst.msk [vmem:[#allocation3 + $0x9c] sm:$0xf] %vm2116, %v2003
  %2157 = vst.msk [vmem:[#allocation3 + $0xa0] sm:$0xf] %vm2116, %v2005
  %2158 = vst.msk [vmem:[#allocation3 + $0xa4] sm:$0xf] %vm2116, %v2007
  %2159 = vst.msk [vmem:[#allocation3 + $0xa8] sm:$0xf] %vm2116, %v2009
  %2160 = vst.msk [vmem:[#allocation3 + $0xac] sm:$0xf] %vm2116, %v2011
  %2161 = vst.msk [vmem:[#allocation3 + $0xb0] sm:$0xf] %vm2116, %v2013
  %2162 = vst.msk [vmem:[#allocation3 + $0xb4] sm:$0xf] %vm2116, %v2015
  %2163 = vst.msk [vmem:[#allocation3 + $0xb8] sm:$0xf] %vm2116, %v2017
  %2164 = vst.msk [vmem:[#allocation3 + $0xbc] sm:$0xf] %vm2116, %v2019
  %2165 = vst.msk [vmem:[#allocation3 + $0xc0] sm:$0xf] %vm2116, %v2021
  %2166 = vst.msk [vmem:[#allocation3 + $0xc4] sm:$0xf] %vm2116, %v2023
  %2167 = vst.msk [vmem:[#allocation3 + $0xc8] sm:$0xf] %vm2116, %v2025
  %2168 = vst.msk [vmem:[#allocation3 + $0xcc] sm:$0xf] %vm2116, %v2027
  %2169 = vst.msk [vmem:[#allocation3 + $0xd0] sm:$0xf] %vm2116, %v2029
  %2170 = vst.msk [vmem:[#allocation3 + $0xd4] sm:$0xf] %vm2116, %v2031
  %2171 = vst.msk [vmem:[#allocation3 + $0xd8] sm:$0xf] %vm2116, %v2033
  %2172 = vst.msk [vmem:[#allocation3 + $0xdc] sm:$0xf] %vm2116, %v2035
  %2173 = vst.msk [vmem:[#allocation3 + $0xe0] sm:$0xf] %vm2116, %v2037
  %2174 = vst.msk [vmem:[#allocation3 + $0xe4] sm:$0xf] %vm2116, %v2039
  %2175 = vst.msk [vmem:[#allocation3 + $0xe8] sm:$0xf] %vm2116, %v2041
  %2176 = vst.msk [vmem:[#allocation3 + $0xec] sm:$0xf] %vm2116, %v2043
  %2177 = vst.msk [vmem:[#allocation3 + $0xf0] sm:$0xf] %vm2116, %v2045
  %2178 = vst.msk [vmem:[#allocation3 + $0xf4] sm:$0xf] %vm2116, %v2047
  %2179 = vst.msk [vmem:[#allocation3 + $0xf8] sm:$0xf] %vm2116, %v2049
  %2180 = vst.msk [vmem:[#allocation3 + $0xfc] sm:$0xf] %vm2116, %v2051
  %v2181 = vld [vmem:[%s192 + $0x1] sm:$0xff]
  %v2182 = vld [vmem:[%s192 + $0x9] sm:$0xff]
  %v2183 = vld [vmem:[%s192 + $0x19] sm:$0xff]
  %v2184 = vld [vmem:[%s192 + $0x21] sm:$0xff]
  %v2185 = vld [vmem:[%s192 + $0x31] sm:$0xff]
  %v2186 = vld [vmem:[%s192 + $0x39] sm:$0xff]
  %v2187 = vld [vmem:[%s192 + $0x49] sm:$0xff]
  %v2188 = vld [vmem:[%s192 + $0x51] sm:$0xff]
  %v2189 = vld [vmem:[%s192 + $0x61] sm:$0xff]
  %v2190 = vld [vmem:[%s192 + $0x69] sm:$0xff]
  %v2191 = vld [vmem:[%s192 + $0x79] sm:$0xff]
  %v2192 = vld [vmem:[%s192 + $0x81] sm:$0xff]
  %v2193 = vld [vmem:[%s192 + $0x91] sm:$0xff]
  %v2194 = vld [vmem:[%s192 + $0x99] sm:$0xff]
  %v2195 = vld [vmem:[%s192 + $0xa9] sm:$0xff]
  %v2196 = vld [vmem:[%s192 + $0xb1] sm:$0xff]
  %v2197 = vld [vmem:[%s192 + $0xc1] sm:$0xff]
  %v2198 = vld [vmem:[%s192 + $0xc9] sm:$0xff]
  %v2199 = vld [vmem:[%s192 + $0xd9] sm:$0xff]
  %v2200 = vld [vmem:[%s192 + $0xe1] sm:$0xff]
  %v2201 = vld [vmem:[%s192 + $0xf1] sm:$0xff]
  %v2202 = vld [vmem:[%s192 + $0xf9] sm:$0xff]
  %v2203 = vld [vmem:[%s192 + $0x109] sm:$0xff]
  %v2204 = vld [vmem:[%s192 + $0x111] sm:$0xff]
  %v2205 = vld [vmem:[%s192 + $0x121] sm:$0xff]
  %v2206 = vld [vmem:[%s192 + $0x129] sm:$0xff]
  %v2207 = vld [vmem:[%s192 + $0x139] sm:$0xff]
  %v2208 = vld [vmem:[%s192 + $0x141] sm:$0xff]
  %v2209 = vld [vmem:[%s192 + $0x151] sm:$0xff]
  %v2210 = vld [vmem:[%s192 + $0x159] sm:$0xff]
  %v2211 = vld [vmem:[%s192 + $0x169] sm:$0xff]
  %v2212 = vld [vmem:[%s192 + $0x171] sm:$0xff]
  %v2213 = vld [vmem:[%s192 + $0x1b1] sm:$0xff]
  %v2214 = vld [vmem:[%s192 + $0x1b9] sm:$0xff]
  %v2215 = vld [vmem:[%s192 + $0x1c9] sm:$0xff]
  %v2216 = vld [vmem:[%s192 + $0x1d1] sm:$0xff]
  %v2217 = vld [vmem:[%s192 + $0x1e1] sm:$0xff]
  %v2218 = vld [vmem:[%s192 + $0x1e9] sm:$0xff]
  %v2219 = vld [vmem:[%s192 + $0x1f9] sm:$0xff]
  %v2220 = vld [vmem:[%s192 + $0x201] sm:$0xff]
  %v2221 = vld [vmem:[%s192 + $0x211] sm:$0xff]
  %v2222 = vld [vmem:[%s192 + $0x219] sm:$0xff]
  %v2223 = vld [vmem:[%s192 + $0x229] sm:$0xff]
  %v2224 = vld [vmem:[%s192 + $0x231] sm:$0xff]
  %v2225 = vld [vmem:[%s192 + $0x241] sm:$0xff]
  %v2226 = vld [vmem:[%s192 + $0x249] sm:$0xff]
  %v2227 = vld [vmem:[%s192 + $0x259] sm:$0xff]
  %v2228 = vld [vmem:[%s192 + $0x261] sm:$0xff]
  %v2229 = vld [vmem:[%s192 + $0x271] sm:$0xff]
  %v2230 = vld [vmem:[%s192 + $0x279] sm:$0xff]
  %v2231 = vld [vmem:[%s192 + $0x289] sm:$0xff]
  %v2232 = vld [vmem:[%s192 + $0x291] sm:$0xff]
  %v2233 = vld [vmem:[%s192 + $0x2a1] sm:$0xff]
  %v2234 = vld [vmem:[%s192 + $0x2a9] sm:$0xff]
  %v2235 = vld [vmem:[%s192 + $0x2b9] sm:$0xff]
  %v2236 = vld [vmem:[%s192 + $0x2c1] sm:$0xff]
  %v2237 = vld [vmem:[%s192 + $0x2d1] sm:$0xff]
  %v2238 = vld [vmem:[%s192 + $0x2d9] sm:$0xff]
  %v2239 = vld [vmem:[%s192 + $0x2e9] sm:$0xff]
  %v2240 = vld [vmem:[%s192 + $0x2f1] sm:$0xff]
  %v2241 = vld [vmem:[%s192 + $0x301] sm:$0xff]
  %v2242 = vld [vmem:[%s192 + $0x309] sm:$0xff]
  %v2243 = vld [vmem:[%s192 + $0x319] sm:$0xff]
  %v2244 = vld [vmem:[%s192 + $0x321] sm:$0xff]
  %v2245 = vpack.c.bf16 %v2182, %v2181
  %v2246 = vpack.c.bf16 %v2184, %v2183
  %v2247 = vpack.c.bf16 %v2186, %v2185
  %v2248 = vpack.c.bf16 %v2188, %v2187
  %v2249 = vpack.c.bf16 %v2190, %v2189
  %v2250 = vpack.c.bf16 %v2192, %v2191
  %v2251 = vpack.c.bf16 %v2194, %v2193
  %v2252 = vpack.c.bf16 %v2196, %v2195
  %v2253 = vpack.c.bf16 %v2198, %v2197
  %v2254 = vpack.c.bf16 %v2200, %v2199
  %v2255 = vpack.c.bf16 %v2202, %v2201
  %v2256 = vpack.c.bf16 %v2204, %v2203
  %v2257 = vpack.c.bf16 %v2206, %v2205
  %v2258 = vpack.c.bf16 %v2208, %v2207
  %v2259 = vpack.c.bf16 %v2210, %v2209
  %v2260 = vpack.c.bf16 %v2212, %v2211
  %v2261 = vpack.c.bf16 %v2214, %v2213
  %v2262 = vpack.c.bf16 %v2216, %v2215
  %v2263 = vpack.c.bf16 %v2218, %v2217
  %v2264 = vpack.c.bf16 %v2220, %v2219
  %v2265 = vpack.c.bf16 %v2222, %v2221
  %v2266 = vpack.c.bf16 %v2224, %v2223
  %v2267 = vpack.c.bf16 %v2226, %v2225
  %v2268 = vpack.c.bf16 %v2228, %v2227
  %v2269 = vpack.c.bf16 %v2230, %v2229
  %v2270 = vpack.c.bf16 %v2232, %v2231
  %v2271 = vpack.c.bf16 %v2234, %v2233
  %v2272 = vpack.c.bf16 %v2236, %v2235
  %v2273 = vpack.c.bf16 %v2238, %v2237
  %v2274 = vpack.c.bf16 %v2240, %v2239
  %v2275 = vpack.c.bf16 %v2242, %v2241
  %v2276 = vpack.c.bf16 %v2244, %v2243
  %v2309 = vunpack.c.l.b16 %v2245
  %v2310 = vunpack.c.h.b16 %v2245
  %v2311 = vunpack.c.l.b16 %v2246
  %v2312 = vunpack.c.h.b16 %v2246
  %v2313 = vunpack.c.l.b16 %v2247
  %v2314 = vunpack.c.h.b16 %v2247
  %v2315 = vunpack.c.l.b16 %v2248
  %v2316 = vunpack.c.h.b16 %v2248
  %v2317 = vunpack.c.l.b16 %v2249
  %v2318 = vunpack.c.h.b16 %v2249
  %v2319 = vunpack.c.l.b16 %v2250
  %v2320 = vunpack.c.h.b16 %v2250
  %v2321 = vunpack.c.l.b16 %v2251
  %v2322 = vunpack.c.h.b16 %v2251
  %v2323 = vunpack.c.l.b16 %v2252
  %v2324 = vunpack.c.h.b16 %v2252
  %v2325 = vunpack.c.l.b16 %v2253
  %v2326 = vunpack.c.h.b16 %v2253
  %v2327 = vunpack.c.l.b16 %v2254
  %v2328 = vunpack.c.h.b16 %v2254
  %v2329 = vunpack.c.l.b16 %v2255
  %v2330 = vunpack.c.h.b16 %v2255
  %v2331 = vunpack.c.l.b16 %v2256
  %v2332 = vunpack.c.h.b16 %v2256
  %v2333 = vunpack.c.l.b16 %v2257
  %v2334 = vunpack.c.h.b16 %v2257
  %v2335 = vunpack.c.l.b16 %v2258
  %v2336 = vunpack.c.h.b16 %v2258
  %v2337 = vunpack.c.l.b16 %v2259
  %v2338 = vunpack.c.h.b16 %v2259
  %v2339 = vunpack.c.l.b16 %v2260
  %v2340 = vunpack.c.h.b16 %v2260
  %v2341 = vunpack.c.l.b16 %v2261
  %v2342 = vunpack.c.h.b16 %v2261
  %v2343 = vunpack.c.l.b16 %v2262
  %v2344 = vunpack.c.h.b16 %v2262
  %v2345 = vunpack.c.l.b16 %v2263
  %v2346 = vunpack.c.h.b16 %v2263
  %v2347 = vunpack.c.l.b16 %v2264
  %v2348 = vunpack.c.h.b16 %v2264
  %v2349 = vunpack.c.l.b16 %v2265
  %v2350 = vunpack.c.h.b16 %v2265
  %v2351 = vunpack.c.l.b16 %v2266
  %v2352 = vunpack.c.h.b16 %v2266
  %v2353 = vunpack.c.l.b16 %v2267
  %v2354 = vunpack.c.h.b16 %v2267
  %v2355 = vunpack.c.l.b16 %v2268
  %v2356 = vunpack.c.h.b16 %v2268
  %v2357 = vunpack.c.l.b16 %v2269
  %v2358 = vunpack.c.h.b16 %v2269
  %v2359 = vunpack.c.l.b16 %v2270
  %v2360 = vunpack.c.h.b16 %v2270
  %v2361 = vunpack.c.l.b16 %v2271
  %v2362 = vunpack.c.h.b16 %v2271
  %v2363 = vunpack.c.l.b16 %v2272
  %v2364 = vunpack.c.h.b16 %v2272
  %v2365 = vunpack.c.l.b16 %v2273
  %v2366 = vunpack.c.h.b16 %v2273
  %v2367 = vunpack.c.l.b16 %v2274
  %v2368 = vunpack.c.h.b16 %v2274
  %v2369 = vunpack.c.l.b16 %v2275
  %v2370 = vunpack.c.h.b16 %v2275
  %v2371 = vunpack.c.l.b16 %v2276
  %v2372 = vunpack.c.h.b16 %v2276
  %v2373 = vpack.c.b16 %v2309, %v2309
  %v2374 = vpack.c.b16 %v2310, %v2310
  %v2375 = vpack.c.b16 %v2311, %v2311
  %v2376 = vpack.c.b16 %v2312, %v2312
  %v2377 = vpack.c.b16 %v2313, %v2313
  %v2378 = vpack.c.b16 %v2314, %v2314
  %v2379 = vpack.c.b16 %v2315, %v2315
  %v2380 = vpack.c.b16 %v2316, %v2316
  %v2381 = vpack.c.b16 %v2317, %v2317
  %v2382 = vpack.c.b16 %v2318, %v2318
  %v2383 = vpack.c.b16 %v2319, %v2319
  %v2384 = vpack.c.b16 %v2320, %v2320
  %v2385 = vpack.c.b16 %v2321, %v2321
  %v2386 = vpack.c.b16 %v2322, %v2322
  %v2387 = vpack.c.b16 %v2323, %v2323
  %v2388 = vpack.c.b16 %v2324, %v2324
  %v2389 = vpack.c.b16 %v2325, %v2325
  %v2390 = vpack.c.b16 %v2326, %v2326
  %v2391 = vpack.c.b16 %v2327, %v2327
  %v2392 = vpack.c.b16 %v2328, %v2328
  %v2393 = vpack.c.b16 %v2329, %v2329
  %v2394 = vpack.c.b16 %v2330, %v2330
  %v2395 = vpack.c.b16 %v2331, %v2331
  %v2396 = vpack.c.b16 %v2332, %v2332
  %v2397 = vpack.c.b16 %v2333, %v2333
  %v2398 = vpack.c.b16 %v2334, %v2334
  %v2399 = vpack.c.b16 %v2335, %v2335
  %v2400 = vpack.c.b16 %v2336, %v2336
  %v2401 = vpack.c.b16 %v2337, %v2337
  %v2402 = vpack.c.b16 %v2338, %v2338
  %v2403 = vpack.c.b16 %v2339, %v2339
  %v2404 = vpack.c.b16 %v2340, %v2340
  %v2405 = vpack.c.b16 %v2341, %v2341
  %v2406 = vpack.c.b16 %v2342, %v2342
  %v2407 = vpack.c.b16 %v2343, %v2343
  %v2408 = vpack.c.b16 %v2344, %v2344
  %v2409 = vpack.c.b16 %v2345, %v2345
  %v2410 = vpack.c.b16 %v2346, %v2346
  %v2411 = vpack.c.b16 %v2347, %v2347
  %v2412 = vpack.c.b16 %v2348, %v2348
  %v2413 = vpack.c.b16 %v2349, %v2349
  %v2414 = vpack.c.b16 %v2350, %v2350
  %v2415 = vpack.c.b16 %v2351, %v2351
  %v2416 = vpack.c.b16 %v2352, %v2352
  %v2417 = vpack.c.b16 %v2353, %v2353
  %v2418 = vpack.c.b16 %v2354, %v2354
  %v2419 = vpack.c.b16 %v2355, %v2355
  %v2420 = vpack.c.b16 %v2356, %v2356
  %v2421 = vpack.c.b16 %v2357, %v2357
  %v2422 = vpack.c.b16 %v2358, %v2358
  %v2423 = vpack.c.b16 %v2359, %v2359
  %v2424 = vpack.c.b16 %v2360, %v2360
  %v2425 = vpack.c.b16 %v2361, %v2361
  %v2426 = vpack.c.b16 %v2362, %v2362
  %v2427 = vpack.c.b16 %v2363, %v2363
  %v2428 = vpack.c.b16 %v2364, %v2364
  %v2429 = vpack.c.b16 %v2365, %v2365
  %v2430 = vpack.c.b16 %v2366, %v2366
  %v2431 = vpack.c.b16 %v2367, %v2367
  %v2432 = vpack.c.b16 %v2368, %v2368
  %v2433 = vpack.c.b16 %v2369, %v2369
  %v2434 = vpack.c.b16 %v2370, %v2370
  %v2435 = vpack.c.b16 %v2371, %v2371
  %v2436 = vpack.c.b16 %v2372, %v2372
  %2437 = vrot.lane.b32.xlu0 %v2373, 16
  %v2438 = vpop.permute.xlu0 %2437
  %2439 = vrot.lane.b32.xlu0 %v2374, 16
  %v2440 = vpop.permute.xlu0 %2439
  %2441 = vrot.lane.b32.xlu0 %v2375, 16
  %v2442 = vpop.permute.xlu0 %2441
  %2443 = vrot.lane.b32.xlu0 %v2376, 16
  %v2444 = vpop.permute.xlu0 %2443
  %2445 = vrot.lane.b32.xlu0 %v2377, 16
  %v2446 = vpop.permute.xlu0 %2445
  %2447 = vrot.lane.b32.xlu0 %v2378, 16
  %v2448 = vpop.permute.xlu0 %2447
  %2449 = vrot.lane.b32.xlu0 %v2379, 16
  %v2450 = vpop.permute.xlu0 %2449
  %2451 = vrot.lane.b32.xlu0 %v2380, 16
  %v2452 = vpop.permute.xlu0 %2451
  %2453 = vrot.lane.b32.xlu0 %v2381, 16
  %v2454 = vpop.permute.xlu0 %2453
  %2455 = vrot.lane.b32.xlu0 %v2382, 16
  %v2456 = vpop.permute.xlu0 %2455
  %2457 = vrot.lane.b32.xlu0 %v2383, 16
  %v2458 = vpop.permute.xlu0 %2457
  %2459 = vrot.lane.b32.xlu0 %v2384, 16
  %v2460 = vpop.permute.xlu0 %2459
  %2461 = vrot.lane.b32.xlu0 %v2385, 16
  %v2462 = vpop.permute.xlu0 %2461
  %2463 = vrot.lane.b32.xlu0 %v2386, 16
  %v2464 = vpop.permute.xlu0 %2463
  %2465 = vrot.lane.b32.xlu0 %v2387, 16
  %v2466 = vpop.permute.xlu0 %2465
  %2467 = vrot.lane.b32.xlu0 %v2388, 16
  %v2468 = vpop.permute.xlu0 %2467
  %2469 = vrot.lane.b32.xlu0 %v2389, 16
  %v2470 = vpop.permute.xlu0 %2469
  %2471 = vrot.lane.b32.xlu0 %v2390, 16
  %v2472 = vpop.permute.xlu0 %2471
  %2473 = vrot.lane.b32.xlu0 %v2391, 16
  %v2474 = vpop.permute.xlu0 %2473
  %2475 = vrot.lane.b32.xlu0 %v2392, 16
  %v2476 = vpop.permute.xlu0 %2475
  %2477 = vrot.lane.b32.xlu0 %v2393, 16
  %v2478 = vpop.permute.xlu0 %2477
  %2479 = vrot.lane.b32.xlu0 %v2394, 16
  %v2480 = vpop.permute.xlu0 %2479
  %2481 = vrot.lane.b32.xlu0 %v2395, 16
  %v2482 = vpop.permute.xlu0 %2481
  %2483 = vrot.lane.b32.xlu0 %v2396, 16
  %v2484 = vpop.permute.xlu0 %2483
  %2485 = vrot.lane.b32.xlu0 %v2397, 16
  %v2486 = vpop.permute.xlu0 %2485
  %2487 = vrot.lane.b32.xlu0 %v2398, 16
  %v2488 = vpop.permute.xlu0 %2487
  %2489 = vrot.lane.b32.xlu0 %v2399, 16
  %v2490 = vpop.permute.xlu0 %2489
  %2491 = vrot.lane.b32.xlu0 %v2400, 16
  %v2492 = vpop.permute.xlu0 %2491
  %2493 = vrot.lane.b32.xlu0 %v2401, 16
  %v2494 = vpop.permute.xlu0 %2493
  %2495 = vrot.lane.b32.xlu0 %v2402, 16
  %v2496 = vpop.permute.xlu0 %2495
  %2497 = vrot.lane.b32.xlu0 %v2403, 16
  %v2498 = vpop.permute.xlu0 %2497
  %2499 = vrot.lane.b32.xlu0 %v2404, 16
  %v2500 = vpop.permute.xlu0 %2499
  %2501 = vrot.lane.b32.xlu0 %v2405, 16
  %v2502 = vpop.permute.xlu0 %2501
  %2503 = vrot.lane.b32.xlu0 %v2406, 16
  %v2504 = vpop.permute.xlu0 %2503
  %2505 = vrot.lane.b32.xlu0 %v2407, 16
  %v2506 = vpop.permute.xlu0 %2505
  %2507 = vrot.lane.b32.xlu0 %v2408, 16
  %v2508 = vpop.permute.xlu0 %2507
  %2509 = vrot.lane.b32.xlu0 %v2409, 16
  %v2510 = vpop.permute.xlu0 %2509
  %2511 = vrot.lane.b32.xlu0 %v2410, 16
  %v2512 = vpop.permute.xlu0 %2511
  %2513 = vrot.lane.b32.xlu0 %v2411, 16
  %v2514 = vpop.permute.xlu0 %2513
  %2515 = vrot.lane.b32.xlu0 %v2412, 16
  %v2516 = vpop.permute.xlu0 %2515
  %2517 = vrot.lane.b32.xlu0 %v2413, 16
  %v2518 = vpop.permute.xlu0 %2517
  %2519 = vrot.lane.b32.xlu0 %v2414, 16
  %v2520 = vpop.permute.xlu0 %2519
  %2521 = vrot.lane.b32.xlu0 %v2415, 16
  %v2522 = vpop.permute.xlu0 %2521
  %2523 = vrot.lane.b32.xlu0 %v2416, 16
  %v2524 = vpop.permute.xlu0 %2523
  %2525 = vrot.lane.b32.xlu0 %v2417, 16
  %v2526 = vpop.permute.xlu0 %2525
  %2527 = vrot.lane.b32.xlu0 %v2418, 16
  %v2528 = vpop.permute.xlu0 %2527
  %2529 = vrot.lane.b32.xlu0 %v2419, 16
  %v2530 = vpop.permute.xlu0 %2529
  %2531 = vrot.lane.b32.xlu0 %v2420, 16
  %v2532 = vpop.permute.xlu0 %2531
  %2533 = vrot.lane.b32.xlu0 %v2421, 16
  %v2534 = vpop.permute.xlu0 %2533
  %2535 = vrot.lane.b32.xlu0 %v2422, 16
  %v2536 = vpop.permute.xlu0 %2535
  %2537 = vrot.lane.b32.xlu0 %v2423, 16
  %v2538 = vpop.permute.xlu0 %2537
  %2539 = vrot.lane.b32.xlu0 %v2424, 16
  %v2540 = vpop.permute.xlu0 %2539
  %2541 = vrot.lane.b32.xlu0 %v2425, 16
  %v2542 = vpop.permute.xlu0 %2541
  %2543 = vrot.lane.b32.xlu0 %v2426, 16
  %v2544 = vpop.permute.xlu0 %2543
  %2545 = vrot.lane.b32.xlu0 %v2427, 16
  %v2546 = vpop.permute.xlu0 %2545
  %2547 = vrot.lane.b32.xlu0 %v2428, 16
  %v2548 = vpop.permute.xlu0 %2547
  %2549 = vrot.lane.b32.xlu0 %v2429, 16
  %v2550 = vpop.permute.xlu0 %2549
  %2551 = vrot.lane.b32.xlu0 %v2430, 16
  %v2552 = vpop.permute.xlu0 %2551
  %2553 = vrot.lane.b32.xlu0 %v2431, 16
  %v2554 = vpop.permute.xlu0 %2553
  %2555 = vrot.lane.b32.xlu0 %v2432, 16
  %v2556 = vpop.permute.xlu0 %2555
  %2557 = vrot.lane.b32.xlu0 %v2433, 16
  %v2558 = vpop.permute.xlu0 %2557
  %2559 = vrot.lane.b32.xlu0 %v2434, 16
  %v2560 = vpop.permute.xlu0 %2559
  %2561 = vrot.lane.b32.xlu0 %v2435, 16
  %v2562 = vpop.permute.xlu0 %2561
  %2563 = vrot.lane.b32.xlu0 %v2436, 16
  %v2564 = vpop.permute.xlu0 %2563
  %vm2629 = vcmask 158848
  %2630 = vst.msk [vmem:[#allocation3] sm:$0xf] %vm2629, %v2438
  %2631 = vst.msk [vmem:[#allocation3 + $0x4] sm:$0xf] %vm2629, %v2440
  %2632 = vst.msk [vmem:[#allocation3 + $0x8] sm:$0xf] %vm2629, %v2442
  %2633 = vst.msk [vmem:[#allocation3 + $0xc] sm:$0xf] %vm2629, %v2444
  %2634 = vst.msk [vmem:[#allocation3 + $0x10] sm:$0xf] %vm2629, %v2446
  %2635 = vst.msk [vmem:[#allocation3 + $0x14] sm:$0xf] %vm2629, %v2448
  %2636 = vst.msk [vmem:[#allocation3 + $0x18] sm:$0xf] %vm2629, %v2450
  %2637 = vst.msk [vmem:[#allocation3 + $0x1c] sm:$0xf] %vm2629, %v2452
  %2638 = vst.msk [vmem:[#allocation3 + $0x20] sm:$0xf] %vm2629, %v2454
  %2639 = vst.msk [vmem:[#allocation3 + $0x24] sm:$0xf] %vm2629, %v2456
  %2640 = vst.msk [vmem:[#allocation3 + $0x28] sm:$0xf] %vm2629, %v2458
  %2641 = vst.msk [vmem:[#allocation3 + $0x2c] sm:$0xf] %vm2629, %v2460
  %2642 = vst.msk [vmem:[#allocation3 + $0x30] sm:$0xf] %vm2629, %v2462
  %2643 = vst.msk [vmem:[#allocation3 + $0x34] sm:$0xf] %vm2629, %v2464
  %2644 = vst.msk [vmem:[#allocation3 + $0x38] sm:$0xf] %vm2629, %v2466
  %2645 = vst.msk [vmem:[#allocation3 + $0x3c] sm:$0xf] %vm2629, %v2468
  %2646 = vst.msk [vmem:[#allocation3 + $0x40] sm:$0xf] %vm2629, %v2470
  %2647 = vst.msk [vmem:[#allocation3 + $0x44] sm:$0xf] %vm2629, %v2472
  %2648 = vst.msk [vmem:[#allocation3 + $0x48] sm:$0xf] %vm2629, %v2474
  %2649 = vst.msk [vmem:[#allocation3 + $0x4c] sm:$0xf] %vm2629, %v2476
  %2650 = vst.msk [vmem:[#allocation3 + $0x50] sm:$0xf] %vm2629, %v2478
  %2651 = vst.msk [vmem:[#allocation3 + $0x54] sm:$0xf] %vm2629, %v2480
  %2652 = vst.msk [vmem:[#allocation3 + $0x58] sm:$0xf] %vm2629, %v2482
  %2653 = vst.msk [vmem:[#allocation3 + $0x5c] sm:$0xf] %vm2629, %v2484
  %2654 = vst.msk [vmem:[#allocation3 + $0x60] sm:$0xf] %vm2629, %v2486
  %2655 = vst.msk [vmem:[#allocation3 + $0x64] sm:$0xf] %vm2629, %v2488
  %2656 = vst.msk [vmem:[#allocation3 + $0x68] sm:$0xf] %vm2629, %v2490
  %2657 = vst.msk [vmem:[#allocation3 + $0x6c] sm:$0xf] %vm2629, %v2492
  %2658 = vst.msk [vmem:[#allocation3 + $0x70] sm:$0xf] %vm2629, %v2494
  %2659 = vst.msk [vmem:[#allocation3 + $0x74] sm:$0xf] %vm2629, %v2496
  %2660 = vst.msk [vmem:[#allocation3 + $0x78] sm:$0xf] %vm2629, %v2498
  %2661 = vst.msk [vmem:[#allocation3 + $0x7c] sm:$0xf] %vm2629, %v2500
  %2662 = vst.msk [vmem:[#allocation3 + $0x80] sm:$0xf] %vm2629, %v2502
  %2663 = vst.msk [vmem:[#allocation3 + $0x84] sm:$0xf] %vm2629, %v2504
  %2664 = vst.msk [vmem:[#allocation3 + $0x88] sm:$0xf] %vm2629, %v2506
  %2665 = vst.msk [vmem:[#allocation3 + $0x8c] sm:$0xf] %vm2629, %v2508
  %2666 = vst.msk [vmem:[#allocation3 + $0x90] sm:$0xf] %vm2629, %v2510
  %2667 = vst.msk [vmem:[#allocation3 + $0x94] sm:$0xf] %vm2629, %v2512
  %2668 = vst.msk [vmem:[#allocation3 + $0x98] sm:$0xf] %vm2629, %v2514
  %2669 = vst.msk [vmem:[#allocation3 + $0x9c] sm:$0xf] %vm2629, %v2516
  %2670 = vst.msk [vmem:[#allocation3 + $0xa0] sm:$0xf] %vm2629, %v2518
  %2671 = vst.msk [vmem:[#allocation3 + $0xa4] sm:$0xf] %vm2629, %v2520
  %2672 = vst.msk [vmem:[#allocation3 + $0xa8] sm:$0xf] %vm2629, %v2522
  %2673 = vst.msk [vmem:[#allocation3 + $0xac] sm:$0xf] %vm2629, %v2524
  %2674 = vst.msk [vmem:[#allocation3 + $0xb0] sm:$0xf] %vm2629, %v2526
  %2675 = vst.msk [vmem:[#allocation3 + $0xb4] sm:$0xf] %vm2629, %v2528
  %2676 = vst.msk [vmem:[#allocation3 + $0xb8] sm:$0xf] %vm2629, %v2530
  %2677 = vst.msk [vmem:[#allocation3 + $0xbc] sm:$0xf] %vm2629, %v2532
  %2678 = vst.msk [vmem:[#allocation3 + $0xc0] sm:$0xf] %vm2629, %v2534
  %2679 = vst.msk [vmem:[#allocation3 + $0xc4] sm:$0xf] %vm2629, %v2536
  %2680 = vst.msk [vmem:[#allocation3 + $0xc8] sm:$0xf] %vm2629, %v2538
  %2681 = vst.msk [vmem:[#allocation3 + $0xcc] sm:$0xf] %vm2629, %v2540
  %2682 = vst.msk [vmem:[#allocation3 + $0xd0] sm:$0xf] %vm2629, %v2542
  %2683 = vst.msk [vmem:[#allocation3 + $0xd4] sm:$0xf] %vm2629, %v2544
  %2684 = vst.msk [vmem:[#allocation3 + $0xd8] sm:$0xf] %vm2629, %v2546
  %2685 = vst.msk [vmem:[#allocation3 + $0xdc] sm:$0xf] %vm2629, %v2548
  %2686 = vst.msk [vmem:[#allocation3 + $0xe0] sm:$0xf] %vm2629, %v2550
  %2687 = vst.msk [vmem:[#allocation3 + $0xe4] sm:$0xf] %vm2629, %v2552
  %2688 = vst.msk [vmem:[#allocation3 + $0xe8] sm:$0xf] %vm2629, %v2554
  %2689 = vst.msk [vmem:[#allocation3 + $0xec] sm:$0xf] %vm2629, %v2556
  %2690 = vst.msk [vmem:[#allocation3 + $0xf0] sm:$0xf] %vm2629, %v2558
  %2691 = vst.msk [vmem:[#allocation3 + $0xf4] sm:$0xf] %vm2629, %v2560
  %2692 = vst.msk [vmem:[#allocation3 + $0xf8] sm:$0xf] %vm2629, %v2562
  %2693 = vst.msk [vmem:[#allocation3 + $0xfc] sm:$0xf] %vm2629, %v2564
  %v2694 = vld [vmem:[%s192 + $0x2] sm:$0xff]
  %v2695 = vld [vmem:[%s192 + $0xa] sm:$0xff]
  %v2696 = vld [vmem:[%s192 + $0x1a] sm:$0xff]
  %v2697 = vld [vmem:[%s192 + $0x22] sm:$0xff]
  %v2698 = vld [vmem:[%s192 + $0x32] sm:$0xff]
  %v2699 = vld [vmem:[%s192 + $0x3a] sm:$0xff]
  %v2700 = vld [vmem:[%s192 + $0x4a] sm:$0xff]
  %v2701 = vld [vmem:[%s192 + $0x52] sm:$0xff]
  %v2702 = vld [vmem:[%s192 + $0x62] sm:$0xff]
  %v2703 = vld [vmem:[%s192 + $0x6a] sm:$0xff]
  %v2704 = vld [vmem:[%s192 + $0x7a] sm:$0xff]
  %v2705 = vld [vmem:[%s192 + $0x82] sm:$0xff]
  %v2706 = vld [vmem:[%s192 + $0x92] sm:$0xff]
  %v2707 = vld [vmem:[%s192 + $0x9a] sm:$0xff]
  %v2708 = vld [vmem:[%s192 + $0xaa] sm:$0xff]
  %v2709 = vld [vmem:[%s192 + $0xb2] sm:$0xff]
  %v2710 = vld [vmem:[%s192 + $0xc2] sm:$0xff]
  %v2711 = vld [vmem:[%s192 + $0xca] sm:$0xff]
  %v2712 = vld [vmem:[%s192 + $0xda] sm:$0xff]
  %v2713 = vld [vmem:[%s192 + $0xe2] sm:$0xff]
  %v2714 = vld [vmem:[%s192 + $0xf2] sm:$0xff]
  %v2715 = vld [vmem:[%s192 + $0xfa] sm:$0xff]
  %v2716 = vld [vmem:[%s192 + $0x10a] sm:$0xff]
  %v2717 = vld [vmem:[%s192 + $0x112] sm:$0xff]
  %v2718 = vld [vmem:[%s192 + $0x122] sm:$0xff]
  %v2719 = vld [vmem:[%s192 + $0x12a] sm:$0xff]
  %v2720 = vld [vmem:[%s192 + $0x13a] sm:$0xff]
  %v2721 = vld [vmem:[%s192 + $0x142] sm:$0xff]
  %v2722 = vld [vmem:[%s192 + $0x152] sm:$0xff]
  %v2723 = vld [vmem:[%s192 + $0x15a] sm:$0xff]
  %v2724 = vld [vmem:[%s192 + $0x16a] sm:$0xff]
  %v2725 = vld [vmem:[%s192 + $0x172] sm:$0xff]
  %v2726 = vld [vmem:[%s192 + $0x1b2] sm:$0xff]
  %v2727 = vld [vmem:[%s192 + $0x1ba] sm:$0xff]
  %v2728 = vld [vmem:[%s192 + $0x1ca] sm:$0xff]
  %v2729 = vld [vmem:[%s192 + $0x1d2] sm:$0xff]
  %v2730 = vld [vmem:[%s192 + $0x1e2] sm:$0xff]
  %v2731 = vld [vmem:[%s192 + $0x1ea] sm:$0xff]
  %v2732 = vld [vmem:[%s192 + $0x1fa] sm:$0xff]
  %v2733 = vld [vmem:[%s192 + $0x202] sm:$0xff]
  %v2734 = vld [vmem:[%s192 + $0x212] sm:$0xff]
  %v2735 = vld [vmem:[%s192 + $0x21a] sm:$0xff]
  %v2736 = vld [vmem:[%s192 + $0x22a] sm:$0xff]
  %v2737 = vld [vmem:[%s192 + $0x232] sm:$0xff]
  %v2738 = vld [vmem:[%s192 + $0x242] sm:$0xff]
  %v2739 = vld [vmem:[%s192 + $0x24a] sm:$0xff]
  %v2740 = vld [vmem:[%s192 + $0x25a] sm:$0xff]
  %v2741 = vld [vmem:[%s192 + $0x262] sm:$0xff]
  %v2742 = vld [vmem:[%s192 + $0x272] sm:$0xff]
  %v2743 = vld [vmem:[%s192 + $0x27a] sm:$0xff]
  %v2744 = vld [vmem:[%s192 + $0x28a] sm:$0xff]
  %v2745 = vld [vmem:[%s192 + $0x292] sm:$0xff]
  %v2746 = vld [vmem:[%s192 + $0x2a2] sm:$0xff]
  %v2747 = vld [vmem:[%s192 + $0x2aa] sm:$0xff]
  %v2748 = vld [vmem:[%s192 + $0x2ba] sm:$0xff]
  %v2749 = vld [vmem:[%s192 + $0x2c2] sm:$0xff]
  %v2750 = vld [vmem:[%s192 + $0x2d2] sm:$0xff]
  %v2751 = vld [vmem:[%s192 + $0x2da] sm:$0xff]
  %v2752 = vld [vmem:[%s192 + $0x2ea] sm:$0xff]
  %v2753 = vld [vmem:[%s192 + $0x2f2] sm:$0xff]
  %v2754 = vld [vmem:[%s192 + $0x302] sm:$0xff]
  %v2755 = vld [vmem:[%s192 + $0x30a] sm:$0xff]
  %v2756 = vld [vmem:[%s192 + $0x31a] sm:$0xff]
  %v2757 = vld [vmem:[%s192 + $0x322] sm:$0xff]
  %v2758 = vpack.c.bf16 %v2695, %v2694
  %v2759 = vpack.c.bf16 %v2697, %v2696
  %v2760 = vpack.c.bf16 %v2699, %v2698
  %v2761 = vpack.c.bf16 %v2701, %v2700
  %v2762 = vpack.c.bf16 %v2703, %v2702
  %v2763 = vpack.c.bf16 %v2705, %v2704
  %v2764 = vpack.c.bf16 %v2707, %v2706
  %v2765 = vpack.c.bf16 %v2709, %v2708
  %v2766 = vpack.c.bf16 %v2711, %v2710
  %v2767 = vpack.c.bf16 %v2713, %v2712
  %v2768 = vpack.c.bf16 %v2715, %v2714
  %v2769 = vpack.c.bf16 %v2717, %v2716
  %v2770 = vpack.c.bf16 %v2719, %v2718
  %v2771 = vpack.c.bf16 %v2721, %v2720
  %v2772 = vpack.c.bf16 %v2723, %v2722
  %v2773 = vpack.c.bf16 %v2725, %v2724
  %v2774 = vpack.c.bf16 %v2727, %v2726
  %v2775 = vpack.c.bf16 %v2729, %v2728
  %v2776 = vpack.c.bf16 %v2731, %v2730
  %v2777 = vpack.c.bf16 %v2733, %v2732
  %v2778 = vpack.c.bf16 %v2735, %v2734
  %v2779 = vpack.c.bf16 %v2737, %v2736
  %v2780 = vpack.c.bf16 %v2739, %v2738
  %v2781 = vpack.c.bf16 %v2741, %v2740
  %v2782 = vpack.c.bf16 %v2743, %v2742
  %v2783 = vpack.c.bf16 %v2745, %v2744
  %v2784 = vpack.c.bf16 %v2747, %v2746
  %v2785 = vpack.c.bf16 %v2749, %v2748
  %v2786 = vpack.c.bf16 %v2751, %v2750
  %v2787 = vpack.c.bf16 %v2753, %v2752
  %v2788 = vpack.c.bf16 %v2755, %v2754
  %v2789 = vpack.c.bf16 %v2757, %v2756
  %v2822 = vunpack.c.l.b16 %v2758
  %v2823 = vunpack.c.h.b16 %v2758
  %v2824 = vunpack.c.l.b16 %v2759
  %v2825 = vunpack.c.h.b16 %v2759
  %v2826 = vunpack.c.l.b16 %v2760
  %v2827 = vunpack.c.h.b16 %v2760
  %v2828 = vunpack.c.l.b16 %v2761
  %v2829 = vunpack.c.h.b16 %v2761
  %v2830 = vunpack.c.l.b16 %v2762
  %v2831 = vunpack.c.h.b16 %v2762
  %v2832 = vunpack.c.l.b16 %v2763
  %v2833 = vunpack.c.h.b16 %v2763
  %v2834 = vunpack.c.l.b16 %v2764
  %v2835 = vunpack.c.h.b16 %v2764
  %v2836 = vunpack.c.l.b16 %v2765
  %v2837 = vunpack.c.h.b16 %v2765
  %v2838 = vunpack.c.l.b16 %v2766
  %v2839 = vunpack.c.h.b16 %v2766
  %v2840 = vunpack.c.l.b16 %v2767
  %v2841 = vunpack.c.h.b16 %v2767
  %v2842 = vunpack.c.l.b16 %v2768
  %v2843 = vunpack.c.h.b16 %v2768
  %v2844 = vunpack.c.l.b16 %v2769
  %v2845 = vunpack.c.h.b16 %v2769
  %v2846 = vunpack.c.l.b16 %v2770
  %v2847 = vunpack.c.h.b16 %v2770
  %v2848 = vunpack.c.l.b16 %v2771
  %v2849 = vunpack.c.h.b16 %v2771
  %v2850 = vunpack.c.l.b16 %v2772
  %v2851 = vunpack.c.h.b16 %v2772
  %v2852 = vunpack.c.l.b16 %v2773
  %v2853 = vunpack.c.h.b16 %v2773
  %v2854 = vunpack.c.l.b16 %v2774
  %v2855 = vunpack.c.h.b16 %v2774
  %v2856 = vunpack.c.l.b16 %v2775
  %v2857 = vunpack.c.h.b16 %v2775
  %v2858 = vunpack.c.l.b16 %v2776
  %v2859 = vunpack.c.h.b16 %v2776
  %v2860 = vunpack.c.l.b16 %v2777
  %v2861 = vunpack.c.h.b16 %v2777
  %v2862 = vunpack.c.l.b16 %v2778
  %v2863 = vunpack.c.h.b16 %v2778
  %v2864 = vunpack.c.l.b16 %v2779
  %v2865 = vunpack.c.h.b16 %v2779
  %v2866 = vunpack.c.l.b16 %v2780
  %v2867 = vunpack.c.h.b16 %v2780
  %v2868 = vunpack.c.l.b16 %v2781
  %v2869 = vunpack.c.h.b16 %v2781
  %v2870 = vunpack.c.l.b16 %v2782
  %v2871 = vunpack.c.h.b16 %v2782
  %v2872 = vunpack.c.l.b16 %v2783
  %v2873 = vunpack.c.h.b16 %v2783
  %v2874 = vunpack.c.l.b16 %v2784
  %v2875 = vunpack.c.h.b16 %v2784
  %v2876 = vunpack.c.l.b16 %v2785
  %v2877 = vunpack.c.h.b16 %v2785
  %v2878 = vunpack.c.l.b16 %v2786
  %v2879 = vunpack.c.h.b16 %v2786
  %v2880 = vunpack.c.l.b16 %v2787
  %v2881 = vunpack.c.h.b16 %v2787
  %v2882 = vunpack.c.l.b16 %v2788
  %v2883 = vunpack.c.h.b16 %v2788
  %v2884 = vunpack.c.l.b16 %v2789
  %v2885 = vunpack.c.h.b16 %v2789
  %v2886 = vpack.c.b16 %v2822, %v2822
  %v2887 = vpack.c.b16 %v2823, %v2823
  %v2888 = vpack.c.b16 %v2824, %v2824
  %v2889 = vpack.c.b16 %v2825, %v2825
  %v2890 = vpack.c.b16 %v2826, %v2826
  %v2891 = vpack.c.b16 %v2827, %v2827
  %v2892 = vpack.c.b16 %v2828, %v2828
  %v2893 = vpack.c.b16 %v2829, %v2829
  %v2894 = vpack.c.b16 %v2830, %v2830
  %v2895 = vpack.c.b16 %v2831, %v2831
  %v2896 = vpack.c.b16 %v2832, %v2832
  %v2897 = vpack.c.b16 %v2833, %v2833
  %v2898 = vpack.c.b16 %v2834, %v2834
  %v2899 = vpack.c.b16 %v2835, %v2835
  %v2900 = vpack.c.b16 %v2836, %v2836
  %v2901 = vpack.c.b16 %v2837, %v2837
  %v2902 = vpack.c.b16 %v2838, %v2838
  %v2903 = vpack.c.b16 %v2839, %v2839
  %v2904 = vpack.c.b16 %v2840, %v2840
  %v2905 = vpack.c.b16 %v2841, %v2841
  %v2906 = vpack.c.b16 %v2842, %v2842
  %v2907 = vpack.c.b16 %v2843, %v2843
  %v2908 = vpack.c.b16 %v2844, %v2844
  %v2909 = vpack.c.b16 %v2845, %v2845
  %v2910 = vpack.c.b16 %v2846, %v2846
  %v2911 = vpack.c.b16 %v2847, %v2847
  %v2912 = vpack.c.b16 %v2848, %v2848
  %v2913 = vpack.c.b16 %v2849, %v2849
  %v2914 = vpack.c.b16 %v2850, %v2850
  %v2915 = vpack.c.b16 %v2851, %v2851
  %v2916 = vpack.c.b16 %v2852, %v2852
  %v2917 = vpack.c.b16 %v2853, %v2853
  %v2918 = vpack.c.b16 %v2854, %v2854
  %v2919 = vpack.c.b16 %v2855, %v2855
  %v2920 = vpack.c.b16 %v2856, %v2856
  %v2921 = vpack.c.b16 %v2857, %v2857
  %v2922 = vpack.c.b16 %v2858, %v2858
  %v2923 = vpack.c.b16 %v2859, %v2859
  %v2924 = vpack.c.b16 %v2860, %v2860
  %v2925 = vpack.c.b16 %v2861, %v2861
  %v2926 = vpack.c.b16 %v2862, %v2862
  %v2927 = vpack.c.b16 %v2863, %v2863
  %v2928 = vpack.c.b16 %v2864, %v2864
  %v2929 = vpack.c.b16 %v2865, %v2865
  %v2930 = vpack.c.b16 %v2866, %v2866
  %v2931 = vpack.c.b16 %v2867, %v2867
  %v2932 = vpack.c.b16 %v2868, %v2868
  %v2933 = vpack.c.b16 %v2869, %v2869
  %v2934 = vpack.c.b16 %v2870, %v2870
  %v2935 = vpack.c.b16 %v2871, %v2871
  %v2936 = vpack.c.b16 %v2872, %v2872
  %v2937 = vpack.c.b16 %v2873, %v2873
  %v2938 = vpack.c.b16 %v2874, %v2874
  %v2939 = vpack.c.b16 %v2875, %v2875
  %v2940 = vpack.c.b16 %v2876, %v2876
  %v2941 = vpack.c.b16 %v2877, %v2877
  %v2942 = vpack.c.b16 %v2878, %v2878
  %v2943 = vpack.c.b16 %v2879, %v2879
  %v2944 = vpack.c.b16 %v2880, %v2880
  %v2945 = vpack.c.b16 %v2881, %v2881
  %v2946 = vpack.c.b16 %v2882, %v2882
  %v2947 = vpack.c.b16 %v2883, %v2883
  %v2948 = vpack.c.b16 %v2884, %v2884
  %v2949 = vpack.c.b16 %v2885, %v2885
  %2950 = vrot.lane.b32.xlu0 %v2886, 20
  %v2951 = vpop.permute.xlu0 %2950
  %2952 = vrot.lane.b32.xlu0 %v2887, 20
  %v2953 = vpop.permute.xlu0 %2952
  %2954 = vrot.lane.b32.xlu0 %v2888, 20
  %v2955 = vpop.permute.xlu0 %2954
  %2956 = vrot.lane.b32.xlu0 %v2889, 20
  %v2957 = vpop.permute.xlu0 %2956
  %2958 = vrot.lane.b32.xlu0 %v2890, 20
  %v2959 = vpop.permute.xlu0 %2958
  %2960 = vrot.lane.b32.xlu0 %v2891, 20
  %v2961 = vpop.permute.xlu0 %2960
  %2962 = vrot.lane.b32.xlu0 %v2892, 20
  %v2963 = vpop.permute.xlu0 %2962
  %2964 = vrot.lane.b32.xlu0 %v2893, 20
  %v2965 = vpop.permute.xlu0 %2964
  %2966 = vrot.lane.b32.xlu0 %v2894, 20
  %v2967 = vpop.permute.xlu0 %2966
  %2968 = vrot.lane.b32.xlu0 %v2895, 20
  %v2969 = vpop.permute.xlu0 %2968
  %2970 = vrot.lane.b32.xlu0 %v2896, 20
  %v2971 = vpop.permute.xlu0 %2970
  %2972 = vrot.lane.b32.xlu0 %v2897, 20
  %v2973 = vpop.permute.xlu0 %2972
  %2974 = vrot.lane.b32.xlu0 %v2898, 20
  %v2975 = vpop.permute.xlu0 %2974
  %2976 = vrot.lane.b32.xlu0 %v2899, 20
  %v2977 = vpop.permute.xlu0 %2976
  %2978 = vrot.lane.b32.xlu0 %v2900, 20
  %v2979 = vpop.permute.xlu0 %2978
  %2980 = vrot.lane.b32.xlu0 %v2901, 20
  %v2981 = vpop.permute.xlu0 %2980
  %2982 = vrot.lane.b32.xlu0 %v2902, 20
  %v2983 = vpop.permute.xlu0 %2982
  %2984 = vrot.lane.b32.xlu0 %v2903, 20
  %v2985 = vpop.permute.xlu0 %2984
  %2986 = vrot.lane.b32.xlu0 %v2904, 20
  %v2987 = vpop.permute.xlu0 %2986
  %2988 = vrot.lane.b32.xlu0 %v2905, 20
  %v2989 = vpop.permute.xlu0 %2988
  %2990 = vrot.lane.b32.xlu0 %v2906, 20
  %v2991 = vpop.permute.xlu0 %2990
  %2992 = vrot.lane.b32.xlu0 %v2907, 20
  %v2993 = vpop.permute.xlu0 %2992
  %2994 = vrot.lane.b32.xlu0 %v2908, 20
  %v2995 = vpop.permute.xlu0 %2994
  %2996 = vrot.lane.b32.xlu0 %v2909, 20
  %v2997 = vpop.permute.xlu0 %2996
  %2998 = vrot.lane.b32.xlu0 %v2910, 20
  %v2999 = vpop.permute.xlu0 %2998
  %3000 = vrot.lane.b32.xlu0 %v2911, 20
  %v3001 = vpop.permute.xlu0 %3000
  %3002 = vrot.lane.b32.xlu0 %v2912, 20
  %v3003 = vpop.permute.xlu0 %3002
  %3004 = vrot.lane.b32.xlu0 %v2913, 20
  %v3005 = vpop.permute.xlu0 %3004
  %3006 = vrot.lane.b32.xlu0 %v2914, 20
  %v3007 = vpop.permute.xlu0 %3006
  %3008 = vrot.lane.b32.xlu0 %v2915, 20
  %v3009 = vpop.permute.xlu0 %3008
  %3010 = vrot.lane.b32.xlu0 %v2916, 20
  %v3011 = vpop.permute.xlu0 %3010
  %3012 = vrot.lane.b32.xlu0 %v2917, 20
  %v3013 = vpop.permute.xlu0 %3012
  %3014 = vrot.lane.b32.xlu0 %v2918, 20
  %v3015 = vpop.permute.xlu0 %3014
  %3016 = vrot.lane.b32.xlu0 %v2919, 20
  %v3017 = vpop.permute.xlu0 %3016
  %3018 = vrot.lane.b32.xlu0 %v2920, 20
  %v3019 = vpop.permute.xlu0 %3018
  %3020 = vrot.lane.b32.xlu0 %v2921, 20
  %v3021 = vpop.permute.xlu0 %3020
  %3022 = vrot.lane.b32.xlu0 %v2922, 20
  %v3023 = vpop.permute.xlu0 %3022
  %3024 = vrot.lane.b32.xlu0 %v2923, 20
  %v3025 = vpop.permute.xlu0 %3024
  %3026 = vrot.lane.b32.xlu0 %v2924, 20
  %v3027 = vpop.permute.xlu0 %3026
  %3028 = vrot.lane.b32.xlu0 %v2925, 20
  %v3029 = vpop.permute.xlu0 %3028
  %3030 = vrot.lane.b32.xlu0 %v2926, 20
  %v3031 = vpop.permute.xlu0 %3030
  %3032 = vrot.lane.b32.xlu0 %v2927, 20
  %v3033 = vpop.permute.xlu0 %3032
  %3034 = vrot.lane.b32.xlu0 %v2928, 20
  %v3035 = vpop.permute.xlu0 %3034
  %3036 = vrot.lane.b32.xlu0 %v2929, 20
  %v3037 = vpop.permute.xlu0 %3036
  %3038 = vrot.lane.b32.xlu0 %v2930, 20
  %v3039 = vpop.permute.xlu0 %3038
  %3040 = vrot.lane.b32.xlu0 %v2931, 20
  %v3041 = vpop.permute.xlu0 %3040
  %3042 = vrot.lane.b32.xlu0 %v2932, 20
  %v3043 = vpop.permute.xlu0 %3042
  %3044 = vrot.lane.b32.xlu0 %v2933, 20
  %v3045 = vpop.permute.xlu0 %3044
  %3046 = vrot.lane.b32.xlu0 %v2934, 20
  %v3047 = vpop.permute.xlu0 %3046
  %3048 = vrot.lane.b32.xlu0 %v2935, 20
  %v3049 = vpop.permute.xlu0 %3048
  %3050 = vrot.lane.b32.xlu0 %v2936, 20
  %v3051 = vpop.permute.xlu0 %3050
  %3052 = vrot.lane.b32.xlu0 %v2937, 20
  %v3053 = vpop.permute.xlu0 %3052
  %3054 = vrot.lane.b32.xlu0 %v2938, 20
  %v3055 = vpop.permute.xlu0 %3054
  %3056 = vrot.lane.b32.xlu0 %v2939, 20
  %v3057 = vpop.permute.xlu0 %3056
  %3058 = vrot.lane.b32.xlu0 %v2940, 20
  %v3059 = vpop.permute.xlu0 %3058
  %3060 = vrot.lane.b32.xlu0 %v2941, 20
  %v3061 = vpop.permute.xlu0 %3060
  %3062 = vrot.lane.b32.xlu0 %v2942, 20
  %v3063 = vpop.permute.xlu0 %3062
  %3064 = vrot.lane.b32.xlu0 %v2943, 20
  %v3065 = vpop.permute.xlu0 %3064
  %3066 = vrot.lane.b32.xlu0 %v2944, 20
  %v3067 = vpop.permute.xlu0 %3066
  %3068 = vrot.lane.b32.xlu0 %v2945, 20
  %v3069 = vpop.permute.xlu0 %3068
  %3070 = vrot.lane.b32.xlu0 %v2946, 20
  %v3071 = vpop.permute.xlu0 %3070
  %3072 = vrot.lane.b32.xlu0 %v2947, 20
  %v3073 = vpop.permute.xlu0 %3072
  %3074 = vrot.lane.b32.xlu0 %v2948, 20
  %v3075 = vpop.permute.xlu0 %3074
  %3076 = vrot.lane.b32.xlu0 %v2949, 20
  %v3077 = vpop.permute.xlu0 %3076
  %vm3142 = vcmask 191648
  %3143 = vst.msk [vmem:[#allocation3] sm:$0xf] %vm3142, %v2951
  %3144 = vst.msk [vmem:[#allocation3 + $0x4] sm:$0xf] %vm3142, %v2953
  %3145 = vst.msk [vmem:[#allocation3 + $0x8] sm:$0xf] %vm3142, %v2955
  %3146 = vst.msk [vmem:[#allocation3 + $0xc] sm:$0xf] %vm3142, %v2957
  %3147 = vst.msk [vmem:[#allocation3 + $0x10] sm:$0xf] %vm3142, %v2959
  %3148 = vst.msk [vmem:[#allocation3 + $0x14] sm:$0xf] %vm3142, %v2961
  %3149 = vst.msk [vmem:[#allocation3 + $0x18] sm:$0xf] %vm3142, %v2963
  %3150 = vst.msk [vmem:[#allocation3 + $0x1c] sm:$0xf] %vm3142, %v2965
  %3151 = vst.msk [vmem:[#allocation3 + $0x20] sm:$0xf] %vm3142, %v2967
  %3152 = vst.msk [vmem:[#allocation3 + $0x24] sm:$0xf] %vm3142, %v2969
  %3153 = vst.msk [vmem:[#allocation3 + $0x28] sm:$0xf] %vm3142, %v2971
  %3154 = vst.msk [vmem:[#allocation3 + $0x2c] sm:$0xf] %vm3142, %v2973
  %3155 = vst.msk [vmem:[#allocation3 + $0x30] sm:$0xf] %vm3142, %v2975
  %3156 = vst.msk [vmem:[#allocation3 + $0x34] sm:$0xf] %vm3142, %v2977
  %3157 = vst.msk [vmem:[#allocation3 + $0x38] sm:$0xf] %vm3142, %v2979
  %3158 = vst.msk [vmem:[#allocation3 + $0x3c] sm:$0xf] %vm3142, %v2981
  %3159 = vst.msk [vmem:[#allocation3 + $0x40] sm:$0xf] %vm3142, %v2983
  %3160 = vst.msk [vmem:[#allocation3 + $0x44] sm:$0xf] %vm3142, %v2985
  %3161 = vst.msk [vmem:[#allocation3 + $0x48] sm:$0xf] %vm3142, %v2987
  %3162 = vst.msk [vmem:[#allocation3 + $0x4c] sm:$0xf] %vm3142, %v2989
  %3163 = vst.msk [vmem:[#allocation3 + $0x50] sm:$0xf] %vm3142, %v2991
  %3164 = vst.msk [vmem:[#allocation3 + $0x54] sm:$0xf] %vm3142, %v2993
  %3165 = vst.msk [vmem:[#allocation3 + $0x58] sm:$0xf] %vm3142, %v2995
  %3166 = vst.msk [vmem:[#allocation3 + $0x5c] sm:$0xf] %vm3142, %v2997
  %3167 = vst.msk [vmem:[#allocation3 + $0x60] sm:$0xf] %vm3142, %v2999
  %3168 = vst.msk [vmem:[#allocation3 + $0x64] sm:$0xf] %vm3142, %v3001
  %3169 = vst.msk [vmem:[#allocation3 + $0x68] sm:$0xf] %vm3142, %v3003
  %3170 = vst.msk [vmem:[#allocation3 + $0x6c] sm:$0xf] %vm3142, %v3005
  %3171 = vst.msk [vmem:[#allocation3 + $0x70] sm:$0xf] %vm3142, %v3007
  %3172 = vst.msk [vmem:[#allocation3 + $0x74] sm:$0xf] %vm3142, %v3009
  %3173 = vst.msk [vmem:[#allocation3 + $0x78] sm:$0xf] %vm3142, %v3011
  %3174 = vst.msk [vmem:[#allocation3 + $0x7c] sm:$0xf] %vm3142, %v3013
  %3175 = vst.msk [vmem:[#allocation3 + $0x80] sm:$0xf] %vm3142, %v3015
  %3176 = vst.msk [vmem:[#allocation3 + $0x84] sm:$0xf] %vm3142, %v3017
  %3177 = vst.msk [vmem:[#allocation3 + $0x88] sm:$0xf] %vm3142, %v3019
  %3178 = vst.msk [vmem:[#allocation3 + $0x8c] sm:$0xf] %vm3142, %v3021
  %3179 = vst.msk [vmem:[#allocation3 + $0x90] sm:$0xf] %vm3142, %v3023
  %3180 = vst.msk [vmem:[#allocation3 + $0x94] sm:$0xf] %vm3142, %v3025
  %3181 = vst.msk [vmem:[#allocation3 + $0x98] sm:$0xf] %vm3142, %v3027
  %3182 = vst.msk [vmem:[#allocation3 + $0x9c] sm:$0xf] %vm3142, %v3029
  %3183 = vst.msk [vmem:[#allocation3 + $0xa0] sm:$0xf] %vm3142, %v3031
  %3184 = vst.msk [vmem:[#allocation3 + $0xa4] sm:$0xf] %vm3142, %v3033
  %3185 = vst.msk [vmem:[#allocation3 + $0xa8] sm:$0xf] %vm3142, %v3035
  %3186 = vst.msk [vmem:[#allocation3 + $0xac] sm:$0xf] %vm3142, %v3037
  %3187 = vst.msk [vmem:[#allocation3 + $0xb0] sm:$0xf] %vm3142, %v3039
  %3188 = vst.msk [vmem:[#allocation3 + $0xb4] sm:$0xf] %vm3142, %v3041
  %3189 = vst.msk [vmem:[#allocation3 + $0xb8] sm:$0xf] %vm3142, %v3043
  %3190 = vst.msk [vmem:[#allocation3 + $0xbc] sm:$0xf] %vm3142, %v3045
  %3191 = vst.msk [vmem:[#allocation3 + $0xc0] sm:$0xf] %vm3142, %v3047
  %3192 = vst.msk [vmem:[#allocation3 + $0xc4] sm:$0xf] %vm3142, %v3049
  %3193 = vst.msk [vmem:[#allocation3 + $0xc8] sm:$0xf] %vm3142, %v3051
  %3194 = vst.msk [vmem:[#allocation3 + $0xcc] sm:$0xf] %vm3142, %v3053
  %3195 = vst.msk [vmem:[#allocation3 + $0xd0] sm:$0xf] %vm3142, %v3055
  %3196 = vst.msk [vmem:[#allocation3 + $0xd4] sm:$0xf] %vm3142, %v3057
  %3197 = vst.msk [vmem:[#allocation3 + $0xd8] sm:$0xf] %vm3142, %v3059
  %3198 = vst.msk [vmem:[#allocation3 + $0xdc] sm:$0xf] %vm3142, %v3061
  %3199 = vst.msk [vmem:[#allocation3 + $0xe0] sm:$0xf] %vm3142, %v3063
  %3200 = vst.msk [vmem:[#allocation3 + $0xe4] sm:$0xf] %vm3142, %v3065
  %3201 = vst.msk [vmem:[#allocation3 + $0xe8] sm:$0xf] %vm3142, %v3067
  %3202 = vst.msk [vmem:[#allocation3 + $0xec] sm:$0xf] %vm3142, %v3069
  %3203 = vst.msk [vmem:[#allocation3 + $0xf0] sm:$0xf] %vm3142, %v3071
  %3204 = vst.msk [vmem:[#allocation3 + $0xf4] sm:$0xf] %vm3142, %v3073
  %3205 = vst.msk [vmem:[#allocation3 + $0xf8] sm:$0xf] %vm3142, %v3075
  %3206 = vst.msk [vmem:[#allocation3 + $0xfc] sm:$0xf] %vm3142, %v3077
  %s3207 = scalar_lea.vmem [#allocation2], 48
  %v3208 = vld [vmem:[%s3207] sm:$0xff]
  %v3209 = vld [vmem:[%s3207 + $0x8] sm:$0xff]
  %v3210 = vld [vmem:[%s3207 + $0x18] sm:$0xff]
  %v3211 = vld [vmem:[%s3207 + $0x20] sm:$0xff]
  %v3212 = vld [vmem:[%s3207 + $0x30] sm:$0xff]
  %v3213 = vld [vmem:[%s3207 + $0x38] sm:$0xff]
  %v3214 = vld [vmem:[%s3207 + $0x48] sm:$0xff]
  %v3215 = vld [vmem:[%s3207 + $0x50] sm:$0xff]
  %v3216 = vld [vmem:[%s3207 + $0x60] sm:$0xff]
  %v3217 = vld [vmem:[%s3207 + $0x68] sm:$0xff]
  %v3218 = vld [vmem:[%s3207 + $0x78] sm:$0xff]
  %v3219 = vld [vmem:[%s3207 + $0x80] sm:$0xff]
  %v3220 = vld [vmem:[%s3207 + $0x90] sm:$0xff]
  %v3221 = vld [vmem:[%s3207 + $0x98] sm:$0xff]
  %v3222 = vld [vmem:[%s3207 + $0xa8] sm:$0xff]
  %v3223 = vld [vmem:[%s3207 + $0xb0] sm:$0xff]
  %v3224 = vld [vmem:[%s3207 + $0xc0] sm:$0xff]
  %v3225 = vld [vmem:[%s3207 + $0xc8] sm:$0xff]
  %v3226 = vld [vmem:[%s3207 + $0xd8] sm:$0xff]
  %v3227 = vld [vmem:[%s3207 + $0xe0] sm:$0xff]
  %v3228 = vld [vmem:[%s3207 + $0xf0] sm:$0xff]
  %v3229 = vld [vmem:[%s3207 + $0xf8] sm:$0xff]
  %v3230 = vld [vmem:[%s3207 + $0x108] sm:$0xff]
  %v3231 = vld [vmem:[%s3207 + $0x110] sm:$0xff]
  %v3232 = vld [vmem:[%s3207 + $0x120] sm:$0xff]
  %v3233 = vld [vmem:[%s3207 + $0x128] sm:$0xff]
  %v3234 = vld [vmem:[%s3207 + $0x138] sm:$0xff]
  %v3235 = vld [vmem:[%s3207 + $0x140] sm:$0xff]
  %v3236 = vld [vmem:[%s3207 + $0x150] sm:$0xff]
  %v3237 = vld [vmem:[%s3207 + $0x158] sm:$0xff]
  %v3238 = vld [vmem:[%s3207 + $0x168] sm:$0xff]
  %v3239 = vld [vmem:[%s3207 + $0x170] sm:$0xff]
  %v3240 = vld [vmem:[%s3207 + $0x1b0] sm:$0xff]
  %v3241 = vld [vmem:[%s3207 + $0x1b8] sm:$0xff]
  %v3242 = vld [vmem:[%s3207 + $0x1c8] sm:$0xff]
  %v3243 = vld [vmem:[%s3207 + $0x1d0] sm:$0xff]
  %v3244 = vld [vmem:[%s3207 + $0x1e0] sm:$0xff]
  %v3245 = vld [vmem:[%s3207 + $0x1e8] sm:$0xff]
  %v3246 = vld [vmem:[%s3207 + $0x1f8] sm:$0xff]
  %v3247 = vld [vmem:[%s3207 + $0x200] sm:$0xff]
  %v3248 = vld [vmem:[%s3207 + $0x210] sm:$0xff]
  %v3249 = vld [vmem:[%s3207 + $0x218] sm:$0xff]
  %v3250 = vld [vmem:[%s3207 + $0x228] sm:$0xff]
  %v3251 = vld [vmem:[%s3207 + $0x230] sm:$0xff]
  %v3252 = vld [vmem:[%s3207 + $0x240] sm:$0xff]
  %v3253 = vld [vmem:[%s3207 + $0x248] sm:$0xff]
  %v3254 = vld [vmem:[%s3207 + $0x258] sm:$0xff]
  %v3255 = vld [vmem:[%s3207 + $0x260] sm:$0xff]
  %v3256 = vld [vmem:[%s3207 + $0x270] sm:$0xff]
  %v3257 = vld [vmem:[%s3207 + $0x278] sm:$0xff]
  %v3258 = vld [vmem:[%s3207 + $0x288] sm:$0xff]
  %v3259 = vld [vmem:[%s3207 + $0x290] sm:$0xff]
  %v3260 = vld [vmem:[%s3207 + $0x2a0] sm:$0xff]
  %v3261 = vld [vmem:[%s3207 + $0x2a8] sm:$0xff]
  %v3262 = vld [vmem:[%s3207 + $0x2b8] sm:$0xff]
  %v3263 = vld [vmem:[%s3207 + $0x2c0] sm:$0xff]
  %v3264 = vld [vmem:[%s3207 + $0x2d0] sm:$0xff]
  %v3265 = vld [vmem:[%s3207 + $0x2d8] sm:$0xff]
  %v3266 = vld [vmem:[%s3207 + $0x2e8] sm:$0xff]
  %v3267 = vld [vmem:[%s3207 + $0x2f0] sm:$0xff]
  %v3268 = vld [vmem:[%s3207 + $0x300] sm:$0xff]
  %v3269 = vld [vmem:[%s3207 + $0x308] sm:$0xff]
  %v3270 = vld [vmem:[%s3207 + $0x318] sm:$0xff]
  %v3271 = vld [vmem:[%s3207 + $0x320] sm:$0xff]
  %v3272 = vpack.c.bf16 %v3209, %v3208
  %v3273 = vpack.c.bf16 %v3211, %v3210
  %v3274 = vpack.c.bf16 %v3213, %v3212
  %v3275 = vpack.c.bf16 %v3215, %v3214
  %v3276 = vpack.c.bf16 %v3217, %v3216
  %v3277 = vpack.c.bf16 %v3219, %v3218
  %v3278 = vpack.c.bf16 %v3221, %v3220
  %v3279 = vpack.c.bf16 %v3223, %v3222
  %v3280 = vpack.c.bf16 %v3225, %v3224
  %v3281 = vpack.c.bf16 %v3227, %v3226
  %v3282 = vpack.c.bf16 %v3229, %v3228
  %v3283 = vpack.c.bf16 %v3231, %v3230
  %v3284 = vpack.c.bf16 %v3233, %v3232
  %v3285 = vpack.c.bf16 %v3235, %v3234
  %v3286 = vpack.c.bf16 %v3237, %v3236
  %v3287 = vpack.c.bf16 %v3239, %v3238
  %v3288 = vpack.c.bf16 %v3241, %v3240
  %v3289 = vpack.c.bf16 %v3243, %v3242
  %v3290 = vpack.c.bf16 %v3245, %v3244
  %v3291 = vpack.c.bf16 %v3247, %v3246
  %v3292 = vpack.c.bf16 %v3249, %v3248
  %v3293 = vpack.c.bf16 %v3251, %v3250
  %v3294 = vpack.c.bf16 %v3253, %v3252
  %v3295 = vpack.c.bf16 %v3255, %v3254
  %v3296 = vpack.c.bf16 %v3257, %v3256
  %v3297 = vpack.c.bf16 %v3259, %v3258
  %v3298 = vpack.c.bf16 %v3261, %v3260
  %v3299 = vpack.c.bf16 %v3263, %v3262
  %v3300 = vpack.c.bf16 %v3265, %v3264
  %v3301 = vpack.c.bf16 %v3267, %v3266
  %v3302 = vpack.c.bf16 %v3269, %v3268
  %v3303 = vpack.c.bf16 %v3271, %v3270
  %v3336 = vunpack.c.l.b16 %v3272
  %v3337 = vunpack.c.h.b16 %v3272
  %v3338 = vunpack.c.l.b16 %v3273
  %v3339 = vunpack.c.h.b16 %v3273
  %v3340 = vunpack.c.l.b16 %v3274
  %v3341 = vunpack.c.h.b16 %v3274
  %v3342 = vunpack.c.l.b16 %v3275
  %v3343 = vunpack.c.h.b16 %v3275
  %v3344 = vunpack.c.l.b16 %v3276
  %v3345 = vunpack.c.h.b16 %v3276
  %v3346 = vunpack.c.l.b16 %v3277
  %v3347 = vunpack.c.h.b16 %v3277
  %v3348 = vunpack.c.l.b16 %v3278
  %v3349 = vunpack.c.h.b16 %v3278
  %v3350 = vunpack.c.l.b16 %v3279
  %v3351 = vunpack.c.h.b16 %v3279
  %v3352 = vunpack.c.l.b16 %v3280
  %v3353 = vunpack.c.h.b16 %v3280
  %v3354 = vunpack.c.l.b16 %v3281
  %v3355 = vunpack.c.h.b16 %v3281
  %v3356 = vunpack.c.l.b16 %v3282
  %v3357 = vunpack.c.h.b16 %v3282
  %v3358 = vunpack.c.l.b16 %v3283
  %v3359 = vunpack.c.h.b16 %v3283
  %v3360 = vunpack.c.l.b16 %v3284
  %v3361 = vunpack.c.h.b16 %v3284
  %v3362 = vunpack.c.l.b16 %v3285
  %v3363 = vunpack.c.h.b16 %v3285
  %v3364 = vunpack.c.l.b16 %v3286
  %v3365 = vunpack.c.h.b16 %v3286
  %v3366 = vunpack.c.l.b16 %v3287
  %v3367 = vunpack.c.h.b16 %v3287
  %v3368 = vunpack.c.l.b16 %v3288
  %v3369 = vunpack.c.h.b16 %v3288
  %v3370 = vunpack.c.l.b16 %v3289
  %v3371 = vunpack.c.h.b16 %v3289
  %v3372 = vunpack.c.l.b16 %v3290
  %v3373 = vunpack.c.h.b16 %v3290
  %v3374 = vunpack.c.l.b16 %v3291
  %v3375 = vunpack.c.h.b16 %v3291
  %v3376 = vunpack.c.l.b16 %v3292
  %v3377 = vunpack.c.h.b16 %v3292
  %v3378 = vunpack.c.l.b16 %v3293
  %v3379 = vunpack.c.h.b16 %v3293
  %v3380 = vunpack.c.l.b16 %v3294
  %v3381 = vunpack.c.h.b16 %v3294
  %v3382 = vunpack.c.l.b16 %v3295
  %v3383 = vunpack.c.h.b16 %v3295
  %v3384 = vunpack.c.l.b16 %v3296
  %v3385 = vunpack.c.h.b16 %v3296
  %v3386 = vunpack.c.l.b16 %v3297
  %v3387 = vunpack.c.h.b16 %v3297
  %v3388 = vunpack.c.l.b16 %v3298
  %v3389 = vunpack.c.h.b16 %v3298
  %v3390 = vunpack.c.l.b16 %v3299
  %v3391 = vunpack.c.h.b16 %v3299
  %v3392 = vunpack.c.l.b16 %v3300
  %v3393 = vunpack.c.h.b16 %v3300
  %v3394 = vunpack.c.l.b16 %v3301
  %v3395 = vunpack.c.h.b16 %v3301
  %v3396 = vunpack.c.l.b16 %v3302
  %v3397 = vunpack.c.h.b16 %v3302
  %v3398 = vunpack.c.l.b16 %v3303
  %v3399 = vunpack.c.h.b16 %v3303
  %v3400 = vpack.c.b16 %v3336, %v3336
  %v3401 = vpack.c.b16 %v3337, %v3337
  %v3402 = vpack.c.b16 %v3338, %v3338
  %v3403 = vpack.c.b16 %v3339, %v3339
  %v3404 = vpack.c.b16 %v3340, %v3340
  %v3405 = vpack.c.b16 %v3341, %v3341
  %v3406 = vpack.c.b16 %v3342, %v3342
  %v3407 = vpack.c.b16 %v3343, %v3343
  %v3408 = vpack.c.b16 %v3344, %v3344
  %v3409 = vpack.c.b16 %v3345, %v3345
  %v3410 = vpack.c.b16 %v3346, %v3346
  %v3411 = vpack.c.b16 %v3347, %v3347
  %v3412 = vpack.c.b16 %v3348, %v3348
  %v3413 = vpack.c.b16 %v3349, %v3349
  %v3414 = vpack.c.b16 %v3350, %v3350
  %v3415 = vpack.c.b16 %v3351, %v3351
  %v3416 = vpack.c.b16 %v3352, %v3352
  %v3417 = vpack.c.b16 %v3353, %v3353
  %v3418 = vpack.c.b16 %v3354, %v3354
  %v3419 = vpack.c.b16 %v3355, %v3355
  %v3420 = vpack.c.b16 %v3356, %v3356
  %v3421 = vpack.c.b16 %v3357, %v3357
  %v3422 = vpack.c.b16 %v3358, %v3358
  %v3423 = vpack.c.b16 %v3359, %v3359
  %v3424 = vpack.c.b16 %v3360, %v3360
  %v3425 = vpack.c.b16 %v3361, %v3361
  %v3426 = vpack.c.b16 %v3362, %v3362
  %v3427 = vpack.c.b16 %v3363, %v3363
  %v3428 = vpack.c.b16 %v3364, %v3364
  %v3429 = vpack.c.b16 %v3365, %v3365
  %v3430 = vpack.c.b16 %v3366, %v3366
  %v3431 = vpack.c.b16 %v3367, %v3367
  %v3432 = vpack.c.b16 %v3368, %v3368
  %v3433 = vpack.c.b16 %v3369, %v3369
  %v3434 = vpack.c.b16 %v3370, %v3370
  %v3435 = vpack.c.b16 %v3371, %v3371
  %v3436 = vpack.c.b16 %v3372, %v3372
  %v3437 = vpack.c.b16 %v3373, %v3373
  %v3438 = vpack.c.b16 %v3374, %v3374
  %v3439 = vpack.c.b16 %v3375, %v3375
  %v3440 = vpack.c.b16 %v3376, %v3376
  %v3441 = vpack.c.b16 %v3377, %v3377
  %v3442 = vpack.c.b16 %v3378, %v3378
  %v3443 = vpack.c.b16 %v3379, %v3379
  %v3444 = vpack.c.b16 %v3380, %v3380
  %v3445 = vpack.c.b16 %v3381, %v3381
  %v3446 = vpack.c.b16 %v3382, %v3382
  %v3447 = vpack.c.b16 %v3383, %v3383
  %v3448 = vpack.c.b16 %v3384, %v3384
  %v3449 = vpack.c.b16 %v3385, %v3385
  %v3450 = vpack.c.b16 %v3386, %v3386
  %v3451 = vpack.c.b16 %v3387, %v3387
  %v3452 = vpack.c.b16 %v3388, %v3388
  %v3453 = vpack.c.b16 %v3389, %v3389
  %v3454 = vpack.c.b16 %v3390, %v3390
  %v3455 = vpack.c.b16 %v3391, %v3391
  %v3456 = vpack.c.b16 %v3392, %v3392
  %v3457 = vpack.c.b16 %v3393, %v3393
  %v3458 = vpack.c.b16 %v3394, %v3394
  %v3459 = vpack.c.b16 %v3395, %v3395
  %v3460 = vpack.c.b16 %v3396, %v3396
  %v3461 = vpack.c.b16 %v3397, %v3397
  %v3462 = vpack.c.b16 %v3398, %v3398
  %v3463 = vpack.c.b16 %v3399, %v3399
  %3464 = vrot.lane.b32.xlu0 %v3400, 24
  %v3465 = vpop.permute.xlu0 %3464
  %3466 = vrot.lane.b32.xlu0 %v3401, 24
  %v3467 = vpop.permute.xlu0 %3466
  %3468 = vrot.lane.b32.xlu0 %v3402, 24
  %v3469 = vpop.permute.xlu0 %3468
  %3470 = vrot.lane.b32.xlu0 %v3403, 24
  %v3471 = vpop.permute.xlu0 %3470
  %3472 = vrot.lane.b32.xlu0 %v3404, 24
  %v3473 = vpop.permute.xlu0 %3472
  %3474 = vrot.lane.b32.xlu0 %v3405, 24
  %v3475 = vpop.permute.xlu0 %3474
  %3476 = vrot.lane.b32.xlu0 %v3406, 24
  %v3477 = vpop.permute.xlu0 %3476
  %3478 = vrot.lane.b32.xlu0 %v3407, 24
  %v3479 = vpop.permute.xlu0 %3478
  %3480 = vrot.lane.b32.xlu0 %v3408, 24
  %v3481 = vpop.permute.xlu0 %3480
  %3482 = vrot.lane.b32.xlu0 %v3409, 24
  %v3483 = vpop.permute.xlu0 %3482
  %3484 = vrot.lane.b32.xlu0 %v3410, 24
  %v3485 = vpop.permute.xlu0 %3484
  %3486 = vrot.lane.b32.xlu0 %v3411, 24
  %v3487 = vpop.permute.xlu0 %3486
  %3488 = vrot.lane.b32.xlu0 %v3412, 24
  %v3489 = vpop.permute.xlu0 %3488
  %3490 = vrot.lane.b32.xlu0 %v3413, 24
  %v3491 = vpop.permute.xlu0 %3490
  %3492 = vrot.lane.b32.xlu0 %v3414, 24
  %v3493 = vpop.permute.xlu0 %3492
  %3494 = vrot.lane.b32.xlu0 %v3415, 24
  %v3495 = vpop.permute.xlu0 %3494
  %3496 = vrot.lane.b32.xlu0 %v3416, 24
  %v3497 = vpop.permute.xlu0 %3496
  %3498 = vrot.lane.b32.xlu0 %v3417, 24
  %v3499 = vpop.permute.xlu0 %3498
  %3500 = vrot.lane.b32.xlu0 %v3418, 24
  %v3501 = vpop.permute.xlu0 %3500
  %3502 = vrot.lane.b32.xlu0 %v3419, 24
  %v3503 = vpop.permute.xlu0 %3502
  %3504 = vrot.lane.b32.xlu0 %v3420, 24
  %v3505 = vpop.permute.xlu0 %3504
  %3506 = vrot.lane.b32.xlu0 %v3421, 24
  %v3507 = vpop.permute.xlu0 %3506
  %3508 = vrot.lane.b32.xlu0 %v3422, 24
  %v3509 = vpop.permute.xlu0 %3508
  %3510 = vrot.lane.b32.xlu0 %v3423, 24
  %v3511 = vpop.permute.xlu0 %3510
  %3512 = vrot.lane.b32.xlu0 %v3424, 24
  %v3513 = vpop.permute.xlu0 %3512
  %3514 = vrot.lane.b32.xlu0 %v3425, 24
  %v3515 = vpop.permute.xlu0 %3514
  %3516 = vrot.lane.b32.xlu0 %v3426, 24
  %v3517 = vpop.permute.xlu0 %3516
  %3518 = vrot.lane.b32.xlu0 %v3427, 24
  %v3519 = vpop.permute.xlu0 %3518
  %3520 = vrot.lane.b32.xlu0 %v3428, 24
  %v3521 = vpop.permute.xlu0 %3520
  %3522 = vrot.lane.b32.xlu0 %v3429, 24
  %v3523 = vpop.permute.xlu0 %3522
  %3524 = vrot.lane.b32.xlu0 %v3430, 24
  %v3525 = vpop.permute.xlu0 %3524
  %3526 = vrot.lane.b32.xlu0 %v3431, 24
  %v3527 = vpop.permute.xlu0 %3526
  %3528 = vrot.lane.b32.xlu0 %v3432, 24
  %v3529 = vpop.permute.xlu0 %3528
  %3530 = vrot.lane.b32.xlu0 %v3433, 24
  %v3531 = vpop.permute.xlu0 %3530
  %3532 = vrot.lane.b32.xlu0 %v3434, 24
  %v3533 = vpop.permute.xlu0 %3532
  %3534 = vrot.lane.b32.xlu0 %v3435, 24
  %v3535 = vpop.permute.xlu0 %3534
  %3536 = vrot.lane.b32.xlu0 %v3436, 24
  %v3537 = vpop.permute.xlu0 %3536
  %3538 = vrot.lane.b32.xlu0 %v3437, 24
  %v3539 = vpop.permute.xlu0 %3538
  %3540 = vrot.lane.b32.xlu0 %v3438, 24
  %v3541 = vpop.permute.xlu0 %3540
  %3542 = vrot.lane.b32.xlu0 %v3439, 24
  %v3543 = vpop.permute.xlu0 %3542
  %3544 = vrot.lane.b32.xlu0 %v3440, 24
  %v3545 = vpop.permute.xlu0 %3544
  %3546 = vrot.lane.b32.xlu0 %v3441, 24
  %v3547 = vpop.permute.xlu0 %3546
  %3548 = vrot.lane.b32.xlu0 %v3442, 24
  %v3549 = vpop.permute.xlu0 %3548
  %3550 = vrot.lane.b32.xlu0 %v3443, 24
  %v3551 = vpop.permute.xlu0 %3550
  %3552 = vrot.lane.b32.xlu0 %v3444, 24
  %v3553 = vpop.permute.xlu0 %3552
  %3554 = vrot.lane.b32.xlu0 %v3445, 24
  %v3555 = vpop.permute.xlu0 %3554
  %3556 = vrot.lane.b32.xlu0 %v3446, 24
  %v3557 = vpop.permute.xlu0 %3556
  %3558 = vrot.lane.b32.xlu0 %v3447, 24
  %v3559 = vpop.permute.xlu0 %3558
  %3560 = vrot.lane.b32.xlu0 %v3448, 24
  %v3561 = vpop.permute.xlu0 %3560
  %3562 = vrot.lane.b32.xlu0 %v3449, 24
  %v3563 = vpop.permute.xlu0 %3562
  %3564 = vrot.lane.b32.xlu0 %v3450, 24
  %v3565 = vpop.permute.xlu0 %3564
  %3566 = vrot.lane.b32.xlu0 %v3451, 24
  %v3567 = vpop.permute.xlu0 %3566
  %3568 = vrot.lane.b32.xlu0 %v3452, 24
  %v3569 = vpop.permute.xlu0 %3568
  %3570 = vrot.lane.b32.xlu0 %v3453, 24
  %v3571 = vpop.permute.xlu0 %3570
  %3572 = vrot.lane.b32.xlu0 %v3454, 24
  %v3573 = vpop.permute.xlu0 %3572
  %3574 = vrot.lane.b32.xlu0 %v3455, 24
  %v3575 = vpop.permute.xlu0 %3574
  %3576 = vrot.lane.b32.xlu0 %v3456, 24
  %v3577 = vpop.permute.xlu0 %3576
  %3578 = vrot.lane.b32.xlu0 %v3457, 24
  %v3579 = vpop.permute.xlu0 %3578
  %3580 = vrot.lane.b32.xlu0 %v3458, 24
  %v3581 = vpop.permute.xlu0 %3580
  %3582 = vrot.lane.b32.xlu0 %v3459, 24
  %v3583 = vpop.permute.xlu0 %3582
  %3584 = vrot.lane.b32.xlu0 %v3460, 24
  %v3585 = vpop.permute.xlu0 %3584
  %3586 = vrot.lane.b32.xlu0 %v3461, 24
  %v3587 = vpop.permute.xlu0 %3586
  %3588 = vrot.lane.b32.xlu0 %v3462, 24
  %v3589 = vpop.permute.xlu0 %3588
  %3590 = vrot.lane.b32.xlu0 %v3463, 24
  %v3591 = vpop.permute.xlu0 %3590
  %vm3656 = vcmask 224448
  %3657 = vst.msk [vmem:[#allocation3] sm:$0xf] %vm3656, %v3465
  %3658 = vst.msk [vmem:[#allocation3 + $0x4] sm:$0xf] %vm3656, %v3467
  %3659 = vst.msk [vmem:[#allocation3 + $0x8] sm:$0xf] %vm3656, %v3469
  %3660 = vst.msk [vmem:[#allocation3 + $0xc] sm:$0xf] %vm3656, %v3471
  %3661 = vst.msk [vmem:[#allocation3 + $0x10] sm:$0xf] %vm3656, %v3473
  %3662 = vst.msk [vmem:[#allocation3 + $0x14] sm:$0xf] %vm3656, %v3475
  %3663 = vst.msk [vmem:[#allocation3 + $0x18] sm:$0xf] %vm3656, %v3477
  %3664 = vst.msk [vmem:[#allocation3 + $0x1c] sm:$0xf] %vm3656, %v3479
  %3665 = vst.msk [vmem:[#allocation3 + $0x20] sm:$0xf] %vm3656, %v3481
  %3666 = vst.msk [vmem:[#allocation3 + $0x24] sm:$0xf] %vm3656, %v3483
  %3667 = vst.msk [vmem:[#allocation3 + $0x28] sm:$0xf] %vm3656, %v3485
  %3668 = vst.msk [vmem:[#allocation3 + $0x2c] sm:$0xf] %vm3656, %v3487
  %3669 = vst.msk [vmem:[#allocation3 + $0x30] sm:$0xf] %vm3656, %v3489
  %3670 = vst.msk [vmem:[#allocation3 + $0x34] sm:$0xf] %vm3656, %v3491
  %3671 = vst.msk [vmem:[#allocation3 + $0x38] sm:$0xf] %vm3656, %v3493
  %3672 = vst.msk [vmem:[#allocation3 + $0x3c] sm:$0xf] %vm3656, %v3495
  %3673 = vst.msk [vmem:[#allocation3 + $0x40] sm:$0xf] %vm3656, %v3497
  %3674 = vst.msk [vmem:[#allocation3 + $0x44] sm:$0xf] %vm3656, %v3499
  %3675 = vst.msk [vmem:[#allocation3 + $0x48] sm:$0xf] %vm3656, %v3501
  %3676 = vst.msk [vmem:[#allocation3 + $0x4c] sm:$0xf] %vm3656, %v3503
  %3677 = vst.msk [vmem:[#allocation3 + $0x50] sm:$0xf] %vm3656, %v3505
  %3678 = vst.msk [vmem:[#allocation3 + $0x54] sm:$0xf] %vm3656, %v3507
  %3679 = vst.msk [vmem:[#allocation3 + $0x58] sm:$0xf] %vm3656, %v3509
  %3680 = vst.msk [vmem:[#allocation3 + $0x5c] sm:$0xf] %vm3656, %v3511
  %3681 = vst.msk [vmem:[#allocation3 + $0x60] sm:$0xf] %vm3656, %v3513
  %3682 = vst.msk [vmem:[#allocation3 + $0x64] sm:$0xf] %vm3656, %v3515
  %3683 = vst.msk [vmem:[#allocation3 + $0x68] sm:$0xf] %vm3656, %v3517
  %3684 = vst.msk [vmem:[#allocation3 + $0x6c] sm:$0xf] %vm3656, %v3519
  %3685 = vst.msk [vmem:[#allocation3 + $0x70] sm:$0xf] %vm3656, %v3521
  %3686 = vst.msk [vmem:[#allocation3 + $0x74] sm:$0xf] %vm3656, %v3523
  %3687 = vst.msk [vmem:[#allocation3 + $0x78] sm:$0xf] %vm3656, %v3525
  %3688 = vst.msk [vmem:[#allocation3 + $0x7c] sm:$0xf] %vm3656, %v3527
  %3689 = vst.msk [vmem:[#allocation3 + $0x80] sm:$0xf] %vm3656, %v3529
  %3690 = vst.msk [vmem:[#allocation3 + $0x84] sm:$0xf] %vm3656, %v3531
  %3691 = vst.msk [vmem:[#allocation3 + $0x88] sm:$0xf] %vm3656, %v3533
  %3692 = vst.msk [vmem:[#allocation3 + $0x8c] sm:$0xf] %vm3656, %v3535
  %3693 = vst.msk [vmem:[#allocation3 + $0x90] sm:$0xf] %vm3656, %v3537
  %3694 = vst.msk [vmem:[#allocation3 + $0x94] sm:$0xf] %vm3656, %v3539
  %3695 = vst.msk [vmem:[#allocation3 + $0x98] sm:$0xf] %vm3656, %v3541
  %3696 = vst.msk [vmem:[#allocation3 + $0x9c] sm:$0xf] %vm3656, %v3543
  %3697 = vst.msk [vmem:[#allocation3 + $0xa0] sm:$0xf] %vm3656, %v3545
  %3698 = vst.msk [vmem:[#allocation3 + $0xa4] sm:$0xf] %vm3656, %v3547
  %3699 = vst.msk [vmem:[#allocation3 + $0xa8] sm:$0xf] %vm3656, %v3549
  %3700 = vst.msk [vmem:[#allocation3 + $0xac] sm:$0xf] %vm3656, %v3551
  %3701 = vst.msk [vmem:[#allocation3 + $0xb0] sm:$0xf] %vm3656, %v3553
  %3702 = vst.msk [vmem:[#allocation3 + $0xb4] sm:$0xf] %vm3656, %v3555
  %3703 = vst.msk [vmem:[#allocation3 + $0xb8] sm:$0xf] %vm3656, %v3557
  %3704 = vst.msk [vmem:[#allocation3 + $0xbc] sm:$0xf] %vm3656, %v3559
  %3705 = vst.msk [vmem:[#allocation3 + $0xc0] sm:$0xf] %vm3656, %v3561
  %3706 = vst.msk [vmem:[#allocation3 + $0xc4] sm:$0xf] %vm3656, %v3563
  %3707 = vst.msk [vmem:[#allocation3 + $0xc8] sm:$0xf] %vm3656, %v3565
  %3708 = vst.msk [vmem:[#allocation3 + $0xcc] sm:$0xf] %vm3656, %v3567
  %3709 = vst.msk [vmem:[#allocation3 + $0xd0] sm:$0xf] %vm3656, %v3569
  %3710 = vst.msk [vmem:[#allocation3 + $0xd4] sm:$0xf] %vm3656, %v3571
  %3711 = vst.msk [vmem:[#allocation3 + $0xd8] sm:$0xf] %vm3656, %v3573
  %3712 = vst.msk [vmem:[#allocation3 + $0xdc] sm:$0xf] %vm3656, %v3575
  %3713 = vst.msk [vmem:[#allocation3 + $0xe0] sm:$0xf] %vm3656, %v3577
  %3714 = vst.msk [vmem:[#allocation3 + $0xe4] sm:$0xf] %vm3656, %v3579
  %3715 = vst.msk [vmem:[#allocation3 + $0xe8] sm:$0xf] %vm3656, %v3581
  %3716 = vst.msk [vmem:[#allocation3 + $0xec] sm:$0xf] %vm3656, %v3583
  %3717 = vst.msk [vmem:[#allocation3 + $0xf0] sm:$0xf] %vm3656, %v3585
  %3718 = vst.msk [vmem:[#allocation3 + $0xf4] sm:$0xf] %vm3656, %v3587
  %3719 = vst.msk [vmem:[#allocation3 + $0xf8] sm:$0xf] %vm3656, %v3589
  %3720 = vst.msk [vmem:[#allocation3 + $0xfc] sm:$0xf] %vm3656, %v3591
  %v3721 = vld [vmem:[%s3207 + $0x1] sm:$0xff]
  %v3722 = vld [vmem:[%s3207 + $0x9] sm:$0xff]
  %v3723 = vld [vmem:[%s3207 + $0x19] sm:$0xff]
  %v3724 = vld [vmem:[%s3207 + $0x21] sm:$0xff]
  %v3725 = vld [vmem:[%s3207 + $0x31] sm:$0xff]
  %v3726 = vld [vmem:[%s3207 + $0x39] sm:$0xff]
  %v3727 = vld [vmem:[%s3207 + $0x49] sm:$0xff]
  %v3728 = vld [vmem:[%s3207 + $0x51] sm:$0xff]
  %v3729 = vld [vmem:[%s3207 + $0x61] sm:$0xff]
  %v3730 = vld [vmem:[%s3207 + $0x69] sm:$0xff]
  %v3731 = vld [vmem:[%s3207 + $0x79] sm:$0xff]
  %v3732 = vld [vmem:[%s3207 + $0x81] sm:$0xff]
  %v3733 = vld [vmem:[%s3207 + $0x91] sm:$0xff]
  %v3734 = vld [vmem:[%s3207 + $0x99] sm:$0xff]
  %v3735 = vld [vmem:[%s3207 + $0xa9] sm:$0xff]
  %v3736 = vld [vmem:[%s3207 + $0xb1] sm:$0xff]
  %v3737 = vld [vmem:[%s3207 + $0xc1] sm:$0xff]
  %v3738 = vld [vmem:[%s3207 + $0xc9] sm:$0xff]
  %v3739 = vld [vmem:[%s3207 + $0xd9] sm:$0xff]
  %v3740 = vld [vmem:[%s3207 + $0xe1] sm:$0xff]
  %v3741 = vld [vmem:[%s3207 + $0xf1] sm:$0xff]
  %v3742 = vld [vmem:[%s3207 + $0xf9] sm:$0xff]
  %v3743 = vld [vmem:[%s3207 + $0x109] sm:$0xff]
  %v3744 = vld [vmem:[%s3207 + $0x111] sm:$0xff]
  %v3745 = vld [vmem:[%s3207 + $0x121] sm:$0xff]
  %v3746 = vld [vmem:[%s3207 + $0x129] sm:$0xff]
  %v3747 = vld [vmem:[%s3207 + $0x139] sm:$0xff]
  %v3748 = vld [vmem:[%s3207 + $0x141] sm:$0xff]
  %v3749 = vld [vmem:[%s3207 + $0x151] sm:$0xff]
  %v3750 = vld [vmem:[%s3207 + $0x159] sm:$0xff]
  %v3751 = vld [vmem:[%s3207 + $0x169] sm:$0xff]
  %v3752 = vld [vmem:[%s3207 + $0x171] sm:$0xff]
  %v3753 = vld [vmem:[%s3207 + $0x1b1] sm:$0xff]
  %v3754 = vld [vmem:[%s3207 + $0x1b9] sm:$0xff]
  %v3755 = vld [vmem:[%s3207 + $0x1c9] sm:$0xff]
  %v3756 = vld [vmem:[%s3207 + $0x1d1] sm:$0xff]
  %v3757 = vld [vmem:[%s3207 + $0x1e1] sm:$0xff]
  %v3758 = vld [vmem:[%s3207 + $0x1e9] sm:$0xff]
  %v3759 = vld [vmem:[%s3207 + $0x1f9] sm:$0xff]
  %v3760 = vld [vmem:[%s3207 + $0x201] sm:$0xff]
  %v3761 = vld [vmem:[%s3207 + $0x211] sm:$0xff]
  %v3762 = vld [vmem:[%s3207 + $0x219] sm:$0xff]
  %v3763 = vld [vmem:[%s3207 + $0x229] sm:$0xff]
  %v3764 = vld [vmem:[%s3207 + $0x231] sm:$0xff]
  %v3765 = vld [vmem:[%s3207 + $0x241] sm:$0xff]
  %v3766 = vld [vmem:[%s3207 + $0x249] sm:$0xff]
  %v3767 = vld [vmem:[%s3207 + $0x259] sm:$0xff]
  %v3768 = vld [vmem:[%s3207 + $0x261] sm:$0xff]
  %v3769 = vld [vmem:[%s3207 + $0x271] sm:$0xff]
  %v3770 = vld [vmem:[%s3207 + $0x279] sm:$0xff]
  %v3771 = vld [vmem:[%s3207 + $0x289] sm:$0xff]
  %v3772 = vld [vmem:[%s3207 + $0x291] sm:$0xff]
  %v3773 = vld [vmem:[%s3207 + $0x2a1] sm:$0xff]
  %v3774 = vld [vmem:[%s3207 + $0x2a9] sm:$0xff]
  %v3775 = vld [vmem:[%s3207 + $0x2b9] sm:$0xff]
  %v3776 = vld [vmem:[%s3207 + $0x2c1] sm:$0xff]
  %v3777 = vld [vmem:[%s3207 + $0x2d1] sm:$0xff]
  %v3778 = vld [vmem:[%s3207 + $0x2d9] sm:$0xff]
  %v3779 = vld [vmem:[%s3207 + $0x2e9] sm:$0xff]
  %v3780 = vld [vmem:[%s3207 + $0x2f1] sm:$0xff]
  %v3781 = vld [vmem:[%s3207 + $0x301] sm:$0xff]
  %v3782 = vld [vmem:[%s3207 + $0x309] sm:$0xff]
  %v3783 = vld [vmem:[%s3207 + $0x319] sm:$0xff]
  %v3784 = vld [vmem:[%s3207 + $0x321] sm:$0xff]
  %v3785 = vpack.c.bf16 %v3722, %v3721
  %v3786 = vpack.c.bf16 %v3724, %v3723
  %v3787 = vpack.c.bf16 %v3726, %v3725
  %v3788 = vpack.c.bf16 %v3728, %v3727
  %v3789 = vpack.c.bf16 %v3730, %v3729
  %v3790 = vpack.c.bf16 %v3732, %v3731
  %v3791 = vpack.c.bf16 %v3734, %v3733
  %v3792 = vpack.c.bf16 %v3736, %v3735
  %v3793 = vpack.c.bf16 %v3738, %v3737
  %v3794 = vpack.c.bf16 %v3740, %v3739
  %v3795 = vpack.c.bf16 %v3742, %v3741
  %v3796 = vpack.c.bf16 %v3744, %v3743
  %v3797 = vpack.c.bf16 %v3746, %v3745
  %v3798 = vpack.c.bf16 %v3748, %v3747
  %v3799 = vpack.c.bf16 %v3750, %v3749
  %v3800 = vpack.c.bf16 %v3752, %v3751
  %v3801 = vpack.c.bf16 %v3754, %v3753
  %v3802 = vpack.c.bf16 %v3756, %v3755
  %v3803 = vpack.c.bf16 %v3758, %v3757
  %v3804 = vpack.c.bf16 %v3760, %v3759
  %v3805 = vpack.c.bf16 %v3762, %v3761
  %v3806 = vpack.c.bf16 %v3764, %v3763
  %v3807 = vpack.c.bf16 %v3766, %v3765
  %v3808 = vpack.c.bf16 %v3768, %v3767
  %v3809 = vpack.c.bf16 %v3770, %v3769
  %v3810 = vpack.c.bf16 %v3772, %v3771
  %v3811 = vpack.c.bf16 %v3774, %v3773
  %v3812 = vpack.c.bf16 %v3776, %v3775
  %v3813 = vpack.c.bf16 %v3778, %v3777
  %v3814 = vpack.c.bf16 %v3780, %v3779
  %v3815 = vpack.c.bf16 %v3782, %v3781
  %v3816 = vpack.c.bf16 %v3784, %v3783
  %v3849 = vunpack.c.l.b16 %v3785
  %v3850 = vunpack.c.h.b16 %v3785
  %v3851 = vunpack.c.l.b16 %v3786
  %v3852 = vunpack.c.h.b16 %v3786
  %v3853 = vunpack.c.l.b16 %v3787
  %v3854 = vunpack.c.h.b16 %v3787
  %v3855 = vunpack.c.l.b16 %v3788
  %v3856 = vunpack.c.h.b16 %v3788
  %v3857 = vunpack.c.l.b16 %v3789
  %v3858 = vunpack.c.h.b16 %v3789
  %v3859 = vunpack.c.l.b16 %v3790
  %v3860 = vunpack.c.h.b16 %v3790
  %v3861 = vunpack.c.l.b16 %v3791
  %v3862 = vunpack.c.h.b16 %v3791
  %v3863 = vunpack.c.l.b16 %v3792
  %v3864 = vunpack.c.h.b16 %v3792
  %v3865 = vunpack.c.l.b16 %v3793
  %v3866 = vunpack.c.h.b16 %v3793
  %v3867 = vunpack.c.l.b16 %v3794
  %v3868 = vunpack.c.h.b16 %v3794
  %v3869 = vunpack.c.l.b16 %v3795
  %v3870 = vunpack.c.h.b16 %v3795
  %v3871 = vunpack.c.l.b16 %v3796
  %v3872 = vunpack.c.h.b16 %v3796
  %v3873 = vunpack.c.l.b16 %v3797
  %v3874 = vunpack.c.h.b16 %v3797
  %v3875 = vunpack.c.l.b16 %v3798
  %v3876 = vunpack.c.h.b16 %v3798
  %v3877 = vunpack.c.l.b16 %v3799
  %v3878 = vunpack.c.h.b16 %v3799
  %v3879 = vunpack.c.l.b16 %v3800
  %v3880 = vunpack.c.h.b16 %v3800
  %v3881 = vunpack.c.l.b16 %v3801
  %v3882 = vunpack.c.h.b16 %v3801
  %v3883 = vunpack.c.l.b16 %v3802
  %v3884 = vunpack.c.h.b16 %v3802
  %v3885 = vunpack.c.l.b16 %v3803
  %v3886 = vunpack.c.h.b16 %v3803
  %v3887 = vunpack.c.l.b16 %v3804
  %v3888 = vunpack.c.h.b16 %v3804
  %v3889 = vunpack.c.l.b16 %v3805
  %v3890 = vunpack.c.h.b16 %v3805
  %v3891 = vunpack.c.l.b16 %v3806
  %v3892 = vunpack.c.h.b16 %v3806
  %v3893 = vunpack.c.l.b16 %v3807
  %v3894 = vunpack.c.h.b16 %v3807
  %v3895 = vunpack.c.l.b16 %v3808
  %v3896 = vunpack.c.h.b16 %v3808
  %v3897 = vunpack.c.l.b16 %v3809
  %v3898 = vunpack.c.h.b16 %v3809
  %v3899 = vunpack.c.l.b16 %v3810
  %v3900 = vunpack.c.h.b16 %v3810
  %v3901 = vunpack.c.l.b16 %v3811
  %v3902 = vunpack.c.h.b16 %v3811
  %v3903 = vunpack.c.l.b16 %v3812
  %v3904 = vunpack.c.h.b16 %v3812
  %v3905 = vunpack.c.l.b16 %v3813
  %v3906 = vunpack.c.h.b16 %v3813
  %v3907 = vunpack.c.l.b16 %v3814
  %v3908 = vunpack.c.h.b16 %v3814
  %v3909 = vunpack.c.l.b16 %v3815
  %v3910 = vunpack.c.h.b16 %v3815
  %v3911 = vunpack.c.l.b16 %v3816
  %v3912 = vunpack.c.h.b16 %v3816
  %v3913 = vpack.c.b16 %v3849, %v3849
  %v3914 = vpack.c.b16 %v3850, %v3850
  %v3915 = vpack.c.b16 %v3851, %v3851
  %v3916 = vpack.c.b16 %v3852, %v3852
  %v3917 = vpack.c.b16 %v3853, %v3853
  %v3918 = vpack.c.b16 %v3854, %v3854
  %v3919 = vpack.c.b16 %v3855, %v3855
  %v3920 = vpack.c.b16 %v3856, %v3856
  %v3921 = vpack.c.b16 %v3857, %v3857
  %v3922 = vpack.c.b16 %v3858, %v3858
  %v3923 = vpack.c.b16 %v3859, %v3859
  %v3924 = vpack.c.b16 %v3860, %v3860
  %v3925 = vpack.c.b16 %v3861, %v3861
  %v3926 = vpack.c.b16 %v3862, %v3862
  %v3927 = vpack.c.b16 %v3863, %v3863
  %v3928 = vpack.c.b16 %v3864, %v3864
  %v3929 = vpack.c.b16 %v3865, %v3865
  %v3930 = vpack.c.b16 %v3866, %v3866
  %v3931 = vpack.c.b16 %v3867, %v3867
  %v3932 = vpack.c.b16 %v3868, %v3868
  %v3933 = vpack.c.b16 %v3869, %v3869
  %v3934 = vpack.c.b16 %v3870, %v3870
  %v3935 = vpack.c.b16 %v3871, %v3871
  %v3936 = vpack.c.b16 %v3872, %v3872
  %v3937 = vpack.c.b16 %v3873, %v3873
  %v3938 = vpack.c.b16 %v3874, %v3874
  %v3939 = vpack.c.b16 %v3875, %v3875
  %v3940 = vpack.c.b16 %v3876, %v3876
  %v3941 = vpack.c.b16 %v3877, %v3877
  %v3942 = vpack.c.b16 %v3878, %v3878
  %v3943 = vpack.c.b16 %v3879, %v3879
  %v3944 = vpack.c.b16 %v3880, %v3880
  %v3945 = vpack.c.b16 %v3881, %v3881
  %v3946 = vpack.c.b16 %v3882, %v3882
  %v3947 = vpack.c.b16 %v3883, %v3883
  %v3948 = vpack.c.b16 %v3884, %v3884
  %v3949 = vpack.c.b16 %v3885, %v3885
  %v3950 = vpack.c.b16 %v3886, %v3886
  %v3951 = vpack.c.b16 %v3887, %v3887
  %v3952 = vpack.c.b16 %v3888, %v3888
  %v3953 = vpack.c.b16 %v3889, %v3889
  %v3954 = vpack.c.b16 %v3890, %v3890
  %v3955 = vpack.c.b16 %v3891, %v3891
  %v3956 = vpack.c.b16 %v3892, %v3892
  %v3957 = vpack.c.b16 %v3893, %v3893
  %v3958 = vpack.c.b16 %v3894, %v3894
  %v3959 = vpack.c.b16 %v3895, %v3895
  %v3960 = vpack.c.b16 %v3896, %v3896
  %v3961 = vpack.c.b16 %v3897, %v3897
  %v3962 = vpack.c.b16 %v3898, %v3898
  %v3963 = vpack.c.b16 %v3899, %v3899
  %v3964 = vpack.c.b16 %v3900, %v3900
  %v3965 = vpack.c.b16 %v3901, %v3901
  %v3966 = vpack.c.b16 %v3902, %v3902
  %v3967 = vpack.c.b16 %v3903, %v3903
  %v3968 = vpack.c.b16 %v3904, %v3904
  %v3969 = vpack.c.b16 %v3905, %v3905
  %v3970 = vpack.c.b16 %v3906, %v3906
  %v3971 = vpack.c.b16 %v3907, %v3907
  %v3972 = vpack.c.b16 %v3908, %v3908
  %v3973 = vpack.c.b16 %v3909, %v3909
  %v3974 = vpack.c.b16 %v3910, %v3910
  %v3975 = vpack.c.b16 %v3911, %v3911
  %v3976 = vpack.c.b16 %v3912, %v3912
  %3977 = vrot.lane.b32.xlu0 %v3913, 28
  %v3978 = vpop.permute.xlu0 %3977
  %3979 = vrot.lane.b32.xlu0 %v3914, 28
  %v3980 = vpop.permute.xlu0 %3979
  %3981 = vrot.lane.b32.xlu0 %v3915, 28
  %v3982 = vpop.permute.xlu0 %3981
  %3983 = vrot.lane.b32.xlu0 %v3916, 28
  %v3984 = vpop.permute.xlu0 %3983
  %3985 = vrot.lane.b32.xlu0 %v3917, 28
  %v3986 = vpop.permute.xlu0 %3985
  %3987 = vrot.lane.b32.xlu0 %v3918, 28
  %v3988 = vpop.permute.xlu0 %3987
  %3989 = vrot.lane.b32.xlu0 %v3919, 28
  %v3990 = vpop.permute.xlu0 %3989
  %3991 = vrot.lane.b32.xlu0 %v3920, 28
  %v3992 = vpop.permute.xlu0 %3991
  %3993 = vrot.lane.b32.xlu0 %v3921, 28
  %v3994 = vpop.permute.xlu0 %3993
  %3995 = vrot.lane.b32.xlu0 %v3922, 28
  %v3996 = vpop.permute.xlu0 %3995
  %3997 = vrot.lane.b32.xlu0 %v3923, 28
  %v3998 = vpop.permute.xlu0 %3997
  %3999 = vrot.lane.b32.xlu0 %v3924, 28
  %v4000 = vpop.permute.xlu0 %3999
  %4001 = vrot.lane.b32.xlu0 %v3925, 28
  %v4002 = vpop.permute.xlu0 %4001
  %4003 = vrot.lane.b32.xlu0 %v3926, 28
  %v4004 = vpop.permute.xlu0 %4003
  %4005 = vrot.lane.b32.xlu0 %v3927, 28
  %v4006 = vpop.permute.xlu0 %4005
  %4007 = vrot.lane.b32.xlu0 %v3928, 28
  %v4008 = vpop.permute.xlu0 %4007
  %4009 = vrot.lane.b32.xlu0 %v3929, 28
  %v4010 = vpop.permute.xlu0 %4009
  %4011 = vrot.lane.b32.xlu0 %v3930, 28
  %v4012 = vpop.permute.xlu0 %4011
  %4013 = vrot.lane.b32.xlu0 %v3931, 28
  %v4014 = vpop.permute.xlu0 %4013
  %4015 = vrot.lane.b32.xlu0 %v3932, 28
  %v4016 = vpop.permute.xlu0 %4015
  %4017 = vrot.lane.b32.xlu0 %v3933, 28
  %v4018 = vpop.permute.xlu0 %4017
  %4019 = vrot.lane.b32.xlu0 %v3934, 28
  %v4020 = vpop.permute.xlu0 %4019
  %4021 = vrot.lane.b32.xlu0 %v3935, 28
  %v4022 = vpop.permute.xlu0 %4021
  %4023 = vrot.lane.b32.xlu0 %v3936, 28
  %v4024 = vpop.permute.xlu0 %4023
  %4025 = vrot.lane.b32.xlu0 %v3937, 28
  %v4026 = vpop.permute.xlu0 %4025
  %4027 = vrot.lane.b32.xlu0 %v3938, 28
  %v4028 = vpop.permute.xlu0 %4027
  %4029 = vrot.lane.b32.xlu0 %v3939, 28
  %v4030 = vpop.permute.xlu0 %4029
  %4031 = vrot.lane.b32.xlu0 %v3940, 28
  %v4032 = vpop.permute.xlu0 %4031
  %4033 = vrot.lane.b32.xlu0 %v3941, 28
  %v4034 = vpop.permute.xlu0 %4033
  %4035 = vrot.lane.b32.xlu0 %v3942, 28
  %v4036 = vpop.permute.xlu0 %4035
  %4037 = vrot.lane.b32.xlu0 %v3943, 28
  %v4038 = vpop.permute.xlu0 %4037
  %4039 = vrot.lane.b32.xlu0 %v3944, 28
  %v4040 = vpop.permute.xlu0 %4039
  %4041 = vrot.lane.b32.xlu0 %v3945, 28
  %v4042 = vpop.permute.xlu0 %4041
  %4043 = vrot.lane.b32.xlu0 %v3946, 28
  %v4044 = vpop.permute.xlu0 %4043
  %4045 = vrot.lane.b32.xlu0 %v3947, 28
  %v4046 = vpop.permute.xlu0 %4045
  %4047 = vrot.lane.b32.xlu0 %v3948, 28
  %v4048 = vpop.permute.xlu0 %4047
  %4049 = vrot.lane.b32.xlu0 %v3949, 28
  %v4050 = vpop.permute.xlu0 %4049
  %4051 = vrot.lane.b32.xlu0 %v3950, 28
  %v4052 = vpop.permute.xlu0 %4051
  %4053 = vrot.lane.b32.xlu0 %v3951, 28
  %v4054 = vpop.permute.xlu0 %4053
  %4055 = vrot.lane.b32.xlu0 %v3952, 28
  %v4056 = vpop.permute.xlu0 %4055
  %4057 = vrot.lane.b32.xlu0 %v3953, 28
  %v4058 = vpop.permute.xlu0 %4057
  %4059 = vrot.lane.b32.xlu0 %v3954, 28
  %v4060 = vpop.permute.xlu0 %4059
  %4061 = vrot.lane.b32.xlu0 %v3955, 28
  %v4062 = vpop.permute.xlu0 %4061
  %4063 = vrot.lane.b32.xlu0 %v3956, 28
  %v4064 = vpop.permute.xlu0 %4063
  %4065 = vrot.lane.b32.xlu0 %v3957, 28
  %v4066 = vpop.permute.xlu0 %4065
  %4067 = vrot.lane.b32.xlu0 %v3958, 28
  %v4068 = vpop.permute.xlu0 %4067
  %4069 = vrot.lane.b32.xlu0 %v3959, 28
  %v4070 = vpop.permute.xlu0 %4069
  %4071 = vrot.lane.b32.xlu0 %v3960, 28
  %v4072 = vpop.permute.xlu0 %4071
  %4073 = vrot.lane.b32.xlu0 %v3961, 28
  %v4074 = vpop.permute.xlu0 %4073
  %4075 = vrot.lane.b32.xlu0 %v3962, 28
  %v4076 = vpop.permute.xlu0 %4075
  %4077 = vrot.lane.b32.xlu0 %v3963, 28
  %v4078 = vpop.permute.xlu0 %4077
  %4079 = vrot.lane.b32.xlu0 %v3964, 28
  %v4080 = vpop.permute.xlu0 %4079
  %4081 = vrot.lane.b32.xlu0 %v3965, 28
  %v4082 = vpop.permute.xlu0 %4081
  %4083 = vrot.lane.b32.xlu0 %v3966, 28
  %v4084 = vpop.permute.xlu0 %4083
  %4085 = vrot.lane.b32.xlu0 %v3967, 28
  %v4086 = vpop.permute.xlu0 %4085
  %4087 = vrot.lane.b32.xlu0 %v3968, 28
  %v4088 = vpop.permute.xlu0 %4087
  %4089 = vrot.lane.b32.xlu0 %v3969, 28
  %v4090 = vpop.permute.xlu0 %4089
  %4091 = vrot.lane.b32.xlu0 %v3970, 28
  %v4092 = vpop.permute.xlu0 %4091
  %4093 = vrot.lane.b32.xlu0 %v3971, 28
  %v4094 = vpop.permute.xlu0 %4093
  %4095 = vrot.lane.b32.xlu0 %v3972, 28
  %v4096 = vpop.permute.xlu0 %4095
  %4097 = vrot.lane.b32.xlu0 %v3973, 28
  %v4098 = vpop.permute.xlu0 %4097
  %4099 = vrot.lane.b32.xlu0 %v3974, 28
  %v4100 = vpop.permute.xlu0 %4099
  %4101 = vrot.lane.b32.xlu0 %v3975, 28
  %v4102 = vpop.permute.xlu0 %4101
  %4103 = vrot.lane.b32.xlu0 %v3976, 28
  %v4104 = vpop.permute.xlu0 %4103
  %vm4169 = vcmask 257248
  %4170 = vst.msk [vmem:[#allocation3] sm:$0xf] %vm4169, %v3978
  %4171 = vst.msk [vmem:[#allocation3 + $0x4] sm:$0xf] %vm4169, %v3980
  %4172 = vst.msk [vmem:[#allocation3 + $0x8] sm:$0xf] %vm4169, %v3982
  %4173 = vst.msk [vmem:[#allocation3 + $0xc] sm:$0xf] %vm4169, %v3984
  %4174 = vst.msk [vmem:[#allocation3 + $0x10] sm:$0xf] %vm4169, %v3986
  %4175 = vst.msk [vmem:[#allocation3 + $0x14] sm:$0xf] %vm4169, %v3988
  %4176 = vst.msk [vmem:[#allocation3 + $0x18] sm:$0xf] %vm4169, %v3990
  %4177 = vst.msk [vmem:[#allocation3 + $0x1c] sm:$0xf] %vm4169, %v3992
  %4178 = vst.msk [vmem:[#allocation3 + $0x20] sm:$0xf] %vm4169, %v3994
  %4179 = vst.msk [vmem:[#allocation3 + $0x24] sm:$0xf] %vm4169, %v3996
  %4180 = vst.msk [vmem:[#allocation3 + $0x28] sm:$0xf] %vm4169, %v3998
  %4181 = vst.msk [vmem:[#allocation3 + $0x2c] sm:$0xf] %vm4169, %v4000
  %4182 = vst.msk [vmem:[#allocation3 + $0x30] sm:$0xf] %vm4169, %v4002
  %4183 = vst.msk [vmem:[#allocation3 + $0x34] sm:$0xf] %vm4169, %v4004
  %4184 = vst.msk [vmem:[#allocation3 + $0x38] sm:$0xf] %vm4169, %v4006
  %4185 = vst.msk [vmem:[#allocation3 + $0x3c] sm:$0xf] %vm4169, %v4008
  %4186 = vst.msk [vmem:[#allocation3 + $0x40] sm:$0xf] %vm4169, %v4010
  %4187 = vst.msk [vmem:[#allocation3 + $0x44] sm:$0xf] %vm4169, %v4012
  %4188 = vst.msk [vmem:[#allocation3 + $0x48] sm:$0xf] %vm4169, %v4014
  %4189 = vst.msk [vmem:[#allocation3 + $0x4c] sm:$0xf] %vm4169, %v4016
  %4190 = vst.msk [vmem:[#allocation3 + $0x50] sm:$0xf] %vm4169, %v4018
  %4191 = vst.msk [vmem:[#allocation3 + $0x54] sm:$0xf] %vm4169, %v4020
  %4192 = vst.msk [vmem:[#allocation3 + $0x58] sm:$0xf] %vm4169, %v4022
  %4193 = vst.msk [vmem:[#allocation3 + $0x5c] sm:$0xf] %vm4169, %v4024
  %4194 = vst.msk [vmem:[#allocation3 + $0x60] sm:$0xf] %vm4169, %v4026
  %4195 = vst.msk [vmem:[#allocation3 + $0x64] sm:$0xf] %vm4169, %v4028
  %4196 = vst.msk [vmem:[#allocation3 + $0x68] sm:$0xf] %vm4169, %v4030
  %4197 = vst.msk [vmem:[#allocation3 + $0x6c] sm:$0xf] %vm4169, %v4032
  %4198 = vst.msk [vmem:[#allocation3 + $0x70] sm:$0xf] %vm4169, %v4034
  %4199 = vst.msk [vmem:[#allocation3 + $0x74] sm:$0xf] %vm4169, %v4036
  %4200 = vst.msk [vmem:[#allocation3 + $0x78] sm:$0xf] %vm4169, %v4038
  %4201 = vst.msk [vmem:[#allocation3 + $0x7c] sm:$0xf] %vm4169, %v4040
  %4202 = vst.msk [vmem:[#allocation3 + $0x80] sm:$0xf] %vm4169, %v4042
  %4203 = vst.msk [vmem:[#allocation3 + $0x84] sm:$0xf] %vm4169, %v4044
  %4204 = vst.msk [vmem:[#allocation3 + $0x88] sm:$0xf] %vm4169, %v4046
  %4205 = vst.msk [vmem:[#allocation3 + $0x8c] sm:$0xf] %vm4169, %v4048
  %4206 = vst.msk [vmem:[#allocation3 + $0x90] sm:$0xf] %vm4169, %v4050
  %4207 = vst.msk [vmem:[#allocation3 + $0x94] sm:$0xf] %vm4169, %v4052
  %4208 = vst.msk [vmem:[#allocation3 + $0x98] sm:$0xf] %vm4169, %v4054
  %4209 = vst.msk [vmem:[#allocation3 + $0x9c] sm:$0xf] %vm4169, %v4056
  %4210 = vst.msk [vmem:[#allocation3 + $0xa0] sm:$0xf] %vm4169, %v4058
  %4211 = vst.msk [vmem:[#allocation3 + $0xa4] sm:$0xf] %vm4169, %v4060
  %4212 = vst.msk [vmem:[#allocation3 + $0xa8] sm:$0xf] %vm4169, %v4062
  %4213 = vst.msk [vmem:[#allocation3 + $0xac] sm:$0xf] %vm4169, %v4064
  %4214 = vst.msk [vmem:[#allocation3 + $0xb0] sm:$0xf] %vm4169, %v4066
  %4215 = vst.msk [vmem:[#allocation3 + $0xb4] sm:$0xf] %vm4169, %v4068
  %4216 = vst.msk [vmem:[#allocation3 + $0xb8] sm:$0xf] %vm4169, %v4070
  %4217 = vst.msk [vmem:[#allocation3 + $0xbc] sm:$0xf] %vm4169, %v4072
  %4218 = vst.msk [vmem:[#allocation3 + $0xc0] sm:$0xf] %vm4169, %v4074
  %4219 = vst.msk [vmem:[#allocation3 + $0xc4] sm:$0xf] %vm4169, %v4076
  %4220 = vst.msk [vmem:[#allocation3 + $0xc8] sm:$0xf] %vm4169, %v4078
  %4221 = vst.msk [vmem:[#allocation3 + $0xcc] sm:$0xf] %vm4169, %v4080
  %4222 = vst.msk [vmem:[#allocation3 + $0xd0] sm:$0xf] %vm4169, %v4082
  %4223 = vst.msk [vmem:[#allocation3 + $0xd4] sm:$0xf] %vm4169, %v4084
  %4224 = vst.msk [vmem:[#allocation3 + $0xd8] sm:$0xf] %vm4169, %v4086
  %4225 = vst.msk [vmem:[#allocation3 + $0xdc] sm:$0xf] %vm4169, %v4088
  %4226 = vst.msk [vmem:[#allocation3 + $0xe0] sm:$0xf] %vm4169, %v4090
  %4227 = vst.msk [vmem:[#allocation3 + $0xe4] sm:$0xf] %vm4169, %v4092
  %4228 = vst.msk [vmem:[#allocation3 + $0xe8] sm:$0xf] %vm4169, %v4094
  %4229 = vst.msk [vmem:[#allocation3 + $0xec] sm:$0xf] %vm4169, %v4096
  %4230 = vst.msk [vmem:[#allocation3 + $0xf0] sm:$0xf] %vm4169, %v4098
  %4231 = vst.msk [vmem:[#allocation3 + $0xf4] sm:$0xf] %vm4169, %v4100
  %4232 = vst.msk [vmem:[#allocation3 + $0xf8] sm:$0xf] %vm4169, %v4102
  %4233 = vst.msk [vmem:[#allocation3 + $0xfc] sm:$0xf] %vm4169, %v4104
  %v4234 = vld [vmem:[%s3207 + $0x2] sm:$0xff]
  %v4235 = vld [vmem:[%s3207 + $0xa] sm:$0xff]
  %v4236 = vld [vmem:[%s3207 + $0x1a] sm:$0xff]
  %v4237 = vld [vmem:[%s3207 + $0x22] sm:$0xff]
  %v4238 = vld [vmem:[%s3207 + $0x32] sm:$0xff]
  %v4239 = vld [vmem:[%s3207 + $0x3a] sm:$0xff]
  %v4240 = vld [vmem:[%s3207 + $0x4a] sm:$0xff]
  %v4241 = vld [vmem:[%s3207 + $0x52] sm:$0xff]
  %v4242 = vld [vmem:[%s3207 + $0x62] sm:$0xff]
  %v4243 = vld [vmem:[%s3207 + $0x6a] sm:$0xff]
  %v4244 = vld [vmem:[%s3207 + $0x7a] sm:$0xff]
  %v4245 = vld [vmem:[%s3207 + $0x82] sm:$0xff]
  %v4246 = vld [vmem:[%s3207 + $0x92] sm:$0xff]
  %v4247 = vld [vmem:[%s3207 + $0x9a] sm:$0xff]
  %v4248 = vld [vmem:[%s3207 + $0xaa] sm:$0xff]
  %v4249 = vld [vmem:[%s3207 + $0xb2] sm:$0xff]
  %v4250 = vld [vmem:[%s3207 + $0xc2] sm:$0xff]
  %v4251 = vld [vmem:[%s3207 + $0xca] sm:$0xff]
  %v4252 = vld [vmem:[%s3207 + $0xda] sm:$0xff]
  %v4253 = vld [vmem:[%s3207 + $0xe2] sm:$0xff]
  %v4254 = vld [vmem:[%s3207 + $0xf2] sm:$0xff]
  %v4255 = vld [vmem:[%s3207 + $0xfa] sm:$0xff]
  %v4256 = vld [vmem:[%s3207 + $0x10a] sm:$0xff]
  %v4257 = vld [vmem:[%s3207 + $0x112] sm:$0xff]
  %v4258 = vld [vmem:[%s3207 + $0x122] sm:$0xff]
  %v4259 = vld [vmem:[%s3207 + $0x12a] sm:$0xff]
  %v4260 = vld [vmem:[%s3207 + $0x13a] sm:$0xff]
  %v4261 = vld [vmem:[%s3207 + $0x142] sm:$0xff]
  %v4262 = vld [vmem:[%s3207 + $0x152] sm:$0xff]
  %v4263 = vld [vmem:[%s3207 + $0x15a] sm:$0xff]
  %v4264 = vld [vmem:[%s3207 + $0x16a] sm:$0xff]
  %v4265 = vld [vmem:[%s3207 + $0x172] sm:$0xff]
  %v4266 = vld [vmem:[%s3207 + $0x1b2] sm:$0xff]
  %v4267 = vld [vmem:[%s3207 + $0x1ba] sm:$0xff]
  %v4268 = vld [vmem:[%s3207 + $0x1ca] sm:$0xff]
  %v4269 = vld [vmem:[%s3207 + $0x1d2] sm:$0xff]
  %v4270 = vld [vmem:[%s3207 + $0x1e2] sm:$0xff]
  %v4271 = vld [vmem:[%s3207 + $0x1ea] sm:$0xff]
  %v4272 = vld [vmem:[%s3207 + $0x1fa] sm:$0xff]
  %v4273 = vld [vmem:[%s3207 + $0x202] sm:$0xff]
  %v4274 = vld [vmem:[%s3207 + $0x212] sm:$0xff]
  %v4275 = vld [vmem:[%s3207 + $0x21a] sm:$0xff]
  %v4276 = vld [vmem:[%s3207 + $0x22a] sm:$0xff]
  %v4277 = vld [vmem:[%s3207 + $0x232] sm:$0xff]
  %v4278 = vld [vmem:[%s3207 + $0x242] sm:$0xff]
  %v4279 = vld [vmem:[%s3207 + $0x24a] sm:$0xff]
  %v4280 = vld [vmem:[%s3207 + $0x25a] sm:$0xff]
  %v4281 = vld [vmem:[%s3207 + $0x262] sm:$0xff]
  %v4282 = vld [vmem:[%s3207 + $0x272] sm:$0xff]
  %v4283 = vld [vmem:[%s3207 + $0x27a] sm:$0xff]
  %v4284 = vld [vmem:[%s3207 + $0x28a] sm:$0xff]
  %v4285 = vld [vmem:[%s3207 + $0x292] sm:$0xff]
  %v4286 = vld [vmem:[%s3207 + $0x2a2] sm:$0xff]
  %v4287 = vld [vmem:[%s3207 + $0x2aa] sm:$0xff]
  %v4288 = vld [vmem:[%s3207 + $0x2ba] sm:$0xff]
  %v4289 = vld [vmem:[%s3207 + $0x2c2] sm:$0xff]
  %v4290 = vld [vmem:[%s3207 + $0x2d2] sm:$0xff]
  %v4291 = vld [vmem:[%s3207 + $0x2da] sm:$0xff]
  %v4292 = vld [vmem:[%s3207 + $0x2ea] sm:$0xff]
  %v4293 = vld [vmem:[%s3207 + $0x2f2] sm:$0xff]
  %v4294 = vld [vmem:[%s3207 + $0x302] sm:$0xff]
  %v4295 = vld [vmem:[%s3207 + $0x30a] sm:$0xff]
  %v4296 = vld [vmem:[%s3207 + $0x31a] sm:$0xff]
  %v4297 = vld [vmem:[%s3207 + $0x322] sm:$0xff]
  %v4298 = vpack.c.bf16 %v4235, %v4234
  %v4299 = vpack.c.bf16 %v4237, %v4236
  %v4300 = vpack.c.bf16 %v4239, %v4238
  %v4301 = vpack.c.bf16 %v4241, %v4240
  %v4302 = vpack.c.bf16 %v4243, %v4242
  %v4303 = vpack.c.bf16 %v4245, %v4244
  %v4304 = vpack.c.bf16 %v4247, %v4246
  %v4305 = vpack.c.bf16 %v4249, %v4248
  %v4306 = vpack.c.bf16 %v4251, %v4250
  %v4307 = vpack.c.bf16 %v4253, %v4252
  %v4308 = vpack.c.bf16 %v4255, %v4254
  %v4309 = vpack.c.bf16 %v4257, %v4256
  %v4310 = vpack.c.bf16 %v4259, %v4258
  %v4311 = vpack.c.bf16 %v4261, %v4260
  %v4312 = vpack.c.bf16 %v4263, %v4262
  %v4313 = vpack.c.bf16 %v4265, %v4264
  %v4314 = vpack.c.bf16 %v4267, %v4266
  %v4315 = vpack.c.bf16 %v4269, %v4268
  %v4316 = vpack.c.bf16 %v4271, %v4270
  %v4317 = vpack.c.bf16 %v4273, %v4272
  %v4318 = vpack.c.bf16 %v4275, %v4274
  %v4319 = vpack.c.bf16 %v4277, %v4276
  %v4320 = vpack.c.bf16 %v4279, %v4278
  %v4321 = vpack.c.bf16 %v4281, %v4280
  %v4322 = vpack.c.bf16 %v4283, %v4282
  %v4323 = vpack.c.bf16 %v4285, %v4284
  %v4324 = vpack.c.bf16 %v4287, %v4286
  %v4325 = vpack.c.bf16 %v4289, %v4288
  %v4326 = vpack.c.bf16 %v4291, %v4290
  %v4327 = vpack.c.bf16 %v4293, %v4292
  %v4328 = vpack.c.bf16 %v4295, %v4294
  %v4329 = vpack.c.bf16 %v4297, %v4296
  %v4362 = vunpack.c.l.b16 %v4298
  %v4363 = vunpack.c.h.b16 %v4298
  %v4364 = vunpack.c.l.b16 %v4299
  %v4365 = vunpack.c.h.b16 %v4299
  %v4366 = vunpack.c.l.b16 %v4300
  %v4367 = vunpack.c.h.b16 %v4300
  %v4368 = vunpack.c.l.b16 %v4301
  %v4369 = vunpack.c.h.b16 %v4301
  %v4370 = vunpack.c.l.b16 %v4302
  %v4371 = vunpack.c.h.b16 %v4302
  %v4372 = vunpack.c.l.b16 %v4303
  %v4373 = vunpack.c.h.b16 %v4303
  %v4374 = vunpack.c.l.b16 %v4304
  %v4375 = vunpack.c.h.b16 %v4304
  %v4376 = vunpack.c.l.b16 %v4305
  %v4377 = vunpack.c.h.b16 %v4305
  %v4378 = vunpack.c.l.b16 %v4306
  %v4379 = vunpack.c.h.b16 %v4306
  %v4380 = vunpack.c.l.b16 %v4307
  %v4381 = vunpack.c.h.b16 %v4307
  %v4382 = vunpack.c.l.b16 %v4308
  %v4383 = vunpack.c.h.b16 %v4308
  %v4384 = vunpack.c.l.b16 %v4309
  %v4385 = vunpack.c.h.b16 %v4309
  %v4386 = vunpack.c.l.b16 %v4310
  %v4387 = vunpack.c.h.b16 %v4310
  %v4388 = vunpack.c.l.b16 %v4311
  %v4389 = vunpack.c.h.b16 %v4311
  %v4390 = vunpack.c.l.b16 %v4312
  %v4391 = vunpack.c.h.b16 %v4312
  %v4392 = vunpack.c.l.b16 %v4313
  %v4393 = vunpack.c.h.b16 %v4313
  %v4394 = vunpack.c.l.b16 %v4314
  %v4395 = vunpack.c.h.b16 %v4314
  %v4396 = vunpack.c.l.b16 %v4315
  %v4397 = vunpack.c.h.b16 %v4315
  %v4398 = vunpack.c.l.b16 %v4316
  %v4399 = vunpack.c.h.b16 %v4316
  %v4400 = vunpack.c.l.b16 %v4317
  %v4401 = vunpack.c.h.b16 %v4317
  %v4402 = vunpack.c.l.b16 %v4318
  %v4403 = vunpack.c.h.b16 %v4318
  %v4404 = vunpack.c.l.b16 %v4319
  %v4405 = vunpack.c.h.b16 %v4319
  %v4406 = vunpack.c.l.b16 %v4320
  %v4407 = vunpack.c.h.b16 %v4320
  %v4408 = vunpack.c.l.b16 %v4321
  %v4409 = vunpack.c.h.b16 %v4321
  %v4410 = vunpack.c.l.b16 %v4322
  %v4411 = vunpack.c.h.b16 %v4322
  %v4412 = vunpack.c.l.b16 %v4323
  %v4413 = vunpack.c.h.b16 %v4323
  %v4414 = vunpack.c.l.b16 %v4324
  %v4415 = vunpack.c.h.b16 %v4324
  %v4416 = vunpack.c.l.b16 %v4325
  %v4417 = vunpack.c.h.b16 %v4325
  %v4418 = vunpack.c.l.b16 %v4326
  %v4419 = vunpack.c.h.b16 %v4326
  %v4420 = vunpack.c.l.b16 %v4327
  %v4421 = vunpack.c.h.b16 %v4327
  %v4422 = vunpack.c.l.b16 %v4328
  %v4423 = vunpack.c.h.b16 %v4328
  %v4424 = vunpack.c.l.b16 %v4329
  %v4425 = vunpack.c.h.b16 %v4329
  %v4426 = vpack.c.b16 %v4362, %v4362
  %v4427 = vpack.c.b16 %v4363, %v4363
  %v4428 = vpack.c.b16 %v4364, %v4364
  %v4429 = vpack.c.b16 %v4365, %v4365
  %v4430 = vpack.c.b16 %v4366, %v4366
  %v4431 = vpack.c.b16 %v4367, %v4367
  %v4432 = vpack.c.b16 %v4368, %v4368
  %v4433 = vpack.c.b16 %v4369, %v4369
  %v4434 = vpack.c.b16 %v4370, %v4370
  %v4435 = vpack.c.b16 %v4371, %v4371
  %v4436 = vpack.c.b16 %v4372, %v4372
  %v4437 = vpack.c.b16 %v4373, %v4373
  %v4438 = vpack.c.b16 %v4374, %v4374
  %v4439 = vpack.c.b16 %v4375, %v4375
  %v4440 = vpack.c.b16 %v4376, %v4376
  %v4441 = vpack.c.b16 %v4377, %v4377
  %v4442 = vpack.c.b16 %v4378, %v4378
  %v4443 = vpack.c.b16 %v4379, %v4379
  %v4444 = vpack.c.b16 %v4380, %v4380
  %v4445 = vpack.c.b16 %v4381, %v4381
  %v4446 = vpack.c.b16 %v4382, %v4382
  %v4447 = vpack.c.b16 %v4383, %v4383
  %v4448 = vpack.c.b16 %v4384, %v4384
  %v4449 = vpack.c.b16 %v4385, %v4385
  %v4450 = vpack.c.b16 %v4386, %v4386
  %v4451 = vpack.c.b16 %v4387, %v4387
  %v4452 = vpack.c.b16 %v4388, %v4388
  %v4453 = vpack.c.b16 %v4389, %v4389
  %v4454 = vpack.c.b16 %v4390, %v4390
  %v4455 = vpack.c.b16 %v4391, %v4391
  %v4456 = vpack.c.b16 %v4392, %v4392
  %v4457 = vpack.c.b16 %v4393, %v4393
  %v4458 = vpack.c.b16 %v4394, %v4394
  %v4459 = vpack.c.b16 %v4395, %v4395
  %v4460 = vpack.c.b16 %v4396, %v4396
  %v4461 = vpack.c.b16 %v4397, %v4397
  %v4462 = vpack.c.b16 %v4398, %v4398
  %v4463 = vpack.c.b16 %v4399, %v4399
  %v4464 = vpack.c.b16 %v4400, %v4400
  %v4465 = vpack.c.b16 %v4401, %v4401
  %v4466 = vpack.c.b16 %v4402, %v4402
  %v4467 = vpack.c.b16 %v4403, %v4403
  %v4468 = vpack.c.b16 %v4404, %v4404
  %v4469 = vpack.c.b16 %v4405, %v4405
  %v4470 = vpack.c.b16 %v4406, %v4406
  %v4471 = vpack.c.b16 %v4407, %v4407
  %v4472 = vpack.c.b16 %v4408, %v4408
  %v4473 = vpack.c.b16 %v4409, %v4409
  %v4474 = vpack.c.b16 %v4410, %v4410
  %v4475 = vpack.c.b16 %v4411, %v4411
  %v4476 = vpack.c.b16 %v4412, %v4412
  %v4477 = vpack.c.b16 %v4413, %v4413
  %v4478 = vpack.c.b16 %v4414, %v4414
  %v4479 = vpack.c.b16 %v4415, %v4415
  %v4480 = vpack.c.b16 %v4416, %v4416
  %v4481 = vpack.c.b16 %v4417, %v4417
  %v4482 = vpack.c.b16 %v4418, %v4418
  %v4483 = vpack.c.b16 %v4419, %v4419
  %v4484 = vpack.c.b16 %v4420, %v4420
  %v4485 = vpack.c.b16 %v4421, %v4421
  %v4486 = vpack.c.b16 %v4422, %v4422
  %v4487 = vpack.c.b16 %v4423, %v4423
  %v4488 = vpack.c.b16 %v4424, %v4424
  %v4489 = vpack.c.b16 %v4425, %v4425
  %4490 = vrot.lane.b32.xlu0 %v4426, 32
  %v4491 = vpop.permute.xlu0 %4490
  %4492 = vrot.lane.b32.xlu0 %v4427, 32
  %v4493 = vpop.permute.xlu0 %4492
  %4494 = vrot.lane.b32.xlu0 %v4428, 32
  %v4495 = vpop.permute.xlu0 %4494
  %4496 = vrot.lane.b32.xlu0 %v4429, 32
  %v4497 = vpop.permute.xlu0 %4496
  %4498 = vrot.lane.b32.xlu0 %v4430, 32
  %v4499 = vpop.permute.xlu0 %4498
  %4500 = vrot.lane.b32.xlu0 %v4431, 32
  %v4501 = vpop.permute.xlu0 %4500
  %4502 = vrot.lane.b32.xlu0 %v4432, 32
  %v4503 = vpop.permute.xlu0 %4502
  %4504 = vrot.lane.b32.xlu0 %v4433, 32
  %v4505 = vpop.permute.xlu0 %4504
  %4506 = vrot.lane.b32.xlu0 %v4434, 32
  %v4507 = vpop.permute.xlu0 %4506
  %4508 = vrot.lane.b32.xlu0 %v4435, 32
  %v4509 = vpop.permute.xlu0 %4508
  %4510 = vrot.lane.b32.xlu0 %v4436, 32
  %v4511 = vpop.permute.xlu0 %4510
  %4512 = vrot.lane.b32.xlu0 %v4437, 32
  %v4513 = vpop.permute.xlu0 %4512
  %4514 = vrot.lane.b32.xlu0 %v4438, 32
  %v4515 = vpop.permute.xlu0 %4514
  %4516 = vrot.lane.b32.xlu0 %v4439, 32
  %v4517 = vpop.permute.xlu0 %4516
  %4518 = vrot.lane.b32.xlu0 %v4440, 32
  %v4519 = vpop.permute.xlu0 %4518
  %4520 = vrot.lane.b32.xlu0 %v4441, 32
  %v4521 = vpop.permute.xlu0 %4520
  %4522 = vrot.lane.b32.xlu0 %v4442, 32
  %v4523 = vpop.permute.xlu0 %4522
  %4524 = vrot.lane.b32.xlu0 %v4443, 32
  %v4525 = vpop.permute.xlu0 %4524
  %4526 = vrot.lane.b32.xlu0 %v4444, 32
  %v4527 = vpop.permute.xlu0 %4526
  %4528 = vrot.lane.b32.xlu0 %v4445, 32
  %v4529 = vpop.permute.xlu0 %4528
  %4530 = vrot.lane.b32.xlu0 %v4446, 32
  %v4531 = vpop.permute.xlu0 %4530
  %4532 = vrot.lane.b32.xlu0 %v4447, 32
  %v4533 = vpop.permute.xlu0 %4532
  %4534 = vrot.lane.b32.xlu0 %v4448, 32
  %v4535 = vpop.permute.xlu0 %4534
  %4536 = vrot.lane.b32.xlu0 %v4449, 32
  %v4537 = vpop.permute.xlu0 %4536
  %4538 = vrot.lane.b32.xlu0 %v4450, 32
  %v4539 = vpop.permute.xlu0 %4538
  %4540 = vrot.lane.b32.xlu0 %v4451, 32
  %v4541 = vpop.permute.xlu0 %4540
  %4542 = vrot.lane.b32.xlu0 %v4452, 32
  %v4543 = vpop.permute.xlu0 %4542
  %4544 = vrot.lane.b32.xlu0 %v4453, 32
  %v4545 = vpop.permute.xlu0 %4544
  %4546 = vrot.lane.b32.xlu0 %v4454, 32
  %v4547 = vpop.permute.xlu0 %4546
  %4548 = vrot.lane.b32.xlu0 %v4455, 32
  %v4549 = vpop.permute.xlu0 %4548
  %4550 = vrot.lane.b32.xlu0 %v4456, 32
  %v4551 = vpop.permute.xlu0 %4550
  %4552 = vrot.lane.b32.xlu0 %v4457, 32
  %v4553 = vpop.permute.xlu0 %4552
  %4554 = vrot.lane.b32.xlu0 %v4458, 32
  %v4555 = vpop.permute.xlu0 %4554
  %4556 = vrot.lane.b32.xlu0 %v4459, 32
  %v4557 = vpop.permute.xlu0 %4556
  %4558 = vrot.lane.b32.xlu0 %v4460, 32
  %v4559 = vpop.permute.xlu0 %4558
  %4560 = vrot.lane.b32.xlu0 %v4461, 32
  %v4561 = vpop.permute.xlu0 %4560
  %4562 = vrot.lane.b32.xlu0 %v4462, 32
  %v4563 = vpop.permute.xlu0 %4562
  %4564 = vrot.lane.b32.xlu0 %v4463, 32
  %v4565 = vpop.permute.xlu0 %4564
  %4566 = vrot.lane.b32.xlu0 %v4464, 32
  %v4567 = vpop.permute.xlu0 %4566
  %4568 = vrot.lane.b32.xlu0 %v4465, 32
  %v4569 = vpop.permute.xlu0 %4568
  %4570 = vrot.lane.b32.xlu0 %v4466, 32
  %v4571 = vpop.permute.xlu0 %4570
  %4572 = vrot.lane.b32.xlu0 %v4467, 32
  %v4573 = vpop.permute.xlu0 %4572
  %4574 = vrot.lane.b32.xlu0 %v4468, 32
  %v4575 = vpop.permute.xlu0 %4574
  %4576 = vrot.lane.b32.xlu0 %v4469, 32
  %v4577 = vpop.permute.xlu0 %4576
  %4578 = vrot.lane.b32.xlu0 %v4470, 32
  %v4579 = vpop.permute.xlu0 %4578
  %4580 = vrot.lane.b32.xlu0 %v4471, 32
  %v4581 = vpop.permute.xlu0 %4580
  %4582 = vrot.lane.b32.xlu0 %v4472, 32
  %v4583 = vpop.permute.xlu0 %4582
  %4584 = vrot.lane.b32.xlu0 %v4473, 32
  %v4585 = vpop.permute.xlu0 %4584
  %4586 = vrot.lane.b32.xlu0 %v4474, 32
  %v4587 = vpop.permute.xlu0 %4586
  %4588 = vrot.lane.b32.xlu0 %v4475, 32
  %v4589 = vpop.permute.xlu0 %4588
  %4590 = vrot.lane.b32.xlu0 %v4476, 32
  %v4591 = vpop.permute.xlu0 %4590
  %4592 = vrot.lane.b32.xlu0 %v4477, 32
  %v4593 = vpop.permute.xlu0 %4592
  %4594 = vrot.lane.b32.xlu0 %v4478, 32
  %v4595 = vpop.permute.xlu0 %4594
  %4596 = vrot.lane.b32.xlu0 %v4479, 32
  %v4597 = vpop.permute.xlu0 %4596
  %4598 = vrot.lane.b32.xlu0 %v4480, 32
  %v4599 = vpop.permute.xlu0 %4598
  %4600 = vrot.lane.b32.xlu0 %v4481, 32
  %v4601 = vpop.permute.xlu0 %4600
  %4602 = vrot.lane.b32.xlu0 %v4482, 32
  %v4603 = vpop.permute.xlu0 %4602
  %4604 = vrot.lane.b32.xlu0 %v4483, 32
  %v4605 = vpop.permute.xlu0 %4604
  %4606 = vrot.lane.b32.xlu0 %v4484, 32
  %v4607 = vpop.permute.xlu0 %4606
  %4608 = vrot.lane.b32.xlu0 %v4485, 32
  %v4609 = vpop.permute.xlu0 %4608
  %4610 = vrot.lane.b32.xlu0 %v4486, 32
  %v4611 = vpop.permute.xlu0 %4610
  %4612 = vrot.lane.b32.xlu0 %v4487, 32
  %v4613 = vpop.permute.xlu0 %4612
  %4614 = vrot.lane.b32.xlu0 %v4488, 32
  %v4615 = vpop.permute.xlu0 %4614
  %4616 = vrot.lane.b32.xlu0 %v4489, 32
  %v4617 = vpop.permute.xlu0 %4616
  %vm4682 = vcmask 290048
  %4683 = vst.msk [vmem:[#allocation3] sm:$0xf] %vm4682, %v4491
  %4684 = vst.msk [vmem:[#allocation3 + $0x4] sm:$0xf] %vm4682, %v4493
  %4685 = vst.msk [vmem:[#allocation3 + $0x8] sm:$0xf] %vm4682, %v4495
  %4686 = vst.msk [vmem:[#allocation3 + $0xc] sm:$0xf] %vm4682, %v4497
  %4687 = vst.msk [vmem:[#allocation3 + $0x10] sm:$0xf] %vm4682, %v4499
  %4688 = vst.msk [vmem:[#allocation3 + $0x14] sm:$0xf] %vm4682, %v4501
  %4689 = vst.msk [vmem:[#allocation3 + $0x18] sm:$0xf] %vm4682, %v4503
  %4690 = vst.msk [vmem:[#allocation3 + $0x1c] sm:$0xf] %vm4682, %v4505
  %4691 = vst.msk [vmem:[#allocation3 + $0x20] sm:$0xf] %vm4682, %v4507
  %4692 = vst.msk [vmem:[#allocation3 + $0x24] sm:$0xf] %vm4682, %v4509
  %4693 = vst.msk [vmem:[#allocation3 + $0x28] sm:$0xf] %vm4682, %v4511
  %4694 = vst.msk [vmem:[#allocation3 + $0x2c] sm:$0xf] %vm4682, %v4513
  %4695 = vst.msk [vmem:[#allocation3 + $0x30] sm:$0xf] %vm4682, %v4515
  %4696 = vst.msk [vmem:[#allocation3 + $0x34] sm:$0xf] %vm4682, %v4517
  %4697 = vst.msk [vmem:[#allocation3 + $0x38] sm:$0xf] %vm4682, %v4519
  %4698 = vst.msk [vmem:[#allocation3 + $0x3c] sm:$0xf] %vm4682, %v4521
  %4699 = vst.msk [vmem:[#allocation3 + $0x40] sm:$0xf] %vm4682, %v4523
  %4700 = vst.msk [vmem:[#allocation3 + $0x44] sm:$0xf] %vm4682, %v4525
  %4701 = vst.msk [vmem:[#allocation3 + $0x48] sm:$0xf] %vm4682, %v4527
  %4702 = vst.msk [vmem:[#allocation3 + $0x4c] sm:$0xf] %vm4682, %v4529
  %4703 = vst.msk [vmem:[#allocation3 + $0x50] sm:$0xf] %vm4682, %v4531
  %4704 = vst.msk [vmem:[#allocation3 + $0x54] sm:$0xf] %vm4682, %v4533
  %4705 = vst.msk [vmem:[#allocation3 + $0x58] sm:$0xf] %vm4682, %v4535
  %4706 = vst.msk [vmem:[#allocation3 + $0x5c] sm:$0xf] %vm4682, %v4537
  %4707 = vst.msk [vmem:[#allocation3 + $0x60] sm:$0xf] %vm4682, %v4539
  %4708 = vst.msk [vmem:[#allocation3 + $0x64] sm:$0xf] %vm4682, %v4541
  %4709 = vst.msk [vmem:[#allocation3 + $0x68] sm:$0xf] %vm4682, %v4543
  %4710 = vst.msk [vmem:[#allocation3 + $0x6c] sm:$0xf] %vm4682, %v4545
  %4711 = vst.msk [vmem:[#allocation3 + $0x70] sm:$0xf] %vm4682, %v4547
  %4712 = vst.msk [vmem:[#allocation3 + $0x74] sm:$0xf] %vm4682, %v4549
  %4713 = vst.msk [vmem:[#allocation3 + $0x78] sm:$0xf] %vm4682, %v4551
  %4714 = vst.msk [vmem:[#allocation3 + $0x7c] sm:$0xf] %vm4682, %v4553
  %4715 = vst.msk [vmem:[#allocation3 + $0x80] sm:$0xf] %vm4682, %v4555
  %4716 = vst.msk [vmem:[#allocation3 + $0x84] sm:$0xf] %vm4682, %v4557
  %4717 = vst.msk [vmem:[#allocation3 + $0x88] sm:$0xf] %vm4682, %v4559
  %4718 = vst.msk [vmem:[#allocation3 + $0x8c] sm:$0xf] %vm4682, %v4561
  %4719 = vst.msk [vmem:[#allocation3 + $0x90] sm:$0xf] %vm4682, %v4563
  %4720 = vst.msk [vmem:[#allocation3 + $0x94] sm:$0xf] %vm4682, %v4565
  %4721 = vst.msk [vmem:[#allocation3 + $0x98] sm:$0xf] %vm4682, %v4567
  %4722 = vst.msk [vmem:[#allocation3 + $0x9c] sm:$0xf] %vm4682, %v4569
  %4723 = vst.msk [vmem:[#allocation3 + $0xa0] sm:$0xf] %vm4682, %v4571
  %4724 = vst.msk [vmem:[#allocation3 + $0xa4] sm:$0xf] %vm4682, %v4573
  %4725 = vst.msk [vmem:[#allocation3 + $0xa8] sm:$0xf] %vm4682, %v4575
  %4726 = vst.msk [vmem:[#allocation3 + $0xac] sm:$0xf] %vm4682, %v4577
  %4727 = vst.msk [vmem:[#allocation3 + $0xb0] sm:$0xf] %vm4682, %v4579
  %4728 = vst.msk [vmem:[#allocation3 + $0xb4] sm:$0xf] %vm4682, %v4581
  %4729 = vst.msk [vmem:[#allocation3 + $0xb8] sm:$0xf] %vm4682, %v4583
  %4730 = vst.msk [vmem:[#allocation3 + $0xbc] sm:$0xf] %vm4682, %v4585
  %4731 = vst.msk [vmem:[#allocation3 + $0xc0] sm:$0xf] %vm4682, %v4587
  %4732 = vst.msk [vmem:[#allocation3 + $0xc4] sm:$0xf] %vm4682, %v4589
  %4733 = vst.msk [vmem:[#allocation3 + $0xc8] sm:$0xf] %vm4682, %v4591
  %4734 = vst.msk [vmem:[#allocation3 + $0xcc] sm:$0xf] %vm4682, %v4593
  %4735 = vst.msk [vmem:[#allocation3 + $0xd0] sm:$0xf] %vm4682, %v4595
  %4736 = vst.msk [vmem:[#allocation3 + $0xd4] sm:$0xf] %vm4682, %v4597
  %4737 = vst.msk [vmem:[#allocation3 + $0xd8] sm:$0xf] %vm4682, %v4599
  %4738 = vst.msk [vmem:[#allocation3 + $0xdc] sm:$0xf] %vm4682, %v4601
  %4739 = vst.msk [vmem:[#allocation3 + $0xe0] sm:$0xf] %vm4682, %v4603
  %4740 = vst.msk [vmem:[#allocation3 + $0xe4] sm:$0xf] %vm4682, %v4605
  %4741 = vst.msk [vmem:[#allocation3 + $0xe8] sm:$0xf] %vm4682, %v4607
  %4742 = vst.msk [vmem:[#allocation3 + $0xec] sm:$0xf] %vm4682, %v4609
  %4743 = vst.msk [vmem:[#allocation3 + $0xf0] sm:$0xf] %vm4682, %v4611
  %4744 = vst.msk [vmem:[#allocation3 + $0xf4] sm:$0xf] %vm4682, %v4613
  %4745 = vst.msk [vmem:[#allocation3 + $0xf8] sm:$0xf] %vm4682, %v4615
  %4746 = vst.msk [vmem:[#allocation3 + $0xfc] sm:$0xf] %vm4682, %v4617
  %v4747 = vld [vmem:[#allocation3] sm:$0xf]
  %v4748 = vld [vmem:[#allocation3 + $0x4] sm:$0xf]
  %v4749 = vld [vmem:[#allocation3 + $0x8] sm:$0xf]
  %v4750 = vld [vmem:[#allocation3 + $0xc] sm:$0xf]
  %v4751 = vld [vmem:[#allocation3 + $0x10] sm:$0xf]
  %v4752 = vld [vmem:[#allocation3 + $0x14] sm:$0xf]
  %v4753 = vld [vmem:[#allocation3 + $0x18] sm:$0xf]
  %v4754 = vld [vmem:[#allocation3 + $0x1c] sm:$0xf]
  %v4755 = vld [vmem:[#allocation3 + $0x20] sm:$0xf]
  %v4756 = vld [vmem:[#allocation3 + $0x24] sm:$0xf]
  %v4757 = vld [vmem:[#allocation3 + $0x28] sm:$0xf]
  %v4758 = vld [vmem:[#allocation3 + $0x2c] sm:$0xf]
  %v4759 = vld [vmem:[#allocation3 + $0x30] sm:$0xf]
  %v4760 = vld [vmem:[#allocation3 + $0x34] sm:$0xf]
  %v4761 = vld [vmem:[#allocation3 + $0x38] sm:$0xf]
  %v4762 = vld [vmem:[#allocation3 + $0x3c] sm:$0xf]
  %v4763 = vld [vmem:[#allocation3 + $0x40] sm:$0xf]
  %v4764 = vld [vmem:[#allocation3 + $0x44] sm:$0xf]
  %v4765 = vld [vmem:[#allocation3 + $0x48] sm:$0xf]
  %v4766 = vld [vmem:[#allocation3 + $0x4c] sm:$0xf]
  %v4767 = vld [vmem:[#allocation3 + $0x50] sm:$0xf]
  %v4768 = vld [vmem:[#allocation3 + $0x54] sm:$0xf]
  %v4769 = vld [vmem:[#allocation3 + $0x58] sm:$0xf]
  %v4770 = vld [vmem:[#allocation3 + $0x5c] sm:$0xf]
  %v4771 = vld [vmem:[#allocation3 + $0x60] sm:$0xf]
  %v4772 = vld [vmem:[#allocation3 + $0x64] sm:$0xf]
  %v4773 = vld [vmem:[#allocation3 + $0x68] sm:$0xf]
  %v4774 = vld [vmem:[#allocation3 + $0x6c] sm:$0xf]
  %v4775 = vld [vmem:[#allocation3 + $0x70] sm:$0xf]
  %v4776 = vld [vmem:[#allocation3 + $0x74] sm:$0xf]
  %v4777 = vld [vmem:[#allocation3 + $0x78] sm:$0xf]
  %v4778 = vld [vmem:[#allocation3 + $0x7c] sm:$0xf]
  %v4779 = vld [vmem:[#allocation3 + $0x80] sm:$0xf]
  %v4780 = vld [vmem:[#allocation3 + $0x84] sm:$0xf]
  %v4781 = vld [vmem:[#allocation3 + $0x88] sm:$0xf]
  %v4782 = vld [vmem:[#allocation3 + $0x8c] sm:$0xf]
  %v4783 = vld [vmem:[#allocation3 + $0x90] sm:$0xf]
  %v4784 = vld [vmem:[#allocation3 + $0x94] sm:$0xf]
  %v4785 = vld [vmem:[#allocation3 + $0x98] sm:$0xf]
  %v4786 = vld [vmem:[#allocation3 + $0x9c] sm:$0xf]
  %v4787 = vld [vmem:[#allocation3 + $0xa0] sm:$0xf]
  %v4788 = vld [vmem:[#allocation3 + $0xa4] sm:$0xf]
  %v4789 = vld [vmem:[#allocation3 + $0xa8] sm:$0xf]
  %v4790 = vld [vmem:[#allocation3 + $0xac] sm:$0xf]
  %v4791 = vld [vmem:[#allocation3 + $0xb0] sm:$0xf]
  %v4792 = vld [vmem:[#allocation3 + $0xb4] sm:$0xf]
  %v4793 = vld [vmem:[#allocation3 + $0xb8] sm:$0xf]
  %v4794 = vld [vmem:[#allocation3 + $0xbc] sm:$0xf]
  %v4795 = vld [vmem:[#allocation3 + $0xc0] sm:$0xf]
  %v4796 = vld [vmem:[#allocation3 + $0xc4] sm:$0xf]
  %v4797 = vld [vmem:[#allocation3 + $0xc8] sm:$0xf]
  %v4798 = vld [vmem:[#allocation3 + $0xcc] sm:$0xf]
  %v4799 = vld [vmem:[#allocation3 + $0xd0] sm:$0xf]
  %v4800 = vld [vmem:[#allocation3 + $0xd4] sm:$0xf]
  %v4801 = vld [vmem:[#allocation3 + $0xd8] sm:$0xf]
  %v4802 = vld [vmem:[#allocation3 + $0xdc] sm:$0xf]
  %v4803 = vld [vmem:[#allocation3 + $0xe0] sm:$0xf]
  %v4804 = vld [vmem:[#allocation3 + $0xe4] sm:$0xf]
  %v4805 = vld [vmem:[#allocation3 + $0xe8] sm:$0xf]
  %v4806 = vld [vmem:[#allocation3 + $0xec] sm:$0xf]
  %v4807 = vld [vmem:[#allocation3 + $0xf0] sm:$0xf]
  %v4808 = vld [vmem:[#allocation3 + $0xf4] sm:$0xf]
  %v4809 = vld [vmem:[#allocation3 + $0xf8] sm:$0xf]
  %v4810 = vld [vmem:[#allocation3 + $0xfc] sm:$0xf]
  %v4811 = vld [vmem:[%s1] sm:$0xf]
  %v4812 = vld [vmem:[%s1 + $0x4] sm:$0xf]
  %v4813 = vld [vmem:[%s1 + $0x8] sm:$0xf]
  %v4814 = vld [vmem:[%s1 + $0xc] sm:$0xf]
  %v4815 = vld [vmem:[%s1 + $0x10] sm:$0x3]
  %v4880 = vunpack.c.l.b16 %v4747
  %v4881 = vunpack.c.l.b16 %v4748
  %v4882 = vunpack.c.l.b16 %v4749
  %v4883 = vunpack.c.l.b16 %v4750
  %v4884 = vunpack.c.l.b16 %v4751
  %v4885 = vunpack.c.l.b16 %v4752
  %v4886 = vunpack.c.l.b16 %v4753
  %v4887 = vunpack.c.l.b16 %v4754
  %v4888 = vunpack.c.l.b16 %v4755
  %v4889 = vunpack.c.l.b16 %v4756
  %v4890 = vunpack.c.l.b16 %v4757
  %v4891 = vunpack.c.l.b16 %v4758
  %v4892 = vunpack.c.l.b16 %v4759
  %v4893 = vunpack.c.l.b16 %v4760
  %v4894 = vunpack.c.l.b16 %v4761
  %v4895 = vunpack.c.l.b16 %v4762
  %v4896 = vunpack.c.l.b16 %v4763
  %v4897 = vunpack.c.l.b16 %v4764
  %v4898 = vunpack.c.l.b16 %v4765
  %v4899 = vunpack.c.l.b16 %v4766
  %v4900 = vunpack.c.l.b16 %v4767
  %v4901 = vunpack.c.l.b16 %v4768
  %v4902 = vunpack.c.l.b16 %v4769
  %v4903 = vunpack.c.l.b16 %v4770
  %v4904 = vunpack.c.l.b16 %v4771
  %v4905 = vunpack.c.l.b16 %v4772
  %v4906 = vunpack.c.l.b16 %v4773
  %v4907 = vunpack.c.l.b16 %v4774
  %v4908 = vunpack.c.l.b16 %v4775
  %v4909 = vunpack.c.l.b16 %v4776
  %v4910 = vunpack.c.l.b16 %v4777
  %v4911 = vunpack.c.l.b16 %v4778
  %v4912 = vunpack.c.l.b16 %v4779
  %v4913 = vunpack.c.l.b16 %v4780
  %v4914 = vunpack.c.l.b16 %v4781
  %v4915 = vunpack.c.l.b16 %v4782
  %v4916 = vunpack.c.l.b16 %v4783
  %v4917 = vunpack.c.l.b16 %v4784
  %v4918 = vunpack.c.l.b16 %v4785
  %v4919 = vunpack.c.l.b16 %v4786
  %v4920 = vunpack.c.l.b16 %v4787
  %v4921 = vunpack.c.l.b16 %v4788
  %v4922 = vunpack.c.l.b16 %v4789
  %v4923 = vunpack.c.l.b16 %v4790
  %v4924 = vunpack.c.l.b16 %v4791
  %v4925 = vunpack.c.l.b16 %v4792
  %v4926 = vunpack.c.l.b16 %v4793
  %v4927 = vunpack.c.l.b16 %v4794
  %v4928 = vunpack.c.l.b16 %v4795
  %v4929 = vunpack.c.l.b16 %v4796
  %v4930 = vunpack.c.l.b16 %v4797
  %v4931 = vunpack.c.l.b16 %v4798
  %v4932 = vunpack.c.l.b16 %v4799
  %v4933 = vunpack.c.l.b16 %v4800
  %v4934 = vunpack.c.l.b16 %v4801
  %v4935 = vunpack.c.l.b16 %v4802
  %v4936 = vunpack.c.l.b16 %v4803
  %v4937 = vunpack.c.l.b16 %v4804
  %v4938 = vunpack.c.l.b16 %v4805
  %v4939 = vunpack.c.l.b16 %v4806
  %v4940 = vunpack.c.l.b16 %v4807
  %v4941 = vunpack.c.l.b16 %v4808
  %v4942 = vunpack.c.l.b16 %v4809
  %v4943 = vunpack.c.l.b16 %v4810
  %v4944 = vpack.c.b16 %v4881, %v4880
  %v4945 = vpack.c.b16 %v4883, %v4882
  %v4946 = vpack.c.b16 %v4885, %v4884
  %v4947 = vpack.c.b16 %v4887, %v4886
  %v4948 = vpack.c.b16 %v4889, %v4888
  %v4949 = vpack.c.b16 %v4891, %v4890
  %v4950 = vpack.c.b16 %v4893, %v4892
  %v4951 = vpack.c.b16 %v4895, %v4894
  %v4952 = vpack.c.b16 %v4897, %v4896
  %v4953 = vpack.c.b16 %v4899, %v4898
  %v4954 = vpack.c.b16 %v4901, %v4900
  %v4955 = vpack.c.b16 %v4903, %v4902
  %v4956 = vpack.c.b16 %v4905, %v4904
  %v4957 = vpack.c.b16 %v4907, %v4906
  %v4958 = vpack.c.b16 %v4909, %v4908
  %v4959 = vpack.c.b16 %v4911, %v4910
  %v4960 = vpack.c.b16 %v4913, %v4912
  %v4961 = vpack.c.b16 %v4915, %v4914
  %v4962 = vpack.c.b16 %v4917, %v4916
  %v4963 = vpack.c.b16 %v4919, %v4918
  %v4964 = vpack.c.b16 %v4921, %v4920
  %v4965 = vpack.c.b16 %v4923, %v4922
  %v4966 = vpack.c.b16 %v4925, %v4924
  %v4967 = vpack.c.b16 %v4927, %v4926
  %v4968 = vpack.c.b16 %v4929, %v4928
  %v4969 = vpack.c.b16 %v4931, %v4930
  %v4970 = vpack.c.b16 %v4933, %v4932
  %v4971 = vpack.c.b16 %v4935, %v4934
  %v4972 = vpack.c.b16 %v4937, %v4936
  %v4973 = vpack.c.b16 %v4939, %v4938
  %v4974 = vpack.c.b16 %v4941, %v4940
  %v4975 = vpack.c.b16 %v4943, %v4942
  %v4981 = vunpack.c.l.b16 %v4811
  %v4982 = vunpack.c.l.b16 %v4812
  %v4983 = vunpack.c.l.b16 %v4813
  %v4984 = vunpack.c.l.b16 %v4814
  %v4985 = vunpack.c.l.b16 %v4815
  %v4986 = vpack.c.b16 %v4982, %v4981
  %v4987 = vpack.c.b16 %v4984, %v4983
  %v4988 = vpack.c.b16 %v4985, %v4985
  %vm4991 = vcmask 293888
  %v4993 = vsel %vm4991, %v4944, 0
  %v4996 = vsel %vm4991, %v4945, 0
  %v4999 = vsel %vm4991, %v4946, 0
  %v5002 = vsel %vm4991, %v4947, 0
  %v5005 = vsel %vm4991, %v4948, 0
  %v5008 = vsel %vm4991, %v4949, 0
  %v5011 = vsel %vm4991, %v4950, 0
  %v5014 = vsel %vm4991, %v4951, 0
  %v5017 = vsel %vm4991, %v4952, 0
  %v5020 = vsel %vm4991, %v4953, 0
  %v5023 = vsel %vm4991, %v4954, 0
  %v5026 = vsel %vm4991, %v4955, 0
  %v5029 = vsel %vm4991, %v4956, 0
  %v5032 = vsel %vm4991, %v4957, 0
  %v5035 = vsel %vm4991, %v4958, 0
  %v5038 = vsel %vm4991, %v4959, 0
  %v5041 = vsel %vm4991, %v4960, 0
  %v5044 = vsel %vm4991, %v4961, 0
  %v5047 = vsel %vm4991, %v4962, 0
  %v5050 = vsel %vm4991, %v4963, 0
  %v5053 = vsel %vm4991, %v4964, 0
  %v5056 = vsel %vm4991, %v4965, 0
  %v5059 = vsel %vm4991, %v4966, 0
  %v5062 = vsel %vm4991, %v4967, 0
  %v5065 = vsel %vm4991, %v4968, 0
  %v5068 = vsel %vm4991, %v4969, 0
  %v5071 = vsel %vm4991, %v4970, 0
  %v5074 = vsel %vm4991, %v4971, 0
  %v5077 = vsel %vm4991, %v4972, 0
  %v5080 = vsel %vm4991, %v4973, 0
  %v5083 = vsel %vm4991, %v4974, 0
  %v5086 = vsel %vm4991, %v4975, 0
  %vm5088 = vcmask 1041408
  %v5090 = vsel %vm5088, %v4988, 0
  %5092 = vmatprep.subr.bf16.mxu0 0
  %5093 = vmatpush1.bf16.msra.mxu0 0
  %5094 = vmatprep.subr.bf16.mxu0 0
  %5095 = vmatpush1.bf16.msra.mxu0 0
  %5096 = vmatprep.subr.bf16.mxu0 0
  %5097 = vmatpush1.bf16.msra.mxu0 0
  %5098 = vmatprep.subr.bf16.mxu0 0
  %5099 = vmatpush1.bf16.msra.mxu0 0
  %5100 = vmatprep.subr.bf16.mxu0 0
  %5101 = vmatpush1.bf16.msra.mxu0 0
  %5102 = vmatprep.subr.bf16.mxu0 0
  %5103 = vmatpush1.bf16.msra.mxu0 %v5090
  %5104 = vmatprep.subr.bf16.mxu0 0
  %5105 = vmatpush1.bf16.msra.mxu0 %v4987
  %5106 = vmatprep.subr.bf16.mxu0 0
  %5107 = vmatpush1.bf16.msra.mxu0 %v4986
  %5108 = vmatprep.subr.bf16.mxu0 0
  %5109 = vmatpush2.bf16.msra.mxu0 0
  %5110 = vmatprep.subr.bf16.mxu0 0
  %5111 = vmatpush2.bf16.msra.mxu0 0
  %5112 = vmatprep.subr.bf16.mxu0 0
  %5113 = vmatpush2.bf16.msra.mxu0 0
  %5114 = vmatprep.subr.bf16.mxu0 0
  %5115 = vmatpush2.bf16.msra.mxu0 0
  %5116 = vmatprep.subr.bf16.mxu0 0
  %5117 = vmatpush2.bf16.msra.mxu0 0
  %5118 = vmatprep.subr.bf16.mxu0 0
  %5119 = vmatpush2.bf16.msra.mxu0 0
  %5120 = vmatprep.subr.bf16.mxu0 0
  %5121 = vmatpush2.bf16.msra.mxu0 0
  %5122 = vmatprep.subr.bf16.mxu0 0
  %5123 = vmatpush2.bf16.msra.mxu0 0
  %5124 = vmatprep.mubr.bf16.mxu0 0
  %5125 = vmatmul.mubr.bf16.gmra.mxu0 %v4993
  %v5126 = vpop.f32.mrf.mxu0
  %v5127 = vadd.f32 0.0, %v5126
  %v5128 = vpop.f32.mrf.mxu0
  %v5129 = vpop.f32.mrf.mxu0
  %v5130 = vadd.f32 0.0, %v5129
  %v5131 = vpop.f32.mrf.mxu0
  %5132 = vmatprep.mubr.bf16.mxu0 0
  %5133 = vmatmul.mubr.bf16.gmra.mxu0 %v4996
  %v5134 = vpop.f32.mrf.mxu0
  %v5135 = vadd.f32 0.0, %v5134
  %v5136 = vpop.f32.mrf.mxu0
  %v5137 = vpop.f32.mrf.mxu0
  %v5138 = vadd.f32 0.0, %v5137
  %v5139 = vpop.f32.mrf.mxu0
  %5140 = vmatprep.mubr.bf16.mxu0 0
  %5141 = vmatmul.mubr.bf16.gmra.mxu0 %v4999
  %v5142 = vpop.f32.mrf.mxu0
  %v5143 = vadd.f32 0.0, %v5142
  %v5144 = vpop.f32.mrf.mxu0
  %v5145 = vpop.f32.mrf.mxu0
  %v5146 = vadd.f32 0.0, %v5145
  %v5147 = vpop.f32.mrf.mxu0
  %5148 = vmatprep.mubr.bf16.mxu0 0
  %5149 = vmatmul.mubr.bf16.gmra.mxu0 %v5002
  %v5150 = vpop.f32.mrf.mxu0
  %v5151 = vadd.f32 0.0, %v5150
  %v5152 = vpop.f32.mrf.mxu0
  %v5153 = vpop.f32.mrf.mxu0
  %v5154 = vadd.f32 0.0, %v5153
  %v5155 = vpop.f32.mrf.mxu0
  %5156 = vmatprep.mubr.bf16.mxu0 0
  %5157 = vmatmul.mubr.bf16.gmra.mxu0 %v5005
  %v5158 = vpop.f32.mrf.mxu0
  %v5159 = vadd.f32 0.0, %v5158
  %v5160 = vpop.f32.mrf.mxu0
  %v5161 = vpop.f32.mrf.mxu0
  %v5162 = vadd.f32 0.0, %v5161
  %v5163 = vpop.f32.mrf.mxu0
  %5164 = vmatprep.mubr.bf16.mxu0 0
  %5165 = vmatmul.mubr.bf16.gmra.mxu0 %v5008
  %v5166 = vpop.f32.mrf.mxu0
  %v5167 = vadd.f32 0.0, %v5166
  %v5168 = vpop.f32.mrf.mxu0
  %v5169 = vpop.f32.mrf.mxu0
  %v5170 = vadd.f32 0.0, %v5169
  %v5171 = vpop.f32.mrf.mxu0
  %5172 = vmatprep.mubr.bf16.mxu0 0
  %5173 = vmatmul.mubr.bf16.gmra.mxu0 %v5011
  %v5174 = vpop.f32.mrf.mxu0
  %v5175 = vadd.f32 0.0, %v5174
  %v5176 = vpop.f32.mrf.mxu0
  %v5177 = vpop.f32.mrf.mxu0
  %v5178 = vadd.f32 0.0, %v5177
  %v5179 = vpop.f32.mrf.mxu0
  %5180 = vmatprep.mubr.bf16.mxu0 0
  %5181 = vmatmul.mubr.bf16.gmra.mxu0 %v5014
  %v5182 = vpop.f32.mrf.mxu0
  %v5183 = vadd.f32 0.0, %v5182
  %v5184 = vpop.f32.mrf.mxu0
  %v5185 = vpop.f32.mrf.mxu0
  %v5186 = vadd.f32 0.0, %v5185
  %v5187 = vpop.f32.mrf.mxu0
  %5188 = vmatprep.mubr.bf16.mxu0 0
  %5189 = vmatmul.mubr.bf16.gmra.mxu0 %v5017
  %v5190 = vpop.f32.mrf.mxu0
  %v5191 = vadd.f32 0.0, %v5190
  %v5192 = vpop.f32.mrf.mxu0
  %v5193 = vpop.f32.mrf.mxu0
  %v5194 = vadd.f32 0.0, %v5193
  %v5195 = vpop.f32.mrf.mxu0
  %5196 = vmatprep.mubr.bf16.mxu0 0
  %5197 = vmatmul.mubr.bf16.gmra.mxu0 %v5020
  %v5198 = vpop.f32.mrf.mxu0
  %v5199 = vadd.f32 0.0, %v5198
  %v5200 = vpop.f32.mrf.mxu0
  %v5201 = vpop.f32.mrf.mxu0
  %v5202 = vadd.f32 0.0, %v5201
  %v5203 = vpop.f32.mrf.mxu0
  %5204 = vmatprep.mubr.bf16.mxu0 0
  %5205 = vmatmul.mubr.bf16.gmra.mxu0 %v5023
  %v5206 = vpop.f32.mrf.mxu0
  %v5207 = vadd.f32 0.0, %v5206
  %v5208 = vpop.f32.mrf.mxu0
  %v5209 = vpop.f32.mrf.mxu0
  %v5210 = vadd.f32 0.0, %v5209
  %v5211 = vpop.f32.mrf.mxu0
  %5212 = vmatprep.mubr.bf16.mxu0 0
  %5213 = vmatmul.mubr.bf16.gmra.mxu0 %v5026
  %v5214 = vpop.f32.mrf.mxu0
  %v5215 = vadd.f32 0.0, %v5214
  %v5216 = vpop.f32.mrf.mxu0
  %v5217 = vpop.f32.mrf.mxu0
  %v5218 = vadd.f32 0.0, %v5217
  %v5219 = vpop.f32.mrf.mxu0
  %5220 = vmatprep.mubr.bf16.mxu0 0
  %5221 = vmatmul.mubr.bf16.gmra.mxu0 %v5029
  %v5222 = vpop.f32.mrf.mxu0
  %v5223 = vadd.f32 0.0, %v5222
  %v5224 = vpop.f32.mrf.mxu0
  %v5225 = vpop.f32.mrf.mxu0
  %v5226 = vadd.f32 0.0, %v5225
  %v5227 = vpop.f32.mrf.mxu0
  %5228 = vmatprep.mubr.bf16.mxu0 0
  %5229 = vmatmul.mubr.bf16.gmra.mxu0 %v5032
  %v5230 = vpop.f32.mrf.mxu0
  %v5231 = vadd.f32 0.0, %v5230
  %v5232 = vpop.f32.mrf.mxu0
  %v5233 = vpop.f32.mrf.mxu0
  %v5234 = vadd.f32 0.0, %v5233
  %v5235 = vpop.f32.mrf.mxu0
  %5236 = vmatprep.mubr.bf16.mxu0 0
  %5237 = vmatmul.mubr.bf16.gmra.mxu0 %v5035
  %v5238 = vpop.f32.mrf.mxu0
  %v5239 = vadd.f32 0.0, %v5238
  %v5240 = vpop.f32.mrf.mxu0
  %v5241 = vpop.f32.mrf.mxu0
  %v5242 = vadd.f32 0.0, %v5241
  %v5243 = vpop.f32.mrf.mxu0
  %5244 = vmatprep.mubr.bf16.mxu0 0
  %5245 = vmatmul.mubr.bf16.gmra.mxu0 %v5038
  %v5246 = vpop.f32.mrf.mxu0
  %v5247 = vadd.f32 0.0, %v5246
  %v5248 = vpop.f32.mrf.mxu0
  %v5249 = vpop.f32.mrf.mxu0
  %v5250 = vadd.f32 0.0, %v5249
  %v5251 = vpop.f32.mrf.mxu0
  %5252 = vmatprep.mubr.bf16.mxu0 0
  %5253 = vmatmul.mubr.bf16.gmra.mxu0 %v5041
  %v5254 = vpop.f32.mrf.mxu0
  %v5255 = vadd.f32 0.0, %v5254
  %v5256 = vpop.f32.mrf.mxu0
  %v5257 = vpop.f32.mrf.mxu0
  %v5258 = vadd.f32 0.0, %v5257
  %v5259 = vpop.f32.mrf.mxu0
  %5260 = vmatprep.mubr.bf16.mxu0 0
  %5261 = vmatmul.mubr.bf16.gmra.mxu0 %v5044
  %v5262 = vpop.f32.mrf.mxu0
  %v5263 = vadd.f32 0.0, %v5262
  %v5264 = vpop.f32.mrf.mxu0
  %v5265 = vpop.f32.mrf.mxu0
  %v5266 = vadd.f32 0.0, %v5265
  %v5267 = vpop.f32.mrf.mxu0
  %5268 = vmatprep.mubr.bf16.mxu0 0
  %5269 = vmatmul.mubr.bf16.gmra.mxu0 %v5047
  %v5270 = vpop.f32.mrf.mxu0
  %v5271 = vadd.f32 0.0, %v5270
  %v5272 = vpop.f32.mrf.mxu0
  %v5273 = vpop.f32.mrf.mxu0
  %v5274 = vadd.f32 0.0, %v5273
  %v5275 = vpop.f32.mrf.mxu0
  %5276 = vmatprep.mubr.bf16.mxu0 0
  %5277 = vmatmul.mubr.bf16.gmra.mxu0 %v5050
  %v5278 = vpop.f32.mrf.mxu0
  %v5279 = vadd.f32 0.0, %v5278
  %v5280 = vpop.f32.mrf.mxu0
  %v5281 = vpop.f32.mrf.mxu0
  %v5282 = vadd.f32 0.0, %v5281
  %v5283 = vpop.f32.mrf.mxu0
  %5284 = vmatprep.mubr.bf16.mxu0 0
  %5285 = vmatmul.mubr.bf16.gmra.mxu0 %v5053
  %v5286 = vpop.f32.mrf.mxu0
  %v5287 = vadd.f32 0.0, %v5286
  %v5288 = vpop.f32.mrf.mxu0
  %v5289 = vpop.f32.mrf.mxu0
  %v5290 = vadd.f32 0.0, %v5289
  %v5291 = vpop.f32.mrf.mxu0
  %5292 = vmatprep.mubr.bf16.mxu0 0
  %5293 = vmatmul.mubr.bf16.gmra.mxu0 %v5056
  %v5294 = vpop.f32.mrf.mxu0
  %v5295 = vadd.f32 0.0, %v5294
  %v5296 = vpop.f32.mrf.mxu0
  %v5297 = vpop.f32.mrf.mxu0
  %v5298 = vadd.f32 0.0, %v5297
  %v5299 = vpop.f32.mrf.mxu0
  %5300 = vmatprep.mubr.bf16.mxu0 0
  %5301 = vmatmul.mubr.bf16.gmra.mxu0 %v5059
  %v5302 = vpop.f32.mrf.mxu0
  %v5303 = vadd.f32 0.0, %v5302
  %v5304 = vpop.f32.mrf.mxu0
  %v5305 = vpop.f32.mrf.mxu0
  %v5306 = vadd.f32 0.0, %v5305
  %v5307 = vpop.f32.mrf.mxu0
  %5308 = vmatprep.mubr.bf16.mxu0 0
  %5309 = vmatmul.mubr.bf16.gmra.mxu0 %v5062
  %v5310 = vpop.f32.mrf.mxu0
  %v5311 = vadd.f32 0.0, %v5310
  %v5312 = vpop.f32.mrf.mxu0
  %v5313 = vpop.f32.mrf.mxu0
  %v5314 = vadd.f32 0.0, %v5313
  %v5315 = vpop.f32.mrf.mxu0
  %5316 = vmatprep.mubr.bf16.mxu0 0
  %5317 = vmatmul.mubr.bf16.gmra.mxu0 %v5065
  %v5318 = vpop.f32.mrf.mxu0
  %v5319 = vadd.f32 0.0, %v5318
  %v5320 = vpop.f32.mrf.mxu0
  %v5321 = vpop.f32.mrf.mxu0
  %v5322 = vadd.f32 0.0, %v5321
  %v5323 = vpop.f32.mrf.mxu0
  %5324 = vmatprep.mubr.bf16.mxu0 0
  %5325 = vmatmul.mubr.bf16.gmra.mxu0 %v5068
  %v5326 = vpop.f32.mrf.mxu0
  %v5327 = vadd.f32 0.0, %v5326
  %v5328 = vpop.f32.mrf.mxu0
  %v5329 = vpop.f32.mrf.mxu0
  %v5330 = vadd.f32 0.0, %v5329
  %v5331 = vpop.f32.mrf.mxu0
  %5332 = vmatprep.mubr.bf16.mxu0 0
  %5333 = vmatmul.mubr.bf16.gmra.mxu0 %v5071
  %v5334 = vpop.f32.mrf.mxu0
  %v5335 = vadd.f32 0.0, %v5334
  %v5336 = vpop.f32.mrf.mxu0
  %v5337 = vpop.f32.mrf.mxu0
  %v5338 = vadd.f32 0.0, %v5337
  %v5339 = vpop.f32.mrf.mxu0
  %5340 = vmatprep.mubr.bf16.mxu0 0
  %5341 = vmatmul.mubr.bf16.gmra.mxu0 %v5074
  %v5342 = vpop.f32.mrf.mxu0
  %v5343 = vadd.f32 0.0, %v5342
  %v5344 = vpop.f32.mrf.mxu0
  %v5345 = vpop.f32.mrf.mxu0
  %v5346 = vadd.f32 0.0, %v5345
  %v5347 = vpop.f32.mrf.mxu0
  %5348 = vmatprep.mubr.bf16.mxu0 0
  %5349 = vmatmul.mubr.bf16.gmra.mxu0 %v5077
  %v5350 = vpop.f32.mrf.mxu0
  %v5351 = vadd.f32 0.0, %v5350
  %v5352 = vpop.f32.mrf.mxu0
  %v5353 = vpop.f32.mrf.mxu0
  %v5354 = vadd.f32 0.0, %v5353
  %v5355 = vpop.f32.mrf.mxu0
  %5356 = vmatprep.mubr.bf16.mxu0 0
  %5357 = vmatmul.mubr.bf16.gmra.mxu0 %v5080
  %v5358 = vpop.f32.mrf.mxu0
  %v5359 = vadd.f32 0.0, %v5358
  %v5360 = vpop.f32.mrf.mxu0
  %v5361 = vpop.f32.mrf.mxu0
  %v5362 = vadd.f32 0.0, %v5361
  %v5363 = vpop.f32.mrf.mxu0
  %5364 = vmatprep.mubr.bf16.mxu0 0
  %5365 = vmatmul.mubr.bf16.gmra.mxu0 %v5083
  %v5366 = vpop.f32.mrf.mxu0
  %v5367 = vadd.f32 0.0, %v5366
  %v5368 = vpop.f32.mrf.mxu0
  %v5369 = vpop.f32.mrf.mxu0
  %v5370 = vadd.f32 0.0, %v5369
  %v5371 = vpop.f32.mrf.mxu0
  %5372 = vmatprep.mubr.bf16.mxu0 0
  %5373 = vmatmul.mubr.bf16.gmra.mxu0 %v5086
  %v5374 = vpop.f32.mrf.mxu0
  %v5375 = vadd.f32 0.0, %v5374
  %v5376 = vpop.f32.mrf.mxu0
  %v5377 = vpop.f32.mrf.mxu0
  %v5378 = vadd.f32 0.0, %v5377
  %v5379 = vpop.f32.mrf.mxu0
  %5380 = vdwg.mxu0
  %vm5381 = vcmask 130048
  %v5382 = vsel %vm5381, %v5127, 0.0
  %v5383 = vsel %vm5381, %v5130, 0.0
  %v5384 = vadd.f32 %v5382, %v5383
  %v5385 = vsel %vm5381, %v5135, 0.0
  %v5386 = vadd.f32 %v5384, %v5385
  %v5387 = vsel %vm5381, %v5138, 0.0
  %v5388 = vadd.f32 %v5386, %v5387
  %v5389 = vsel %vm5381, %v5143, 0.0
  %v5390 = vadd.f32 %v5388, %v5389
  %v5391 = vsel %vm5381, %v5146, 0.0
  %v5392 = vadd.f32 %v5390, %v5391
  %v5393 = vsel %vm5381, %v5151, 0.0
  %v5394 = vadd.f32 %v5392, %v5393
  %v5395 = vsel %vm5381, %v5154, 0.0
  %v5396 = vadd.f32 %v5394, %v5395
  %v5397 = vsel %vm5381, %v5159, 0.0
  %v5398 = vadd.f32 %v5396, %v5397
  %v5399 = vsel %vm5381, %v5162, 0.0
  %v5400 = vadd.f32 %v5398, %v5399
  %v5401 = vsel %vm5381, %v5167, 0.0
  %v5402 = vadd.f32 %v5400, %v5401
  %v5403 = vsel %vm5381, %v5170, 0.0
  %v5404 = vadd.f32 %v5402, %v5403
  %v5405 = vsel %vm5381, %v5175, 0.0
  %v5406 = vadd.f32 %v5404, %v5405
  %v5407 = vsel %vm5381, %v5178, 0.0
  %v5408 = vadd.f32 %v5406, %v5407
  %v5409 = vsel %vm5381, %v5183, 0.0
  %v5410 = vadd.f32 %v5408, %v5409
  %v5411 = vsel %vm5381, %v5186, 0.0
  %v5412 = vadd.f32 %v5410, %v5411
  %v5413 = vsel %vm5381, %v5191, 0.0
  %v5414 = vadd.f32 %v5412, %v5413
  %v5415 = vsel %vm5381, %v5194, 0.0
  %v5416 = vadd.f32 %v5414, %v5415
  %v5417 = vsel %vm5381, %v5199, 0.0
  %v5418 = vadd.f32 %v5416, %v5417
  %v5419 = vsel %vm5381, %v5202, 0.0
  %v5420 = vadd.f32 %v5418, %v5419
  %v5421 = vsel %vm5381, %v5207, 0.0
  %v5422 = vadd.f32 %v5420, %v5421
  %v5423 = vsel %vm5381, %v5210, 0.0
  %v5424 = vadd.f32 %v5422, %v5423
  %v5425 = vsel %vm5381, %v5215, 0.0
  %v5426 = vadd.f32 %v5424, %v5425
  %v5427 = vsel %vm5381, %v5218, 0.0
  %v5428 = vadd.f32 %v5426, %v5427
  %v5429 = vsel %vm5381, %v5223, 0.0
  %v5430 = vadd.f32 %v5428, %v5429
  %v5431 = vsel %vm5381, %v5226, 0.0
  %v5432 = vadd.f32 %v5430, %v5431
  %v5433 = vsel %vm5381, %v5231, 0.0
  %v5434 = vadd.f32 %v5432, %v5433
  %v5435 = vsel %vm5381, %v5234, 0.0
  %v5436 = vadd.f32 %v5434, %v5435
  %v5437 = vsel %vm5381, %v5239, 0.0
  %v5438 = vadd.f32 %v5436, %v5437
  %v5439 = vsel %vm5381, %v5242, 0.0
  %v5440 = vadd.f32 %v5438, %v5439
  %v5441 = vsel %vm5381, %v5247, 0.0
  %v5442 = vadd.f32 %v5440, %v5441
  %v5443 = vsel %vm5381, %v5250, 0.0
  %v5444 = vadd.f32 %v5442, %v5443
  %v5445 = vsel %vm5381, %v5255, 0.0
  %v5446 = vadd.f32 %v5444, %v5445
  %v5447 = vsel %vm5381, %v5258, 0.0
  %v5448 = vadd.f32 %v5446, %v5447
  %v5449 = vsel %vm5381, %v5263, 0.0
  %v5450 = vadd.f32 %v5448, %v5449
  %v5451 = vsel %vm5381, %v5266, 0.0
  %v5452 = vadd.f32 %v5450, %v5451
  %v5453 = vsel %vm5381, %v5271, 0.0
  %v5454 = vadd.f32 %v5452, %v5453
  %v5455 = vsel %vm5381, %v5274, 0.0
  %v5456 = vadd.f32 %v5454, %v5455
  %v5457 = vsel %vm5381, %v5279, 0.0
  %v5458 = vadd.f32 %v5456, %v5457
  %v5459 = vsel %vm5381, %v5282, 0.0
  %v5460 = vadd.f32 %v5458, %v5459
  %v5461 = vsel %vm5381, %v5287, 0.0
  %v5462 = vadd.f32 %v5460, %v5461
  %v5463 = vsel %vm5381, %v5290, 0.0
  %v5464 = vadd.f32 %v5462, %v5463
  %v5465 = vsel %vm5381, %v5295, 0.0
  %v5466 = vadd.f32 %v5464, %v5465
  %v5467 = vsel %vm5381, %v5298, 0.0
  %v5468 = vadd.f32 %v5466, %v5467
  %v5469 = vsel %vm5381, %v5303, 0.0
  %v5470 = vadd.f32 %v5468, %v5469
  %v5471 = vsel %vm5381, %v5306, 0.0
  %v5472 = vadd.f32 %v5470, %v5471
  %v5473 = vsel %vm5381, %v5311, 0.0
  %v5474 = vadd.f32 %v5472, %v5473
  %v5475 = vsel %vm5381, %v5314, 0.0
  %v5476 = vadd.f32 %v5474, %v5475
  %v5477 = vsel %vm5381, %v5319, 0.0
  %v5478 = vadd.f32 %v5476, %v5477
  %v5479 = vsel %vm5381, %v5322, 0.0
  %v5480 = vadd.f32 %v5478, %v5479
  %v5481 = vsel %vm5381, %v5327, 0.0
  %v5482 = vadd.f32 %v5480, %v5481
  %v5483 = vsel %vm5381, %v5330, 0.0
  %v5484 = vadd.f32 %v5482, %v5483
  %v5485 = vsel %vm5381, %v5335, 0.0
  %v5486 = vadd.f32 %v5484, %v5485
  %v5487 = vsel %vm5381, %v5338, 0.0
  %v5488 = vadd.f32 %v5486, %v5487
  %v5489 = vsel %vm5381, %v5343, 0.0
  %v5490 = vadd.f32 %v5488, %v5489
  %v5491 = vsel %vm5381, %v5346, 0.0
  %v5492 = vadd.f32 %v5490, %v5491
  %v5493 = vsel %vm5381, %v5351, 0.0
  %v5494 = vadd.f32 %v5492, %v5493
  %v5495 = vsel %vm5381, %v5354, 0.0
  %v5496 = vadd.f32 %v5494, %v5495
  %v5497 = vsel %vm5381, %v5359, 0.0
  %v5498 = vadd.f32 %v5496, %v5497
  %v5499 = vsel %vm5381, %v5362, 0.0
  %v5500 = vadd.f32 %v5498, %v5499
  %v5501 = vsel %vm5381, %v5367, 0.0
  %v5502 = vadd.f32 %v5500, %v5501
  %v5503 = vsel %vm5381, %v5370, 0.0
  %v5504 = vadd.f32 %v5502, %v5503
  %v5505 = vsel %vm5381, %v5375, 0.0
  %v5506 = vadd.f32 %v5504, %v5505
  %v5507 = vsel %vm5381, %v5378, 0.0
  %v5508 = vadd.f32 %v5506, %v5507
  %v5509 = vrot.slane %v5508, 4
  %v5510 = vadd.f32 %v5508, %v5509
  %v5511 = vrot.slane %v5510, 2
  %v5512 = vadd.f32 %v5510, %v5511
  %v5513 = vrot.slane %v5512, 1
  %v5514 = vadd.f32 %v5512, %v5513
  %v5515 = vmul.f32 %v5514, 0.001953125
  %v5516 = vmul.f32 %v5127, %v5127
  %v5517 = vmul.f32 %v5130, %v5130
  %v5518 = vmul.f32 %v5135, %v5135
  %v5519 = vmul.f32 %v5138, %v5138
  %v5520 = vmul.f32 %v5143, %v5143
  %v5521 = vmul.f32 %v5146, %v5146
  %v5522 = vmul.f32 %v5151, %v5151
  %v5523 = vmul.f32 %v5154, %v5154
  %v5524 = vmul.f32 %v5159, %v5159
  %v5525 = vmul.f32 %v5162, %v5162
  %v5526 = vmul.f32 %v5167, %v5167
  %v5527 = vmul.f32 %v5170, %v5170
  %v5528 = vmul.f32 %v5175, %v5175
  %v5529 = vmul.f32 %v5178, %v5178
  %v5530 = vmul.f32 %v5183, %v5183
  %v5531 = vmul.f32 %v5186, %v5186
  %v5532 = vmul.f32 %v5191, %v5191
  %v5533 = vmul.f32 %v5194, %v5194
  %v5534 = vmul.f32 %v5199, %v5199
  %v5535 = vmul.f32 %v5202, %v5202
  %v5536 = vmul.f32 %v5207, %v5207
  %v5537 = vmul.f32 %v5210, %v5210
  %v5538 = vmul.f32 %v5215, %v5215
  %v5539 = vmul.f32 %v5218, %v5218
  %v5540 = vmul.f32 %v5223, %v5223
  %v5541 = vmul.f32 %v5226, %v5226
  %v5542 = vmul.f32 %v5231, %v5231
  %v5543 = vmul.f32 %v5234, %v5234
  %v5544 = vmul.f32 %v5239, %v5239
  %v5545 = vmul.f32 %v5242, %v5242
  %v5546 = vmul.f32 %v5247, %v5247
  %v5547 = vmul.f32 %v5250, %v5250
  %v5548 = vmul.f32 %v5255, %v5255
  %v5549 = vmul.f32 %v5258, %v5258
  %v5550 = vmul.f32 %v5263, %v5263
  %v5551 = vmul.f32 %v5266, %v5266
  %v5552 = vmul.f32 %v5271, %v5271
  %v5553 = vmul.f32 %v5274, %v5274
  %v5554 = vmul.f32 %v5279, %v5279
  %v5555 = vmul.f32 %v5282, %v5282
  %v5556 = vmul.f32 %v5287, %v5287
  %v5557 = vmul.f32 %v5290, %v5290
  %v5558 = vmul.f32 %v5295, %v5295
  %v5559 = vmul.f32 %v5298, %v5298
  %v5560 = vmul.f32 %v5303, %v5303
  %v5561 = vmul.f32 %v5306, %v5306
  %v5562 = vmul.f32 %v5311, %v5311
  %v5563 = vmul.f32 %v5314, %v5314
  %v5564 = vmul.f32 %v5319, %v5319
  %v5565 = vmul.f32 %v5322, %v5322
  %v5566 = vmul.f32 %v5327, %v5327
  %v5567 = vmul.f32 %v5330, %v5330
  %v5568 = vmul.f32 %v5335, %v5335
  %v5569 = vmul.f32 %v5338, %v5338
  %v5570 = vmul.f32 %v5343, %v5343
  %v5571 = vmul.f32 %v5346, %v5346
  %v5572 = vmul.f32 %v5351, %v5351
  %v5573 = vmul.f32 %v5354, %v5354
  %v5574 = vmul.f32 %v5359, %v5359
  %v5575 = vmul.f32 %v5362, %v5362
  %v5576 = vmul.f32 %v5367, %v5367
  %v5577 = vmul.f32 %v5370, %v5370
  %v5578 = vmul.f32 %v5375, %v5375
  %v5579 = vmul.f32 %v5378, %v5378
  %v5580 = vsel %vm5381, %v5516, 0.0
  %v5581 = vsel %vm5381, %v5517, 0.0
  %v5582 = vadd.f32 %v5580, %v5581
  %v5583 = vsel %vm5381, %v5518, 0.0
  %v5584 = vadd.f32 %v5582, %v5583
  %v5585 = vsel %vm5381, %v5519, 0.0
  %v5586 = vadd.f32 %v5584, %v5585
  %v5587 = vsel %vm5381, %v5520, 0.0
  %v5588 = vadd.f32 %v5586, %v5587
  %v5589 = vsel %vm5381, %v5521, 0.0
  %v5590 = vadd.f32 %v5588, %v5589
  %v5591 = vsel %vm5381, %v5522, 0.0
  %v5592 = vadd.f32 %v5590, %v5591
  %v5593 = vsel %vm5381, %v5523, 0.0
  %v5594 = vadd.f32 %v5592, %v5593
  %v5595 = vsel %vm5381, %v5524, 0.0
  %v5596 = vadd.f32 %v5594, %v5595
  %v5597 = vsel %vm5381, %v5525, 0.0
  %v5598 = vadd.f32 %v5596, %v5597
  %v5599 = vsel %vm5381, %v5526, 0.0
  %v5600 = vadd.f32 %v5598, %v5599
  %v5601 = vsel %vm5381, %v5527, 0.0
  %v5602 = vadd.f32 %v5600, %v5601
  %v5603 = vsel %vm5381, %v5528, 0.0
  %v5604 = vadd.f32 %v5602, %v5603
  %v5605 = vsel %vm5381, %v5529, 0.0
  %v5606 = vadd.f32 %v5604, %v5605
  %v5607 = vsel %vm5381, %v5530, 0.0
  %v5608 = vadd.f32 %v5606, %v5607
  %v5609 = vsel %vm5381, %v5531, 0.0
  %v5610 = vadd.f32 %v5608, %v5609
  %v5611 = vsel %vm5381, %v5532, 0.0
  %v5612 = vadd.f32 %v5610, %v5611
  %v5613 = vsel %vm5381, %v5533, 0.0
  %v5614 = vadd.f32 %v5612, %v5613
  %v5615 = vsel %vm5381, %v5534, 0.0
  %v5616 = vadd.f32 %v5614, %v5615
  %v5617 = vsel %vm5381, %v5535, 0.0
  %v5618 = vadd.f32 %v5616, %v5617
  %v5619 = vsel %vm5381, %v5536, 0.0
  %v5620 = vadd.f32 %v5618, %v5619
  %v5621 = vsel %vm5381, %v5537, 0.0
  %v5622 = vadd.f32 %v5620, %v5621
  %v5623 = vsel %vm5381, %v5538, 0.0
  %v5624 = vadd.f32 %v5622, %v5623
  %v5625 = vsel %vm5381, %v5539, 0.0
  %v5626 = vadd.f32 %v5624, %v5625
  %v5627 = vsel %vm5381, %v5540, 0.0
  %v5628 = vadd.f32 %v5626, %v5627
  %v5629 = vsel %vm5381, %v5541, 0.0
  %v5630 = vadd.f32 %v5628, %v5629
  %v5631 = vsel %vm5381, %v5542, 0.0
  %v5632 = vadd.f32 %v5630, %v5631
  %v5633 = vsel %vm5381, %v5543, 0.0
  %v5634 = vadd.f32 %v5632, %v5633
  %v5635 = vsel %vm5381, %v5544, 0.0
  %v5636 = vadd.f32 %v5634, %v5635
  %v5637 = vsel %vm5381, %v5545, 0.0
  %v5638 = vadd.f32 %v5636, %v5637
  %v5639 = vsel %vm5381, %v5546, 0.0
  %v5640 = vadd.f32 %v5638, %v5639
  %v5641 = vsel %vm5381, %v5547, 0.0
  %v5642 = vadd.f32 %v5640, %v5641
  %v5643 = vsel %vm5381, %v5548, 0.0
  %v5644 = vadd.f32 %v5642, %v5643
  %v5645 = vsel %vm5381, %v5549, 0.0
  %v5646 = vadd.f32 %v5644, %v5645
  %v5647 = vsel %vm5381, %v5550, 0.0
  %v5648 = vadd.f32 %v5646, %v5647
  %v5649 = vsel %vm5381, %v5551, 0.0
  %v5650 = vadd.f32 %v5648, %v5649
  %v5651 = vsel %vm5381, %v5552, 0.0
  %v5652 = vadd.f32 %v5650, %v5651
  %v5653 = vsel %vm5381, %v5553, 0.0
  %v5654 = vadd.f32 %v5652, %v5653
  %v5655 = vsel %vm5381, %v5554, 0.0
  %v5656 = vadd.f32 %v5654, %v5655
  %v5657 = vsel %vm5381, %v5555, 0.0
  %v5658 = vadd.f32 %v5656, %v5657
  %v5659 = vsel %vm5381, %v5556, 0.0
  %v5660 = vadd.f32 %v5658, %v5659
  %v5661 = vsel %vm5381, %v5557, 0.0
  %v5662 = vadd.f32 %v5660, %v5661
  %v5663 = vsel %vm5381, %v5558, 0.0
  %v5664 = vadd.f32 %v5662, %v5663
  %v5665 = vsel %vm5381, %v5559, 0.0
  %v5666 = vadd.f32 %v5664, %v5665
  %v5667 = vsel %vm5381, %v5560, 0.0
  %v5668 = vadd.f32 %v5666, %v5667
  %v5669 = vsel %vm5381, %v5561, 0.0
  %v5670 = vadd.f32 %v5668, %v5669
  %v5671 = vsel %vm5381, %v5562, 0.0
  %v5672 = vadd.f32 %v5670, %v5671
  %v5673 = vsel %vm5381, %v5563, 0.0
  %v5674 = vadd.f32 %v5672, %v5673
  %v5675 = vsel %vm5381, %v5564, 0.0
  %v5676 = vadd.f32 %v5674, %v5675
  %v5677 = vsel %vm5381, %v5565, 0.0
  %v5678 = vadd.f32 %v5676, %v5677
  %v5679 = vsel %vm5381, %v5566, 0.0
  %v5680 = vadd.f32 %v5678, %v5679
  %v5681 = vsel %vm5381, %v5567, 0.0
  %v5682 = vadd.f32 %v5680, %v5681
  %v5683 = vsel %vm5381, %v5568, 0.0
  %v5684 = vadd.f32 %v5682, %v5683
  %v5685 = vsel %vm5381, %v5569, 0.0
  %v5686 = vadd.f32 %v5684, %v5685
  %v5687 = vsel %vm5381, %v5570, 0.0
  %v5688 = vadd.f32 %v5686, %v5687
  %v5689 = vsel %vm5381, %v5571, 0.0
  %v5690 = vadd.f32 %v5688, %v5689
  %v5691 = vsel %vm5381, %v5572, 0.0
  %v5692 = vadd.f32 %v5690, %v5691
  %v5693 = vsel %vm5381, %v5573, 0.0
  %v5694 = vadd.f32 %v5692, %v5693
  %v5695 = vsel %vm5381, %v5574, 0.0
  %v5696 = vadd.f32 %v5694, %v5695
  %v5697 = vsel %vm5381, %v5575, 0.0
  %v5698 = vadd.f32 %v5696, %v5697
  %v5699 = vsel %vm5381, %v5576, 0.0
  %v5700 = vadd.f32 %v5698, %v5699
  %v5701 = vsel %vm5381, %v5577, 0.0
  %v5702 = vadd.f32 %v5700, %v5701
  %v5703 = vsel %vm5381, %v5578, 0.0
  %v5704 = vadd.f32 %v5702, %v5703
  %v5705 = vsel %vm5381, %v5579, 0.0
  %v5706 = vadd.f32 %v5704, %v5705
  %v5707 = vrot.slane %v5706, 4
  %v5708 = vadd.f32 %v5706, %v5707
  %v5709 = vrot.slane %v5708, 2
  %v5710 = vadd.f32 %v5708, %v5709
  %v5711 = vrot.slane %v5710, 1
  %v5712 = vadd.f32 %v5710, %v5711
  %v5713 = vmul.f32 %v5712, 0.001953125
  %v5714 = vmul.f32 %v5515, %v5515
  %v5715 = vsub.f32 %v5713, %v5714
  %v5716 = vmax.f32 %v5715, 0.0
  %v5717 = vsub.f32 %v5127, %v5515
  %v5718 = vsub.f32 %v5130, %v5515
  %v5719 = vsub.f32 %v5135, %v5515
  %v5720 = vsub.f32 %v5138, %v5515
  %v5721 = vsub.f32 %v5143, %v5515
  %v5722 = vsub.f32 %v5146, %v5515
  %v5723 = vsub.f32 %v5151, %v5515
  %v5724 = vsub.f32 %v5154, %v5515
  %v5725 = vsub.f32 %v5159, %v5515
  %v5726 = vsub.f32 %v5162, %v5515
  %v5727 = vsub.f32 %v5167, %v5515
  %v5728 = vsub.f32 %v5170, %v5515
  %v5729 = vsub.f32 %v5175, %v5515
  %v5730 = vsub.f32 %v5178, %v5515
  %v5731 = vsub.f32 %v5183, %v5515
  %v5732 = vsub.f32 %v5186, %v5515
  %v5733 = vsub.f32 %v5191, %v5515
  %v5734 = vsub.f32 %v5194, %v5515
  %v5735 = vsub.f32 %v5199, %v5515
  %v5736 = vsub.f32 %v5202, %v5515
  %v5737 = vsub.f32 %v5207, %v5515
  %v5738 = vsub.f32 %v5210, %v5515
  %v5739 = vsub.f32 %v5215, %v5515
  %v5740 = vsub.f32 %v5218, %v5515
  %v5741 = vsub.f32 %v5223, %v5515
  %v5742 = vsub.f32 %v5226, %v5515
  %v5743 = vsub.f32 %v5231, %v5515
  %v5744 = vsub.f32 %v5234, %v5515
  %v5745 = vsub.f32 %v5239, %v5515
  %v5746 = vsub.f32 %v5242, %v5515
  %v5747 = vsub.f32 %v5247, %v5515
  %v5748 = vsub.f32 %v5250, %v5515
  %v5749 = vsub.f32 %v5255, %v5515
  %v5750 = vsub.f32 %v5258, %v5515
  %v5751 = vsub.f32 %v5263, %v5515
  %v5752 = vsub.f32 %v5266, %v5515
  %v5753 = vsub.f32 %v5271, %v5515
  %v5754 = vsub.f32 %v5274, %v5515
  %v5755 = vsub.f32 %v5279, %v5515
  %v5756 = vsub.f32 %v5282, %v5515
  %v5757 = vsub.f32 %v5287, %v5515
  %v5758 = vsub.f32 %v5290, %v5515
  %v5759 = vsub.f32 %v5295, %v5515
  %v5760 = vsub.f32 %v5298, %v5515
  %v5761 = vsub.f32 %v5303, %v5515
  %v5762 = vsub.f32 %v5306, %v5515
  %v5763 = vsub.f32 %v5311, %v5515
  %v5764 = vsub.f32 %v5314, %v5515
  %v5765 = vsub.f32 %v5319, %v5515
  %v5766 = vsub.f32 %v5322, %v5515
  %v5767 = vsub.f32 %v5327, %v5515
  %v5768 = vsub.f32 %v5330, %v5515
  %v5769 = vsub.f32 %v5335, %v5515
  %v5770 = vsub.f32 %v5338, %v5515
  %v5771 = vsub.f32 %v5343, %v5515
  %v5772 = vsub.f32 %v5346, %v5515
  %v5773 = vsub.f32 %v5351, %v5515
  %v5774 = vsub.f32 %v5354, %v5515
  %v5775 = vsub.f32 %v5359, %v5515
  %v5776 = vsub.f32 %v5362, %v5515
  %v5777 = vsub.f32 %v5367, %v5515
  %v5778 = vsub.f32 %v5370, %v5515
  %v5779 = vsub.f32 %v5375, %v5515
  %v5780 = vsub.f32 %v5378, %v5515
  %v5781 = vadd.f32 %v5716, 1e-05
  %v5782 = vrsqrt.pop %v5781
  %v5783 = vmul.f32 %v5717, %v5782
  %v5784 = vmul.f32 %v5718, %v5782
  %v5785 = vmul.f32 %v5719, %v5782
  %v5786 = vmul.f32 %v5720, %v5782
  %v5787 = vmul.f32 %v5721, %v5782
  %v5788 = vmul.f32 %v5722, %v5782
  %v5789 = vmul.f32 %v5723, %v5782
  %v5790 = vmul.f32 %v5724, %v5782
  %v5791 = vmul.f32 %v5725, %v5782
  %v5792 = vmul.f32 %v5726, %v5782
  %v5793 = vmul.f32 %v5727, %v5782
  %v5794 = vmul.f32 %v5728, %v5782
  %v5795 = vmul.f32 %v5729, %v5782
  %v5796 = vmul.f32 %v5730, %v5782
  %v5797 = vmul.f32 %v5731, %v5782
  %v5798 = vmul.f32 %v5732, %v5782
  %v5799 = vmul.f32 %v5733, %v5782
  %v5800 = vmul.f32 %v5734, %v5782
  %v5801 = vmul.f32 %v5735, %v5782
  %v5802 = vmul.f32 %v5736, %v5782
  %v5803 = vmul.f32 %v5737, %v5782
  %v5804 = vmul.f32 %v5738, %v5782
  %v5805 = vmul.f32 %v5739, %v5782
  %v5806 = vmul.f32 %v5740, %v5782
  %v5807 = vmul.f32 %v5741, %v5782
  %v5808 = vmul.f32 %v5742, %v5782
  %v5809 = vmul.f32 %v5743, %v5782
  %v5810 = vmul.f32 %v5744, %v5782
  %v5811 = vmul.f32 %v5745, %v5782
  %v5812 = vmul.f32 %v5746, %v5782
  %v5813 = vmul.f32 %v5747, %v5782
  %v5814 = vmul.f32 %v5748, %v5782
  %v5815 = vmul.f32 %v5749, %v5782
  %v5816 = vmul.f32 %v5750, %v5782
  %v5817 = vmul.f32 %v5751, %v5782
  %v5818 = vmul.f32 %v5752, %v5782
  %v5819 = vmul.f32 %v5753, %v5782
  %v5820 = vmul.f32 %v5754, %v5782
  %v5821 = vmul.f32 %v5755, %v5782
  %v5822 = vmul.f32 %v5756, %v5782
  %v5823 = vmul.f32 %v5757, %v5782
  %v5824 = vmul.f32 %v5758, %v5782
  %v5825 = vmul.f32 %v5759, %v5782
  %v5826 = vmul.f32 %v5760, %v5782
  %v5827 = vmul.f32 %v5761, %v5782
  %v5828 = vmul.f32 %v5762, %v5782
  %v5829 = vmul.f32 %v5763, %v5782
  %v5830 = vmul.f32 %v5764, %v5782
  %v5831 = vmul.f32 %v5765, %v5782
  %v5832 = vmul.f32 %v5766, %v5782
  %v5833 = vmul.f32 %v5767, %v5782
  %v5834 = vmul.f32 %v5768, %v5782
  %v5835 = vmul.f32 %v5769, %v5782
  %v5836 = vmul.f32 %v5770, %v5782
  %v5837 = vmul.f32 %v5771, %v5782
  %v5838 = vmul.f32 %v5772, %v5782
  %v5839 = vmul.f32 %v5773, %v5782
  %v5840 = vmul.f32 %v5774, %v5782
  %v5841 = vmul.f32 %v5775, %v5782
  %v5842 = vmul.f32 %v5776, %v5782
  %v5843 = vmul.f32 %v5777, %v5782
  %v5844 = vmul.f32 %v5778, %v5782
  %v5845 = vmul.f32 %v5779, %v5782
  %v5846 = vmul.f32 %v5780, %v5782
  %v5847 = vld [vmem:[%s2] sm:$0x1]
  %v5849 = vlaneseq
  %v5850 = vshrl.u32 %v5849, 7
  %v5851 = vsub.s32 0, %v5850
  %v5852 = vrot.slane %v5847, %v5851
  %v5854 = vmul.f32 %v5783, %v5852
  %v5855 = vmul.f32 %v5784, %v5852
  %v5856 = vmul.f32 %v5785, %v5852
  %v5857 = vmul.f32 %v5786, %v5852
  %v5858 = vmul.f32 %v5787, %v5852
  %v5859 = vmul.f32 %v5788, %v5852
  %v5860 = vmul.f32 %v5789, %v5852
  %v5861 = vmul.f32 %v5790, %v5852
  %v5862 = vmul.f32 %v5791, %v5852
  %v5863 = vmul.f32 %v5792, %v5852
  %v5864 = vmul.f32 %v5793, %v5852
  %v5865 = vmul.f32 %v5794, %v5852
  %v5866 = vmul.f32 %v5795, %v5852
  %v5867 = vmul.f32 %v5796, %v5852
  %v5868 = vmul.f32 %v5797, %v5852
  %v5869 = vmul.f32 %v5798, %v5852
  %v5870 = vmul.f32 %v5799, %v5852
  %v5871 = vmul.f32 %v5800, %v5852
  %v5872 = vmul.f32 %v5801, %v5852
  %v5873 = vmul.f32 %v5802, %v5852
  %v5874 = vmul.f32 %v5803, %v5852
  %v5875 = vmul.f32 %v5804, %v5852
  %v5876 = vmul.f32 %v5805, %v5852
  %v5877 = vmul.f32 %v5806, %v5852
  %v5878 = vmul.f32 %v5807, %v5852
  %v5879 = vmul.f32 %v5808, %v5852
  %v5880 = vmul.f32 %v5809, %v5852
  %v5881 = vmul.f32 %v5810, %v5852
  %v5882 = vmul.f32 %v5811, %v5852
  %v5883 = vmul.f32 %v5812, %v5852
  %v5884 = vmul.f32 %v5813, %v5852
  %v5885 = vmul.f32 %v5814, %v5852
  %v5886 = vmul.f32 %v5815, %v5852
  %v5887 = vmul.f32 %v5816, %v5852
  %v5888 = vmul.f32 %v5817, %v5852
  %v5889 = vmul.f32 %v5818, %v5852
  %v5890 = vmul.f32 %v5819, %v5852
  %v5891 = vmul.f32 %v5820, %v5852
  %v5892 = vmul.f32 %v5821, %v5852
  %v5893 = vmul.f32 %v5822, %v5852
  %v5894 = vmul.f32 %v5823, %v5852
  %v5895 = vmul.f32 %v5824, %v5852
  %v5896 = vmul.f32 %v5825, %v5852
  %v5897 = vmul.f32 %v5826, %v5852
  %v5898 = vmul.f32 %v5827, %v5852
  %v5899 = vmul.f32 %v5828, %v5852
  %v5900 = vmul.f32 %v5829, %v5852
  %v5901 = vmul.f32 %v5830, %v5852
  %v5902 = vmul.f32 %v5831, %v5852
  %v5903 = vmul.f32 %v5832, %v5852
  %v5904 = vmul.f32 %v5833, %v5852
  %v5905 = vmul.f32 %v5834, %v5852
  %v5906 = vmul.f32 %v5835, %v5852
  %v5907 = vmul.f32 %v5836, %v5852
  %v5908 = vmul.f32 %v5837, %v5852
  %v5909 = vmul.f32 %v5838, %v5852
  %v5910 = vmul.f32 %v5839, %v5852
  %v5911 = vmul.f32 %v5840, %v5852
  %v5912 = vmul.f32 %v5841, %v5852
  %v5913 = vmul.f32 %v5842, %v5852
  %v5914 = vmul.f32 %v5843, %v5852
  %v5915 = vmul.f32 %v5844, %v5852
  %v5916 = vmul.f32 %v5845, %v5852
  %v5917 = vmul.f32 %v5846, %v5852
  %v5918 = vld [vmem:[%s3] sm:$0x1]
  %v5920 = vlaneseq
  %v5921 = vshrl.u32 %v5920, 7
  %v5922 = vsub.s32 0, %v5921
  %v5923 = vrot.slane %v5918, %v5922
  %v5925 = vadd.f32 %v5854, %v5923
  %v5926 = vadd.f32 %v5855, %v5923
  %v5927 = vadd.f32 %v5856, %v5923
  %v5928 = vadd.f32 %v5857, %v5923
  %v5929 = vadd.f32 %v5858, %v5923
  %v5930 = vadd.f32 %v5859, %v5923
  %v5931 = vadd.f32 %v5860, %v5923
  %v5932 = vadd.f32 %v5861, %v5923
  %v5933 = vadd.f32 %v5862, %v5923
  %v5934 = vadd.f32 %v5863, %v5923
  %v5935 = vadd.f32 %v5864, %v5923
  %v5936 = vadd.f32 %v5865, %v5923
  %v5937 = vadd.f32 %v5866, %v5923
  %v5938 = vadd.f32 %v5867, %v5923
  %v5939 = vadd.f32 %v5868, %v5923
  %v5940 = vadd.f32 %v5869, %v5923
  %v5941 = vadd.f32 %v5870, %v5923
  %v5942 = vadd.f32 %v5871, %v5923
  %v5943 = vadd.f32 %v5872, %v5923
  %v5944 = vadd.f32 %v5873, %v5923
  %v5945 = vadd.f32 %v5874, %v5923
  %v5946 = vadd.f32 %v5875, %v5923
  %v5947 = vadd.f32 %v5876, %v5923
  %v5948 = vadd.f32 %v5877, %v5923
  %v5949 = vadd.f32 %v5878, %v5923
  %v5950 = vadd.f32 %v5879, %v5923
  %v5951 = vadd.f32 %v5880, %v5923
  %v5952 = vadd.f32 %v5881, %v5923
  %v5953 = vadd.f32 %v5882, %v5923
  %v5954 = vadd.f32 %v5883, %v5923
  %v5955 = vadd.f32 %v5884, %v5923
  %v5956 = vadd.f32 %v5885, %v5923
  %v5957 = vadd.f32 %v5886, %v5923
  %v5958 = vadd.f32 %v5887, %v5923
  %v5959 = vadd.f32 %v5888, %v5923
  %v5960 = vadd.f32 %v5889, %v5923
  %v5961 = vadd.f32 %v5890, %v5923
  %v5962 = vadd.f32 %v5891, %v5923
  %v5963 = vadd.f32 %v5892, %v5923
  %v5964 = vadd.f32 %v5893, %v5923
  %v5965 = vadd.f32 %v5894, %v5923
  %v5966 = vadd.f32 %v5895, %v5923
  %v5967 = vadd.f32 %v5896, %v5923
  %v5968 = vadd.f32 %v5897, %v5923
  %v5969 = vadd.f32 %v5898, %v5923
  %v5970 = vadd.f32 %v5899, %v5923
  %v5971 = vadd.f32 %v5900, %v5923
  %v5972 = vadd.f32 %v5901, %v5923
  %v5973 = vadd.f32 %v5902, %v5923
  %v5974 = vadd.f32 %v5903, %v5923
  %v5975 = vadd.f32 %v5904, %v5923
  %v5976 = vadd.f32 %v5905, %v5923
  %v5977 = vadd.f32 %v5906, %v5923
  %v5978 = vadd.f32 %v5907, %v5923
  %v5979 = vadd.f32 %v5908, %v5923
  %v5980 = vadd.f32 %v5909, %v5923
  %v5981 = vadd.f32 %v5910, %v5923
  %v5982 = vadd.f32 %v5911, %v5923
  %v5983 = vadd.f32 %v5912, %v5923
  %v5984 = vadd.f32 %v5913, %v5923
  %v5985 = vadd.f32 %v5914, %v5923
  %v5986 = vadd.f32 %v5915, %v5923
  %v5987 = vadd.f32 %v5916, %v5923
  %v5988 = vadd.f32 %v5917, %v5923
  %v5989 = vmax.f32 %v5925, 0.0
  %v5990 = vmax.f32 %v5926, 0.0
  %v5991 = vmax.f32 %v5927, 0.0
  %v5992 = vmax.f32 %v5928, 0.0
  %v5993 = vmax.f32 %v5929, 0.0
  %v5994 = vmax.f32 %v5930, 0.0
  %v5995 = vmax.f32 %v5931, 0.0
  %v5996 = vmax.f32 %v5932, 0.0
  %v5997 = vmax.f32 %v5933, 0.0
  %v5998 = vmax.f32 %v5934, 0.0
  %v5999 = vmax.f32 %v5935, 0.0
  %v6000 = vmax.f32 %v5936, 0.0
  %v6001 = vmax.f32 %v5937, 0.0
  %v6002 = vmax.f32 %v5938, 0.0
  %v6003 = vmax.f32 %v5939, 0.0
  %v6004 = vmax.f32 %v5940, 0.0
  %v6005 = vmax.f32 %v5941, 0.0
  %v6006 = vmax.f32 %v5942, 0.0
  %v6007 = vmax.f32 %v5943, 0.0
  %v6008 = vmax.f32 %v5944, 0.0
  %v6009 = vmax.f32 %v5945, 0.0
  %v6010 = vmax.f32 %v5946, 0.0
  %v6011 = vmax.f32 %v5947, 0.0
  %v6012 = vmax.f32 %v5948, 0.0
  %v6013 = vmax.f32 %v5949, 0.0
  %v6014 = vmax.f32 %v5950, 0.0
  %v6015 = vmax.f32 %v5951, 0.0
  %v6016 = vmax.f32 %v5952, 0.0
  %v6017 = vmax.f32 %v5953, 0.0
  %v6018 = vmax.f32 %v5954, 0.0
  %v6019 = vmax.f32 %v5955, 0.0
  %v6020 = vmax.f32 %v5956, 0.0
  %v6021 = vmax.f32 %v5957, 0.0
  %v6022 = vmax.f32 %v5958, 0.0
  %v6023 = vmax.f32 %v5959, 0.0
  %v6024 = vmax.f32 %v5960, 0.0
  %v6025 = vmax.f32 %v5961, 0.0
  %v6026 = vmax.f32 %v5962, 0.0
  %v6027 = vmax.f32 %v5963, 0.0
  %v6028 = vmax.f32 %v5964, 0.0
  %v6029 = vmax.f32 %v5965, 0.0
  %v6030 = vmax.f32 %v5966, 0.0
  %v6031 = vmax.f32 %v5967, 0.0
  %v6032 = vmax.f32 %v5968, 0.0
  %v6033 = vmax.f32 %v5969, 0.0
  %v6034 = vmax.f32 %v5970, 0.0
  %v6035 = vmax.f32 %v5971, 0.0
  %v6036 = vmax.f32 %v5972, 0.0
  %v6037 = vmax.f32 %v5973, 0.0
  %v6038 = vmax.f32 %v5974, 0.0
  %v6039 = vmax.f32 %v5975, 0.0
  %v6040 = vmax.f32 %v5976, 0.0
  %v6041 = vmax.f32 %v5977, 0.0
  %v6042 = vmax.f32 %v5978, 0.0
  %v6043 = vmax.f32 %v5979, 0.0
  %v6044 = vmax.f32 %v5980, 0.0
  %v6045 = vmax.f32 %v5981, 0.0
  %v6046 = vmax.f32 %v5982, 0.0
  %v6047 = vmax.f32 %v5983, 0.0
  %v6048 = vmax.f32 %v5984, 0.0
  %v6049 = vmax.f32 %v5985, 0.0
  %v6050 = vmax.f32 %v5986, 0.0
  %v6051 = vmax.f32 %v5987, 0.0
  %v6052 = vmax.f32 %v5988, 0.0
  %v6117 = vcombine.high %v5989, %v5989
  %v6119 = vunpack.c.l.s4 1983009808
  %v6120 = vunpack.c.0.s8 %v6119
  %v6121 = vlaneseq
  %v6122 = vshrl.u32 %v6121, 7
  %v6123 = vsub.s32 %v6120, %v6122
  %v6124 = vrot.slane %v5989, %v6123
  %v6126 = vunpack.c.l.s4 1983009808
  %v6127 = vunpack.c.0.s8 %v6126
  %v6128 = vlaneseq
  %v6129 = vshrl.u32 %v6128, 7
  %v6130 = vsub.s32 %v6127, %v6129
  %v6131 = vrot.slane %v6117, %v6130
  %v6132 = vcombine.high %v6124, %v6124
  %v6133 = vcombine.high %v6131, %v6131
  %v6134 = vcombine.high %v5990, %v5990
  %v6136 = vunpack.c.l.s4 1983009808
  %v6137 = vunpack.c.0.s8 %v6136
  %v6138 = vlaneseq
  %v6139 = vshrl.u32 %v6138, 7
  %v6140 = vsub.s32 %v6137, %v6139
  %v6141 = vrot.slane %v5990, %v6140
  %v6143 = vunpack.c.l.s4 1983009808
  %v6144 = vunpack.c.0.s8 %v6143
  %v6145 = vlaneseq
  %v6146 = vshrl.u32 %v6145, 7
  %v6147 = vsub.s32 %v6144, %v6146
  %v6148 = vrot.slane %v6134, %v6147
  %v6149 = vcombine.high %v6141, %v6141
  %v6150 = vcombine.high %v6148, %v6148
  %v6151 = vcombine.high %v5991, %v5991
  %v6153 = vunpack.c.l.s4 1983009808
  %v6154 = vunpack.c.0.s8 %v6153
  %v6155 = vlaneseq
  %v6156 = vshrl.u32 %v6155, 7
  %v6157 = vsub.s32 %v6154, %v6156
  %v6158 = vrot.slane %v5991, %v6157
  %v6160 = vunpack.c.l.s4 1983009808
  %v6161 = vunpack.c.0.s8 %v6160
  %v6162 = vlaneseq
  %v6163 = vshrl.u32 %v6162, 7
  %v6164 = vsub.s32 %v6161, %v6163
  %v6165 = vrot.slane %v6151, %v6164
  %v6166 = vcombine.high %v6158, %v6158
  %v6167 = vcombine.high %v6165, %v6165
  %v6168 = vcombine.high %v5992, %v5992
  %v6170 = vunpack.c.l.s4 1983009808
  %v6171 = vunpack.c.0.s8 %v6170
  %v6172 = vlaneseq
  %v6173 = vshrl.u32 %v6172, 7
  %v6174 = vsub.s32 %v6171, %v6173
  %v6175 = vrot.slane %v5992, %v6174
  %v6177 = vunpack.c.l.s4 1983009808
  %v6178 = vunpack.c.0.s8 %v6177
  %v6179 = vlaneseq
  %v6180 = vshrl.u32 %v6179, 7
  %v6181 = vsub.s32 %v6178, %v6180
  %v6182 = vrot.slane %v6168, %v6181
  %v6183 = vcombine.high %v6175, %v6175
  %v6184 = vcombine.high %v6182, %v6182
  %v6185 = vcombine.high %v5993, %v5993
  %v6187 = vunpack.c.l.s4 1983009808
  %v6188 = vunpack.c.0.s8 %v6187
  %v6189 = vlaneseq
  %v6190 = vshrl.u32 %v6189, 7
  %v6191 = vsub.s32 %v6188, %v6190
  %v6192 = vrot.slane %v5993, %v6191
  %v6194 = vunpack.c.l.s4 1983009808
  %v6195 = vunpack.c.0.s8 %v6194
  %v6196 = vlaneseq
  %v6197 = vshrl.u32 %v6196, 7
  %v6198 = vsub.s32 %v6195, %v6197
  %v6199 = vrot.slane %v6185, %v6198
  %v6200 = vcombine.high %v6192, %v6192
  %v6201 = vcombine.high %v6199, %v6199
  %v6202 = vcombine.high %v5994, %v5994
  %v6204 = vunpack.c.l.s4 1983009808
  %v6205 = vunpack.c.0.s8 %v6204
  %v6206 = vlaneseq
  %v6207 = vshrl.u32 %v6206, 7
  %v6208 = vsub.s32 %v6205, %v6207
  %v6209 = vrot.slane %v5994, %v6208
  %v6211 = vunpack.c.l.s4 1983009808
  %v6212 = vunpack.c.0.s8 %v6211
  %v6213 = vlaneseq
  %v6214 = vshrl.u32 %v6213, 7
  %v6215 = vsub.s32 %v6212, %v6214
  %v6216 = vrot.slane %v6202, %v6215
  %v6217 = vcombine.high %v6209, %v6209
  %v6218 = vcombine.high %v6216, %v6216
  %v6219 = vcombine.high %v5995, %v5995
  %v6221 = vunpack.c.l.s4 1983009808
  %v6222 = vunpack.c.0.s8 %v6221
  %v6223 = vlaneseq
  %v6224 = vshrl.u32 %v6223, 7
  %v6225 = vsub.s32 %v6222, %v6224
  %v6226 = vrot.slane %v5995, %v6225
  %v6228 = vunpack.c.l.s4 1983009808
  %v6229 = vunpack.c.0.s8 %v6228
  %v6230 = vlaneseq
  %v6231 = vshrl.u32 %v6230, 7
  %v6232 = vsub.s32 %v6229, %v6231
  %v6233 = vrot.slane %v6219, %v6232
  %v6234 = vcombine.high %v6226, %v6226
  %v6235 = vcombine.high %v6233, %v6233
  %v6236 = vcombine.high %v5996, %v5996
  %v6238 = vunpack.c.l.s4 1983009808
  %v6239 = vunpack.c.0.s8 %v6238
  %v6240 = vlaneseq
  %v6241 = vshrl.u32 %v6240, 7
  %v6242 = vsub.s32 %v6239, %v6241
  %v6243 = vrot.slane %v5996, %v6242
  %v6245 = vunpack.c.l.s4 1983009808
  %v6246 = vunpack.c.0.s8 %v6245
  %v6247 = vlaneseq
  %v6248 = vshrl.u32 %v6247, 7
  %v6249 = vsub.s32 %v6246, %v6248
  %v6250 = vrot.slane %v6236, %v6249
  %v6251 = vcombine.high %v6243, %v6243
  %v6252 = vcombine.high %v6250, %v6250
  %v6253 = vcombine.high %v5997, %v5997
  %v6255 = vunpack.c.l.s4 1983009808
  %v6256 = vunpack.c.0.s8 %v6255
  %v6257 = vlaneseq
  %v6258 = vshrl.u32 %v6257, 7
  %v6259 = vsub.s32 %v6256, %v6258
  %v6260 = vrot.slane %v5997, %v6259
  %v6262 = vunpack.c.l.s4 1983009808
  %v6263 = vunpack.c.0.s8 %v6262
  %v6264 = vlaneseq
  %v6265 = vshrl.u32 %v6264, 7
  %v6266 = vsub.s32 %v6263, %v6265
  %v6267 = vrot.slane %v6253, %v6266
  %v6268 = vcombine.high %v6260, %v6260
  %v6269 = vcombine.high %v6267, %v6267
  %v6270 = vcombine.high %v5998, %v5998
  %v6272 = vunpack.c.l.s4 1983009808
  %v6273 = vunpack.c.0.s8 %v6272
  %v6274 = vlaneseq
  %v6275 = vshrl.u32 %v6274, 7
  %v6276 = vsub.s32 %v6273, %v6275
  %v6277 = vrot.slane %v5998, %v6276
  %v6279 = vunpack.c.l.s4 1983009808
  %v6280 = vunpack.c.0.s8 %v6279
  %v6281 = vlaneseq
  %v6282 = vshrl.u32 %v6281, 7
  %v6283 = vsub.s32 %v6280, %v6282
  %v6284 = vrot.slane %v6270, %v6283
  %v6285 = vcombine.high %v6277, %v6277
  %v6286 = vcombine.high %v6284, %v6284
  %v6287 = vcombine.high %v5999, %v5999
  %v6289 = vunpack.c.l.s4 1983009808
  %v6290 = vunpack.c.0.s8 %v6289
  %v6291 = vlaneseq
  %v6292 = vshrl.u32 %v6291, 7
  %v6293 = vsub.s32 %v6290, %v6292
  %v6294 = vrot.slane %v5999, %v6293
  %v6296 = vunpack.c.l.s4 1983009808
  %v6297 = vunpack.c.0.s8 %v6296
  %v6298 = vlaneseq
  %v6299 = vshrl.u32 %v6298, 7
  %v6300 = vsub.s32 %v6297, %v6299
  %v6301 = vrot.slane %v6287, %v6300
  %v6302 = vcombine.high %v6294, %v6294
  %v6303 = vcombine.high %v6301, %v6301
  %v6304 = vcombine.high %v6000, %v6000
  %v6306 = vunpack.c.l.s4 1983009808
  %v6307 = vunpack.c.0.s8 %v6306
  %v6308 = vlaneseq
  %v6309 = vshrl.u32 %v6308, 7
  %v6310 = vsub.s32 %v6307, %v6309
  %v6311 = vrot.slane %v6000, %v6310
  %v6313 = vunpack.c.l.s4 1983009808
  %v6314 = vunpack.c.0.s8 %v6313
  %v6315 = vlaneseq
  %v6316 = vshrl.u32 %v6315, 7
  %v6317 = vsub.s32 %v6314, %v6316
  %v6318 = vrot.slane %v6304, %v6317
  %v6319 = vcombine.high %v6311, %v6311
  %v6320 = vcombine.high %v6318, %v6318
  %v6321 = vcombine.high %v6001, %v6001
  %v6323 = vunpack.c.l.s4 1983009808
  %v6324 = vunpack.c.0.s8 %v6323
  %v6325 = vlaneseq
  %v6326 = vshrl.u32 %v6325, 7
  %v6327 = vsub.s32 %v6324, %v6326
  %v6328 = vrot.slane %v6001, %v6327
  %v6330 = vunpack.c.l.s4 1983009808
  %v6331 = vunpack.c.0.s8 %v6330
  %v6332 = vlaneseq
  %v6333 = vshrl.u32 %v6332, 7
  %v6334 = vsub.s32 %v6331, %v6333
  %v6335 = vrot.slane %v6321, %v6334
  %v6336 = vcombine.high %v6328, %v6328
  %v6337 = vcombine.high %v6335, %v6335
  %v6338 = vcombine.high %v6002, %v6002
  %v6340 = vunpack.c.l.s4 1983009808
  %v6341 = vunpack.c.0.s8 %v6340
  %v6342 = vlaneseq
  %v6343 = vshrl.u32 %v6342, 7
  %v6344 = vsub.s32 %v6341, %v6343
  %v6345 = vrot.slane %v6002, %v6344
  %v6347 = vunpack.c.l.s4 1983009808
  %v6348 = vunpack.c.0.s8 %v6347
  %v6349 = vlaneseq
  %v6350 = vshrl.u32 %v6349, 7
  %v6351 = vsub.s32 %v6348, %v6350
  %v6352 = vrot.slane %v6338, %v6351
  %v6353 = vcombine.high %v6345, %v6345
  %v6354 = vcombine.high %v6352, %v6352
  %v6355 = vcombine.high %v6003, %v6003
  %v6357 = vunpack.c.l.s4 1983009808
  %v6358 = vunpack.c.0.s8 %v6357
  %v6359 = vlaneseq
  %v6360 = vshrl.u32 %v6359, 7
  %v6361 = vsub.s32 %v6358, %v6360
  %v6362 = vrot.slane %v6003, %v6361
  %v6364 = vunpack.c.l.s4 1983009808
  %v6365 = vunpack.c.0.s8 %v6364
  %v6366 = vlaneseq
  %v6367 = vshrl.u32 %v6366, 7
  %v6368 = vsub.s32 %v6365, %v6367
  %v6369 = vrot.slane %v6355, %v6368
  %v6370 = vcombine.high %v6362, %v6362
  %v6371 = vcombine.high %v6369, %v6369
  %v6372 = vcombine.high %v6004, %v6004
  %v6374 = vunpack.c.l.s4 1983009808
  %v6375 = vunpack.c.0.s8 %v6374
  %v6376 = vlaneseq
  %v6377 = vshrl.u32 %v6376, 7
  %v6378 = vsub.s32 %v6375, %v6377
  %v6379 = vrot.slane %v6004, %v6378
  %v6381 = vunpack.c.l.s4 1983009808
  %v6382 = vunpack.c.0.s8 %v6381
  %v6383 = vlaneseq
  %v6384 = vshrl.u32 %v6383, 7
  %v6385 = vsub.s32 %v6382, %v6384
  %v6386 = vrot.slane %v6372, %v6385
  %v6387 = vcombine.high %v6379, %v6379
  %v6388 = vcombine.high %v6386, %v6386
  %v6389 = vcombine.high %v6005, %v6005
  %v6391 = vunpack.c.l.s4 1983009808
  %v6392 = vunpack.c.0.s8 %v6391
  %v6393 = vlaneseq
  %v6394 = vshrl.u32 %v6393, 7
  %v6395 = vsub.s32 %v6392, %v6394
  %v6396 = vrot.slane %v6005, %v6395
  %v6398 = vunpack.c.l.s4 1983009808
  %v6399 = vunpack.c.0.s8 %v6398
  %v6400 = vlaneseq
  %v6401 = vshrl.u32 %v6400, 7
  %v6402 = vsub.s32 %v6399, %v6401
  %v6403 = vrot.slane %v6389, %v6402
  %v6404 = vcombine.high %v6396, %v6396
  %v6405 = vcombine.high %v6403, %v6403
  %v6406 = vcombine.high %v6006, %v6006
  %v6408 = vunpack.c.l.s4 1983009808
  %v6409 = vunpack.c.0.s8 %v6408
  %v6410 = vlaneseq
  %v6411 = vshrl.u32 %v6410, 7
  %v6412 = vsub.s32 %v6409, %v6411
  %v6413 = vrot.slane %v6006, %v6412
  %v6415 = vunpack.c.l.s4 1983009808
  %v6416 = vunpack.c.0.s8 %v6415
  %v6417 = vlaneseq
  %v6418 = vshrl.u32 %v6417, 7
  %v6419 = vsub.s32 %v6416, %v6418
  %v6420 = vrot.slane %v6406, %v6419
  %v6421 = vcombine.high %v6413, %v6413
  %v6422 = vcombine.high %v6420, %v6420
  %v6423 = vcombine.high %v6007, %v6007
  %v6425 = vunpack.c.l.s4 1983009808
  %v6426 = vunpack.c.0.s8 %v6425
  %v6427 = vlaneseq
  %v6428 = vshrl.u32 %v6427, 7
  %v6429 = vsub.s32 %v6426, %v6428
  %v6430 = vrot.slane %v6007, %v6429
  %v6432 = vunpack.c.l.s4 1983009808
  %v6433 = vunpack.c.0.s8 %v6432
  %v6434 = vlaneseq
  %v6435 = vshrl.u32 %v6434, 7
  %v6436 = vsub.s32 %v6433, %v6435
  %v6437 = vrot.slane %v6423, %v6436
  %v6438 = vcombine.high %v6430, %v6430
  %v6439 = vcombine.high %v6437, %v6437
  %v6440 = vcombine.high %v6008, %v6008
  %v6442 = vunpack.c.l.s4 1983009808
  %v6443 = vunpack.c.0.s8 %v6442
  %v6444 = vlaneseq
  %v6445 = vshrl.u32 %v6444, 7
  %v6446 = vsub.s32 %v6443, %v6445
  %v6447 = vrot.slane %v6008, %v6446
  %v6449 = vunpack.c.l.s4 1983009808
  %v6450 = vunpack.c.0.s8 %v6449
  %v6451 = vlaneseq
  %v6452 = vshrl.u32 %v6451, 7
  %v6453 = vsub.s32 %v6450, %v6452
  %v6454 = vrot.slane %v6440, %v6453
  %v6455 = vcombine.high %v6447, %v6447
  %v6456 = vcombine.high %v6454, %v6454
  %v6457 = vcombine.high %v6009, %v6009
  %v6459 = vunpack.c.l.s4 1983009808
  %v6460 = vunpack.c.0.s8 %v6459
  %v6461 = vlaneseq
  %v6462 = vshrl.u32 %v6461, 7
  %v6463 = vsub.s32 %v6460, %v6462
  %v6464 = vrot.slane %v6009, %v6463
  %v6466 = vunpack.c.l.s4 1983009808
  %v6467 = vunpack.c.0.s8 %v6466
  %v6468 = vlaneseq
  %v6469 = vshrl.u32 %v6468, 7
  %v6470 = vsub.s32 %v6467, %v6469
  %v6471 = vrot.slane %v6457, %v6470
  %v6472 = vcombine.high %v6464, %v6464
  %v6473 = vcombine.high %v6471, %v6471
  %v6474 = vcombine.high %v6010, %v6010
  %v6476 = vunpack.c.l.s4 1983009808
  %v6477 = vunpack.c.0.s8 %v6476
  %v6478 = vlaneseq
  %v6479 = vshrl.u32 %v6478, 7
  %v6480 = vsub.s32 %v6477, %v6479
  %v6481 = vrot.slane %v6010, %v6480
  %v6483 = vunpack.c.l.s4 1983009808
  %v6484 = vunpack.c.0.s8 %v6483
  %v6485 = vlaneseq
  %v6486 = vshrl.u32 %v6485, 7
  %v6487 = vsub.s32 %v6484, %v6486
  %v6488 = vrot.slane %v6474, %v6487
  %v6489 = vcombine.high %v6481, %v6481
  %v6490 = vcombine.high %v6488, %v6488
  %v6491 = vcombine.high %v6011, %v6011
  %v6493 = vunpack.c.l.s4 1983009808
  %v6494 = vunpack.c.0.s8 %v6493
  %v6495 = vlaneseq
  %v6496 = vshrl.u32 %v6495, 7
  %v6497 = vsub.s32 %v6494, %v6496
  %v6498 = vrot.slane %v6011, %v6497
  %v6500 = vunpack.c.l.s4 1983009808
  %v6501 = vunpack.c.0.s8 %v6500
  %v6502 = vlaneseq
  %v6503 = vshrl.u32 %v6502, 7
  %v6504 = vsub.s32 %v6501, %v6503
  %v6505 = vrot.slane %v6491, %v6504
  %v6506 = vcombine.high %v6498, %v6498
  %v6507 = vcombine.high %v6505, %v6505
  %v6508 = vcombine.high %v6012, %v6012
  %v6510 = vunpack.c.l.s4 1983009808
  %v6511 = vunpack.c.0.s8 %v6510
  %v6512 = vlaneseq
  %v6513 = vshrl.u32 %v6512, 7
  %v6514 = vsub.s32 %v6511, %v6513
  %v6515 = vrot.slane %v6012, %v6514
  %v6517 = vunpack.c.l.s4 1983009808
  %v6518 = vunpack.c.0.s8 %v6517
  %v6519 = vlaneseq
  %v6520 = vshrl.u32 %v6519, 7
  %v6521 = vsub.s32 %v6518, %v6520
  %v6522 = vrot.slane %v6508, %v6521
  %v6523 = vcombine.high %v6515, %v6515
  %v6524 = vcombine.high %v6522, %v6522
  %v6525 = vcombine.high %v6013, %v6013
  %v6527 = vunpack.c.l.s4 1983009808
  %v6528 = vunpack.c.0.s8 %v6527
  %v6529 = vlaneseq
  %v6530 = vshrl.u32 %v6529, 7
  %v6531 = vsub.s32 %v6528, %v6530
  %v6532 = vrot.slane %v6013, %v6531
  %v6534 = vunpack.c.l.s4 1983009808
  %v6535 = vunpack.c.0.s8 %v6534
  %v6536 = vlaneseq
  %v6537 = vshrl.u32 %v6536, 7
  %v6538 = vsub.s32 %v6535, %v6537
  %v6539 = vrot.slane %v6525, %v6538
  %v6540 = vcombine.high %v6532, %v6532
  %v6541 = vcombine.high %v6539, %v6539
  %v6542 = vcombine.high %v6014, %v6014
  %v6544 = vunpack.c.l.s4 1983009808
  %v6545 = vunpack.c.0.s8 %v6544
  %v6546 = vlaneseq
  %v6547 = vshrl.u32 %v6546, 7
  %v6548 = vsub.s32 %v6545, %v6547
  %v6549 = vrot.slane %v6014, %v6548
  %v6551 = vunpack.c.l.s4 1983009808
  %v6552 = vunpack.c.0.s8 %v6551
  %v6553 = vlaneseq
  %v6554 = vshrl.u32 %v6553, 7
  %v6555 = vsub.s32 %v6552, %v6554
  %v6556 = vrot.slane %v6542, %v6555
  %v6557 = vcombine.high %v6549, %v6549
  %v6558 = vcombine.high %v6556, %v6556
  %v6559 = vcombine.high %v6015, %v6015
  %v6561 = vunpack.c.l.s4 1983009808
  %v6562 = vunpack.c.0.s8 %v6561
  %v6563 = vlaneseq
  %v6564 = vshrl.u32 %v6563, 7
  %v6565 = vsub.s32 %v6562, %v6564
  %v6566 = vrot.slane %v6015, %v6565
  %v6568 = vunpack.c.l.s4 1983009808
  %v6569 = vunpack.c.0.s8 %v6568
  %v6570 = vlaneseq
  %v6571 = vshrl.u32 %v6570, 7
  %v6572 = vsub.s32 %v6569, %v6571
  %v6573 = vrot.slane %v6559, %v6572
  %v6574 = vcombine.high %v6566, %v6566
  %v6575 = vcombine.high %v6573, %v6573
  %v6576 = vcombine.high %v6016, %v6016
  %v6578 = vunpack.c.l.s4 1983009808
  %v6579 = vunpack.c.0.s8 %v6578
  %v6580 = vlaneseq
  %v6581 = vshrl.u32 %v6580, 7
  %v6582 = vsub.s32 %v6579, %v6581
  %v6583 = vrot.slane %v6016, %v6582
  %v6585 = vunpack.c.l.s4 1983009808
  %v6586 = vunpack.c.0.s8 %v6585
  %v6587 = vlaneseq
  %v6588 = vshrl.u32 %v6587, 7
  %v6589 = vsub.s32 %v6586, %v6588
  %v6590 = vrot.slane %v6576, %v6589
  %v6591 = vcombine.high %v6583, %v6583
  %v6592 = vcombine.high %v6590, %v6590
  %v6593 = vcombine.high %v6017, %v6017
  %v6595 = vunpack.c.l.s4 1983009808
  %v6596 = vunpack.c.0.s8 %v6595
  %v6597 = vlaneseq
  %v6598 = vshrl.u32 %v6597, 7
  %v6599 = vsub.s32 %v6596, %v6598
  %v6600 = vrot.slane %v6017, %v6599
  %v6602 = vunpack.c.l.s4 1983009808
  %v6603 = vunpack.c.0.s8 %v6602
  %v6604 = vlaneseq
  %v6605 = vshrl.u32 %v6604, 7
  %v6606 = vsub.s32 %v6603, %v6605
  %v6607 = vrot.slane %v6593, %v6606
  %v6608 = vcombine.high %v6600, %v6600
  %v6609 = vcombine.high %v6607, %v6607
  %v6610 = vcombine.high %v6018, %v6018
  %v6612 = vunpack.c.l.s4 1983009808
  %v6613 = vunpack.c.0.s8 %v6612
  %v6614 = vlaneseq
  %v6615 = vshrl.u32 %v6614, 7
  %v6616 = vsub.s32 %v6613, %v6615
  %v6617 = vrot.slane %v6018, %v6616
  %v6619 = vunpack.c.l.s4 1983009808
  %v6620 = vunpack.c.0.s8 %v6619
  %v6621 = vlaneseq
  %v6622 = vshrl.u32 %v6621, 7
  %v6623 = vsub.s32 %v6620, %v6622
  %v6624 = vrot.slane %v6610, %v6623
  %v6625 = vcombine.high %v6617, %v6617
  %v6626 = vcombine.high %v6624, %v6624
  %v6627 = vcombine.high %v6019, %v6019
  %v6629 = vunpack.c.l.s4 1983009808
  %v6630 = vunpack.c.0.s8 %v6629
  %v6631 = vlaneseq
  %v6632 = vshrl.u32 %v6631, 7
  %v6633 = vsub.s32 %v6630, %v6632
  %v6634 = vrot.slane %v6019, %v6633
  %v6636 = vunpack.c.l.s4 1983009808
  %v6637 = vunpack.c.0.s8 %v6636
  %v6638 = vlaneseq
  %v6639 = vshrl.u32 %v6638, 7
  %v6640 = vsub.s32 %v6637, %v6639
  %v6641 = vrot.slane %v6627, %v6640
  %v6642 = vcombine.high %v6634, %v6634
  %v6643 = vcombine.high %v6641, %v6641
  %v6644 = vcombine.high %v6020, %v6020
  %v6646 = vunpack.c.l.s4 1983009808
  %v6647 = vunpack.c.0.s8 %v6646
  %v6648 = vlaneseq
  %v6649 = vshrl.u32 %v6648, 7
  %v6650 = vsub.s32 %v6647, %v6649
  %v6651 = vrot.slane %v6020, %v6650
  %v6653 = vunpack.c.l.s4 1983009808
  %v6654 = vunpack.c.0.s8 %v6653
  %v6655 = vlaneseq
  %v6656 = vshrl.u32 %v6655, 7
  %v6657 = vsub.s32 %v6654, %v6656
  %v6658 = vrot.slane %v6644, %v6657
  %v6659 = vcombine.high %v6651, %v6651
  %v6660 = vcombine.high %v6658, %v6658
  %v6661 = vcombine.high %v6021, %v6021
  %v6663 = vunpack.c.l.s4 1983009808
  %v6664 = vunpack.c.0.s8 %v6663
  %v6665 = vlaneseq
  %v6666 = vshrl.u32 %v6665, 7
  %v6667 = vsub.s32 %v6664, %v6666
  %v6668 = vrot.slane %v6021, %v6667
  %v6670 = vunpack.c.l.s4 1983009808
  %v6671 = vunpack.c.0.s8 %v6670
  %v6672 = vlaneseq
  %v6673 = vshrl.u32 %v6672, 7
  %v6674 = vsub.s32 %v6671, %v6673
  %v6675 = vrot.slane %v6661, %v6674
  %v6676 = vcombine.high %v6668, %v6668
  %v6677 = vcombine.high %v6675, %v6675
  %v6678 = vcombine.high %v6022, %v6022
  %v6680 = vunpack.c.l.s4 1983009808
  %v6681 = vunpack.c.0.s8 %v6680
  %v6682 = vlaneseq
  %v6683 = vshrl.u32 %v6682, 7
  %v6684 = vsub.s32 %v6681, %v6683
  %v6685 = vrot.slane %v6022, %v6684
  %v6687 = vunpack.c.l.s4 1983009808
  %v6688 = vunpack.c.0.s8 %v6687
  %v6689 = vlaneseq
  %v6690 = vshrl.u32 %v6689, 7
  %v6691 = vsub.s32 %v6688, %v6690
  %v6692 = vrot.slane %v6678, %v6691
  %v6693 = vcombine.high %v6685, %v6685
  %v6694 = vcombine.high %v6692, %v6692
  %v6695 = vcombine.high %v6023, %v6023
  %v6697 = vunpack.c.l.s4 1983009808
  %v6698 = vunpack.c.0.s8 %v6697
  %v6699 = vlaneseq
  %v6700 = vshrl.u32 %v6699, 7
  %v6701 = vsub.s32 %v6698, %v6700
  %v6702 = vrot.slane %v6023, %v6701
  %v6704 = vunpack.c.l.s4 1983009808
  %v6705 = vunpack.c.0.s8 %v6704
  %v6706 = vlaneseq
  %v6707 = vshrl.u32 %v6706, 7
  %v6708 = vsub.s32 %v6705, %v6707
  %v6709 = vrot.slane %v6695, %v6708
  %v6710 = vcombine.high %v6702, %v6702
  %v6711 = vcombine.high %v6709, %v6709
  %v6712 = vcombine.high %v6024, %v6024
  %v6714 = vunpack.c.l.s4 1983009808
  %v6715 = vunpack.c.0.s8 %v6714
  %v6716 = vlaneseq
  %v6717 = vshrl.u32 %v6716, 7
  %v6718 = vsub.s32 %v6715, %v6717
  %v6719 = vrot.slane %v6024, %v6718
  %v6721 = vunpack.c.l.s4 1983009808
  %v6722 = vunpack.c.0.s8 %v6721
  %v6723 = vlaneseq
  %v6724 = vshrl.u32 %v6723, 7
  %v6725 = vsub.s32 %v6722, %v6724
  %v6726 = vrot.slane %v6712, %v6725
  %v6727 = vcombine.high %v6719, %v6719
  %v6728 = vcombine.high %v6726, %v6726
  %v6729 = vcombine.high %v6025, %v6025
  %v6731 = vunpack.c.l.s4 1983009808
  %v6732 = vunpack.c.0.s8 %v6731
  %v6733 = vlaneseq
  %v6734 = vshrl.u32 %v6733, 7
  %v6735 = vsub.s32 %v6732, %v6734
  %v6736 = vrot.slane %v6025, %v6735
  %v6738 = vunpack.c.l.s4 1983009808
  %v6739 = vunpack.c.0.s8 %v6738
  %v6740 = vlaneseq
  %v6741 = vshrl.u32 %v6740, 7
  %v6742 = vsub.s32 %v6739, %v6741
  %v6743 = vrot.slane %v6729, %v6742
  %v6744 = vcombine.high %v6736, %v6736
  %v6745 = vcombine.high %v6743, %v6743
  %v6746 = vcombine.high %v6026, %v6026
  %v6748 = vunpack.c.l.s4 1983009808
  %v6749 = vunpack.c.0.s8 %v6748
  %v6750 = vlaneseq
  %v6751 = vshrl.u32 %v6750, 7
  %v6752 = vsub.s32 %v6749, %v6751
  %v6753 = vrot.slane %v6026, %v6752
  %v6755 = vunpack.c.l.s4 1983009808
  %v6756 = vunpack.c.0.s8 %v6755
  %v6757 = vlaneseq
  %v6758 = vshrl.u32 %v6757, 7
  %v6759 = vsub.s32 %v6756, %v6758
  %v6760 = vrot.slane %v6746, %v6759
  %v6761 = vcombine.high %v6753, %v6753
  %v6762 = vcombine.high %v6760, %v6760
  %v6763 = vcombine.high %v6027, %v6027
  %v6765 = vunpack.c.l.s4 1983009808
  %v6766 = vunpack.c.0.s8 %v6765
  %v6767 = vlaneseq
  %v6768 = vshrl.u32 %v6767, 7
  %v6769 = vsub.s32 %v6766, %v6768
  %v6770 = vrot.slane %v6027, %v6769
  %v6772 = vunpack.c.l.s4 1983009808
  %v6773 = vunpack.c.0.s8 %v6772
  %v6774 = vlaneseq
  %v6775 = vshrl.u32 %v6774, 7
  %v6776 = vsub.s32 %v6773, %v6775
  %v6777 = vrot.slane %v6763, %v6776
  %v6778 = vcombine.high %v6770, %v6770
  %v6779 = vcombine.high %v6777, %v6777
  %v6780 = vcombine.high %v6028, %v6028
  %v6782 = vunpack.c.l.s4 1983009808
  %v6783 = vunpack.c.0.s8 %v6782
  %v6784 = vlaneseq
  %v6785 = vshrl.u32 %v6784, 7
  %v6786 = vsub.s32 %v6783, %v6785
  %v6787 = vrot.slane %v6028, %v6786
  %v6789 = vunpack.c.l.s4 1983009808
  %v6790 = vunpack.c.0.s8 %v6789
  %v6791 = vlaneseq
  %v6792 = vshrl.u32 %v6791, 7
  %v6793 = vsub.s32 %v6790, %v6792
  %v6794 = vrot.slane %v6780, %v6793
  %v6795 = vcombine.high %v6787, %v6787
  %v6796 = vcombine.high %v6794, %v6794
  %v6797 = vcombine.high %v6029, %v6029
  %v6799 = vunpack.c.l.s4 1983009808
  %v6800 = vunpack.c.0.s8 %v6799
  %v6801 = vlaneseq
  %v6802 = vshrl.u32 %v6801, 7
  %v6803 = vsub.s32 %v6800, %v6802
  %v6804 = vrot.slane %v6029, %v6803
  %v6806 = vunpack.c.l.s4 1983009808
  %v6807 = vunpack.c.0.s8 %v6806
  %v6808 = vlaneseq
  %v6809 = vshrl.u32 %v6808, 7
  %v6810 = vsub.s32 %v6807, %v6809
  %v6811 = vrot.slane %v6797, %v6810
  %v6812 = vcombine.high %v6804, %v6804
  %v6813 = vcombine.high %v6811, %v6811
  %v6814 = vcombine.high %v6030, %v6030
  %v6816 = vunpack.c.l.s4 1983009808
  %v6817 = vunpack.c.0.s8 %v6816
  %v6818 = vlaneseq
  %v6819 = vshrl.u32 %v6818, 7
  %v6820 = vsub.s32 %v6817, %v6819
  %v6821 = vrot.slane %v6030, %v6820
  %v6823 = vunpack.c.l.s4 1983009808
  %v6824 = vunpack.c.0.s8 %v6823
  %v6825 = vlaneseq
  %v6826 = vshrl.u32 %v6825, 7
  %v6827 = vsub.s32 %v6824, %v6826
  %v6828 = vrot.slane %v6814, %v6827
  %v6829 = vcombine.high %v6821, %v6821
  %v6830 = vcombine.high %v6828, %v6828
  %v6831 = vcombine.high %v6031, %v6031
  %v6833 = vunpack.c.l.s4 1983009808
  %v6834 = vunpack.c.0.s8 %v6833
  %v6835 = vlaneseq
  %v6836 = vshrl.u32 %v6835, 7
  %v6837 = vsub.s32 %v6834, %v6836
  %v6838 = vrot.slane %v6031, %v6837
  %v6840 = vunpack.c.l.s4 1983009808
  %v6841 = vunpack.c.0.s8 %v6840
  %v6842 = vlaneseq
  %v6843 = vshrl.u32 %v6842, 7
  %v6844 = vsub.s32 %v6841, %v6843
  %v6845 = vrot.slane %v6831, %v6844
  %v6846 = vcombine.high %v6838, %v6838
  %v6847 = vcombine.high %v6845, %v6845
  %v6848 = vcombine.high %v6032, %v6032
  %v6850 = vunpack.c.l.s4 1983009808
  %v6851 = vunpack.c.0.s8 %v6850
  %v6852 = vlaneseq
  %v6853 = vshrl.u32 %v6852, 7
  %v6854 = vsub.s32 %v6851, %v6853
  %v6855 = vrot.slane %v6032, %v6854
  %v6857 = vunpack.c.l.s4 1983009808
  %v6858 = vunpack.c.0.s8 %v6857
  %v6859 = vlaneseq
  %v6860 = vshrl.u32 %v6859, 7
  %v6861 = vsub.s32 %v6858, %v6860
  %v6862 = vrot.slane %v6848, %v6861
  %v6863 = vcombine.high %v6855, %v6855
  %v6864 = vcombine.high %v6862, %v6862
  %v6865 = vcombine.high %v6033, %v6033
  %v6867 = vunpack.c.l.s4 1983009808
  %v6868 = vunpack.c.0.s8 %v6867
  %v6869 = vlaneseq
  %v6870 = vshrl.u32 %v6869, 7
  %v6871 = vsub.s32 %v6868, %v6870
  %v6872 = vrot.slane %v6033, %v6871
  %v6874 = vunpack.c.l.s4 1983009808
  %v6875 = vunpack.c.0.s8 %v6874
  %v6876 = vlaneseq
  %v6877 = vshrl.u32 %v6876, 7
  %v6878 = vsub.s32 %v6875, %v6877
  %v6879 = vrot.slane %v6865, %v6878
  %v6880 = vcombine.high %v6872, %v6872
  %v6881 = vcombine.high %v6879, %v6879
  %v6882 = vcombine.high %v6034, %v6034
  %v6884 = vunpack.c.l.s4 1983009808
  %v6885 = vunpack.c.0.s8 %v6884
  %v6886 = vlaneseq
  %v6887 = vshrl.u32 %v6886, 7
  %v6888 = vsub.s32 %v6885, %v6887
  %v6889 = vrot.slane %v6034, %v6888
  %v6891 = vunpack.c.l.s4 1983009808
  %v6892 = vunpack.c.0.s8 %v6891
  %v6893 = vlaneseq
  %v6894 = vshrl.u32 %v6893, 7
  %v6895 = vsub.s32 %v6892, %v6894
  %v6896 = vrot.slane %v6882, %v6895
  %v6897 = vcombine.high %v6889, %v6889
  %v6898 = vcombine.high %v6896, %v6896
  %v6899 = vcombine.high %v6035, %v6035
  %v6901 = vunpack.c.l.s4 1983009808
  %v6902 = vunpack.c.0.s8 %v6901
  %v6903 = vlaneseq
  %v6904 = vshrl.u32 %v6903, 7
  %v6905 = vsub.s32 %v6902, %v6904
  %v6906 = vrot.slane %v6035, %v6905
  %v6908 = vunpack.c.l.s4 1983009808
  %v6909 = vunpack.c.0.s8 %v6908
  %v6910 = vlaneseq
  %v6911 = vshrl.u32 %v6910, 7
  %v6912 = vsub.s32 %v6909, %v6911
  %v6913 = vrot.slane %v6899, %v6912
  %v6914 = vcombine.high %v6906, %v6906
  %v6915 = vcombine.high %v6913, %v6913
  %v6916 = vcombine.high %v6036, %v6036
  %v6918 = vunpack.c.l.s4 1983009808
  %v6919 = vunpack.c.0.s8 %v6918
  %v6920 = vlaneseq
  %v6921 = vshrl.u32 %v6920, 7
  %v6922 = vsub.s32 %v6919, %v6921
  %v6923 = vrot.slane %v6036, %v6922
  %v6925 = vunpack.c.l.s4 1983009808
  %v6926 = vunpack.c.0.s8 %v6925
  %v6927 = vlaneseq
  %v6928 = vshrl.u32 %v6927, 7
  %v6929 = vsub.s32 %v6926, %v6928
  %v6930 = vrot.slane %v6916, %v6929
  %v6931 = vcombine.high %v6923, %v6923
  %v6932 = vcombine.high %v6930, %v6930
  %v6933 = vcombine.high %v6037, %v6037
  %v6935 = vunpack.c.l.s4 1983009808
  %v6936 = vunpack.c.0.s8 %v6935
  %v6937 = vlaneseq
  %v6938 = vshrl.u32 %v6937, 7
  %v6939 = vsub.s32 %v6936, %v6938
  %v6940 = vrot.slane %v6037, %v6939
  %v6942 = vunpack.c.l.s4 1983009808
  %v6943 = vunpack.c.0.s8 %v6942
  %v6944 = vlaneseq
  %v6945 = vshrl.u32 %v6944, 7
  %v6946 = vsub.s32 %v6943, %v6945
  %v6947 = vrot.slane %v6933, %v6946
  %v6948 = vcombine.high %v6940, %v6940
  %v6949 = vcombine.high %v6947, %v6947
  %v6950 = vcombine.high %v6038, %v6038
  %v6952 = vunpack.c.l.s4 1983009808
  %v6953 = vunpack.c.0.s8 %v6952
  %v6954 = vlaneseq
  %v6955 = vshrl.u32 %v6954, 7
  %v6956 = vsub.s32 %v6953, %v6955
  %v6957 = vrot.slane %v6038, %v6956
  %v6959 = vunpack.c.l.s4 1983009808
  %v6960 = vunpack.c.0.s8 %v6959
  %v6961 = vlaneseq
  %v6962 = vshrl.u32 %v6961, 7
  %v6963 = vsub.s32 %v6960, %v6962
  %v6964 = vrot.slane %v6950, %v6963
  %v6965 = vcombine.high %v6957, %v6957
  %v6966 = vcombine.high %v6964, %v6964
  %v6967 = vcombine.high %v6039, %v6039
  %v6969 = vunpack.c.l.s4 1983009808
  %v6970 = vunpack.c.0.s8 %v6969
  %v6971 = vlaneseq
  %v6972 = vshrl.u32 %v6971, 7
  %v6973 = vsub.s32 %v6970, %v6972
  %v6974 = vrot.slane %v6039, %v6973
  %v6976 = vunpack.c.l.s4 1983009808
  %v6977 = vunpack.c.0.s8 %v6976
  %v6978 = vlaneseq
  %v6979 = vshrl.u32 %v6978, 7
  %v6980 = vsub.s32 %v6977, %v6979
  %v6981 = vrot.slane %v6967, %v6980
  %v6982 = vcombine.high %v6974, %v6974
  %v6983 = vcombine.high %v6981, %v6981
  %v6984 = vcombine.high %v6040, %v6040
  %v6986 = vunpack.c.l.s4 1983009808
  %v6987 = vunpack.c.0.s8 %v6986
  %v6988 = vlaneseq
  %v6989 = vshrl.u32 %v6988, 7
  %v6990 = vsub.s32 %v6987, %v6989
  %v6991 = vrot.slane %v6040, %v6990
  %v6993 = vunpack.c.l.s4 1983009808
  %v6994 = vunpack.c.0.s8 %v6993
  %v6995 = vlaneseq
  %v6996 = vshrl.u32 %v6995, 7
  %v6997 = vsub.s32 %v6994, %v6996
  %v6998 = vrot.slane %v6984, %v6997
  %v6999 = vcombine.high %v6991, %v6991
  %v7000 = vcombine.high %v6998, %v6998
  %v7001 = vcombine.high %v6041, %v6041
  %v7003 = vunpack.c.l.s4 1983009808
  %v7004 = vunpack.c.0.s8 %v7003
  %v7005 = vlaneseq
  %v7006 = vshrl.u32 %v7005, 7
  %v7007 = vsub.s32 %v7004, %v7006
  %v7008 = vrot.slane %v6041, %v7007
  %v7010 = vunpack.c.l.s4 1983009808
  %v7011 = vunpack.c.0.s8 %v7010
  %v7012 = vlaneseq
  %v7013 = vshrl.u32 %v7012, 7
  %v7014 = vsub.s32 %v7011, %v7013
  %v7015 = vrot.slane %v7001, %v7014
  %v7016 = vcombine.high %v7008, %v7008
  %v7017 = vcombine.high %v7015, %v7015
  %v7018 = vcombine.high %v6042, %v6042
  %v7020 = vunpack.c.l.s4 1983009808
  %v7021 = vunpack.c.0.s8 %v7020
  %v7022 = vlaneseq
  %v7023 = vshrl.u32 %v7022, 7
  %v7024 = vsub.s32 %v7021, %v7023
  %v7025 = vrot.slane %v6042, %v7024
  %v7027 = vunpack.c.l.s4 1983009808
  %v7028 = vunpack.c.0.s8 %v7027
  %v7029 = vlaneseq
  %v7030 = vshrl.u32 %v7029, 7
  %v7031 = vsub.s32 %v7028, %v7030
  %v7032 = vrot.slane %v7018, %v7031
  %v7033 = vcombine.high %v7025, %v7025
  %v7034 = vcombine.high %v7032, %v7032
  %v7035 = vcombine.high %v6043, %v6043
  %v7037 = vunpack.c.l.s4 1983009808
  %v7038 = vunpack.c.0.s8 %v7037
  %v7039 = vlaneseq
  %v7040 = vshrl.u32 %v7039, 7
  %v7041 = vsub.s32 %v7038, %v7040
  %v7042 = vrot.slane %v6043, %v7041
  %v7044 = vunpack.c.l.s4 1983009808
  %v7045 = vunpack.c.0.s8 %v7044
  %v7046 = vlaneseq
  %v7047 = vshrl.u32 %v7046, 7
  %v7048 = vsub.s32 %v7045, %v7047
  %v7049 = vrot.slane %v7035, %v7048
  %v7050 = vcombine.high %v7042, %v7042
  %v7051 = vcombine.high %v7049, %v7049
  %v7052 = vcombine.high %v6044, %v6044
  %v7054 = vunpack.c.l.s4 1983009808
  %v7055 = vunpack.c.0.s8 %v7054
  %v7056 = vlaneseq
  %v7057 = vshrl.u32 %v7056, 7
  %v7058 = vsub.s32 %v7055, %v7057
  %v7059 = vrot.slane %v6044, %v7058
  %v7061 = vunpack.c.l.s4 1983009808
  %v7062 = vunpack.c.0.s8 %v7061
  %v7063 = vlaneseq
  %v7064 = vshrl.u32 %v7063, 7
  %v7065 = vsub.s32 %v7062, %v7064
  %v7066 = vrot.slane %v7052, %v7065
  %v7067 = vcombine.high %v7059, %v7059
  %v7068 = vcombine.high %v7066, %v7066
  %v7069 = vcombine.high %v6045, %v6045
  %v7071 = vunpack.c.l.s4 1983009808
  %v7072 = vunpack.c.0.s8 %v7071
  %v7073 = vlaneseq
  %v7074 = vshrl.u32 %v7073, 7
  %v7075 = vsub.s32 %v7072, %v7074
  %v7076 = vrot.slane %v6045, %v7075
  %v7078 = vunpack.c.l.s4 1983009808
  %v7079 = vunpack.c.0.s8 %v7078
  %v7080 = vlaneseq
  %v7081 = vshrl.u32 %v7080, 7
  %v7082 = vsub.s32 %v7079, %v7081
  %v7083 = vrot.slane %v7069, %v7082
  %v7084 = vcombine.high %v7076, %v7076
  %v7085 = vcombine.high %v7083, %v7083
  %v7086 = vcombine.high %v6046, %v6046
  %v7088 = vunpack.c.l.s4 1983009808
  %v7089 = vunpack.c.0.s8 %v7088
  %v7090 = vlaneseq
  %v7091 = vshrl.u32 %v7090, 7
  %v7092 = vsub.s32 %v7089, %v7091
  %v7093 = vrot.slane %v6046, %v7092
  %v7095 = vunpack.c.l.s4 1983009808
  %v7096 = vunpack.c.0.s8 %v7095
  %v7097 = vlaneseq
  %v7098 = vshrl.u32 %v7097, 7
  %v7099 = vsub.s32 %v7096, %v7098
  %v7100 = vrot.slane %v7086, %v7099
  %v7101 = vcombine.high %v7093, %v7093
  %v7102 = vcombine.high %v7100, %v7100
  %v7103 = vcombine.high %v6047, %v6047
  %v7105 = vunpack.c.l.s4 1983009808
  %v7106 = vunpack.c.0.s8 %v7105
  %v7107 = vlaneseq
  %v7108 = vshrl.u32 %v7107, 7
  %v7109 = vsub.s32 %v7106, %v7108
  %v7110 = vrot.slane %v6047, %v7109
  %v7112 = vunpack.c.l.s4 1983009808
  %v7113 = vunpack.c.0.s8 %v7112
  %v7114 = vlaneseq
  %v7115 = vshrl.u32 %v7114, 7
  %v7116 = vsub.s32 %v7113, %v7115
  %v7117 = vrot.slane %v7103, %v7116
  %v7118 = vcombine.high %v7110, %v7110
  %v7119 = vcombine.high %v7117, %v7117
  %v7120 = vcombine.high %v6048, %v6048
  %v7122 = vunpack.c.l.s4 1983009808
  %v7123 = vunpack.c.0.s8 %v7122
  %v7124 = vlaneseq
  %v7125 = vshrl.u32 %v7124, 7
  %v7126 = vsub.s32 %v7123, %v7125
  %v7127 = vrot.slane %v6048, %v7126
  %v7129 = vunpack.c.l.s4 1983009808
  %v7130 = vunpack.c.0.s8 %v7129
  %v7131 = vlaneseq
  %v7132 = vshrl.u32 %v7131, 7
  %v7133 = vsub.s32 %v7130, %v7132
  %v7134 = vrot.slane %v7120, %v7133
  %v7135 = vcombine.high %v7127, %v7127
  %v7136 = vcombine.high %v7134, %v7134
  %v7137 = vcombine.high %v6049, %v6049
  %v7139 = vunpack.c.l.s4 1983009808
  %v7140 = vunpack.c.0.s8 %v7139
  %v7141 = vlaneseq
  %v7142 = vshrl.u32 %v7141, 7
  %v7143 = vsub.s32 %v7140, %v7142
  %v7144 = vrot.slane %v6049, %v7143
  %v7146 = vunpack.c.l.s4 1983009808
  %v7147 = vunpack.c.0.s8 %v7146
  %v7148 = vlaneseq
  %v7149 = vshrl.u32 %v7148, 7
  %v7150 = vsub.s32 %v7147, %v7149
  %v7151 = vrot.slane %v7137, %v7150
  %v7152 = vcombine.high %v7144, %v7144
  %v7153 = vcombine.high %v7151, %v7151
  %v7154 = vcombine.high %v6050, %v6050
  %v7156 = vunpack.c.l.s4 1983009808
  %v7157 = vunpack.c.0.s8 %v7156
  %v7158 = vlaneseq
  %v7159 = vshrl.u32 %v7158, 7
  %v7160 = vsub.s32 %v7157, %v7159
  %v7161 = vrot.slane %v6050, %v7160
  %v7163 = vunpack.c.l.s4 1983009808
  %v7164 = vunpack.c.0.s8 %v7163
  %v7165 = vlaneseq
  %v7166 = vshrl.u32 %v7165, 7
  %v7167 = vsub.s32 %v7164, %v7166
  %v7168 = vrot.slane %v7154, %v7167
  %v7169 = vcombine.high %v7161, %v7161
  %v7170 = vcombine.high %v7168, %v7168
  %v7171 = vcombine.high %v6051, %v6051
  %v7173 = vunpack.c.l.s4 1983009808
  %v7174 = vunpack.c.0.s8 %v7173
  %v7175 = vlaneseq
  %v7176 = vshrl.u32 %v7175, 7
  %v7177 = vsub.s32 %v7174, %v7176
  %v7178 = vrot.slane %v6051, %v7177
  %v7180 = vunpack.c.l.s4 1983009808
  %v7181 = vunpack.c.0.s8 %v7180
  %v7182 = vlaneseq
  %v7183 = vshrl.u32 %v7182, 7
  %v7184 = vsub.s32 %v7181, %v7183
  %v7185 = vrot.slane %v7171, %v7184
  %v7186 = vcombine.high %v7178, %v7178
  %v7187 = vcombine.high %v7185, %v7185
  %v7188 = vcombine.high %v6052, %v6052
  %v7190 = vunpack.c.l.s4 1983009808
  %v7191 = vunpack.c.0.s8 %v7190
  %v7192 = vlaneseq
  %v7193 = vshrl.u32 %v7192, 7
  %v7194 = vsub.s32 %v7191, %v7193
  %v7195 = vrot.slane %v6052, %v7194
  %v7197 = vunpack.c.l.s4 1983009808
  %v7198 = vunpack.c.0.s8 %v7197
  %v7199 = vlaneseq
  %v7200 = vshrl.u32 %v7199, 7
  %v7201 = vsub.s32 %v7198, %v7200
  %v7202 = vrot.slane %v7188, %v7201
  %v7203 = vcombine.high %v7195, %v7195
  %v7204 = vcombine.high %v7202, %v7202
  %v7461 = vrot.slane %v6124, 7
  %v7462 = vrot.slane %v7461, 2
  %v7463 = vrot.slane %v6132, 7
  %v7464 = vrot.slane %v7463, 2
  %v7465 = vrot.slane %v6131, 7
  %v7466 = vrot.slane %v7465, 2
  %v7467 = vrot.slane %v6133, 7
  %v7468 = vrot.slane %v7467, 2
  %v7469 = vrot.slane %v6141, 7
  %v7470 = vrot.slane %v7469, 2
  %v7471 = vrot.slane %v6149, 7
  %v7472 = vrot.slane %v7471, 2
  %v7473 = vrot.slane %v6148, 7
  %v7474 = vrot.slane %v7473, 2
  %v7475 = vrot.slane %v6150, 7
  %v7476 = vrot.slane %v7475, 2
  %v7477 = vrot.slane %v6158, 7
  %v7478 = vrot.slane %v7477, 2
  %v7479 = vrot.slane %v6166, 7
  %v7480 = vrot.slane %v7479, 2
  %v7481 = vrot.slane %v6165, 7
  %v7482 = vrot.slane %v7481, 2
  %v7483 = vrot.slane %v6167, 7
  %v7484 = vrot.slane %v7483, 2
  %v7485 = vrot.slane %v6175, 7
  %v7486 = vrot.slane %v7485, 2
  %v7487 = vrot.slane %v6183, 7
  %v7488 = vrot.slane %v7487, 2
  %v7489 = vrot.slane %v6182, 7
  %v7490 = vrot.slane %v7489, 2
  %v7491 = vrot.slane %v6184, 7
  %v7492 = vrot.slane %v7491, 2
  %v7493 = vrot.slane %v6192, 7
  %v7494 = vrot.slane %v7493, 2
  %v7495 = vrot.slane %v6200, 7
  %v7496 = vrot.slane %v7495, 2
  %v7497 = vrot.slane %v6199, 7
  %v7498 = vrot.slane %v7497, 2
  %v7499 = vrot.slane %v6201, 7
  %v7500 = vrot.slane %v7499, 2
  %v7501 = vrot.slane %v6209, 7
  %v7502 = vrot.slane %v7501, 2
  %v7503 = vrot.slane %v6217, 7
  %v7504 = vrot.slane %v7503, 2
  %v7505 = vrot.slane %v6216, 7
  %v7506 = vrot.slane %v7505, 2
  %v7507 = vrot.slane %v6218, 7
  %v7508 = vrot.slane %v7507, 2
  %v7509 = vrot.slane %v6226, 7
  %v7510 = vrot.slane %v7509, 2
  %v7511 = vrot.slane %v6234, 7
  %v7512 = vrot.slane %v7511, 2
  %v7513 = vrot.slane %v6233, 7
  %v7514 = vrot.slane %v7513, 2
  %v7515 = vrot.slane %v6235, 7
  %v7516 = vrot.slane %v7515, 2
  %v7517 = vrot.slane %v6243, 7
  %v7518 = vrot.slane %v7517, 2
  %v7519 = vrot.slane %v6251, 7
  %v7520 = vrot.slane %v7519, 2
  %v7521 = vrot.slane %v6250, 7
  %v7522 = vrot.slane %v7521, 2
  %v7523 = vrot.slane %v6252, 7
  %v7524 = vrot.slane %v7523, 2
  %v7525 = vrot.slane %v6260, 7
  %v7526 = vrot.slane %v7525, 2
  %v7527 = vrot.slane %v6268, 7
  %v7528 = vrot.slane %v7527, 2
  %v7529 = vrot.slane %v6267, 7
  %v7530 = vrot.slane %v7529, 2
  %v7531 = vrot.slane %v6269, 7
  %v7532 = vrot.slane %v7531, 2
  %v7533 = vrot.slane %v6277, 7
  %v7534 = vrot.slane %v7533, 2
  %v7535 = vrot.slane %v6285, 7
  %v7536 = vrot.slane %v7535, 2
  %v7537 = vrot.slane %v6284, 7
  %v7538 = vrot.slane %v7537, 2
  %v7539 = vrot.slane %v6286, 7
  %v7540 = vrot.slane %v7539, 2
  %v7541 = vrot.slane %v6294, 7
  %v7542 = vrot.slane %v7541, 2
  %v7543 = vrot.slane %v6302, 7
  %v7544 = vrot.slane %v7543, 2
  %v7545 = vrot.slane %v6301, 7
  %v7546 = vrot.slane %v7545, 2
  %v7547 = vrot.slane %v6303, 7
  %v7548 = vrot.slane %v7547, 2
  %v7549 = vrot.slane %v6311, 7
  %v7550 = vrot.slane %v7549, 2
  %v7551 = vrot.slane %v6319, 7
  %v7552 = vrot.slane %v7551, 2
  %v7553 = vrot.slane %v6318, 7
  %v7554 = vrot.slane %v7553, 2
  %v7555 = vrot.slane %v6320, 7
  %v7556 = vrot.slane %v7555, 2
  %v7557 = vrot.slane %v6328, 7
  %v7558 = vrot.slane %v7557, 2
  %v7559 = vrot.slane %v6336, 7
  %v7560 = vrot.slane %v7559, 2
  %v7561 = vrot.slane %v6335, 7
  %v7562 = vrot.slane %v7561, 2
  %v7563 = vrot.slane %v6337, 7
  %v7564 = vrot.slane %v7563, 2
  %v7565 = vrot.slane %v6345, 7
  %v7566 = vrot.slane %v7565, 2
  %v7567 = vrot.slane %v6353, 7
  %v7568 = vrot.slane %v7567, 2
  %v7569 = vrot.slane %v6352, 7
  %v7570 = vrot.slane %v7569, 2
  %v7571 = vrot.slane %v6354, 7
  %v7572 = vrot.slane %v7571, 2
  %v7573 = vrot.slane %v6362, 7
  %v7574 = vrot.slane %v7573, 2
  %v7575 = vrot.slane %v6370, 7
  %v7576 = vrot.slane %v7575, 2
  %v7577 = vrot.slane %v6369, 7
  %v7578 = vrot.slane %v7577, 2
  %v7579 = vrot.slane %v6371, 7
  %v7580 = vrot.slane %v7579, 2
  %v7581 = vrot.slane %v6379, 7
  %v7582 = vrot.slane %v7581, 2
  %v7583 = vrot.slane %v6387, 7
  %v7584 = vrot.slane %v7583, 2
  %v7585 = vrot.slane %v6386, 7
  %v7586 = vrot.slane %v7585, 2
  %v7587 = vrot.slane %v6388, 7
  %v7588 = vrot.slane %v7587, 2
  %v7589 = vrot.slane %v6396, 7
  %v7590 = vrot.slane %v7589, 2
  %v7591 = vrot.slane %v6404, 7
  %v7592 = vrot.slane %v7591, 2
  %v7593 = vrot.slane %v6403, 7
  %v7594 = vrot.slane %v7593, 2
  %v7595 = vrot.slane %v6405, 7
  %v7596 = vrot.slane %v7595, 2
  %v7597 = vrot.slane %v6413, 7
  %v7598 = vrot.slane %v7597, 2
  %v7599 = vrot.slane %v6421, 7
  %v7600 = vrot.slane %v7599, 2
  %v7601 = vrot.slane %v6420, 7
  %v7602 = vrot.slane %v7601, 2
  %v7603 = vrot.slane %v6422, 7
  %v7604 = vrot.slane %v7603, 2
  %v7605 = vrot.slane %v6430, 7
  %v7606 = vrot.slane %v7605, 2
  %v7607 = vrot.slane %v6438, 7
  %v7608 = vrot.slane %v7607, 2
  %v7609 = vrot.slane %v6437, 7
  %v7610 = vrot.slane %v7609, 2
  %v7611 = vrot.slane %v6439, 7
  %v7612 = vrot.slane %v7611, 2
  %v7613 = vrot.slane %v6447, 7
  %v7614 = vrot.slane %v7613, 2
  %v7615 = vrot.slane %v6455, 7
  %v7616 = vrot.slane %v7615, 2
  %v7617 = vrot.slane %v6454, 7
  %v7618 = vrot.slane %v7617, 2
  %v7619 = vrot.slane %v6456, 7
  %v7620 = vrot.slane %v7619, 2
  %v7621 = vrot.slane %v6464, 7
  %v7622 = vrot.slane %v7621, 2
  %v7623 = vrot.slane %v6472, 7
  %v7624 = vrot.slane %v7623, 2
  %v7625 = vrot.slane %v6471, 7
  %v7626 = vrot.slane %v7625, 2
  %v7627 = vrot.slane %v6473, 7
  %v7628 = vrot.slane %v7627, 2
  %v7629 = vrot.slane %v6481, 7
  %v7630 = vrot.slane %v7629, 2
  %v7631 = vrot.slane %v6489, 7
  %v7632 = vrot.slane %v7631, 2
  %v7633 = vrot.slane %v6488, 7
  %v7634 = vrot.slane %v7633, 2
  %v7635 = vrot.slane %v6490, 7
  %v7636 = vrot.slane %v7635, 2
  %v7637 = vrot.slane %v6498, 7
  %v7638 = vrot.slane %v7637, 2
  %v7639 = vrot.slane %v6506, 7
  %v7640 = vrot.slane %v7639, 2
  %v7641 = vrot.slane %v6505, 7
  %v7642 = vrot.slane %v7641, 2
  %v7643 = vrot.slane %v6507, 7
  %v7644 = vrot.slane %v7643, 2
  %v7645 = vrot.slane %v6515, 7
  %v7646 = vrot.slane %v7645, 2
  %v7647 = vrot.slane %v6523, 7
  %v7648 = vrot.slane %v7647, 2
  %v7649 = vrot.slane %v6522, 7
  %v7650 = vrot.slane %v7649, 2
  %v7651 = vrot.slane %v6524, 7
  %v7652 = vrot.slane %v7651, 2
  %v7653 = vrot.slane %v6532, 7
  %v7654 = vrot.slane %v7653, 2
  %v7655 = vrot.slane %v6540, 7
  %v7656 = vrot.slane %v7655, 2
  %v7657 = vrot.slane %v6539, 7
  %v7658 = vrot.slane %v7657, 2
  %v7659 = vrot.slane %v6541, 7
  %v7660 = vrot.slane %v7659, 2
  %v7661 = vrot.slane %v6549, 7
  %v7662 = vrot.slane %v7661, 2
  %v7663 = vrot.slane %v6557, 7
  %v7664 = vrot.slane %v7663, 2
  %v7665 = vrot.slane %v6556, 7
  %v7666 = vrot.slane %v7665, 2
  %v7667 = vrot.slane %v6558, 7
  %v7668 = vrot.slane %v7667, 2
  %v7669 = vrot.slane %v6566, 7
  %v7670 = vrot.slane %v7669, 2
  %v7671 = vrot.slane %v6574, 7
  %v7672 = vrot.slane %v7671, 2
  %v7673 = vrot.slane %v6573, 7
  %v7674 = vrot.slane %v7673, 2
  %v7675 = vrot.slane %v6575, 7
  %v7676 = vrot.slane %v7675, 2
  %v7677 = vrot.slane %v6583, 7
  %v7678 = vrot.slane %v7677, 2
  %v7679 = vrot.slane %v6591, 7
  %v7680 = vrot.slane %v7679, 2
  %v7681 = vrot.slane %v6590, 7
  %v7682 = vrot.slane %v7681, 2
  %v7683 = vrot.slane %v6592, 7
  %v7684 = vrot.slane %v7683, 2
  %v7685 = vrot.slane %v6600, 7
  %v7686 = vrot.slane %v7685, 2
  %v7687 = vrot.slane %v6608, 7
  %v7688 = vrot.slane %v7687, 2
  %v7689 = vrot.slane %v6607, 7
  %v7690 = vrot.slane %v7689, 2
  %v7691 = vrot.slane %v6609, 7
  %v7692 = vrot.slane %v7691, 2
  %v7693 = vrot.slane %v6617, 7
  %v7694 = vrot.slane %v7693, 2
  %v7695 = vrot.slane %v6625, 7
  %v7696 = vrot.slane %v7695, 2
  %v7697 = vrot.slane %v6624, 7
  %v7698 = vrot.slane %v7697, 2
  %v7699 = vrot.slane %v6626, 7
  %v7700 = vrot.slane %v7699, 2
  %v7701 = vrot.slane %v6634, 7
  %v7702 = vrot.slane %v7701, 2
  %v7703 = vrot.slane %v6642, 7
  %v7704 = vrot.slane %v7703, 2
  %v7705 = vrot.slane %v6641, 7
  %v7706 = vrot.slane %v7705, 2
  %v7707 = vrot.slane %v6643, 7
  %v7708 = vrot.slane %v7707, 2
  %v7709 = vrot.slane %v6651, 7
  %v7710 = vrot.slane %v7709, 2
  %v7711 = vrot.slane %v6659, 7
  %v7712 = vrot.slane %v7711, 2
  %v7713 = vrot.slane %v6658, 7
  %v7714 = vrot.slane %v7713, 2
  %v7715 = vrot.slane %v6660, 7
  %v7716 = vrot.slane %v7715, 2
  %v7717 = vrot.slane %v6668, 7
  %v7718 = vrot.slane %v7717, 2
  %v7719 = vrot.slane %v6676, 7
  %v7720 = vrot.slane %v7719, 2
  %v7721 = vrot.slane %v6675, 7
  %v7722 = vrot.slane %v7721, 2
  %v7723 = vrot.slane %v6677, 7
  %v7724 = vrot.slane %v7723, 2
  %v7725 = vrot.slane %v6685, 7
  %v7726 = vrot.slane %v7725, 2
  %v7727 = vrot.slane %v6693, 7
  %v7728 = vrot.slane %v7727, 2
  %v7729 = vrot.slane %v6692, 7
  %v7730 = vrot.slane %v7729, 2
  %v7731 = vrot.slane %v6694, 7
  %v7732 = vrot.slane %v7731, 2
  %v7733 = vrot.slane %v6702, 7
  %v7734 = vrot.slane %v7733, 2
  %v7735 = vrot.slane %v6710, 7
  %v7736 = vrot.slane %v7735, 2
  %v7737 = vrot.slane %v6709, 7
  %v7738 = vrot.slane %v7737, 2
  %v7739 = vrot.slane %v6711, 7
  %v7740 = vrot.slane %v7739, 2
  %v7741 = vrot.slane %v6719, 7
  %v7742 = vrot.slane %v7741, 2
  %v7743 = vrot.slane %v6727, 7
  %v7744 = vrot.slane %v7743, 2
  %v7745 = vrot.slane %v6726, 7
  %v7746 = vrot.slane %v7745, 2
  %v7747 = vrot.slane %v6728, 7
  %v7748 = vrot.slane %v7747, 2
  %v7749 = vrot.slane %v6736, 7
  %v7750 = vrot.slane %v7749, 2
  %v7751 = vrot.slane %v6744, 7
  %v7752 = vrot.slane %v7751, 2
  %v7753 = vrot.slane %v6743, 7
  %v7754 = vrot.slane %v7753, 2
  %v7755 = vrot.slane %v6745, 7
  %v7756 = vrot.slane %v7755, 2
  %v7757 = vrot.slane %v6753, 7
  %v7758 = vrot.slane %v7757, 2
  %v7759 = vrot.slane %v6761, 7
  %v7760 = vrot.slane %v7759, 2
  %v7761 = vrot.slane %v6760, 7
  %v7762 = vrot.slane %v7761, 2
  %v7763 = vrot.slane %v6762, 7
  %v7764 = vrot.slane %v7763, 2
  %v7765 = vrot.slane %v6770, 7
  %v7766 = vrot.slane %v7765, 2
  %v7767 = vrot.slane %v6778, 7
  %v7768 = vrot.slane %v7767, 2
  %v7769 = vrot.slane %v6777, 7
  %v7770 = vrot.slane %v7769, 2
  %v7771 = vrot.slane %v6779, 7
  %v7772 = vrot.slane %v7771, 2
  %v7773 = vrot.slane %v6787, 7
  %v7774 = vrot.slane %v7773, 2
  %v7775 = vrot.slane %v6795, 7
  %v7776 = vrot.slane %v7775, 2
  %v7777 = vrot.slane %v6794, 7
  %v7778 = vrot.slane %v7777, 2
  %v7779 = vrot.slane %v6796, 7
  %v7780 = vrot.slane %v7779, 2
  %v7781 = vrot.slane %v6804, 7
  %v7782 = vrot.slane %v7781, 2
  %v7783 = vrot.slane %v6812, 7
  %v7784 = vrot.slane %v7783, 2
  %v7785 = vrot.slane %v6811, 7
  %v7786 = vrot.slane %v7785, 2
  %v7787 = vrot.slane %v6813, 7
  %v7788 = vrot.slane %v7787, 2
  %v7789 = vrot.slane %v6821, 7
  %v7790 = vrot.slane %v7789, 2
  %v7791 = vrot.slane %v6829, 7
  %v7792 = vrot.slane %v7791, 2
  %v7793 = vrot.slane %v6828, 7
  %v7794 = vrot.slane %v7793, 2
  %v7795 = vrot.slane %v6830, 7
  %v7796 = vrot.slane %v7795, 2
  %v7797 = vrot.slane %v6838, 7
  %v7798 = vrot.slane %v7797, 2
  %v7799 = vrot.slane %v6846, 7
  %v7800 = vrot.slane %v7799, 2
  %v7801 = vrot.slane %v6845, 7
  %v7802 = vrot.slane %v7801, 2
  %v7803 = vrot.slane %v6847, 7
  %v7804 = vrot.slane %v7803, 2
  %v7805 = vrot.slane %v6855, 7
  %v7806 = vrot.slane %v7805, 2
  %v7807 = vrot.slane %v6863, 7
  %v7808 = vrot.slane %v7807, 2
  %v7809 = vrot.slane %v6862, 7
  %v7810 = vrot.slane %v7809, 2
  %v7811 = vrot.slane %v6864, 7
  %v7812 = vrot.slane %v7811, 2
  %v7813 = vrot.slane %v6872, 7
  %v7814 = vrot.slane %v7813, 2
  %v7815 = vrot.slane %v6880, 7
  %v7816 = vrot.slane %v7815, 2
  %v7817 = vrot.slane %v6879, 7
  %v7818 = vrot.slane %v7817, 2
  %v7819 = vrot.slane %v6881, 7
  %v7820 = vrot.slane %v7819, 2
  %v7821 = vrot.slane %v6889, 7
  %v7822 = vrot.slane %v7821, 2
  %v7823 = vrot.slane %v6897, 7
  %v7824 = vrot.slane %v7823, 2
  %v7825 = vrot.slane %v6896, 7
  %v7826 = vrot.slane %v7825, 2
  %v7827 = vrot.slane %v6898, 7
  %v7828 = vrot.slane %v7827, 2
  %v7829 = vrot.slane %v6906, 7
  %v7830 = vrot.slane %v7829, 2
  %v7831 = vrot.slane %v6914, 7
  %v7832 = vrot.slane %v7831, 2
  %v7833 = vrot.slane %v6913, 7
  %v7834 = vrot.slane %v7833, 2
  %v7835 = vrot.slane %v6915, 7
  %v7836 = vrot.slane %v7835, 2
  %v7837 = vrot.slane %v6923, 7
  %v7838 = vrot.slane %v7837, 2
  %v7839 = vrot.slane %v6931, 7
  %v7840 = vrot.slane %v7839, 2
  %v7841 = vrot.slane %v6930, 7
  %v7842 = vrot.slane %v7841, 2
  %v7843 = vrot.slane %v6932, 7
  %v7844 = vrot.slane %v7843, 2
  %v7845 = vrot.slane %v6940, 7
  %v7846 = vrot.slane %v7845, 2
  %v7847 = vrot.slane %v6948, 7
  %v7848 = vrot.slane %v7847, 2
  %v7849 = vrot.slane %v6947, 7
  %v7850 = vrot.slane %v7849, 2
  %v7851 = vrot.slane %v6949, 7
  %v7852 = vrot.slane %v7851, 2
  %v7853 = vrot.slane %v6957, 7
  %v7854 = vrot.slane %v7853, 2
  %v7855 = vrot.slane %v6965, 7
  %v7856 = vrot.slane %v7855, 2
  %v7857 = vrot.slane %v6964, 7
  %v7858 = vrot.slane %v7857, 2
  %v7859 = vrot.slane %v6966, 7
  %v7860 = vrot.slane %v7859, 2
  %v7861 = vrot.slane %v6974, 7
  %v7862 = vrot.slane %v7861, 2
  %v7863 = vrot.slane %v6982, 7
  %v7864 = vrot.slane %v7863, 2
  %v7865 = vrot.slane %v6981, 7
  %v7866 = vrot.slane %v7865, 2
  %v7867 = vrot.slane %v6983, 7
  %v7868 = vrot.slane %v7867, 2
  %v7869 = vrot.slane %v6991, 7
  %v7870 = vrot.slane %v7869, 2
  %v7871 = vrot.slane %v6999, 7
  %v7872 = vrot.slane %v7871, 2
  %v7873 = vrot.slane %v6998, 7
  %v7874 = vrot.slane %v7873, 2
  %v7875 = vrot.slane %v7000, 7
  %v7876 = vrot.slane %v7875, 2
  %v7877 = vrot.slane %v7008, 7
  %v7878 = vrot.slane %v7877, 2
  %v7879 = vrot.slane %v7016, 7
  %v7880 = vrot.slane %v7879, 2
  %v7881 = vrot.slane %v7015, 7
  %v7882 = vrot.slane %v7881, 2
  %v7883 = vrot.slane %v7017, 7
  %v7884 = vrot.slane %v7883, 2
  %v7885 = vrot.slane %v7025, 7
  %v7886 = vrot.slane %v7885, 2
  %v7887 = vrot.slane %v7033, 7
  %v7888 = vrot.slane %v7887, 2
  %v7889 = vrot.slane %v7032, 7
  %v7890 = vrot.slane %v7889, 2
  %v7891 = vrot.slane %v7034, 7
  %v7892 = vrot.slane %v7891, 2
  %v7893 = vrot.slane %v7042, 7
  %v7894 = vrot.slane %v7893, 2
  %v7895 = vrot.slane %v7050, 7
  %v7896 = vrot.slane %v7895, 2
  %v7897 = vrot.slane %v7049, 7
  %v7898 = vrot.slane %v7897, 2
  %v7899 = vrot.slane %v7051, 7
  %v7900 = vrot.slane %v7899, 2
  %v7901 = vrot.slane %v7059, 7
  %v7902 = vrot.slane %v7901, 2
  %v7903 = vrot.slane %v7067, 7
  %v7904 = vrot.slane %v7903, 2
  %v7905 = vrot.slane %v7066, 7
  %v7906 = vrot.slane %v7905, 2
  %v7907 = vrot.slane %v7068, 7
  %v7908 = vrot.slane %v7907, 2
  %v7909 = vrot.slane %v7076, 7
  %v7910 = vrot.slane %v7909, 2
  %v7911 = vrot.slane %v7084, 7
  %v7912 = vrot.slane %v7911, 2
  %v7913 = vrot.slane %v7083, 7
  %v7914 = vrot.slane %v7913, 2
  %v7915 = vrot.slane %v7085, 7
  %v7916 = vrot.slane %v7915, 2
  %v7917 = vrot.slane %v7093, 7
  %v7918 = vrot.slane %v7917, 2
  %v7919 = vrot.slane %v7101, 7
  %v7920 = vrot.slane %v7919, 2
  %v7921 = vrot.slane %v7100, 7
  %v7922 = vrot.slane %v7921, 2
  %v7923 = vrot.slane %v7102, 7
  %v7924 = vrot.slane %v7923, 2
  %v7925 = vrot.slane %v7110, 7
  %v7926 = vrot.slane %v7925, 2
  %v7927 = vrot.slane %v7118, 7
  %v7928 = vrot.slane %v7927, 2
  %v7929 = vrot.slane %v7117, 7
  %v7930 = vrot.slane %v7929, 2
  %v7931 = vrot.slane %v7119, 7
  %v7932 = vrot.slane %v7931, 2
  %v7933 = vrot.slane %v7127, 7
  %v7934 = vrot.slane %v7933, 2
  %v7935 = vrot.slane %v7135, 7
  %v7936 = vrot.slane %v7935, 2
  %v7937 = vrot.slane %v7134, 7
  %v7938 = vrot.slane %v7937, 2
  %v7939 = vrot.slane %v7136, 7
  %v7940 = vrot.slane %v7939, 2
  %v7941 = vrot.slane %v7144, 7
  %v7942 = vrot.slane %v7941, 2
  %v7943 = vrot.slane %v7152, 7
  %v7944 = vrot.slane %v7943, 2
  %v7945 = vrot.slane %v7151, 7
  %v7946 = vrot.slane %v7945, 2
  %v7947 = vrot.slane %v7153, 7
  %v7948 = vrot.slane %v7947, 2
  %v7949 = vrot.slane %v7161, 7
  %v7950 = vrot.slane %v7949, 2
  %v7951 = vrot.slane %v7169, 7
  %v7952 = vrot.slane %v7951, 2
  %v7953 = vrot.slane %v7168, 7
  %v7954 = vrot.slane %v7953, 2
  %v7955 = vrot.slane %v7170, 7
  %v7956 = vrot.slane %v7955, 2
  %v7957 = vrot.slane %v7178, 7
  %v7958 = vrot.slane %v7957, 2
  %v7959 = vrot.slane %v7186, 7
  %v7960 = vrot.slane %v7959, 2
  %v7961 = vrot.slane %v7185, 7
  %v7962 = vrot.slane %v7961, 2
  %v7963 = vrot.slane %v7187, 7
  %v7964 = vrot.slane %v7963, 2
  %v7965 = vrot.slane %v7195, 7
  %v7966 = vrot.slane %v7965, 2
  %v7967 = vrot.slane %v7203, 7
  %v7968 = vrot.slane %v7967, 2
  %v7969 = vrot.slane %v7202, 7
  %v7970 = vrot.slane %v7969, 2
  %v7971 = vrot.slane %v7204, 7
  %v7972 = vrot.slane %v7971, 2
  %v8229 = vadd.f32 %v6124, %v7462
  %v8230 = vadd.f32 %v6132, %v7464
  %v8231 = vadd.f32 %v6131, %v7466
  %v8232 = vadd.f32 %v6133, %v7468
  %v8233 = vadd.f32 %v6141, %v7470
  %v8234 = vadd.f32 %v6149, %v7472
  %v8235 = vadd.f32 %v6148, %v7474
  %v8236 = vadd.f32 %v6150, %v7476
  %v8237 = vadd.f32 %v6158, %v7478
  %v8238 = vadd.f32 %v6166, %v7480
  %v8239 = vadd.f32 %v6165, %v7482
  %v8240 = vadd.f32 %v6167, %v7484
  %v8241 = vadd.f32 %v6175, %v7486
  %v8242 = vadd.f32 %v6183, %v7488
  %v8243 = vadd.f32 %v6182, %v7490
  %v8244 = vadd.f32 %v6184, %v7492
  %v8245 = vadd.f32 %v6192, %v7494
  %v8246 = vadd.f32 %v6200, %v7496
  %v8247 = vadd.f32 %v6199, %v7498
  %v8248 = vadd.f32 %v6201, %v7500
  %v8249 = vadd.f32 %v6209, %v7502
  %v8250 = vadd.f32 %v6217, %v7504
  %v8251 = vadd.f32 %v6216, %v7506
  %v8252 = vadd.f32 %v6218, %v7508
  %v8253 = vadd.f32 %v6226, %v7510
  %v8254 = vadd.f32 %v6234, %v7512
  %v8255 = vadd.f32 %v6233, %v7514
  %v8256 = vadd.f32 %v6235, %v7516
  %v8257 = vadd.f32 %v6243, %v7518
  %v8258 = vadd.f32 %v6251, %v7520
  %v8259 = vadd.f32 %v6250, %v7522
  %v8260 = vadd.f32 %v6252, %v7524
  %v8261 = vadd.f32 %v6260, %v7526
  %v8262 = vadd.f32 %v6268, %v7528
  %v8263 = vadd.f32 %v6267, %v7530
  %v8264 = vadd.f32 %v6269, %v7532
  %v8265 = vadd.f32 %v6277, %v7534
  %v8266 = vadd.f32 %v6285, %v7536
  %v8267 = vadd.f32 %v6284, %v7538
  %v8268 = vadd.f32 %v6286, %v7540
  %v8269 = vadd.f32 %v6294, %v7542
  %v8270 = vadd.f32 %v6302, %v7544
  %v8271 = vadd.f32 %v6301, %v7546
  %v8272 = vadd.f32 %v6303, %v7548
  %v8273 = vadd.f32 %v6311, %v7550
  %v8274 = vadd.f32 %v6319, %v7552
  %v8275 = vadd.f32 %v6318, %v7554
  %v8276 = vadd.f32 %v6320, %v7556
  %v8277 = vadd.f32 %v6328, %v7558
  %v8278 = vadd.f32 %v6336, %v7560
  %v8279 = vadd.f32 %v6335, %v7562
  %v8280 = vadd.f32 %v6337, %v7564
  %v8281 = vadd.f32 %v6345, %v7566
  %v8282 = vadd.f32 %v6353, %v7568
  %v8283 = vadd.f32 %v6352, %v7570
  %v8284 = vadd.f32 %v6354, %v7572
  %v8285 = vadd.f32 %v6362, %v7574
  %v8286 = vadd.f32 %v6370, %v7576
  %v8287 = vadd.f32 %v6369, %v7578
  %v8288 = vadd.f32 %v6371, %v7580
  %v8289 = vadd.f32 %v6379, %v7582
  %v8290 = vadd.f32 %v6387, %v7584
  %v8291 = vadd.f32 %v6386, %v7586
  %v8292 = vadd.f32 %v6388, %v7588
  %v8293 = vadd.f32 %v6396, %v7590
  %v8294 = vadd.f32 %v6404, %v7592
  %v8295 = vadd.f32 %v6403, %v7594
  %v8296 = vadd.f32 %v6405, %v7596
  %v8297 = vadd.f32 %v6413, %v7598
  %v8298 = vadd.f32 %v6421, %v7600
  %v8299 = vadd.f32 %v6420, %v7602
  %v8300 = vadd.f32 %v6422, %v7604
  %v8301 = vadd.f32 %v6430, %v7606
  %v8302 = vadd.f32 %v6438, %v7608
  %v8303 = vadd.f32 %v6437, %v7610
  %v8304 = vadd.f32 %v6439, %v7612
  %v8305 = vadd.f32 %v6447, %v7614
  %v8306 = vadd.f32 %v6455, %v7616
  %v8307 = vadd.f32 %v6454, %v7618
  %v8308 = vadd.f32 %v6456, %v7620
  %v8309 = vadd.f32 %v6464, %v7622
  %v8310 = vadd.f32 %v6472, %v7624
  %v8311 = vadd.f32 %v6471, %v7626
  %v8312 = vadd.f32 %v6473, %v7628
  %v8313 = vadd.f32 %v6481, %v7630
  %v8314 = vadd.f32 %v6489, %v7632
  %v8315 = vadd.f32 %v6488, %v7634
  %v8316 = vadd.f32 %v6490, %v7636
  %v8317 = vadd.f32 %v6498, %v7638
  %v8318 = vadd.f32 %v6506, %v7640
  %v8319 = vadd.f32 %v6505, %v7642
  %v8320 = vadd.f32 %v6507, %v7644
  %v8321 = vadd.f32 %v6515, %v7646
  %v8322 = vadd.f32 %v6523, %v7648
  %v8323 = vadd.f32 %v6522, %v7650
  %v8324 = vadd.f32 %v6524, %v7652
  %v8325 = vadd.f32 %v6532, %v7654
  %v8326 = vadd.f32 %v6540, %v7656
  %v8327 = vadd.f32 %v6539, %v7658
  %v8328 = vadd.f32 %v6541, %v7660
  %v8329 = vadd.f32 %v6549, %v7662
  %v8330 = vadd.f32 %v6557, %v7664
  %v8331 = vadd.f32 %v6556, %v7666
  %v8332 = vadd.f32 %v6558, %v7668
  %v8333 = vadd.f32 %v6566, %v7670
  %v8334 = vadd.f32 %v6574, %v7672
  %v8335 = vadd.f32 %v6573, %v7674
  %v8336 = vadd.f32 %v6575, %v7676
  %v8337 = vadd.f32 %v6583, %v7678
  %v8338 = vadd.f32 %v6591, %v7680
  %v8339 = vadd.f32 %v6590, %v7682
  %v8340 = vadd.f32 %v6592, %v7684
  %v8341 = vadd.f32 %v6600, %v7686
  %v8342 = vadd.f32 %v6608, %v7688
  %v8343 = vadd.f32 %v6607, %v7690
  %v8344 = vadd.f32 %v6609, %v7692
  %v8345 = vadd.f32 %v6617, %v7694
  %v8346 = vadd.f32 %v6625, %v7696
  %v8347 = vadd.f32 %v6624, %v7698
  %v8348 = vadd.f32 %v6626, %v7700
  %v8349 = vadd.f32 %v6634, %v7702
  %v8350 = vadd.f32 %v6642, %v7704
  %v8351 = vadd.f32 %v6641, %v7706
  %v8352 = vadd.f32 %v6643, %v7708
  %v8353 = vadd.f32 %v6651, %v7710
  %v8354 = vadd.f32 %v6659, %v7712
  %v8355 = vadd.f32 %v6658, %v7714
  %v8356 = vadd.f32 %v6660, %v7716
  %v8357 = vadd.f32 %v6668, %v7718
  %v8358 = vadd.f32 %v6676, %v7720
  %v8359 = vadd.f32 %v6675, %v7722
  %v8360 = vadd.f32 %v6677, %v7724
  %v8361 = vadd.f32 %v6685, %v7726
  %v8362 = vadd.f32 %v6693, %v7728
  %v8363 = vadd.f32 %v6692, %v7730
  %v8364 = vadd.f32 %v6694, %v7732
  %v8365 = vadd.f32 %v6702, %v7734
  %v8366 = vadd.f32 %v6710, %v7736
  %v8367 = vadd.f32 %v6709, %v7738
  %v8368 = vadd.f32 %v6711, %v7740
  %v8369 = vadd.f32 %v6719, %v7742
  %v8370 = vadd.f32 %v6727, %v7744
  %v8371 = vadd.f32 %v6726, %v7746
  %v8372 = vadd.f32 %v6728, %v7748
  %v8373 = vadd.f32 %v6736, %v7750
  %v8374 = vadd.f32 %v6744, %v7752
  %v8375 = vadd.f32 %v6743, %v7754
  %v8376 = vadd.f32 %v6745, %v7756
  %v8377 = vadd.f32 %v6753, %v7758
  %v8378 = vadd.f32 %v6761, %v7760
  %v8379 = vadd.f32 %v6760, %v7762
  %v8380 = vadd.f32 %v6762, %v7764
  %v8381 = vadd.f32 %v6770, %v7766
  %v8382 = vadd.f32 %v6778, %v7768
  %v8383 = vadd.f32 %v6777, %v7770
  %v8384 = vadd.f32 %v6779, %v7772
  %v8385 = vadd.f32 %v6787, %v7774
  %v8386 = vadd.f32 %v6795, %v7776
  %v8387 = vadd.f32 %v6794, %v7778
  %v8388 = vadd.f32 %v6796, %v7780
  %v8389 = vadd.f32 %v6804, %v7782
  %v8390 = vadd.f32 %v6812, %v7784
  %v8391 = vadd.f32 %v6811, %v7786
  %v8392 = vadd.f32 %v6813, %v7788
  %v8393 = vadd.f32 %v6821, %v7790
  %v8394 = vadd.f32 %v6829, %v7792
  %v8395 = vadd.f32 %v6828, %v7794
  %v8396 = vadd.f32 %v6830, %v7796
  %v8397 = vadd.f32 %v6838, %v7798
  %v8398 = vadd.f32 %v6846, %v7800
  %v8399 = vadd.f32 %v6845, %v7802
  %v8400 = vadd.f32 %v6847, %v7804
  %v8401 = vadd.f32 %v6855, %v7806
  %v8402 = vadd.f32 %v6863, %v7808
  %v8403 = vadd.f32 %v6862, %v7810
  %v8404 = vadd.f32 %v6864, %v7812
  %v8405 = vadd.f32 %v6872, %v7814
  %v8406 = vadd.f32 %v6880, %v7816
  %v8407 = vadd.f32 %v6879, %v7818
  %v8408 = vadd.f32 %v6881, %v7820
  %v8409 = vadd.f32 %v6889, %v7822
  %v8410 = vadd.f32 %v6897, %v7824
  %v8411 = vadd.f32 %v6896, %v7826
  %v8412 = vadd.f32 %v6898, %v7828
  %v8413 = vadd.f32 %v6906, %v7830
  %v8414 = vadd.f32 %v6914, %v7832
  %v8415 = vadd.f32 %v6913, %v7834
  %v8416 = vadd.f32 %v6915, %v7836
  %v8417 = vadd.f32 %v6923, %v7838
  %v8418 = vadd.f32 %v6931, %v7840
  %v8419 = vadd.f32 %v6930, %v7842
  %v8420 = vadd.f32 %v6932, %v7844
  %v8421 = vadd.f32 %v6940, %v7846
  %v8422 = vadd.f32 %v6948, %v7848
  %v8423 = vadd.f32 %v6947, %v7850
  %v8424 = vadd.f32 %v6949, %v7852
  %v8425 = vadd.f32 %v6957, %v7854
  %v8426 = vadd.f32 %v6965, %v7856
  %v8427 = vadd.f32 %v6964, %v7858
  %v8428 = vadd.f32 %v6966, %v7860
  %v8429 = vadd.f32 %v6974, %v7862
  %v8430 = vadd.f32 %v6982, %v7864
  %v8431 = vadd.f32 %v6981, %v7866
  %v8432 = vadd.f32 %v6983, %v7868
  %v8433 = vadd.f32 %v6991, %v7870
  %v8434 = vadd.f32 %v6999, %v7872
  %v8435 = vadd.f32 %v6998, %v7874
  %v8436 = vadd.f32 %v7000, %v7876
  %v8437 = vadd.f32 %v7008, %v7878
  %v8438 = vadd.f32 %v7016, %v7880
  %v8439 = vadd.f32 %v7015, %v7882
  %v8440 = vadd.f32 %v7017, %v7884
  %v8441 = vadd.f32 %v7025, %v7886
  %v8442 = vadd.f32 %v7033, %v7888
  %v8443 = vadd.f32 %v7032, %v7890
  %v8444 = vadd.f32 %v7034, %v7892
  %v8445 = vadd.f32 %v7042, %v7894
  %v8446 = vadd.f32 %v7050, %v7896
  %v8447 = vadd.f32 %v7049, %v7898
  %v8448 = vadd.f32 %v7051, %v7900
  %v8449 = vadd.f32 %v7059, %v7902
  %v8450 = vadd.f32 %v7067, %v7904
  %v8451 = vadd.f32 %v7066, %v7906
  %v8452 = vadd.f32 %v7068, %v7908
  %v8453 = vadd.f32 %v7076, %v7910
  %v8454 = vadd.f32 %v7084, %v7912
  %v8455 = vadd.f32 %v7083, %v7914
  %v8456 = vadd.f32 %v7085, %v7916
  %v8457 = vadd.f32 %v7093, %v7918
  %v8458 = vadd.f32 %v7101, %v7920
  %v8459 = vadd.f32 %v7100, %v7922
  %v8460 = vadd.f32 %v7102, %v7924
  %v8461 = vadd.f32 %v7110, %v7926
  %v8462 = vadd.f32 %v7118, %v7928
  %v8463 = vadd.f32 %v7117, %v7930
  %v8464 = vadd.f32 %v7119, %v7932
  %v8465 = vadd.f32 %v7127, %v7934
  %v8466 = vadd.f32 %v7135, %v7936
  %v8467 = vadd.f32 %v7134, %v7938
  %v8468 = vadd.f32 %v7136, %v7940
  %v8469 = vadd.f32 %v7144, %v7942
  %v8470 = vadd.f32 %v7152, %v7944
  %v8471 = vadd.f32 %v7151, %v7946
  %v8472 = vadd.f32 %v7153, %v7948
  %v8473 = vadd.f32 %v7161, %v7950
  %v8474 = vadd.f32 %v7169, %v7952
  %v8475 = vadd.f32 %v7168, %v7954
  %v8476 = vadd.f32 %v7170, %v7956
  %v8477 = vadd.f32 %v7178, %v7958
  %v8478 = vadd.f32 %v7186, %v7960
  %v8479 = vadd.f32 %v7185, %v7962
  %v8480 = vadd.f32 %v7187, %v7964
  %v8481 = vadd.f32 %v7195, %v7966
  %v8482 = vadd.f32 %v7203, %v7968
  %v8483 = vadd.f32 %v7202, %v7970
  %v8484 = vadd.f32 %v7204, %v7972
  %v8485 = vadd.f32 %v8229, %v8237
  %v8486 = vadd.f32 %v8230, %v8238
  %v8487 = vadd.f32 %v8231, %v8239
  %v8488 = vadd.f32 %v8232, %v8240
  %v8489 = vadd.f32 %v8233, %v8241
  %v8490 = vadd.f32 %v8234, %v8242
  %v8491 = vadd.f32 %v8235, %v8243
  %v8492 = vadd.f32 %v8236, %v8244
  %v8493 = vadd.f32 %v8245, %v8253
  %v8494 = vadd.f32 %v8246, %v8254
  %v8495 = vadd.f32 %v8247, %v8255
  %v8496 = vadd.f32 %v8248, %v8256
  %v8497 = vadd.f32 %v8249, %v8257
  %v8498 = vadd.f32 %v8250, %v8258
  %v8499 = vadd.f32 %v8251, %v8259
  %v8500 = vadd.f32 %v8252, %v8260
  %v8501 = vadd.f32 %v8261, %v8269
  %v8502 = vadd.f32 %v8262, %v8270
  %v8503 = vadd.f32 %v8263, %v8271
  %v8504 = vadd.f32 %v8264, %v8272
  %v8505 = vadd.f32 %v8265, %v8273
  %v8506 = vadd.f32 %v8266, %v8274
  %v8507 = vadd.f32 %v8267, %v8275
  %v8508 = vadd.f32 %v8268, %v8276
  %v8509 = vadd.f32 %v8277, %v8285
  %v8510 = vadd.f32 %v8278, %v8286
  %v8511 = vadd.f32 %v8279, %v8287
  %v8512 = vadd.f32 %v8280, %v8288
  %v8513 = vadd.f32 %v8281, %v8289
  %v8514 = vadd.f32 %v8282, %v8290
  %v8515 = vadd.f32 %v8283, %v8291
  %v8516 = vadd.f32 %v8284, %v8292
  %v8517 = vadd.f32 %v8293, %v8301
  %v8518 = vadd.f32 %v8294, %v8302
  %v8519 = vadd.f32 %v8295, %v8303
  %v8520 = vadd.f32 %v8296, %v8304
  %v8521 = vadd.f32 %v8297, %v8305
  %v8522 = vadd.f32 %v8298, %v8306
  %v8523 = vadd.f32 %v8299, %v8307
  %v8524 = vadd.f32 %v8300, %v8308
  %v8525 = vadd.f32 %v8309, %v8317
  %v8526 = vadd.f32 %v8310, %v8318
  %v8527 = vadd.f32 %v8311, %v8319
  %v8528 = vadd.f32 %v8312, %v8320
  %v8529 = vadd.f32 %v8313, %v8321
  %v8530 = vadd.f32 %v8314, %v8322
  %v8531 = vadd.f32 %v8315, %v8323
  %v8532 = vadd.f32 %v8316, %v8324
  %v8533 = vadd.f32 %v8325, %v8333
  %v8534 = vadd.f32 %v8326, %v8334
  %v8535 = vadd.f32 %v8327, %v8335
  %v8536 = vadd.f32 %v8328, %v8336
  %v8537 = vadd.f32 %v8329, %v8337
  %v8538 = vadd.f32 %v8330, %v8338
  %v8539 = vadd.f32 %v8331, %v8339
  %v8540 = vadd.f32 %v8332, %v8340
  %v8541 = vadd.f32 %v8341, %v8349
  %v8542 = vadd.f32 %v8342, %v8350
  %v8543 = vadd.f32 %v8343, %v8351
  %v8544 = vadd.f32 %v8344, %v8352
  %v8545 = vadd.f32 %v8345, %v8353
  %v8546 = vadd.f32 %v8346, %v8354
  %v8547 = vadd.f32 %v8347, %v8355
  %v8548 = vadd.f32 %v8348, %v8356
  %v8549 = vadd.f32 %v8357, %v8365
  %v8550 = vadd.f32 %v8358, %v8366
  %v8551 = vadd.f32 %v8359, %v8367
  %v8552 = vadd.f32 %v8360, %v8368
  %v8553 = vadd.f32 %v8361, %v8369
  %v8554 = vadd.f32 %v8362, %v8370
  %v8555 = vadd.f32 %v8363, %v8371
  %v8556 = vadd.f32 %v8364, %v8372
  %v8557 = vadd.f32 %v8373, %v8381
  %v8558 = vadd.f32 %v8374, %v8382
  %v8559 = vadd.f32 %v8375, %v8383
  %v8560 = vadd.f32 %v8376, %v8384
  %v8561 = vadd.f32 %v8377, %v8385
  %v8562 = vadd.f32 %v8378, %v8386
  %v8563 = vadd.f32 %v8379, %v8387
  %v8564 = vadd.f32 %v8380, %v8388
  %v8565 = vadd.f32 %v8389, %v8397
  %v8566 = vadd.f32 %v8390, %v8398
  %v8567 = vadd.f32 %v8391, %v8399
  %v8568 = vadd.f32 %v8392, %v8400
  %v8569 = vadd.f32 %v8393, %v8401
  %v8570 = vadd.f32 %v8394, %v8402
  %v8571 = vadd.f32 %v8395, %v8403
  %v8572 = vadd.f32 %v8396, %v8404
  %v8573 = vadd.f32 %v8405, %v8413
  %v8574 = vadd.f32 %v8406, %v8414
  %v8575 = vadd.f32 %v8407, %v8415
  %v8576 = vadd.f32 %v8408, %v8416
  %v8577 = vadd.f32 %v8409, %v8417
  %v8578 = vadd.f32 %v8410, %v8418
  %v8579 = vadd.f32 %v8411, %v8419
  %v8580 = vadd.f32 %v8412, %v8420
  %v8581 = vadd.f32 %v8421, %v8429
  %v8582 = vadd.f32 %v8422, %v8430
  %v8583 = vadd.f32 %v8423, %v8431
  %v8584 = vadd.f32 %v8424, %v8432
  %v8585 = vadd.f32 %v8425, %v8433
  %v8586 = vadd.f32 %v8426, %v8434
  %v8587 = vadd.f32 %v8427, %v8435
  %v8588 = vadd.f32 %v8428, %v8436
  %v8589 = vadd.f32 %v8437, %v8445
  %v8590 = vadd.f32 %v8438, %v8446
  %v8591 = vadd.f32 %v8439, %v8447
  %v8592 = vadd.f32 %v8440, %v8448
  %v8593 = vadd.f32 %v8441, %v8449
  %v8594 = vadd.f32 %v8442, %v8450
  %v8595 = vadd.f32 %v8443, %v8451
  %v8596 = vadd.f32 %v8444, %v8452
  %v8597 = vadd.f32 %v8453, %v8461
  %v8598 = vadd.f32 %v8454, %v8462
  %v8599 = vadd.f32 %v8455, %v8463
  %v8600 = vadd.f32 %v8456, %v8464
  %v8601 = vadd.f32 %v8457, %v8465
  %v8602 = vadd.f32 %v8458, %v8466
  %v8603 = vadd.f32 %v8459, %v8467
  %v8604 = vadd.f32 %v8460, %v8468
  %v8605 = vadd.f32 %v8469, %v8477
  %v8606 = vadd.f32 %v8470, %v8478
  %v8607 = vadd.f32 %v8471, %v8479
  %v8608 = vadd.f32 %v8472, %v8480
  %v8609 = vadd.f32 %v8473, %v8481
  %v8610 = vadd.f32 %v8474, %v8482
  %v8611 = vadd.f32 %v8475, %v8483
  %v8612 = vadd.f32 %v8476, %v8484
  %v8613 = vmul.f32 %v8485, 0.25
  %v8614 = vmul.f32 %v8486, 0.25
  %v8615 = vmul.f32 %v8487, 0.25
  %v8616 = vmul.f32 %v8488, 0.25
  %v8617 = vmul.f32 %v8489, 0.25
  %v8618 = vmul.f32 %v8490, 0.25
  %v8619 = vmul.f32 %v8491, 0.25
  %v8620 = vmul.f32 %v8492, 0.25
  %v8621 = vmul.f32 %v8493, 0.25
  %v8622 = vmul.f32 %v8494, 0.25
  %v8623 = vmul.f32 %v8495, 0.25
  %v8624 = vmul.f32 %v8496, 0.25
  %v8625 = vmul.f32 %v8497, 0.25
  %v8626 = vmul.f32 %v8498, 0.25
  %v8627 = vmul.f32 %v8499, 0.25
  %v8628 = vmul.f32 %v8500, 0.25
  %v8629 = vmul.f32 %v8501, 0.25
  %v8630 = vmul.f32 %v8502, 0.25
  %v8631 = vmul.f32 %v8503, 0.25
  %v8632 = vmul.f32 %v8504, 0.25
  %v8633 = vmul.f32 %v8505, 0.25
  %v8634 = vmul.f32 %v8506, 0.25
  %v8635 = vmul.f32 %v8507, 0.25
  %v8636 = vmul.f32 %v8508, 0.25
  %v8637 = vmul.f32 %v8509, 0.25
  %v8638 = vmul.f32 %v8510, 0.25
  %v8639 = vmul.f32 %v8511, 0.25
  %v8640 = vmul.f32 %v8512, 0.25
  %v8641 = vmul.f32 %v8513, 0.25
  %v8642 = vmul.f32 %v8514, 0.25
  %v8643 = vmul.f32 %v8515, 0.25
  %v8644 = vmul.f32 %v8516, 0.25
  %v8645 = vmul.f32 %v8517, 0.25
  %v8646 = vmul.f32 %v8518, 0.25
  %v8647 = vmul.f32 %v8519, 0.25
  %v8648 = vmul.f32 %v8520, 0.25
  %v8649 = vmul.f32 %v8521, 0.25
  %v8650 = vmul.f32 %v8522, 0.25
  %v8651 = vmul.f32 %v8523, 0.25
  %v8652 = vmul.f32 %v8524, 0.25
  %v8653 = vmul.f32 %v8525, 0.25
  %v8654 = vmul.f32 %v8526, 0.25
  %v8655 = vmul.f32 %v8527, 0.25
  %v8656 = vmul.f32 %v8528, 0.25
  %v8657 = vmul.f32 %v8529, 0.25
  %v8658 = vmul.f32 %v8530, 0.25
  %v8659 = vmul.f32 %v8531, 0.25
  %v8660 = vmul.f32 %v8532, 0.25
  %v8661 = vmul.f32 %v8533, 0.25
  %v8662 = vmul.f32 %v8534, 0.25
  %v8663 = vmul.f32 %v8535, 0.25
  %v8664 = vmul.f32 %v8536, 0.25
  %v8665 = vmul.f32 %v8537, 0.25
  %v8666 = vmul.f32 %v8538, 0.25
  %v8667 = vmul.f32 %v8539, 0.25
  %v8668 = vmul.f32 %v8540, 0.25
  %v8669 = vmul.f32 %v8541, 0.25
  %v8670 = vmul.f32 %v8542, 0.25
  %v8671 = vmul.f32 %v8543, 0.25
  %v8672 = vmul.f32 %v8544, 0.25
  %v8673 = vmul.f32 %v8545, 0.25
  %v8674 = vmul.f32 %v8546, 0.25
  %v8675 = vmul.f32 %v8547, 0.25
  %v8676 = vmul.f32 %v8548, 0.25
  %v8677 = vmul.f32 %v8549, 0.25
  %v8678 = vmul.f32 %v8550, 0.25
  %v8679 = vmul.f32 %v8551, 0.25
  %v8680 = vmul.f32 %v8552, 0.25
  %v8681 = vmul.f32 %v8553, 0.25
  %v8682 = vmul.f32 %v8554, 0.25
  %v8683 = vmul.f32 %v8555, 0.25
  %v8684 = vmul.f32 %v8556, 0.25
  %v8685 = vmul.f32 %v8557, 0.25
  %v8686 = vmul.f32 %v8558, 0.25
  %v8687 = vmul.f32 %v8559, 0.25
  %v8688 = vmul.f32 %v8560, 0.25
  %v8689 = vmul.f32 %v8561, 0.25
  %v8690 = vmul.f32 %v8562, 0.25
  %v8691 = vmul.f32 %v8563, 0.25
  %v8692 = vmul.f32 %v8564, 0.25
  %v8693 = vmul.f32 %v8565, 0.25
  %v8694 = vmul.f32 %v8566, 0.25
  %v8695 = vmul.f32 %v8567, 0.25
  %v8696 = vmul.f32 %v8568, 0.25
  %v8697 = vmul.f32 %v8569, 0.25
  %v8698 = vmul.f32 %v8570, 0.25
  %v8699 = vmul.f32 %v8571, 0.25
  %v8700 = vmul.f32 %v8572, 0.25
  %v8701 = vmul.f32 %v8573, 0.25
  %v8702 = vmul.f32 %v8574, 0.25
  %v8703 = vmul.f32 %v8575, 0.25
  %v8704 = vmul.f32 %v8576, 0.25
  %v8705 = vmul.f32 %v8577, 0.25
  %v8706 = vmul.f32 %v8578, 0.25
  %v8707 = vmul.f32 %v8579, 0.25
  %v8708 = vmul.f32 %v8580, 0.25
  %v8709 = vmul.f32 %v8581, 0.25
  %v8710 = vmul.f32 %v8582, 0.25
  %v8711 = vmul.f32 %v8583, 0.25
  %v8712 = vmul.f32 %v8584, 0.25
  %v8713 = vmul.f32 %v8585, 0.25
  %v8714 = vmul.f32 %v8586, 0.25
  %v8715 = vmul.f32 %v8587, 0.25
  %v8716 = vmul.f32 %v8588, 0.25
  %v8717 = vmul.f32 %v8589, 0.25
  %v8718 = vmul.f32 %v8590, 0.25
  %v8719 = vmul.f32 %v8591, 0.25
  %v8720 = vmul.f32 %v8592, 0.25
  %v8721 = vmul.f32 %v8593, 0.25
  %v8722 = vmul.f32 %v8594, 0.25
  %v8723 = vmul.f32 %v8595, 0.25
  %v8724 = vmul.f32 %v8596, 0.25
  %v8725 = vmul.f32 %v8597, 0.25
  %v8726 = vmul.f32 %v8598, 0.25
  %v8727 = vmul.f32 %v8599, 0.25
  %v8728 = vmul.f32 %v8600, 0.25
  %v8729 = vmul.f32 %v8601, 0.25
  %v8730 = vmul.f32 %v8602, 0.25
  %v8731 = vmul.f32 %v8603, 0.25
  %v8732 = vmul.f32 %v8604, 0.25
  %v8733 = vmul.f32 %v8605, 0.25
  %v8734 = vmul.f32 %v8606, 0.25
  %v8735 = vmul.f32 %v8607, 0.25
  %v8736 = vmul.f32 %v8608, 0.25
  %v8737 = vmul.f32 %v8609, 0.25
  %v8738 = vmul.f32 %v8610, 0.25
  %v8739 = vmul.f32 %v8611, 0.25
  %v8740 = vmul.f32 %v8612, 0.25
  %vm8869 = vcmask 1044484
  %v8870 = vsel %vm8869, %v8613, %v8613
  %vm8871 = vcmask 1046534
  %v8872 = vsel %vm8871, %v8613, %v8870
  %v8873 = vrot.slane %v8614, 7
  %vm8874 = vcmask 1041409
  %v8875 = vsel %vm8874, %v8873, %v8872
  %vm8876 = vcmask 1043459
  %v8877 = vsel %vm8876, %v8873, %v8875
  %vm8878 = vcmask 1045509
  %v8879 = vsel %vm8878, %v8873, %v8877
  %vm8880 = vcmask 1047559
  %v8881 = vsel %vm8880, %v8873, %v8879
  %v8882 = vsel %vm8869, %v8615, %v8615
  %v8883 = vsel %vm8871, %v8615, %v8882
  %v8884 = vrot.slane %v8616, 7
  %v8885 = vsel %vm8874, %v8884, %v8883
  %v8886 = vsel %vm8876, %v8884, %v8885
  %v8887 = vsel %vm8878, %v8884, %v8886
  %v8888 = vsel %vm8880, %v8884, %v8887
  %v8889 = vsel %vm8869, %v8617, %v8617
  %v8890 = vsel %vm8871, %v8617, %v8889
  %v8891 = vrot.slane %v8618, 7
  %v8892 = vsel %vm8874, %v8891, %v8890
  %v8893 = vsel %vm8876, %v8891, %v8892
  %v8894 = vsel %vm8878, %v8891, %v8893
  %v8895 = vsel %vm8880, %v8891, %v8894
  %v8896 = vsel %vm8869, %v8619, %v8619
  %v8897 = vsel %vm8871, %v8619, %v8896
  %v8898 = vrot.slane %v8620, 7
  %v8899 = vsel %vm8874, %v8898, %v8897
  %v8900 = vsel %vm8876, %v8898, %v8899
  %v8901 = vsel %vm8878, %v8898, %v8900
  %v8902 = vsel %vm8880, %v8898, %v8901
  %v8903 = vsel %vm8869, %v8621, %v8621
  %v8904 = vsel %vm8871, %v8621, %v8903
  %v8905 = vrot.slane %v8622, 7
  %v8906 = vsel %vm8874, %v8905, %v8904
  %v8907 = vsel %vm8876, %v8905, %v8906
  %v8908 = vsel %vm8878, %v8905, %v8907
  %v8909 = vsel %vm8880, %v8905, %v8908
  %v8910 = vsel %vm8869, %v8623, %v8623
  %v8911 = vsel %vm8871, %v8623, %v8910
  %v8912 = vrot.slane %v8624, 7
  %v8913 = vsel %vm8874, %v8912, %v8911
  %v8914 = vsel %vm8876, %v8912, %v8913
  %v8915 = vsel %vm8878, %v8912, %v8914
  %v8916 = vsel %vm8880, %v8912, %v8915
  %v8917 = vsel %vm8869, %v8625, %v8625
  %v8918 = vsel %vm8871, %v8625, %v8917
  %v8919 = vrot.slane %v8626, 7
  %v8920 = vsel %vm8874, %v8919, %v8918
  %v8921 = vsel %vm8876, %v8919, %v8920
  %v8922 = vsel %vm8878, %v8919, %v8921
  %v8923 = vsel %vm8880, %v8919, %v8922
  %v8924 = vsel %vm8869, %v8627, %v8627
  %v8925 = vsel %vm8871, %v8627, %v8924
  %v8926 = vrot.slane %v8628, 7
  %v8927 = vsel %vm8874, %v8926, %v8925
  %v8928 = vsel %vm8876, %v8926, %v8927
  %v8929 = vsel %vm8878, %v8926, %v8928
  %v8930 = vsel %vm8880, %v8926, %v8929
  %v8931 = vsel %vm8869, %v8629, %v8629
  %v8932 = vsel %vm8871, %v8629, %v8931
  %v8933 = vrot.slane %v8630, 7
  %v8934 = vsel %vm8874, %v8933, %v8932
  %v8935 = vsel %vm8876, %v8933, %v8934
  %v8936 = vsel %vm8878, %v8933, %v8935
  %v8937 = vsel %vm8880, %v8933, %v8936
  %v8938 = vsel %vm8869, %v8631, %v8631
  %v8939 = vsel %vm8871, %v8631, %v8938
  %v8940 = vrot.slane %v8632, 7
  %v8941 = vsel %vm8874, %v8940, %v8939
  %v8942 = vsel %vm8876, %v8940, %v8941
  %v8943 = vsel %vm8878, %v8940, %v8942
  %v8944 = vsel %vm8880, %v8940, %v8943
  %v8945 = vsel %vm8869, %v8633, %v8633
  %v8946 = vsel %vm8871, %v8633, %v8945
  %v8947 = vrot.slane %v8634, 7
  %v8948 = vsel %vm8874, %v8947, %v8946
  %v8949 = vsel %vm8876, %v8947, %v8948
  %v8950 = vsel %vm8878, %v8947, %v8949
  %v8951 = vsel %vm8880, %v8947, %v8950
  %v8952 = vsel %vm8869, %v8635, %v8635
  %v8953 = vsel %vm8871, %v8635, %v8952
  %v8954 = vrot.slane %v8636, 7
  %v8955 = vsel %vm8874, %v8954, %v8953
  %v8956 = vsel %vm8876, %v8954, %v8955
  %v8957 = vsel %vm8878, %v8954, %v8956
  %v8958 = vsel %vm8880, %v8954, %v8957
  %v8959 = vsel %vm8869, %v8637, %v8637
  %v8960 = vsel %vm8871, %v8637, %v8959
  %v8961 = vrot.slane %v8638, 7
  %v8962 = vsel %vm8874, %v8961, %v8960
  %v8963 = vsel %vm8876, %v8961, %v8962
  %v8964 = vsel %vm8878, %v8961, %v8963
  %v8965 = vsel %vm8880, %v8961, %v8964
  %v8966 = vsel %vm8869, %v8639, %v8639
  %v8967 = vsel %vm8871, %v8639, %v8966
  %v8968 = vrot.slane %v8640, 7
  %v8969 = vsel %vm8874, %v8968, %v8967
  %v8970 = vsel %vm8876, %v8968, %v8969
  %v8971 = vsel %vm8878, %v8968, %v8970
  %v8972 = vsel %vm8880, %v8968, %v8971
  %v8973 = vsel %vm8869, %v8641, %v8641
  %v8974 = vsel %vm8871, %v8641, %v8973
  %v8975 = vrot.slane %v8642, 7
  %v8976 = vsel %vm8874, %v8975, %v8974
  %v8977 = vsel %vm8876, %v8975, %v8976
  %v8978 = vsel %vm8878, %v8975, %v8977
  %v8979 = vsel %vm8880, %v8975, %v8978
  %v8980 = vsel %vm8869, %v8643, %v8643
  %v8981 = vsel %vm8871, %v8643, %v8980
  %v8982 = vrot.slane %v8644, 7
  %v8983 = vsel %vm8874, %v8982, %v8981
  %v8984 = vsel %vm8876, %v8982, %v8983
  %v8985 = vsel %vm8878, %v8982, %v8984
  %v8986 = vsel %vm8880, %v8982, %v8985
  %v8987 = vsel %vm8869, %v8645, %v8645
  %v8988 = vsel %vm8871, %v8645, %v8987
  %v8989 = vrot.slane %v8646, 7
  %v8990 = vsel %vm8874, %v8989, %v8988
  %v8991 = vsel %vm8876, %v8989, %v8990
  %v8992 = vsel %vm8878, %v8989, %v8991
  %v8993 = vsel %vm8880, %v8989, %v8992
  %v8994 = vsel %vm8869, %v8647, %v8647
  %v8995 = vsel %vm8871, %v8647, %v8994
  %v8996 = vrot.slane %v8648, 7
  %v8997 = vsel %vm8874, %v8996, %v8995
  %v8998 = vsel %vm8876, %v8996, %v8997
  %v8999 = vsel %vm8878, %v8996, %v8998
  %v9000 = vsel %vm8880, %v8996, %v8999
  %v9001 = vsel %vm8869, %v8649, %v8649
  %v9002 = vsel %vm8871, %v8649, %v9001
  %v9003 = vrot.slane %v8650, 7
  %v9004 = vsel %vm8874, %v9003, %v9002
  %v9005 = vsel %vm8876, %v9003, %v9004
  %v9006 = vsel %vm8878, %v9003, %v9005
  %v9007 = vsel %vm8880, %v9003, %v9006
  %v9008 = vsel %vm8869, %v8651, %v8651
  %v9009 = vsel %vm8871, %v8651, %v9008
  %v9010 = vrot.slane %v8652, 7
  %v9011 = vsel %vm8874, %v9010, %v9009
  %v9012 = vsel %vm8876, %v9010, %v9011
  %v9013 = vsel %vm8878, %v9010, %v9012
  %v9014 = vsel %vm8880, %v9010, %v9013
  %v9015 = vsel %vm8869, %v8653, %v8653
  %v9016 = vsel %vm8871, %v8653, %v9015
  %v9017 = vrot.slane %v8654, 7
  %v9018 = vsel %vm8874, %v9017, %v9016
  %v9019 = vsel %vm8876, %v9017, %v9018
  %v9020 = vsel %vm8878, %v9017, %v9019
  %v9021 = vsel %vm8880, %v9017, %v9020
  %v9022 = vsel %vm8869, %v8655, %v8655
  %v9023 = vsel %vm8871, %v8655, %v9022
  %v9024 = vrot.slane %v8656, 7
  %v9025 = vsel %vm8874, %v9024, %v9023
  %v9026 = vsel %vm8876, %v9024, %v9025
  %v9027 = vsel %vm8878, %v9024, %v9026
  %v9028 = vsel %vm8880, %v9024, %v9027
  %v9029 = vsel %vm8869, %v8657, %v8657
  %v9030 = vsel %vm8871, %v8657, %v9029
  %v9031 = vrot.slane %v8658, 7
  %v9032 = vsel %vm8874, %v9031, %v9030
  %v9033 = vsel %vm8876, %v9031, %v9032
  %v9034 = vsel %vm8878, %v9031, %v9033
  %v9035 = vsel %vm8880, %v9031, %v9034
  %v9036 = vsel %vm8869, %v8659, %v8659
  %v9037 = vsel %vm8871, %v8659, %v9036
  %v9038 = vrot.slane %v8660, 7
  %v9039 = vsel %vm8874, %v9038, %v9037
  %v9040 = vsel %vm8876, %v9038, %v9039
  %v9041 = vsel %vm8878, %v9038, %v9040
  %v9042 = vsel %vm8880, %v9038, %v9041
  %v9043 = vsel %vm8869, %v8661, %v8661
  %v9044 = vsel %vm8871, %v8661, %v9043
  %v9045 = vrot.slane %v8662, 7
  %v9046 = vsel %vm8874, %v9045, %v9044
  %v9047 = vsel %vm8876, %v9045, %v9046
  %v9048 = vsel %vm8878, %v9045, %v9047
  %v9049 = vsel %vm8880, %v9045, %v9048
  %v9050 = vsel %vm8869, %v8663, %v8663
  %v9051 = vsel %vm8871, %v8663, %v9050
  %v9052 = vrot.slane %v8664, 7
  %v9053 = vsel %vm8874, %v9052, %v9051
  %v9054 = vsel %vm8876, %v9052, %v9053
  %v9055 = vsel %vm8878, %v9052, %v9054
  %v9056 = vsel %vm8880, %v9052, %v9055
  %v9057 = vsel %vm8869, %v8665, %v8665
  %v9058 = vsel %vm8871, %v8665, %v9057
  %v9059 = vrot.slane %v8666, 7
  %v9060 = vsel %vm8874, %v9059, %v9058
  %v9061 = vsel %vm8876, %v9059, %v9060
  %v9062 = vsel %vm8878, %v9059, %v9061
  %v9063 = vsel %vm8880, %v9059, %v9062
  %v9064 = vsel %vm8869, %v8667, %v8667
  %v9065 = vsel %vm8871, %v8667, %v9064
  %v9066 = vrot.slane %v8668, 7
  %v9067 = vsel %vm8874, %v9066, %v9065
  %v9068 = vsel %vm8876, %v9066, %v9067
  %v9069 = vsel %vm8878, %v9066, %v9068
  %v9070 = vsel %vm8880, %v9066, %v9069
  %v9071 = vsel %vm8869, %v8669, %v8669
  %v9072 = vsel %vm8871, %v8669, %v9071
  %v9073 = vrot.slane %v8670, 7
  %v9074 = vsel %vm8874, %v9073, %v9072
  %v9075 = vsel %vm8876, %v9073, %v9074
  %v9076 = vsel %vm8878, %v9073, %v9075
  %v9077 = vsel %vm8880, %v9073, %v9076
  %v9078 = vsel %vm8869, %v8671, %v8671
  %v9079 = vsel %vm8871, %v8671, %v9078
  %v9080 = vrot.slane %v8672, 7
  %v9081 = vsel %vm8874, %v9080, %v9079
  %v9082 = vsel %vm8876, %v9080, %v9081
  %v9083 = vsel %vm8878, %v9080, %v9082
  %v9084 = vsel %vm8880, %v9080, %v9083
  %v9085 = vsel %vm8869, %v8673, %v8673
  %v9086 = vsel %vm8871, %v8673, %v9085
  %v9087 = vrot.slane %v8674, 7
  %v9088 = vsel %vm8874, %v9087, %v9086
  %v9089 = vsel %vm8876, %v9087, %v9088
  %v9090 = vsel %vm8878, %v9087, %v9089
  %v9091 = vsel %vm8880, %v9087, %v9090
  %v9092 = vsel %vm8869, %v8675, %v8675
  %v9093 = vsel %vm8871, %v8675, %v9092
  %v9094 = vrot.slane %v8676, 7
  %v9095 = vsel %vm8874, %v9094, %v9093
  %v9096 = vsel %vm8876, %v9094, %v9095
  %v9097 = vsel %vm8878, %v9094, %v9096
  %v9098 = vsel %vm8880, %v9094, %v9097
  %v9099 = vsel %vm8869, %v8677, %v8677
  %v9100 = vsel %vm8871, %v8677, %v9099
  %v9101 = vrot.slane %v8678, 7
  %v9102 = vsel %vm8874, %v9101, %v9100
  %v9103 = vsel %vm8876, %v9101, %v9102
  %v9104 = vsel %vm8878, %v9101, %v9103
  %v9105 = vsel %vm8880, %v9101, %v9104
  %v9106 = vsel %vm8869, %v8679, %v8679
  %v9107 = vsel %vm8871, %v8679, %v9106
  %v9108 = vrot.slane %v8680, 7
  %v9109 = vsel %vm8874, %v9108, %v9107
  %v9110 = vsel %vm8876, %v9108, %v9109
  %v9111 = vsel %vm8878, %v9108, %v9110
  %v9112 = vsel %vm8880, %v9108, %v9111
  %v9113 = vsel %vm8869, %v8681, %v8681
  %v9114 = vsel %vm8871, %v8681, %v9113
  %v9115 = vrot.slane %v8682, 7
  %v9116 = vsel %vm8874, %v9115, %v9114
  %v9117 = vsel %vm8876, %v9115, %v9116
  %v9118 = vsel %vm8878, %v9115, %v9117
  %v9119 = vsel %vm8880, %v9115, %v9118
  %v9120 = vsel %vm8869, %v8683, %v8683
  %v9121 = vsel %vm8871, %v8683, %v9120
  %v9122 = vrot.slane %v8684, 7
  %v9123 = vsel %vm8874, %v9122, %v9121
  %v9124 = vsel %vm8876, %v9122, %v9123
  %v9125 = vsel %vm8878, %v9122, %v9124
  %v9126 = vsel %vm8880, %v9122, %v9125
  %v9127 = vsel %vm8869, %v8685, %v8685
  %v9128 = vsel %vm8871, %v8685, %v9127
  %v9129 = vrot.slane %v8686, 7
  %v9130 = vsel %vm8874, %v9129, %v9128
  %v9131 = vsel %vm8876, %v9129, %v9130
  %v9132 = vsel %vm8878, %v9129, %v9131
  %v9133 = vsel %vm8880, %v9129, %v9132
  %v9134 = vsel %vm8869, %v8687, %v8687
  %v9135 = vsel %vm8871, %v8687, %v9134
  %v9136 = vrot.slane %v8688, 7
  %v9137 = vsel %vm8874, %v9136, %v9135
  %v9138 = vsel %vm8876, %v9136, %v9137
  %v9139 = vsel %vm8878, %v9136, %v9138
  %v9140 = vsel %vm8880, %v9136, %v9139
  %v9141 = vsel %vm8869, %v8689, %v8689
  %v9142 = vsel %vm8871, %v8689, %v9141
  %v9143 = vrot.slane %v8690, 7
  %v9144 = vsel %vm8874, %v9143, %v9142
  %v9145 = vsel %vm8876, %v9143, %v9144
  %v9146 = vsel %vm8878, %v9143, %v9145
  %v9147 = vsel %vm8880, %v9143, %v9146
  %v9148 = vsel %vm8869, %v8691, %v8691
  %v9149 = vsel %vm8871, %v8691, %v9148
  %v9150 = vrot.slane %v8692, 7
  %v9151 = vsel %vm8874, %v9150, %v9149
  %v9152 = vsel %vm8876, %v9150, %v9151
  %v9153 = vsel %vm8878, %v9150, %v9152
  %v9154 = vsel %vm8880, %v9150, %v9153
  %v9155 = vsel %vm8869, %v8693, %v8693
  %v9156 = vsel %vm8871, %v8693, %v9155
  %v9157 = vrot.slane %v8694, 7
  %v9158 = vsel %vm8874, %v9157, %v9156
  %v9159 = vsel %vm8876, %v9157, %v9158
  %v9160 = vsel %vm8878, %v9157, %v9159
  %v9161 = vsel %vm8880, %v9157, %v9160
  %v9162 = vsel %vm8869, %v8695, %v8695
  %v9163 = vsel %vm8871, %v8695, %v9162
  %v9164 = vrot.slane %v8696, 7
  %v9165 = vsel %vm8874, %v9164, %v9163
  %v9166 = vsel %vm8876, %v9164, %v9165
  %v9167 = vsel %vm8878, %v9164, %v9166
  %v9168 = vsel %vm8880, %v9164, %v9167
  %v9169 = vsel %vm8869, %v8697, %v8697
  %v9170 = vsel %vm8871, %v8697, %v9169
  %v9171 = vrot.slane %v8698, 7
  %v9172 = vsel %vm8874, %v9171, %v9170
  %v9173 = vsel %vm8876, %v9171, %v9172
  %v9174 = vsel %vm8878, %v9171, %v9173
  %v9175 = vsel %vm8880, %v9171, %v9174
  %v9176 = vsel %vm8869, %v8699, %v8699
  %v9177 = vsel %vm8871, %v8699, %v9176
  %v9178 = vrot.slane %v8700, 7
  %v9179 = vsel %vm8874, %v9178, %v9177
  %v9180 = vsel %vm8876, %v9178, %v9179
  %v9181 = vsel %vm8878, %v9178, %v9180
  %v9182 = vsel %vm8880, %v9178, %v9181
  %v9183 = vsel %vm8869, %v8701, %v8701
  %v9184 = vsel %vm8871, %v8701, %v9183
  %v9185 = vrot.slane %v8702, 7
  %v9186 = vsel %vm8874, %v9185, %v9184
  %v9187 = vsel %vm8876, %v9185, %v9186
  %v9188 = vsel %vm8878, %v9185, %v9187
  %v9189 = vsel %vm8880, %v9185, %v9188
  %v9190 = vsel %vm8869, %v8703, %v8703
  %v9191 = vsel %vm8871, %v8703, %v9190
  %v9192 = vrot.slane %v8704, 7
  %v9193 = vsel %vm8874, %v9192, %v9191
  %v9194 = vsel %vm8876, %v9192, %v9193
  %v9195 = vsel %vm8878, %v9192, %v9194
  %v9196 = vsel %vm8880, %v9192, %v9195
  %v9197 = vsel %vm8869, %v8705, %v8705
  %v9198 = vsel %vm8871, %v8705, %v9197
  %v9199 = vrot.slane %v8706, 7
  %v9200 = vsel %vm8874, %v9199, %v9198
  %v9201 = vsel %vm8876, %v9199, %v9200
  %v9202 = vsel %vm8878, %v9199, %v9201
  %v9203 = vsel %vm8880, %v9199, %v9202
  %v9204 = vsel %vm8869, %v8707, %v8707
  %v9205 = vsel %vm8871, %v8707, %v9204
  %v9206 = vrot.slane %v8708, 7
  %v9207 = vsel %vm8874, %v9206, %v9205
  %v9208 = vsel %vm8876, %v9206, %v9207
  %v9209 = vsel %vm8878, %v9206, %v9208
  %v9210 = vsel %vm8880, %v9206, %v9209
  %v9211 = vsel %vm8869, %v8709, %v8709
  %v9212 = vsel %vm8871, %v8709, %v9211
  %v9213 = vrot.slane %v8710, 7
  %v9214 = vsel %vm8874, %v9213, %v9212
  %v9215 = vsel %vm8876, %v9213, %v9214
  %v9216 = vsel %vm8878, %v9213, %v9215
  %v9217 = vsel %vm8880, %v9213, %v9216
  %v9218 = vsel %vm8869, %v8711, %v8711
  %v9219 = vsel %vm8871, %v8711, %v9218
  %v9220 = vrot.slane %v8712, 7
  %v9221 = vsel %vm8874, %v9220, %v9219
  %v9222 = vsel %vm8876, %v9220, %v9221
  %v9223 = vsel %vm8878, %v9220, %v9222
  %v9224 = vsel %vm8880, %v9220, %v9223
  %v9225 = vsel %vm8869, %v8713, %v8713
  %v9226 = vsel %vm8871, %v8713, %v9225
  %v9227 = vrot.slane %v8714, 7
  %v9228 = vsel %vm8874, %v9227, %v9226
  %v9229 = vsel %vm8876, %v9227, %v9228
  %v9230 = vsel %vm8878, %v9227, %v9229
  %v9231 = vsel %vm8880, %v9227, %v9230
  %v9232 = vsel %vm8869, %v8715, %v8715
  %v9233 = vsel %vm8871, %v8715, %v9232
  %v9234 = vrot.slane %v8716, 7
  %v9235 = vsel %vm8874, %v9234, %v9233
  %v9236 = vsel %vm8876, %v9234, %v9235
  %v9237 = vsel %vm8878, %v9234, %v9236
  %v9238 = vsel %vm8880, %v9234, %v9237
  %v9239 = vsel %vm8869, %v8717, %v8717
  %v9240 = vsel %vm8871, %v8717, %v9239
  %v9241 = vrot.slane %v8718, 7
  %v9242 = vsel %vm8874, %v9241, %v9240
  %v9243 = vsel %vm8876, %v9241, %v9242
  %v9244 = vsel %vm8878, %v9241, %v9243
  %v9245 = vsel %vm8880, %v9241, %v9244
  %v9246 = vsel %vm8869, %v8719, %v8719
  %v9247 = vsel %vm8871, %v8719, %v9246
  %v9248 = vrot.slane %v8720, 7
  %v9249 = vsel %vm8874, %v9248, %v9247
  %v9250 = vsel %vm8876, %v9248, %v9249
  %v9251 = vsel %vm8878, %v9248, %v9250
  %v9252 = vsel %vm8880, %v9248, %v9251
  %v9253 = vsel %vm8869, %v8721, %v8721
  %v9254 = vsel %vm8871, %v8721, %v9253
  %v9255 = vrot.slane %v8722, 7
  %v9256 = vsel %vm8874, %v9255, %v9254
  %v9257 = vsel %vm8876, %v9255, %v9256
  %v9258 = vsel %vm8878, %v9255, %v9257
  %v9259 = vsel %vm8880, %v9255, %v9258
  %v9260 = vsel %vm8869, %v8723, %v8723
  %v9261 = vsel %vm8871, %v8723, %v9260
  %v9262 = vrot.slane %v8724, 7
  %v9263 = vsel %vm8874, %v9262, %v9261
  %v9264 = vsel %vm8876, %v9262, %v9263
  %v9265 = vsel %vm8878, %v9262, %v9264
  %v9266 = vsel %vm8880, %v9262, %v9265
  %v9267 = vsel %vm8869, %v8725, %v8725
  %v9268 = vsel %vm8871, %v8725, %v9267
  %v9269 = vrot.slane %v8726, 7
  %v9270 = vsel %vm8874, %v9269, %v9268
  %v9271 = vsel %vm8876, %v9269, %v9270
  %v9272 = vsel %vm8878, %v9269, %v9271
  %v9273 = vsel %vm8880, %v9269, %v9272
  %v9274 = vsel %vm8869, %v8727, %v8727
  %v9275 = vsel %vm8871, %v8727, %v9274
  %v9276 = vrot.slane %v8728, 7
  %v9277 = vsel %vm8874, %v9276, %v9275
  %v9278 = vsel %vm8876, %v9276, %v9277
  %v9279 = vsel %vm8878, %v9276, %v9278
  %v9280 = vsel %vm8880, %v9276, %v9279
  %v9281 = vsel %vm8869, %v8729, %v8729
  %v9282 = vsel %vm8871, %v8729, %v9281
  %v9283 = vrot.slane %v8730, 7
  %v9284 = vsel %vm8874, %v9283, %v9282
  %v9285 = vsel %vm8876, %v9283, %v9284
  %v9286 = vsel %vm8878, %v9283, %v9285
  %v9287 = vsel %vm8880, %v9283, %v9286
  %v9288 = vsel %vm8869, %v8731, %v8731
  %v9289 = vsel %vm8871, %v8731, %v9288
  %v9290 = vrot.slane %v8732, 7
  %v9291 = vsel %vm8874, %v9290, %v9289
  %v9292 = vsel %vm8876, %v9290, %v9291
  %v9293 = vsel %vm8878, %v9290, %v9292
  %v9294 = vsel %vm8880, %v9290, %v9293
  %v9295 = vsel %vm8869, %v8733, %v8733
  %v9296 = vsel %vm8871, %v8733, %v9295
  %v9297 = vrot.slane %v8734, 7
  %v9298 = vsel %vm8874, %v9297, %v9296
  %v9299 = vsel %vm8876, %v9297, %v9298
  %v9300 = vsel %vm8878, %v9297, %v9299
  %v9301 = vsel %vm8880, %v9297, %v9300
  %v9302 = vsel %vm8869, %v8735, %v8735
  %v9303 = vsel %vm8871, %v8735, %v9302
  %v9304 = vrot.slane %v8736, 7
  %v9305 = vsel %vm8874, %v9304, %v9303
  %v9306 = vsel %vm8876, %v9304, %v9305
  %v9307 = vsel %vm8878, %v9304, %v9306
  %v9308 = vsel %vm8880, %v9304, %v9307
  %v9309 = vsel %vm8869, %v8737, %v8737
  %v9310 = vsel %vm8871, %v8737, %v9309
  %v9311 = vrot.slane %v8738, 7
  %v9312 = vsel %vm8874, %v9311, %v9310
  %v9313 = vsel %vm8876, %v9311, %v9312
  %v9314 = vsel %vm8878, %v9311, %v9313
  %v9315 = vsel %vm8880, %v9311, %v9314
  %v9316 = vsel %vm8869, %v8739, %v8739
  %v9317 = vsel %vm8871, %v8739, %v9316
  %v9318 = vrot.slane %v8740, 7
  %v9319 = vsel %vm8874, %v9318, %v9317
  %v9320 = vsel %vm8876, %v9318, %v9319
  %v9321 = vsel %vm8878, %v9318, %v9320
  %v9322 = vsel %vm8880, %v9318, %v9321
  %v9387 = vcombine.low %v8881, %v8909
  %v9389 = vunpack.c.l.s4 1934713408
  %v9390 = vunpack.c.0.s8 %v9389
  %v9391 = vlaneseq
  %v9392 = vshrl.u32 %v9391, 7
  %v9393 = vsub.s32 %v9390, %v9392
  %v9394 = vrot.slane %v9387, %v9393
  %v9395 = vcombine.high %v9394, 0.0
  %v9396 = vcombine.low %v8937, %v8965
  %v9398 = vunpack.c.l.s4 1934713408
  %v9399 = vunpack.c.0.s8 %v9398
  %v9400 = vlaneseq
  %v9401 = vshrl.u32 %v9400, 7
  %v9402 = vsub.s32 %v9399, %v9401
  %v9403 = vrot.slane %v9396, %v9402
  %v9404 = vcombine.high %v9403, 0.0
  %v9405 = vcombine.low %v8993, %v9021
  %v9407 = vunpack.c.l.s4 1934713408
  %v9408 = vunpack.c.0.s8 %v9407
  %v9409 = vlaneseq
  %v9410 = vshrl.u32 %v9409, 7
  %v9411 = vsub.s32 %v9408, %v9410
  %v9412 = vrot.slane %v9405, %v9411
  %v9413 = vcombine.high %v9412, 0.0
  %v9414 = vcombine.low %v9049, %v9077
  %v9416 = vunpack.c.l.s4 1934713408
  %v9417 = vunpack.c.0.s8 %v9416
  %v9418 = vlaneseq
  %v9419 = vshrl.u32 %v9418, 7
  %v9420 = vsub.s32 %v9417, %v9419
  %v9421 = vrot.slane %v9414, %v9420
  %v9422 = vcombine.high %v9421, 0.0
  %v9423 = vcombine.low %v9105, %v9133
  %v9425 = vunpack.c.l.s4 1934713408
  %v9426 = vunpack.c.0.s8 %v9425
  %v9427 = vlaneseq
  %v9428 = vshrl.u32 %v9427, 7
  %v9429 = vsub.s32 %v9426, %v9428
  %v9430 = vrot.slane %v9423, %v9429
  %v9431 = vcombine.high %v9430, 0.0
  %v9432 = vcombine.low %v9161, %v9189
  %v9434 = vunpack.c.l.s4 1934713408
  %v9435 = vunpack.c.0.s8 %v9434
  %v9436 = vlaneseq
  %v9437 = vshrl.u32 %v9436, 7
  %v9438 = vsub.s32 %v9435, %v9437
  %v9439 = vrot.slane %v9432, %v9438
  %v9440 = vcombine.high %v9439, 0.0
  %v9441 = vcombine.low %v9217, %v9245
  %v9443 = vunpack.c.l.s4 1934713408
  %v9444 = vunpack.c.0.s8 %v9443
  %v9445 = vlaneseq
  %v9446 = vshrl.u32 %v9445, 7
  %v9447 = vsub.s32 %v9444, %v9446
  %v9448 = vrot.slane %v9441, %v9447
  %v9449 = vcombine.high %v9448, 0.0
  %v9450 = vcombine.low %v9273, %v9301
  %v9452 = vunpack.c.l.s4 1934713408
  %v9453 = vunpack.c.0.s8 %v9452
  %v9454 = vlaneseq
  %v9455 = vshrl.u32 %v9454, 7
  %v9456 = vsub.s32 %v9453, %v9455
  %v9457 = vrot.slane %v9450, %v9456
  %v9458 = vcombine.high %v9457, 0.0
  %v9459 = vcombine.low %v8888, %v8916
  %v9461 = vunpack.c.l.s4 1934713408
  %v9462 = vunpack.c.0.s8 %v9461
  %v9463 = vlaneseq
  %v9464 = vshrl.u32 %v9463, 7
  %v9465 = vsub.s32 %v9462, %v9464
  %v9466 = vrot.slane %v9459, %v9465
  %v9467 = vcombine.high %v9466, 0.0
  %v9468 = vcombine.low %v8944, %v8972
  %v9470 = vunpack.c.l.s4 1934713408
  %v9471 = vunpack.c.0.s8 %v9470
  %v9472 = vlaneseq
  %v9473 = vshrl.u32 %v9472, 7
  %v9474 = vsub.s32 %v9471, %v9473
  %v9475 = vrot.slane %v9468, %v9474
  %v9476 = vcombine.high %v9475, 0.0
  %v9477 = vcombine.low %v9000, %v9028
  %v9479 = vunpack.c.l.s4 1934713408
  %v9480 = vunpack.c.0.s8 %v9479
  %v9481 = vlaneseq
  %v9482 = vshrl.u32 %v9481, 7
  %v9483 = vsub.s32 %v9480, %v9482
  %v9484 = vrot.slane %v9477, %v9483
  %v9485 = vcombine.high %v9484, 0.0
  %v9486 = vcombine.low %v9056, %v9084
  %v9488 = vunpack.c.l.s4 1934713408
  %v9489 = vunpack.c.0.s8 %v9488
  %v9490 = vlaneseq
  %v9491 = vshrl.u32 %v9490, 7
  %v9492 = vsub.s32 %v9489, %v9491
  %v9493 = vrot.slane %v9486, %v9492
  %v9494 = vcombine.high %v9493, 0.0
  %v9495 = vcombine.low %v9112, %v9140
  %v9497 = vunpack.c.l.s4 1934713408
  %v9498 = vunpack.c.0.s8 %v9497
  %v9499 = vlaneseq
  %v9500 = vshrl.u32 %v9499, 7
  %v9501 = vsub.s32 %v9498, %v9500
  %v9502 = vrot.slane %v9495, %v9501
  %v9503 = vcombine.high %v9502, 0.0
  %v9504 = vcombine.low %v9168, %v9196
  %v9506 = vunpack.c.l.s4 1934713408
  %v9507 = vunpack.c.0.s8 %v9506
  %v9508 = vlaneseq
  %v9509 = vshrl.u32 %v9508, 7
  %v9510 = vsub.s32 %v9507, %v9509
  %v9511 = vrot.slane %v9504, %v9510
  %v9512 = vcombine.high %v9511, 0.0
  %v9513 = vcombine.low %v9224, %v9252
  %v9515 = vunpack.c.l.s4 1934713408
  %v9516 = vunpack.c.0.s8 %v9515
  %v9517 = vlaneseq
  %v9518 = vshrl.u32 %v9517, 7
  %v9519 = vsub.s32 %v9516, %v9518
  %v9520 = vrot.slane %v9513, %v9519
  %v9521 = vcombine.high %v9520, 0.0
  %v9522 = vcombine.low %v9280, %v9308
  %v9524 = vunpack.c.l.s4 1934713408
  %v9525 = vunpack.c.0.s8 %v9524
  %v9526 = vlaneseq
  %v9527 = vshrl.u32 %v9526, 7
  %v9528 = vsub.s32 %v9525, %v9527
  %v9529 = vrot.slane %v9522, %v9528
  %v9530 = vcombine.high %v9529, 0.0
  %v9531 = vcombine.low %v8895, %v8923
  %v9533 = vunpack.c.l.s4 1934713408
  %v9534 = vunpack.c.0.s8 %v9533
  %v9535 = vlaneseq
  %v9536 = vshrl.u32 %v9535, 7
  %v9537 = vsub.s32 %v9534, %v9536
  %v9538 = vrot.slane %v9531, %v9537
  %v9539 = vcombine.high %v9538, 0.0
  %v9540 = vcombine.low %v8951, %v8979
  %v9542 = vunpack.c.l.s4 1934713408
  %v9543 = vunpack.c.0.s8 %v9542
  %v9544 = vlaneseq
  %v9545 = vshrl.u32 %v9544, 7
  %v9546 = vsub.s32 %v9543, %v9545
  %v9547 = vrot.slane %v9540, %v9546
  %v9548 = vcombine.high %v9547, 0.0
  %v9549 = vcombine.low %v9007, %v9035
  %v9551 = vunpack.c.l.s4 1934713408
  %v9552 = vunpack.c.0.s8 %v9551
  %v9553 = vlaneseq
  %v9554 = vshrl.u32 %v9553, 7
  %v9555 = vsub.s32 %v9552, %v9554
  %v9556 = vrot.slane %v9549, %v9555
  %v9557 = vcombine.high %v9556, 0.0
  %v9558 = vcombine.low %v9063, %v9091
  %v9560 = vunpack.c.l.s4 1934713408
  %v9561 = vunpack.c.0.s8 %v9560
  %v9562 = vlaneseq
  %v9563 = vshrl.u32 %v9562, 7
  %v9564 = vsub.s32 %v9561, %v9563
  %v9565 = vrot.slane %v9558, %v9564
  %v9566 = vcombine.high %v9565, 0.0
  %v9567 = vcombine.low %v9119, %v9147
  %v9569 = vunpack.c.l.s4 1934713408
  %v9570 = vunpack.c.0.s8 %v9569
  %v9571 = vlaneseq
  %v9572 = vshrl.u32 %v9571, 7
  %v9573 = vsub.s32 %v9570, %v9572
  %v9574 = vrot.slane %v9567, %v9573
  %v9575 = vcombine.high %v9574, 0.0
  %v9576 = vcombine.low %v9175, %v9203
  %v9578 = vunpack.c.l.s4 1934713408
  %v9579 = vunpack.c.0.s8 %v9578
  %v9580 = vlaneseq
  %v9581 = vshrl.u32 %v9580, 7
  %v9582 = vsub.s32 %v9579, %v9581
  %v9583 = vrot.slane %v9576, %v9582
  %v9584 = vcombine.high %v9583, 0.0
  %v9585 = vcombine.low %v9231, %v9259
  %v9587 = vunpack.c.l.s4 1934713408
  %v9588 = vunpack.c.0.s8 %v9587
  %v9589 = vlaneseq
  %v9590 = vshrl.u32 %v9589, 7
  %v9591 = vsub.s32 %v9588, %v9590
  %v9592 = vrot.slane %v9585, %v9591
  %v9593 = vcombine.high %v9592, 0.0
  %v9594 = vcombine.low %v9287, %v9315
  %v9596 = vunpack.c.l.s4 1934713408
  %v9597 = vunpack.c.0.s8 %v9596
  %v9598 = vlaneseq
  %v9599 = vshrl.u32 %v9598, 7
  %v9600 = vsub.s32 %v9597, %v9599
  %v9601 = vrot.slane %v9594, %v9600
  %v9602 = vcombine.high %v9601, 0.0
  %v9603 = vcombine.low %v8902, %v8930
  %v9605 = vunpack.c.l.s4 1934713408
  %v9606 = vunpack.c.0.s8 %v9605
  %v9607 = vlaneseq
  %v9608 = vshrl.u32 %v9607, 7
  %v9609 = vsub.s32 %v9606, %v9608
  %v9610 = vrot.slane %v9603, %v9609
  %v9611 = vcombine.high %v9610, 0.0
  %v9612 = vcombine.low %v8958, %v8986
  %v9614 = vunpack.c.l.s4 1934713408
  %v9615 = vunpack.c.0.s8 %v9614
  %v9616 = vlaneseq
  %v9617 = vshrl.u32 %v9616, 7
  %v9618 = vsub.s32 %v9615, %v9617
  %v9619 = vrot.slane %v9612, %v9618
  %v9620 = vcombine.high %v9619, 0.0
  %v9621 = vcombine.low %v9014, %v9042
  %v9623 = vunpack.c.l.s4 1934713408
  %v9624 = vunpack.c.0.s8 %v9623
  %v9625 = vlaneseq
  %v9626 = vshrl.u32 %v9625, 7
  %v9627 = vsub.s32 %v9624, %v9626
  %v9628 = vrot.slane %v9621, %v9627
  %v9629 = vcombine.high %v9628, 0.0
  %v9630 = vcombine.low %v9070, %v9098
  %v9632 = vunpack.c.l.s4 1934713408
  %v9633 = vunpack.c.0.s8 %v9632
  %v9634 = vlaneseq
  %v9635 = vshrl.u32 %v9634, 7
  %v9636 = vsub.s32 %v9633, %v9635
  %v9637 = vrot.slane %v9630, %v9636
  %v9638 = vcombine.high %v9637, 0.0
  %v9639 = vcombine.low %v9126, %v9154
  %v9641 = vunpack.c.l.s4 1934713408
  %v9642 = vunpack.c.0.s8 %v9641
  %v9643 = vlaneseq
  %v9644 = vshrl.u32 %v9643, 7
  %v9645 = vsub.s32 %v9642, %v9644
  %v9646 = vrot.slane %v9639, %v9645
  %v9647 = vcombine.high %v9646, 0.0
  %v9648 = vcombine.low %v9182, %v9210
  %v9650 = vunpack.c.l.s4 1934713408
  %v9651 = vunpack.c.0.s8 %v9650
  %v9652 = vlaneseq
  %v9653 = vshrl.u32 %v9652, 7
  %v9654 = vsub.s32 %v9651, %v9653
  %v9655 = vrot.slane %v9648, %v9654
  %v9656 = vcombine.high %v9655, 0.0
  %v9657 = vcombine.low %v9238, %v9266
  %v9659 = vunpack.c.l.s4 1934713408
  %v9660 = vunpack.c.0.s8 %v9659
  %v9661 = vlaneseq
  %v9662 = vshrl.u32 %v9661, 7
  %v9663 = vsub.s32 %v9660, %v9662
  %v9664 = vrot.slane %v9657, %v9663
  %v9665 = vcombine.high %v9664, 0.0
  %v9666 = vcombine.low %v9294, %v9322
  %v9668 = vunpack.c.l.s4 1934713408
  %v9669 = vunpack.c.0.s8 %v9668
  %v9670 = vlaneseq
  %v9671 = vshrl.u32 %v9670, 7
  %v9672 = vsub.s32 %v9669, %v9671
  %v9673 = vrot.slane %v9666, %v9672
  %v9674 = vcombine.high %v9673, 0.0
  %v9683 = vcombine.low %v9394, %v9403
  %v9684 = vcombine.low %v9412, %v9421
  %v9686 = vunpack.c.l.s4 1983009808
  %v9687 = vunpack.c.0.s8 %v9686
  %v9688 = vlaneseq
  %v9689 = vshrl.u32 %v9688, 7
  %v9690 = vsub.s32 %v9687, %v9689
  %v9691 = vrot.slane %v9683, %v9690
  %v9693 = vunpack.c.l.s4 1983009808
  %v9694 = vunpack.c.0.s8 %v9693
  %v9695 = vlaneseq
  %v9696 = vshrl.u32 %v9695, 7
  %v9697 = vsub.s32 %v9694, %v9696
  %v9698 = vrot.slane %v9684, %v9697
  %v9699 = vcombine.low %v9691, %v9698
  %v9700 = vcombine.low %v9430, %v9439
  %v9701 = vcombine.low %v9448, %v9457
  %v9703 = vunpack.c.l.s4 1983009808
  %v9704 = vunpack.c.0.s8 %v9703
  %v9705 = vlaneseq
  %v9706 = vshrl.u32 %v9705, 7
  %v9707 = vsub.s32 %v9704, %v9706
  %v9708 = vrot.slane %v9700, %v9707
  %v9710 = vunpack.c.l.s4 1983009808
  %v9711 = vunpack.c.0.s8 %v9710
  %v9712 = vlaneseq
  %v9713 = vshrl.u32 %v9712, 7
  %v9714 = vsub.s32 %v9711, %v9713
  %v9715 = vrot.slane %v9701, %v9714
  %v9716 = vcombine.low %v9708, %v9715
  %v9727 = vcombine.low %v9395, %v9404
  %v9728 = vcombine.low %v9413, %v9422
  %v9730 = vunpack.c.l.s4 1983009808
  %v9731 = vunpack.c.0.s8 %v9730
  %v9732 = vlaneseq
  %v9733 = vshrl.u32 %v9732, 7
  %v9734 = vsub.s32 %v9731, %v9733
  %v9735 = vrot.slane %v9727, %v9734
  %v9737 = vunpack.c.l.s4 1983009808
  %v9738 = vunpack.c.0.s8 %v9737
  %v9739 = vlaneseq
  %v9740 = vshrl.u32 %v9739, 7
  %v9741 = vsub.s32 %v9738, %v9740
  %v9742 = vrot.slane %v9728, %v9741
  %v9743 = vcombine.low %v9735, %v9742
  %v9744 = vcombine.low %v9431, %v9440
  %v9745 = vcombine.low %v9449, %v9458
  %v9747 = vunpack.c.l.s4 1983009808
  %v9748 = vunpack.c.0.s8 %v9747
  %v9749 = vlaneseq
  %v9750 = vshrl.u32 %v9749, 7
  %v9751 = vsub.s32 %v9748, %v9750
  %v9752 = vrot.slane %v9744, %v9751
  %v9754 = vunpack.c.l.s4 1983009808
  %v9755 = vunpack.c.0.s8 %v9754
  %v9756 = vlaneseq
  %v9757 = vshrl.u32 %v9756, 7
  %v9758 = vsub.s32 %v9755, %v9757
  %v9759 = vrot.slane %v9745, %v9758
  %v9760 = vcombine.low %v9752, %v9759
  %9761 = vrot.lane.b32.xlu0 %v9743, 16
  %v9762 = vpop.permute.xlu0 %9761
  %9763 = vrot.lane.b32.xlu0 %v9760, 16
  %v9764 = vpop.permute.xlu0 %9763
  %v9775 = vcombine.low %v9466, %v9475
  %v9776 = vcombine.low %v9484, %v9493
  %v9778 = vunpack.c.l.s4 1983009808
  %v9779 = vunpack.c.0.s8 %v9778
  %v9780 = vlaneseq
  %v9781 = vshrl.u32 %v9780, 7
  %v9782 = vsub.s32 %v9779, %v9781
  %v9783 = vrot.slane %v9775, %v9782
  %v9785 = vunpack.c.l.s4 1983009808
  %v9786 = vunpack.c.0.s8 %v9785
  %v9787 = vlaneseq
  %v9788 = vshrl.u32 %v9787, 7
  %v9789 = vsub.s32 %v9786, %v9788
  %v9790 = vrot.slane %v9776, %v9789
  %v9791 = vcombine.low %v9783, %v9790
  %v9792 = vcombine.low %v9502, %v9511
  %v9793 = vcombine.low %v9520, %v9529
  %v9795 = vunpack.c.l.s4 1983009808
  %v9796 = vunpack.c.0.s8 %v9795
  %v9797 = vlaneseq
  %v9798 = vshrl.u32 %v9797, 7
  %v9799 = vsub.s32 %v9796, %v9798
  %v9800 = vrot.slane %v9792, %v9799
  %v9802 = vunpack.c.l.s4 1983009808
  %v9803 = vunpack.c.0.s8 %v9802
  %v9804 = vlaneseq
  %v9805 = vshrl.u32 %v9804, 7
  %v9806 = vsub.s32 %v9803, %v9805
  %v9807 = vrot.slane %v9793, %v9806
  %v9808 = vcombine.low %v9800, %v9807
  %9809 = vrot.lane.b32.xlu0 %v9791, 32
  %v9810 = vpop.permute.xlu0 %9809
  %9811 = vrot.lane.b32.xlu0 %v9808, 32
  %v9812 = vpop.permute.xlu0 %9811
  %v9823 = vcombine.low %v9467, %v9476
  %v9824 = vcombine.low %v9485, %v9494
  %v9826 = vunpack.c.l.s4 1983009808
  %v9827 = vunpack.c.0.s8 %v9826
  %v9828 = vlaneseq
  %v9829 = vshrl.u32 %v9828, 7
  %v9830 = vsub.s32 %v9827, %v9829
  %v9831 = vrot.slane %v9823, %v9830
  %v9833 = vunpack.c.l.s4 1983009808
  %v9834 = vunpack.c.0.s8 %v9833
  %v9835 = vlaneseq
  %v9836 = vshrl.u32 %v9835, 7
  %v9837 = vsub.s32 %v9834, %v9836
  %v9838 = vrot.slane %v9824, %v9837
  %v9839 = vcombine.low %v9831, %v9838
  %v9840 = vcombine.low %v9503, %v9512
  %v9841 = vcombine.low %v9521, %v9530
  %v9843 = vunpack.c.l.s4 1983009808
  %v9844 = vunpack.c.0.s8 %v9843
  %v9845 = vlaneseq
  %v9846 = vshrl.u32 %v9845, 7
  %v9847 = vsub.s32 %v9844, %v9846
  %v9848 = vrot.slane %v9840, %v9847
  %v9850 = vunpack.c.l.s4 1983009808
  %v9851 = vunpack.c.0.s8 %v9850
  %v9852 = vlaneseq
  %v9853 = vshrl.u32 %v9852, 7
  %v9854 = vsub.s32 %v9851, %v9853
  %v9855 = vrot.slane %v9841, %v9854
  %v9856 = vcombine.low %v9848, %v9855
  %9857 = vrot.lane.b32.xlu0 %v9839, 48
  %v9858 = vpop.permute.xlu0 %9857
  %9859 = vrot.lane.b32.xlu0 %v9856, 48
  %v9860 = vpop.permute.xlu0 %9859
  %v9871 = vcombine.low %v9538, %v9547
  %v9872 = vcombine.low %v9556, %v9565
  %v9874 = vunpack.c.l.s4 1983009808
  %v9875 = vunpack.c.0.s8 %v9874
  %v9876 = vlaneseq
  %v9877 = vshrl.u32 %v9876, 7
  %v9878 = vsub.s32 %v9875, %v9877
  %v9879 = vrot.slane %v9871, %v9878
  %v9881 = vunpack.c.l.s4 1983009808
  %v9882 = vunpack.c.0.s8 %v9881
  %v9883 = vlaneseq
  %v9884 = vshrl.u32 %v9883, 7
  %v9885 = vsub.s32 %v9882, %v9884
  %v9886 = vrot.slane %v9872, %v9885
  %v9887 = vcombine.low %v9879, %v9886
  %v9888 = vcombine.low %v9574, %v9583
  %v9889 = vcombine.low %v9592, %v9601
  %v9891 = vunpack.c.l.s4 1983009808
  %v9892 = vunpack.c.0.s8 %v9891
  %v9893 = vlaneseq
  %v9894 = vshrl.u32 %v9893, 7
  %v9895 = vsub.s32 %v9892, %v9894
  %v9896 = vrot.slane %v9888, %v9895
  %v9898 = vunpack.c.l.s4 1983009808
  %v9899 = vunpack.c.0.s8 %v9898
  %v9900 = vlaneseq
  %v9901 = vshrl.u32 %v9900, 7
  %v9902 = vsub.s32 %v9899, %v9901
  %v9903 = vrot.slane %v9889, %v9902
  %v9904 = vcombine.low %v9896, %v9903
  %9905 = vrot.lane.b32.xlu0 %v9887, 64
  %v9906 = vpop.permute.xlu0 %9905
  %9907 = vrot.lane.b32.xlu0 %v9904, 64
  %v9908 = vpop.permute.xlu0 %9907
  %v9919 = vcombine.low %v9539, %v9548
  %v9920 = vcombine.low %v9557, %v9566
  %v9922 = vunpack.c.l.s4 1983009808
  %v9923 = vunpack.c.0.s8 %v9922
  %v9924 = vlaneseq
  %v9925 = vshrl.u32 %v9924, 7
  %v9926 = vsub.s32 %v9923, %v9925
  %v9927 = vrot.slane %v9919, %v9926
  %v9929 = vunpack.c.l.s4 1983009808
  %v9930 = vunpack.c.0.s8 %v9929
  %v9931 = vlaneseq
  %v9932 = vshrl.u32 %v9931, 7
  %v9933 = vsub.s32 %v9930, %v9932
  %v9934 = vrot.slane %v9920, %v9933
  %v9935 = vcombine.low %v9927, %v9934
  %v9936 = vcombine.low %v9575, %v9584
  %v9937 = vcombine.low %v9593, %v9602
  %v9939 = vunpack.c.l.s4 1983009808
  %v9940 = vunpack.c.0.s8 %v9939
  %v9941 = vlaneseq
  %v9942 = vshrl.u32 %v9941, 7
  %v9943 = vsub.s32 %v9940, %v9942
  %v9944 = vrot.slane %v9936, %v9943
  %v9946 = vunpack.c.l.s4 1983009808
  %v9947 = vunpack.c.0.s8 %v9946
  %v9948 = vlaneseq
  %v9949 = vshrl.u32 %v9948, 7
  %v9950 = vsub.s32 %v9947, %v9949
  %v9951 = vrot.slane %v9937, %v9950
  %v9952 = vcombine.low %v9944, %v9951
  %9953 = vrot.lane.b32.xlu0 %v9935, 80
  %v9954 = vpop.permute.xlu0 %9953
  %9955 = vrot.lane.b32.xlu0 %v9952, 80
  %v9956 = vpop.permute.xlu0 %9955
  %v9967 = vcombine.low %v9610, %v9619
  %v9968 = vcombine.low %v9628, %v9637
  %v9970 = vunpack.c.l.s4 1983009808
  %v9971 = vunpack.c.0.s8 %v9970
  %v9972 = vlaneseq
  %v9973 = vshrl.u32 %v9972, 7
  %v9974 = vsub.s32 %v9971, %v9973
  %v9975 = vrot.slane %v9967, %v9974
  %v9977 = vunpack.c.l.s4 1983009808
  %v9978 = vunpack.c.0.s8 %v9977
  %v9979 = vlaneseq
  %v9980 = vshrl.u32 %v9979, 7
  %v9981 = vsub.s32 %v9978, %v9980
  %v9982 = vrot.slane %v9968, %v9981
  %v9983 = vcombine.low %v9975, %v9982
  %v9984 = vcombine.low %v9646, %v9655
  %v9985 = vcombine.low %v9664, %v9673
  %v9987 = vunpack.c.l.s4 1983009808
  %v9988 = vunpack.c.0.s8 %v9987
  %v9989 = vlaneseq
  %v9990 = vshrl.u32 %v9989, 7
  %v9991 = vsub.s32 %v9988, %v9990
  %v9992 = vrot.slane %v9984, %v9991
  %v9994 = vunpack.c.l.s4 1983009808
  %v9995 = vunpack.c.0.s8 %v9994
  %v9996 = vlaneseq
  %v9997 = vshrl.u32 %v9996, 7
  %v9998 = vsub.s32 %v9995, %v9997
  %v9999 = vrot.slane %v9985, %v9998
  %v10000 = vcombine.low %v9992, %v9999
  %10001 = vrot.lane.b32.xlu0 %v9983, 96
  %v10002 = vpop.permute.xlu0 %10001
  %10003 = vrot.lane.b32.xlu0 %v10000, 96
  %v10004 = vpop.permute.xlu0 %10003
  %v10015 = vcombine.low %v9611, %v9620
  %v10016 = vcombine.low %v9629, %v9638
  %v10018 = vunpack.c.l.s4 1983009808
  %v10019 = vunpack.c.0.s8 %v10018
  %v10020 = vlaneseq
  %v10021 = vshrl.u32 %v10020, 7
  %v10022 = vsub.s32 %v10019, %v10021
  %v10023 = vrot.slane %v10015, %v10022
  %v10025 = vunpack.c.l.s4 1983009808
  %v10026 = vunpack.c.0.s8 %v10025
  %v10027 = vlaneseq
  %v10028 = vshrl.u32 %v10027, 7
  %v10029 = vsub.s32 %v10026, %v10028
  %v10030 = vrot.slane %v10016, %v10029
  %v10031 = vcombine.low %v10023, %v10030
  %v10032 = vcombine.low %v9647, %v9656
  %v10033 = vcombine.low %v9665, %v9674
  %v10035 = vunpack.c.l.s4 1983009808
  %v10036 = vunpack.c.0.s8 %v10035
  %v10037 = vlaneseq
  %v10038 = vshrl.u32 %v10037, 7
  %v10039 = vsub.s32 %v10036, %v10038
  %v10040 = vrot.slane %v10032, %v10039
  %v10042 = vunpack.c.l.s4 1983009808
  %v10043 = vunpack.c.0.s8 %v10042
  %v10044 = vlaneseq
  %v10045 = vshrl.u32 %v10044, 7
  %v10046 = vsub.s32 %v10043, %v10045
  %v10047 = vrot.slane %v10033, %v10046
  %v10048 = vcombine.low %v10040, %v10047
  %10049 = vrot.lane.b32.xlu0 %v10031, 112
  %v10050 = vpop.permute.xlu0 %10049
  %10051 = vrot.lane.b32.xlu0 %v10048, 112
  %v10052 = vpop.permute.xlu0 %10051
  %v10055 = vsel %vm5381, %v9699, %v9762
  %v10056 = vsel %vm5381, %v9716, %v9764
  %vm10057 = vcmask 261120
  %v10058 = vsel %vm10057, %v10055, %v9810
  %v10059 = vsel %vm10057, %v10056, %v9812
  %vm10060 = vcmask 392192
  %v10061 = vsel %vm10060, %v10058, %v9858
  %v10062 = vsel %vm10060, %v10059, %v9860
  %vm10063 = vcmask 523264
  %v10064 = vsel %vm10063, %v10061, %v9906
  %v10065 = vsel %vm10063, %v10062, %v9908
  %vm10066 = vcmask 654336
  %v10067 = vsel %vm10066, %v10064, %v9954
  %v10068 = vsel %vm10066, %v10065, %v9956
  %vm10069 = vcmask 785408
  %v10070 = vsel %vm10069, %v10067, %v10002
  %v10071 = vsel %vm10069, %v10068, %v10004
  %vm10072 = vcmask 916480
  %v10073 = vsel %vm10072, %v10070, %v10050
  %v10074 = vsel %vm10072, %v10071, %v10052
  %10075 = vst [vmem:[%s4] sm:$0xff] %v10073
  %10076 = vst [vmem:[%s4 + $0x8] sm:$0xff] %v10074
  // Predicated region
  $region18: #{encoder_forward.3} parent=0 // pred_check
    _
  $region19: #{encoder_forward.3} parent=0 // pred_check_branch
    %10078 = sbr.rel (0) target = $region21
  $region20: #{encoder_forward.3} parent=0 // pred_region
    _
  $region21: #{encoder_forward.3} parent=0 // pred_fallthru
    _
  // Predicated region
  $region22: #{encoder_forward.3} parent=0 // pred_check
    _
  $region23: #{encoder_forward.3} parent=0 // pred_check_branch
    %10080 = sbr.rel (0) target = $region25
  $region24: #{encoder_forward.3} parent=0 // pred_region
    _
  $region25: #{encoder_forward.3} parent=0 // pred_fallthru
    _

</llo_original>
